<compile_context>
chip_gen: v6e
topology: v6e:2x2x1
jax: 0.10.0
libtpu: 0.0.40
codegen_flags: <defaults>
</compile_context>

<pallas_src>
import functools

import jax
import jax.numpy as jnp
from jax.experimental import pallas as pl
from jax.experimental.pallas import tpu as pltpu


# (Cout, Cin, KH, KW) for groups 1..5 (num_channel=1) and their MaxPool2d sizes.
_CONV_SPECS = [
    (16, 1, 5, 3),
    (32, 16, 5, 3),
    (64, 32, 5, 3),
    (128, 64, 3, 3),
    (256, 128, 3, 3),
]
_POOLS = [(2, 1), (2, 2), (2, 1), (2, 2), (1, 1)]
_PAD = 1  # every conv uses padding=(1, 1), stride 1


# -----------------------------------------------------------------------------
# Fused Conv2d + BN(eval) + ReLU + MaxPool kernel (one frame per grid step)
# -----------------------------------------------------------------------------
def _conv_group_kernel(x_ref, w_ref, sc_ref, sh_ref, o_ref, tmp_ref,
                       *, KH, Ho, Wo, ph, pw):
    """x_ref : (1, Hp, Wo, KW*Cin) f32  zero-padded, row-patched input
       w_ref : (KH, KW*Cin, Cout)  bf16 conv weight (one K x Cout slab per kernel row)
       sc_ref: (1, Cout) f32  folded BN scale  = gamma / sqrt(var + eps)
       sh_ref: (1, Cout) f32  folded BN shift  = beta + (bias - mean) * scale
       o_ref : (1, Ho//ph, Wo//pw, Cout) f32  pooled output
       tmp_ref: (Ho//ph, Wo, Cout) f32 VMEM scratch for the W-direction pool."""
    kwc = x_ref.shape[-1]
    cout = o_ref.shape[-1]

    xb = x_ref[0].astype(jnp.bfloat16)                    # (Hp, Wo, KW*Cin)

    # Convolution as KH matmuls (one per kernel row).  Tap slices touch only the
    # leading H axis; the reshape keeps the lane dim and an 8-aligned sublane dim.
    acc = jnp.zeros((Ho * Wo, cout), jnp.float32)
    for ki in range(KH):
        patch = xb[ki:ki + Ho].reshape(Ho * Wo, kwc)
        acc = acc + jnp.dot(patch, w_ref[ki], preferred_element_type=jnp.float32)

    # Folded BatchNorm (eval mode) + conv bias + ReLU, in f32.
    y = jnp.maximum(acc * sc_ref[...] + sh_ref[...], 0.0)
    y = y.reshape(Ho, Wo, cout)

    # MaxPool along H: leading-dim reshape + pairwise max (no relayout).
    if ph == 2:
        y = y.reshape(Ho // 2, 2, Wo, cout)
        y = jnp.maximum(y[:, 0], y[:, 1])

    # MaxPool along W: stage in VMEM scratch, pool via sublane-strided loads.
    if pw == 2:
        tmp_ref[...] = y
        y = jnp.maximum(tmp_ref[:, pl.ds(0, Wo // 2, stride=2), :],
                        tmp_ref[:, pl.ds(1, Wo // 2, stride=2), :])

    o_ref[0] = y.astype(o_ref.dtype)


def conv_group(x_nhwc, p, kh, kw, ph, pw):
    """x_nhwc: (N, H, W, Cin) f32 -> pooled conv output (N, Ho//ph, Wo//pw, Cout) f32."""
    N, H, W, Cin = x_nhwc.shape
    Hp = H + 2 * _PAD
    Ho = Hp - kh + 1
    Wo = W + 2 * _PAD - kw + 1
    cout = p["w_mat"].shape[-1]
    # TODO(synk): torch MaxPool2d floor-truncates odd dims; here shapes divide exactly.
    assert Ho % ph == 0 and Wo % pw == 0, (Ho, Wo, ph, pw)
    Hop, Wop = Ho // ph, Wo // pw
    kwc = kw * Cin

    # Zero-pad spatially (semantic conv padding), then build kw-wide row patches
    # along the lane dim (3x concat of tiny tensors; replaces the 9-15x im2col).
    xp = jnp.pad(x_nhwc, ((0, 0), (_PAD, _PAD), (_PAD, _PAD), (0, 0)))
    xrp = jnp.concatenate([xp[:, :, j:j + Wo, :] for j in range(kw)], axis=-1)

    kernel = functools.partial(_conv_group_kernel, KH=kh, Ho=Ho, Wo=Wo, ph=ph, pw=pw)
    return pl.pallas_call(
        kernel,
        out_shape=jax.ShapeDtypeStruct((N, Hop, Wop, cout), jnp.float32),
        grid_spec=pltpu.PrefetchScalarGridSpec(
            num_scalar_prefetch=0,
            grid=(N,),
            in_specs=[
                pl.BlockSpec((1, Hp, Wo, kwc), lambda n: (n, 0, 0, 0)),  # one frame
                pl.BlockSpec((kh, kwc, cout), lambda n: (0, 0, 0)),      # full weight
                pl.BlockSpec((1, cout), lambda n: (0, 0)),               # BN scale
                pl.BlockSpec((1, cout), lambda n: (0, 0)),               # BN shift
            ],
            out_specs=pl.BlockSpec((1, Hop, Wop, cout), lambda n: (n, 0, 0, 0)),
            scratch_shapes=[pltpu.VMEM((Hop, Wo, cout), jnp.float32)],
        ),
        compiler_params=pltpu.CompilerParams(dimension_semantics=("parallel",)),
    )(xrp, p["w_mat"], p["scale"], p["shift"])


# -----------------------------------------------------------------------------
# Parameters (deterministic) and the full forward pass
# -----------------------------------------------------------------------------
def init_group_params(key, cout, cin, kh, kw, eps=1e-5):
    k1, k2, k3, k4, k5, k6 = jax.random.split(key, 6)
    fan_in = cin * kh * kw
    w = jax.random.normal(k1, (cout, cin, kh, kw), jnp.float32) * (1.0 / fan_in) ** 0.5
    b = 0.01 * jax.random.normal(k2, (cout,), jnp.float32)
    gamma = 1.0 + 0.1 * jax.random.normal(k3, (cout,), jnp.float32)
    beta = 0.1 * jax.random.normal(k4, (cout,), jnp.float32)
    mean = 0.05 * jax.random.normal(k5, (cout,), jnp.float32)
    var = 1.0 + 0.1 * jnp.abs(jax.random.normal(k6, (cout,), jnp.float32))

    scale = gamma / jnp.sqrt(var + eps)          # eval-mode BN fold
    shift = beta + (b - mean) * scale
    # torch (Cout, Cin, KH, KW) -> (KH, KW*Cin, Cout): matches the row patches'
    # (kj-major, cin-minor) lane ordering; bf16 for the MXU operand path.
    w_mat = jnp.transpose(w, (2, 3, 1, 0)).reshape(kh, kw * cin, cout).astype(jnp.bfloat16)
    return dict(w_mat=w_mat,
                scale=scale.reshape(1, cout),
                shift=shift.reshape(1, cout))


def imagenet_large_frames_forward(x_btchw, params):
    """x: (B, T, C, H, W).  Returns (g1, g2, g3, g4) = outputs of groups 2..5,
    each reshaped back to (B, T, C', H', W') (TimeDistributed semantics)."""
    B, T, C, H, W = x_btchw.shape
    x = jnp.transpose(x_btchw.reshape(B * T, C, H, W), (0, 2, 3, 1))  # -> NHWC
    feats = []
    for p, (_cout, _cin, kh, kw), (ph, pw) in zip(params, _CONV_SPECS, _POOLS):
        x = conv_group(x, p, kh, kw, ph, pw)
        feats.append(x)
    outs = []
    for f in feats[1:]:                       # forward returns groups 2..5 outputs
        n_, hh, ww, cc = f.shape
        outs.append(jnp.transpose(f, (0, 3, 1, 2)).reshape(B, T, cc, hh, ww))
    return tuple(outs)


# -----------------------------------------------------------------------------
# Main
# -----------------------------------------------------------------------------
if __name__ == "__main__":
    key = jax.random.PRNGKey(0)
    keys = jax.random.split(key, 6)
    params = [init_group_params(k, cout, cin, kh, kw)
              for k, (cout, cin, kh, kw) in zip(keys[:5], _CONV_SPECS)]

    # Small frame stack: batch=2, seq=2 frames, 1 channel, 30x16 spatial
    # (H=30 keeps every conv/MaxPool division exact through all five groups).
    B, T, C, H, W = 2, 2, 1, 30, 16
    x = jax.random.normal(keys[5], (B, T, C, H, W), jnp.float32)

    fwd = jax.jit(imagenet_large_frames_forward)
    g1, g2, g3, g4 = fwd(x, params)
    jax.block_until_ready((g1, g2, g3, g4))

    assert g1.shape == (B, T, 32, 6, 8), g1.shape
    assert g2.shape == (B, T, 64, 2, 8), g2.shape
    assert g3.shape == (B, T, 128, 1, 4), g3.shape
    assert g4.shape == (B, T, 256, 1, 4), g4.shape
    print("KERNEL_OK")
</pallas_src>

<mosaic_0001>
module attributes {stable_mosaic.version = 11 : i64} {
  func.func @_conv_group_kernel(%arg0: i32, %arg1: memref<1x32x16x3xf32, #tpu.memory_space<vmem>>, %arg2: memref<5x3x16xbf16, #tpu.memory_space<vmem>>, %arg3: memref<1x16xf32, #tpu.memory_space<vmem>>, %arg4: memref<1x16xf32, #tpu.memory_space<vmem>>, %arg5: memref<1x14x16x16xf32, #tpu.memory_space<vmem>>, %arg6: memref<14x16x16xf32, #tpu.memory_space<vmem>>) attributes {dimension_semantics = [#tpu.dimension_semantics<parallel>], iteration_bounds = array<i64: 4>, scalar_prefetch = 0 : i64, scratch_operands = 1 : i64, tpu.core_type = #tpu.core_type<tc>, window_params = [{transform_indices = @transform_0, window_bounds = array<i64: 1, 32, 16, 3>}, {pipeline_mode = #tpu.pipeline_mode<synchronous>, transform_indices = @transform_1, window_bounds = array<i64: 5, 3, 16>}, {pipeline_mode = #tpu.pipeline_mode<synchronous>, transform_indices = @transform_2, window_bounds = array<i64: 1, 16>}, {pipeline_mode = #tpu.pipeline_mode<synchronous>, transform_indices = @transform_3, window_bounds = array<i64: 1, 16>}, {transform_indices = @transform_4, window_bounds = array<i64: 1, 14, 16, 16>}]} {
    %c0 = arith.constant 0 : index
    %c0_0 = arith.constant 0 : index
    %c0_1 = arith.constant 0 : index
    %c0_2 = arith.constant 0 : index
    %0 = vector.load %arg1[%c0, %c0_0, %c0_1, %c0_2] : memref<1x32x16x3xf32, #tpu.memory_space<vmem>>, vector<1x32x16x3xf32>
    %1 = vector.shape_cast %0 : vector<1x32x16x3xf32> to vector<32x16x3xf32>
    %2 = arith.truncf %1 : vector<32x16x3xf32> to vector<32x16x3xbf16>
    %cst = arith.constant 0.000000e+00 : f32
    %3 = vector.broadcast %cst : f32 to vector<448x16xf32>
    %4 = vector.extract_strided_slice %2 {offsets = [0, 0, 0], sizes = [28, 16, 3], strides = [1, 1, 1]} : vector<32x16x3xbf16> to vector<28x16x3xbf16>
    %5 = vector.shape_cast %4 : vector<28x16x3xbf16> to vector<448x3xbf16>
    %c0_3 = arith.constant 0 : index
    %c0_4 = arith.constant 0 : index
    %c0_5 = arith.constant 0 : index
    %6 = vector.load %arg2[%c0_3, %c0_4, %c0_5] : memref<5x3x16xbf16, #tpu.memory_space<vmem>>, vector<1x3x16xbf16>
    %7 = vector.shape_cast %6 : vector<1x3x16xbf16> to vector<3x16xbf16>
    %cst_6 = arith.constant dense<0.000000e+00> : vector<448x16xf32>
    %8 = tpu.matmul %5, %7, %cst_6 {dimension_numbers = #tpu.dot_dimension_numbers<[1], [0], [0], [1], [0, 0, 1, 1], [], []>} : vector<448x3xbf16>, vector<3x16xbf16>, vector<448x16xf32> -> vector<448x16xf32>
    %9 = arith.addf %3, %8 : vector<448x16xf32>
    %10 = vector.extract_strided_slice %2 {offsets = [1, 0, 0], sizes = [28, 16, 3], strides = [1, 1, 1]} : vector<32x16x3xbf16> to vector<28x16x3xbf16>
    %11 = vector.shape_cast %10 : vector<28x16x3xbf16> to vector<448x3xbf16>
    %c1 = arith.constant 1 : index
    %c0_7 = arith.constant 0 : index
    %c0_8 = arith.constant 0 : index
    %12 = vector.load %arg2[%c1, %c0_7, %c0_8] : memref<5x3x16xbf16, #tpu.memory_space<vmem>>, vector<1x3x16xbf16>
    %13 = vector.shape_cast %12 : vector<1x3x16xbf16> to vector<3x16xbf16>
    %cst_9 = arith.constant dense<0.000000e+00> : vector<448x16xf32>
    %14 = tpu.matmul %11, %13, %cst_9 {dimension_numbers = #tpu.dot_dimension_numbers<[1], [0], [0], [1], [0, 0, 1, 1], [], []>} : vector<448x3xbf16>, vector<3x16xbf16>, vector<448x16xf32> -> vector<448x16xf32>
    %15 = arith.addf %9, %14 : vector<448x16xf32>
    %16 = vector.extract_strided_slice %2 {offsets = [2, 0, 0], sizes = [28, 16, 3], strides = [1, 1, 1]} : vector<32x16x3xbf16> to vector<28x16x3xbf16>
    %17 = vector.shape_cast %16 : vector<28x16x3xbf16> to vector<448x3xbf16>
    %c2 = arith.constant 2 : index
    %c0_10 = arith.constant 0 : index
    %c0_11 = arith.constant 0 : index
    %18 = vector.load %arg2[%c2, %c0_10, %c0_11] : memref<5x3x16xbf16, #tpu.memory_space<vmem>>, vector<1x3x16xbf16>
    %19 = vector.shape_cast %18 : vector<1x3x16xbf16> to vector<3x16xbf16>
    %cst_12 = arith.constant dense<0.000000e+00> : vector<448x16xf32>
    %20 = tpu.matmul %17, %19, %cst_12 {dimension_numbers = #tpu.dot_dimension_numbers<[1], [0], [0], [1], [0, 0, 1, 1], [], []>} : vector<448x3xbf16>, vector<3x16xbf16>, vector<448x16xf32> -> vector<448x16xf32>
    %21 = arith.addf %15, %20 : vector<448x16xf32>
    %22 = vector.extract_strided_slice %2 {offsets = [3, 0, 0], sizes = [28, 16, 3], strides = [1, 1, 1]} : vector<32x16x3xbf16> to vector<28x16x3xbf16>
    %23 = vector.shape_cast %22 : vector<28x16x3xbf16> to vector<448x3xbf16>
    %c3 = arith.constant 3 : index
    %c0_13 = arith.constant 0 : index
    %c0_14 = arith.constant 0 : index
    %24 = vector.load %arg2[%c3, %c0_13, %c0_14] : memref<5x3x16xbf16, #tpu.memory_space<vmem>>, vector<1x3x16xbf16>
    %25 = vector.shape_cast %24 : vector<1x3x16xbf16> to vector<3x16xbf16>
    %cst_15 = arith.constant dense<0.000000e+00> : vector<448x16xf32>
    %26 = tpu.matmul %23, %25, %cst_15 {dimension_numbers = #tpu.dot_dimension_numbers<[1], [0], [0], [1], [0, 0, 1, 1], [], []>} : vector<448x3xbf16>, vector<3x16xbf16>, vector<448x16xf32> -> vector<448x16xf32>
    %27 = arith.addf %21, %26 : vector<448x16xf32>
    %28 = vector.extract_strided_slice %2 {offsets = [4, 0, 0], sizes = [28, 16, 3], strides = [1, 1, 1]} : vector<32x16x3xbf16> to vector<28x16x3xbf16>
    %29 = vector.shape_cast %28 : vector<28x16x3xbf16> to vector<448x3xbf16>
    %c4 = arith.constant 4 : index
    %c0_16 = arith.constant 0 : index
    %c0_17 = arith.constant 0 : index
    %30 = vector.load %arg2[%c4, %c0_16, %c0_17] : memref<5x3x16xbf16, #tpu.memory_space<vmem>>, vector<1x3x16xbf16>
    %31 = vector.shape_cast %30 : vector<1x3x16xbf16> to vector<3x16xbf16>
    %cst_18 = arith.constant dense<0.000000e+00> : vector<448x16xf32>
    %32 = tpu.matmul %29, %31, %cst_18 {dimension_numbers = #tpu.dot_dimension_numbers<[1], [0], [0], [1], [0, 0, 1, 1], [], []>} : vector<448x3xbf16>, vector<3x16xbf16>, vector<448x16xf32> -> vector<448x16xf32>
    %33 = arith.addf %27, %32 : vector<448x16xf32>
    %c0_19 = arith.constant 0 : index
    %c0_20 = arith.constant 0 : index
    %34 = vector.load %arg3[%c0_19, %c0_20] : memref<1x16xf32, #tpu.memory_space<vmem>>, vector<1x16xf32>
    %35 = vector.broadcast %34 : vector<1x16xf32> to vector<448x16xf32>
    %36 = arith.mulf %33, %35 : vector<448x16xf32>
    %c0_21 = arith.constant 0 : index
    %c0_22 = arith.constant 0 : index
    %37 = vector.load %arg4[%c0_21, %c0_22] : memref<1x16xf32, #tpu.memory_space<vmem>>, vector<1x16xf32>
    %38 = vector.broadcast %37 : vector<1x16xf32> to vector<448x16xf32>
    %39 = arith.addf %36, %38 : vector<448x16xf32>
    %cst_23 = arith.constant 0.000000e+00 : f32
    %40 = vector.broadcast %cst_23 : f32 to vector<448x16xf32>
    %41 = arith.maximumf %39, %40 : vector<448x16xf32>
    %42 = vector.shape_cast %41 : vector<448x16xf32> to vector<28x16x16xf32>
    %43 = vector.shape_cast %42 : vector<28x16x16xf32> to vector<14x2x16x16xf32>
    %44 = vector.extract_strided_slice %43 {offsets = [0, 0, 0, 0], sizes = [14, 1, 16, 16], strides = [1, 1, 1, 1]} : vector<14x2x16x16xf32> to vector<14x1x16x16xf32>
    %45 = vector.shape_cast %44 : vector<14x1x16x16xf32> to vector<14x16x16xf32>
    %46 = vector.extract_strided_slice %43 {offsets = [0, 1, 0, 0], sizes = [14, 1, 16, 16], strides = [1, 1, 1, 1]} : vector<14x2x16x16xf32> to vector<14x1x16x16xf32>
    %47 = vector.shape_cast %46 : vector<14x1x16x16xf32> to vector<14x16x16xf32>
    %48 = arith.maximumf %45, %47 : vector<14x16x16xf32>
    %c0_24 = arith.constant 0 : index
    %c0_25 = arith.constant 0 : index
    %c0_26 = arith.constant 0 : index
    %c0_27 = arith.constant 0 : index
    %49 = vector.load %arg5[%c0_24, %c0_25, %c0_26, %c0_27] : memref<1x14x16x16xf32, #tpu.memory_space<vmem>>, vector<1x14x16x16xf32>
    %50 = vector.shape_cast %49 : vector<1x14x16x16xf32> to vector<14x16x16xf32>
    %51 = vector.shape_cast %48 : vector<14x16x16xf32> to vector<1x14x16x16xf32>
    tpu.vector_store %arg5[%c0_24, %c0_25, %c0_26, %c0_27], %51 {strides = array<i32>} : memref<1x14x16x16xf32, #tpu.memory_space<vmem>>, vector<1x14x16x16xf32>,
    return
  }
  func.func @transform_0(%arg0: i32) -> (i32, i32, i32, i32) {
    %c0_i32 = arith.constant 0 : i32
    %c0_i32_0 = arith.constant 0 : i32
    %c0_i32_1 = arith.constant 0 : i32
    %c0_i32_2 = arith.constant 0 : i32
    return %arg0, %c0_i32, %c0_i32_0, %c0_i32_1 : i32, i32, i32, i32
  }
  func.func @transform_1(%arg0: i32) -> (i32, i32, i32) {
    %c0_i32 = arith.constant 0 : i32
    %c0_i32_0 = arith.constant 0 : i32
    %c0_i32_1 = arith.constant 0 : i32
    %c0_i32_2 = arith.constant 0 : i32
    return %c0_i32, %c0_i32_0, %c0_i32_1 : i32, i32, i32
  }
  func.func @transform_2(%arg0: i32) -> (i32, i32) {
    %c0_i32 = arith.constant 0 : i32
    %c0_i32_0 = arith.constant 0 : i32
    %c0_i32_1 = arith.constant 0 : i32
    return %c0_i32, %c0_i32_0 : i32, i32
  }
  func.func @transform_3(%arg0: i32) -> (i32, i32) {
    %c0_i32 = arith.constant 0 : i32
    %c0_i32_0 = arith.constant 0 : i32
    %c0_i32_1 = arith.constant 0 : i32
    return %c0_i32, %c0_i32_0 : i32, i32
  }
  func.func @transform_4(%arg0: i32) -> (i32, i32, i32, i32) {
    %c0_i32 = arith.constant 0 : i32
    %c0_i32_0 = arith.constant 0 : i32
    %c0_i32_1 = arith.constant 0 : i32
    %c0_i32_2 = arith.constant 0 : i32
    return %arg0, %c0_i32, %c0_i32_0, %c0_i32_1 : i32, i32, i32, i32
  }
}

module attributes {stable_mosaic.version = 11 : i64} {
  func.func @_conv_group_kernel(%arg0: i32, %arg1: memref<1x16x16x48xf32, #tpu.memory_space<vmem>>, %arg2: memref<5x48x32xbf16, #tpu.memory_space<vmem>>, %arg3: memref<1x32xf32, #tpu.memory_space<vmem>>, %arg4: memref<1x32xf32, #tpu.memory_space<vmem>>, %arg5: memref<1x6x8x32xf32, #tpu.memory_space<vmem>>, %arg6: memref<6x16x32xf32, #tpu.memory_space<vmem>>) attributes {dimension_semantics = [#tpu.dimension_semantics<parallel>], iteration_bounds = array<i64: 4>, scalar_prefetch = 0 : i64, scratch_operands = 1 : i64, tpu.core_type = #tpu.core_type<tc>, window_params = [{transform_indices = @transform_0, window_bounds = array<i64: 1, 16, 16, 48>}, {pipeline_mode = #tpu.pipeline_mode<synchronous>, transform_indices = @transform_1, window_bounds = array<i64: 5, 48, 32>}, {pipeline_mode = #tpu.pipeline_mode<synchronous>, transform_indices = @transform_2, window_bounds = array<i64: 1, 32>}, {pipeline_mode = #tpu.pipeline_mode<synchronous>, transform_indices = @transform_3, window_bounds = array<i64: 1, 32>}, {transform_indices = @transform_4, window_bounds = array<i64: 1, 6, 8, 32>}]} {
    %c0 = arith.constant 0 : index
    %c0_0 = arith.constant 0 : index
    %c0_1 = arith.constant 0 : index
    %c0_2 = arith.constant 0 : index
    %0 = vector.load %arg1[%c0, %c0_0, %c0_1, %c0_2] : memref<1x16x16x48xf32, #tpu.memory_space<vmem>>, vector<1x16x16x48xf32>
    %1 = vector.shape_cast %0 : vector<1x16x16x48xf32> to vector<16x16x48xf32>
    %2 = arith.truncf %1 : vector<16x16x48xf32> to vector<16x16x48xbf16>
    %cst = arith.constant 0.000000e+00 : f32
    %3 = vector.broadcast %cst : f32 to vector<192x32xf32>
    %4 = vector.extract_strided_slice %2 {offsets = [0, 0, 0], sizes = [12, 16, 48], strides = [1, 1, 1]} : vector<16x16x48xbf16> to vector<12x16x48xbf16>
    %5 = vector.shape_cast %4 : vector<12x16x48xbf16> to vector<192x48xbf16>
    %c0_3 = arith.constant 0 : index
    %c0_4 = arith.constant 0 : index
    %c0_5 = arith.constant 0 : index
    %6 = vector.load %arg2[%c0_3, %c0_4, %c0_5] : memref<5x48x32xbf16, #tpu.memory_space<vmem>>, vector<1x48x32xbf16>
    %7 = vector.shape_cast %6 : vector<1x48x32xbf16> to vector<48x32xbf16>
    %cst_6 = arith.constant dense<0.000000e+00> : vector<192x32xf32>
    %8 = tpu.matmul %5, %7, %cst_6 {dimension_numbers = #tpu.dot_dimension_numbers<[1], [0], [0], [1], [0, 0, 1, 1], [], []>} : vector<192x48xbf16>, vector<48x32xbf16>, vector<192x32xf32> -> vector<192x32xf32>
    %9 = arith.addf %3, %8 : vector<192x32xf32>
    %10 = vector.extract_strided_slice %2 {offsets = [1, 0, 0], sizes = [12, 16, 48], strides = [1, 1, 1]} : vector<16x16x48xbf16> to vector<12x16x48xbf16>
    %11 = vector.shape_cast %10 : vector<12x16x48xbf16> to vector<192x48xbf16>
    %c1 = arith.constant 1 : index
    %c0_7 = arith.constant 0 : index
    %c0_8 = arith.constant 0 : index
    %12 = vector.load %arg2[%c1, %c0_7, %c0_8] : memref<5x48x32xbf16, #tpu.memory_space<vmem>>, vector<1x48x32xbf16>
    %13 = vector.shape_cast %12 : vector<1x48x32xbf16> to vector<48x32xbf16>
    %cst_9 = arith.constant dense<0.000000e+00> : vector<192x32xf32>
    %14 = tpu.matmul %11, %13, %cst_9 {dimension_numbers = #tpu.dot_dimension_numbers<[1], [0], [0], [1], [0, 0, 1, 1], [], []>} : vector<192x48xbf16>, vector<48x32xbf16>, vector<192x32xf32> -> vector<192x32xf32>
    %15 = arith.addf %9, %14 : vector<192x32xf32>
    %16 = vector.extract_strided_slice %2 {offsets = [2, 0, 0], sizes = [12, 16, 48], strides = [1, 1, 1]} : vector<16x16x48xbf16> to vector<12x16x48xbf16>
    %17 = vector.shape_cast %16 : vector<12x16x48xbf16> to vector<192x48xbf16>
    %c2 = arith.constant 2 : index
    %c0_10 = arith.constant 0 : index
    %c0_11 = arith.constant 0 : index
    %18 = vector.load %arg2[%c2, %c0_10, %c0_11] : memref<5x48x32xbf16, #tpu.memory_space<vmem>>, vector<1x48x32xbf16>
    %19 = vector.shape_cast %18 : vector<1x48x32xbf16> to vector<48x32xbf16>
    %cst_12 = arith.constant dense<0.000000e+00> : vector<192x32xf32>
    %20 = tpu.matmul %17, %19, %cst_12 {dimension_numbers = #tpu.dot_dimension_numbers<[1], [0], [0], [1], [0, 0, 1, 1], [], []>} : vector<192x48xbf16>, vector<48x32xbf16>, vector<192x32xf32> -> vector<192x32xf32>
    %21 = arith.addf %15, %20 : vector<192x32xf32>
    %22 = vector.extract_strided_slice %2 {offsets = [3, 0, 0], sizes = [12, 16, 48], strides = [1, 1, 1]} : vector<16x16x48xbf16> to vector<12x16x48xbf16>
    %23 = vector.shape_cast %22 : vector<12x16x48xbf16> to vector<192x48xbf16>
    %c3 = arith.constant 3 : index
    %c0_13 = arith.constant 0 : index
    %c0_14 = arith.constant 0 : index
    %24 = vector.load %arg2[%c3, %c0_13, %c0_14] : memref<5x48x32xbf16, #tpu.memory_space<vmem>>, vector<1x48x32xbf16>
    %25 = vector.shape_cast %24 : vector<1x48x32xbf16> to vector<48x32xbf16>
    %cst_15 = arith.constant dense<0.000000e+00> : vector<192x32xf32>
    %26 = tpu.matmul %23, %25, %cst_15 {dimension_numbers = #tpu.dot_dimension_numbers<[1], [0], [0], [1], [0, 0, 1, 1], [], []>} : vector<192x48xbf16>, vector<48x32xbf16>, vector<192x32xf32> -> vector<192x32xf32>
    %27 = arith.addf %21, %26 : vector<192x32xf32>
    %28 = vector.extract_strided_slice %2 {offsets = [4, 0, 0], sizes = [12, 16, 48], strides = [1, 1, 1]} : vector<16x16x48xbf16> to vector<12x16x48xbf16>
    %29 = vector.shape_cast %28 : vector<12x16x48xbf16> to vector<192x48xbf16>
    %c4 = arith.constant 4 : index
    %c0_16 = arith.constant 0 : index
    %c0_17 = arith.constant 0 : index
    %30 = vector.load %arg2[%c4, %c0_16, %c0_17] : memref<5x48x32xbf16, #tpu.memory_space<vmem>>, vector<1x48x32xbf16>
    %31 = vector.shape_cast %30 : vector<1x48x32xbf16> to vector<48x32xbf16>
    %cst_18 = arith.constant dense<0.000000e+00> : vector<192x32xf32>
    %32 = tpu.matmul %29, %31, %cst_18 {dimension_numbers = #tpu.dot_dimension_numbers<[1], [0], [0], [1], [0, 0, 1, 1], [], []>} : vector<192x48xbf16>, vector<48x32xbf16>, vector<192x32xf32> -> vector<192x32xf32>
    %33 = arith.addf %27, %32 : vector<192x32xf32>
    %c0_19 = arith.constant 0 : index
    %c0_20 = arith.constant 0 : index
    %34 = vector.load %arg3[%c0_19, %c0_20] : memref<1x32xf32, #tpu.memory_space<vmem>>, vector<1x32xf32>
    %35 = vector.broadcast %34 : vector<1x32xf32> to vector<192x32xf32>
    %36 = arith.mulf %33, %35 : vector<192x32xf32>
    %c0_21 = arith.constant 0 : index
    %c0_22 = arith.constant 0 : index
    %37 = vector.load %arg4[%c0_21, %c0_22] : memref<1x32xf32, #tpu.memory_space<vmem>>, vector<1x32xf32>
    %38 = vector.broadcast %37 : vector<1x32xf32> to vector<192x32xf32>
    %39 = arith.addf %36, %38 : vector<192x32xf32>
    %cst_23 = arith.constant 0.000000e+00 : f32
    %40 = vector.broadcast %cst_23 : f32 to vector<192x32xf32>
    %41 = arith.maximumf %39, %40 : vector<192x32xf32>
    %42 = vector.shape_cast %41 : vector<192x32xf32> to vector<12x16x32xf32>
    %43 = vector.shape_cast %42 : vector<12x16x32xf32> to vector<6x2x16x32xf32>
    %44 = vector.extract_strided_slice %43 {offsets = [0, 0, 0, 0], sizes = [6, 1, 16, 32], strides = [1, 1, 1, 1]} : vector<6x2x16x32xf32> to vector<6x1x16x32xf32>
    %45 = vector.shape_cast %44 : vector<6x1x16x32xf32> to vector<6x16x32xf32>
    %46 = vector.extract_strided_slice %43 {offsets = [0, 1, 0, 0], sizes = [6, 1, 16, 32], strides = [1, 1, 1, 1]} : vector<6x2x16x32xf32> to vector<6x1x16x32xf32>
    %47 = vector.shape_cast %46 : vector<6x1x16x32xf32> to vector<6x16x32xf32>
    %48 = arith.maximumf %45, %47 : vector<6x16x32xf32>
    %c0_24 = arith.constant 0 : index
    %c0_25 = arith.constant 0 : index
    %c0_26 = arith.constant 0 : index
    %49 = vector.load %arg6[%c0_24, %c0_25, %c0_26] : memref<6x16x32xf32, #tpu.memory_space<vmem>>, vector<6x16x32xf32>
    tpu.vector_store %arg6[%c0_24, %c0_25, %c0_26], %48 {strides = array<i32>} : memref<6x16x32xf32, #tpu.memory_space<vmem>>, vector<6x16x32xf32>,
    %c0_27 = arith.constant 0 : index
    %c0_28 = arith.constant 0 : index
    %c0_29 = arith.constant 0 : index
    %50 = tpu.strided_load %arg6[%c0_27, %c0_28, %c0_29] {strides = array<i32: 1, 2, 1>} : memref<6x16x32xf32, #tpu.memory_space<vmem>>, vector<6x8x32xf32>
    %c0_30 = arith.constant 0 : index
    %c1_31 = arith.constant 1 : index
    %c0_32 = arith.constant 0 : index
    %51 = tpu.strided_load %arg6[%c0_30, %c1_31, %c0_32] {strides = array<i32: 1, 2, 1>} : memref<6x16x32xf32, #tpu.memory_space<vmem>>, vector<6x8x32xf32>
    %52 = arith.maximumf %50, %51 : vector<6x8x32xf32>
    %c0_33 = arith.constant 0 : index
    %c0_34 = arith.constant 0 : index
    %c0_35 = arith.constant 0 : index
    %c0_36 = arith.constant 0 : index
    %53 = vector.load %arg5[%c0_33, %c0_34, %c0_35, %c0_36] : memref<1x6x8x32xf32, #tpu.memory_space<vmem>>, vector<1x6x8x32xf32>
    %54 = vector.shape_cast %53 : vector<1x6x8x32xf32> to vector<6x8x32xf32>
    %55 = vector.shape_cast %52 : vector<6x8x32xf32> to vector<1x6x8x32xf32>
    tpu.vector_store %arg5[%c0_33, %c0_34, %c0_35, %c0_36], %55 {strides = array<i32>} : memref<1x6x8x32xf32, #tpu.memory_space<vmem>>, vector<1x6x8x32xf32>,
    return
  }
  func.func @transform_0(%arg0: i32) -> (i32, i32, i32, i32) {
    %c0_i32 = arith.constant 0 : i32
    %c0_i32_0 = arith.constant 0 : i32
    %c0_i32_1 = arith.constant 0 : i32
    %c0_i32_2 = arith.constant 0 : i32
    return %arg0, %c0_i32, %c0_i32_0, %c0_i32_1 : i32, i32, i32, i32
  }
  func.func @transform_1(%arg0: i32) -> (i32, i32, i32) {
    %c0_i32 = arith.constant 0 : i32
    %c0_i32_0 = arith.constant 0 : i32
    %c0_i32_1 = arith.constant 0 : i32
    %c0_i32_2 = arith.constant 0 : i32
    return %c0_i32, %c0_i32_0, %c0_i32_1 : i32, i32, i32
  }
  func.func @transform_2(%arg0: i32) -> (i32, i32) {
    %c0_i32 = arith.constant 0 : i32
    %c0_i32_0 = arith.constant 0 : i32
    %c0_i32_1 = arith.constant 0 : i32
    return %c0_i32, %c0_i32_0 : i32, i32
  }
  func.func @transform_3(%arg0: i32) -> (i32, i32) {
    %c0_i32 = arith.constant 0 : i32
    %c0_i32_0 = arith.constant 0 : i32
    %c0_i32_1 = arith.constant 0 : i32
    return %c0_i32, %c0_i32_0 : i32, i32
  }
  func.func @transform_4(%arg0: i32) -> (i32, i32, i32, i32) {
    %c0_i32 = arith.constant 0 : i32
    %c0_i32_0 = arith.constant 0 : i32
    %c0_i32_1 = arith.constant 0 : i32
    %c0_i32_2 = arith.constant 0 : i32
    return %arg0, %c0_i32, %c0_i32_0, %c0_i32_1 : i32, i32, i32, i32
  }
}

module attributes {stable_mosaic.version = 11 : i64} {
  func.func @_conv_group_kernel(%arg0: i32, %arg1: memref<1x8x8x96xf32, #tpu.memory_space<vmem>>, %arg2: memref<5x96x64xbf16, #tpu.memory_space<vmem>>, %arg3: memref<1x64xf32, #tpu.memory_space<vmem>>, %arg4: memref<1x64xf32, #tpu.memory_space<vmem>>, %arg5: memref<1x2x8x64xf32, #tpu.memory_space<vmem>>, %arg6: memref<2x8x64xf32, #tpu.memory_space<vmem>>) attributes {dimension_semantics = [#tpu.dimension_semantics<parallel>], iteration_bounds = array<i64: 4>, scalar_prefetch = 0 : i64, scratch_operands = 1 : i64, tpu.core_type = #tpu.core_type<tc>, window_params = [{transform_indices = @transform_0, window_bounds = array<i64: 1, 8, 8, 96>}, {pipeline_mode = #tpu.pipeline_mode<synchronous>, transform_indices = @transform_1, window_bounds = array<i64: 5, 96, 64>}, {pipeline_mode = #tpu.pipeline_mode<synchronous>, transform_indices = @transform_2, window_bounds = array<i64: 1, 64>}, {pipeline_mode = #tpu.pipeline_mode<synchronous>, transform_indices = @transform_3, window_bounds = array<i64: 1, 64>}, {transform_indices = @transform_4, window_bounds = array<i64: 1, 2, 8, 64>}]} {
    %c0 = arith.constant 0 : index
    %c0_0 = arith.constant 0 : index
    %c0_1 = arith.constant 0 : index
    %c0_2 = arith.constant 0 : index
    %0 = vector.load %arg1[%c0, %c0_0, %c0_1, %c0_2] : memref<1x8x8x96xf32, #tpu.memory_space<vmem>>, vector<1x8x8x96xf32>
    %1 = vector.shape_cast %0 : vector<1x8x8x96xf32> to vector<8x8x96xf32>
    %2 = arith.truncf %1 : vector<8x8x96xf32> to vector<8x8x96xbf16>
    %cst = arith.constant 0.000000e+00 : f32
    %3 = vector.broadcast %cst : f32 to vector<32x64xf32>
    %4 = vector.extract_strided_slice %2 {offsets = [0, 0, 0], sizes = [4, 8, 96], strides = [1, 1, 1]} : vector<8x8x96xbf16> to vector<4x8x96xbf16>
    %5 = vector.shape_cast %4 : vector<4x8x96xbf16> to vector<32x96xbf16>
    %c0_3 = arith.constant 0 : index
    %c0_4 = arith.constant 0 : index
    %c0_5 = arith.constant 0 : index
    %6 = vector.load %arg2[%c0_3, %c0_4, %c0_5] : memref<5x96x64xbf16, #tpu.memory_space<vmem>>, vector<1x96x64xbf16>
    %7 = vector.shape_cast %6 : vector<1x96x64xbf16> to vector<96x64xbf16>
    %cst_6 = arith.constant dense<0.000000e+00> : vector<32x64xf32>
    %8 = tpu.matmul %5, %7, %cst_6 {dimension_numbers = #tpu.dot_dimension_numbers<[1], [0], [0], [1], [0, 0, 1, 1], [], []>} : vector<32x96xbf16>, vector<96x64xbf16>, vector<32x64xf32> -> vector<32x64xf32>
    %9 = arith.addf %3, %8 : vector<32x64xf32>
    %10 = vector.extract_strided_slice %2 {offsets = [1, 0, 0], sizes = [4, 8, 96], strides = [1, 1, 1]} : vector<8x8x96xbf16> to vector<4x8x96xbf16>
    %11 = vector.shape_cast %10 : vector<4x8x96xbf16> to vector<32x96xbf16>
    %c1 = arith.constant 1 : index
    %c0_7 = arith.constant 0 : index
    %c0_8 = arith.constant 0 : index
    %12 = vector.load %arg2[%c1, %c0_7, %c0_8] : memref<5x96x64xbf16, #tpu.memory_space<vmem>>, vector<1x96x64xbf16>
    %13 = vector.shape_cast %12 : vector<1x96x64xbf16> to vector<96x64xbf16>
    %cst_9 = arith.constant dense<0.000000e+00> : vector<32x64xf32>
    %14 = tpu.matmul %11, %13, %cst_9 {dimension_numbers = #tpu.dot_dimension_numbers<[1], [0], [0], [1], [0, 0, 1, 1], [], []>} : vector<32x96xbf16>, vector<96x64xbf16>, vector<32x64xf32> -> vector<32x64xf32>
    %15 = arith.addf %9, %14 : vector<32x64xf32>
    %16 = vector.extract_strided_slice %2 {offsets = [2, 0, 0], sizes = [4, 8, 96], strides = [1, 1, 1]} : vector<8x8x96xbf16> to vector<4x8x96xbf16>
    %17 = vector.shape_cast %16 : vector<4x8x96xbf16> to vector<32x96xbf16>
    %c2 = arith.constant 2 : index
    %c0_10 = arith.constant 0 : index
    %c0_11 = arith.constant 0 : index
    %18 = vector.load %arg2[%c2, %c0_10, %c0_11] : memref<5x96x64xbf16, #tpu.memory_space<vmem>>, vector<1x96x64xbf16>
    %19 = vector.shape_cast %18 : vector<1x96x64xbf16> to vector<96x64xbf16>
    %cst_12 = arith.constant dense<0.000000e+00> : vector<32x64xf32>
    %20 = tpu.matmul %17, %19, %cst_12 {dimension_numbers = #tpu.dot_dimension_numbers<[1], [0], [0], [1], [0, 0, 1, 1], [], []>} : vector<32x96xbf16>, vector<96x64xbf16>, vector<32x64xf32> -> vector<32x64xf32>
    %21 = arith.addf %15, %20 : vector<32x64xf32>
    %22 = vector.extract_strided_slice %2 {offsets = [3, 0, 0], sizes = [4, 8, 96], strides = [1, 1, 1]} : vector<8x8x96xbf16> to vector<4x8x96xbf16>
    %23 = vector.shape_cast %22 : vector<4x8x96xbf16> to vector<32x96xbf16>
    %c3 = arith.constant 3 : index
    %c0_13 = arith.constant 0 : index
    %c0_14 = arith.constant 0 : index
    %24 = vector.load %arg2[%c3, %c0_13, %c0_14] : memref<5x96x64xbf16, #tpu.memory_space<vmem>>, vector<1x96x64xbf16>
    %25 = vector.shape_cast %24 : vector<1x96x64xbf16> to vector<96x64xbf16>
    %cst_15 = arith.constant dense<0.000000e+00> : vector<32x64xf32>
    %26 = tpu.matmul %23, %25, %cst_15 {dimension_numbers = #tpu.dot_dimension_numbers<[1], [0], [0], [1], [0, 0, 1, 1], [], []>} : vector<32x96xbf16>, vector<96x64xbf16>, vector<32x64xf32> -> vector<32x64xf32>
    %27 = arith.addf %21, %26 : vector<32x64xf32>
    %28 = vector.extract_strided_slice %2 {offsets = [4, 0, 0], sizes = [4, 8, 96], strides = [1, 1, 1]} : vector<8x8x96xbf16> to vector<4x8x96xbf16>
    %29 = vector.shape_cast %28 : vector<4x8x96xbf16> to vector<32x96xbf16>
    %c4 = arith.constant 4 : index
    %c0_16 = arith.constant 0 : index
    %c0_17 = arith.constant 0 : index
    %30 = vector.load %arg2[%c4, %c0_16, %c0_17] : memref<5x96x64xbf16, #tpu.memory_space<vmem>>, vector<1x96x64xbf16>
    %31 = vector.shape_cast %30 : vector<1x96x64xbf16> to vector<96x64xbf16>
    %cst_18 = arith.constant dense<0.000000e+00> : vector<32x64xf32>
    %32 = tpu.matmul %29, %31, %cst_18 {dimension_numbers = #tpu.dot_dimension_numbers<[1], [0], [0], [1], [0, 0, 1, 1], [], []>} : vector<32x96xbf16>, vector<96x64xbf16>, vector<32x64xf32> -> vector<32x64xf32>
    %33 = arith.addf %27, %32 : vector<32x64xf32>
    %c0_19 = arith.constant 0 : index
    %c0_20 = arith.constant 0 : index
    %34 = vector.load %arg3[%c0_19, %c0_20] : memref<1x64xf32, #tpu.memory_space<vmem>>, vector<1x64xf32>
    %35 = vector.broadcast %34 : vector<1x64xf32> to vector<32x64xf32>
    %36 = arith.mulf %33, %35 : vector<32x64xf32>
    %c0_21 = arith.constant 0 : index
    %c0_22 = arith.constant 0 : index
    %37 = vector.load %arg4[%c0_21, %c0_22] : memref<1x64xf32, #tpu.memory_space<vmem>>, vector<1x64xf32>
    %38 = vector.broadcast %37 : vector<1x64xf32> to vector<32x64xf32>
    %39 = arith.addf %36, %38 : vector<32x64xf32>
    %cst_23 = arith.constant 0.000000e+00 : f32
    %40 = vector.broadcast %cst_23 : f32 to vector<32x64xf32>
    %41 = arith.maximumf %39, %40 : vector<32x64xf32>
    %42 = vector.shape_cast %41 : vector<32x64xf32> to vector<4x8x64xf32>
    %43 = vector.shape_cast %42 : vector<4x8x64xf32> to vector<2x2x8x64xf32>
    %44 = vector.extract_strided_slice %43 {offsets = [0, 0, 0, 0], sizes = [2, 1, 8, 64], strides = [1, 1, 1, 1]} : vector<2x2x8x64xf32> to vector<2x1x8x64xf32>
    %45 = vector.shape_cast %44 : vector<2x1x8x64xf32> to vector<2x8x64xf32>
    %46 = vector.extract_strided_slice %43 {offsets = [0, 1, 0, 0], sizes = [2, 1, 8, 64], strides = [1, 1, 1, 1]} : vector<2x2x8x64xf32> to vector<2x1x8x64xf32>
    %47 = vector.shape_cast %46 : vector<2x1x8x64xf32> to vector<2x8x64xf32>
    %48 = arith.maximumf %45, %47 : vector<2x8x64xf32>
    %c0_24 = arith.constant 0 : index
    %c0_25 = arith.constant 0 : index
    %c0_26 = arith.constant 0 : index
    %c0_27 = arith.constant 0 : index
    %49 = vector.load %arg5[%c0_24, %c0_25, %c0_26, %c0_27] : memref<1x2x8x64xf32, #tpu.memory_space<vmem>>, vector<1x2x8x64xf32>
    %50 = vector.shape_cast %49 : vector<1x2x8x64xf32> to vector<2x8x64xf32>
    %51 = vector.shape_cast %48 : vector<2x8x64xf32> to vector<1x2x8x64xf32>
    tpu.vector_store %arg5[%c0_24, %c0_25, %c0_26, %c0_27], %51 {strides = array<i32>} : memref<1x2x8x64xf32, #tpu.memory_space<vmem>>, vector<1x2x8x64xf32>,
    return
  }
  func.func @transform_0(%arg0: i32) -> (i32, i32, i32, i32) {
    %c0_i32 = arith.constant 0 : i32
    %c0_i32_0 = arith.constant 0 : i32
    %c0_i32_1 = arith.constant 0 : i32
    %c0_i32_2 = arith.constant 0 : i32
    return %arg0, %c0_i32, %c0_i32_0, %c0_i32_1 : i32, i32, i32, i32
  }
  func.func @transform_1(%arg0: i32) -> (i32, i32, i32) {
    %c0_i32 = arith.constant 0 : i32
    %c0_i32_0 = arith.constant 0 : i32
    %c0_i32_1 = arith.constant 0 : i32
    %c0_i32_2 = arith.constant 0 : i32
    return %c0_i32, %c0_i32_0, %c0_i32_1 : i32, i32, i32
  }
  func.func @transform_2(%arg0: i32) -> (i32, i32) {
    %c0_i32 = arith.constant 0 : i32
    %c0_i32_0 = arith.constant 0 : i32
    %c0_i32_1 = arith.constant 0 : i32
    return %c0_i32, %c0_i32_0 : i32, i32
  }
  func.func @transform_3(%arg0: i32) -> (i32, i32) {
    %c0_i32 = arith.constant 0 : i32
    %c0_i32_0 = arith.constant 0 : i32
    %c0_i32_1 = arith.constant 0 : i32
    return %c0_i32, %c0_i32_0 : i32, i32
  }
  func.func @transform_4(%arg0: i32) -> (i32, i32, i32, i32) {
    %c0_i32 = arith.constant 0 : i32
    %c0_i32_0 = arith.constant 0 : i32
    %c0_i32_1 = arith.constant 0 : i32
    %c0_i32_2 = arith.constant 0 : i32
    return %arg0, %c0_i32, %c0_i32_0, %c0_i32_1 : i32, i32, i32, i32
  }
}

module attributes {stable_mosaic.version = 11 : i64} {
  func.func @_conv_group_kernel(%arg0: i32, %arg1: memref<1x4x8x192xf32, #tpu.memory_space<vmem>>, %arg2: memref<3x192x128xbf16, #tpu.memory_space<vmem>>, %arg3: memref<1x128xf32, #tpu.memory_space<vmem>>, %arg4: memref<1x128xf32, #tpu.memory_space<vmem>>, %arg5: memref<1x1x4x128xf32, #tpu.memory_space<vmem>>, %arg6: memref<1x8x128xf32, #tpu.memory_space<vmem>>) attributes {dimension_semantics = [#tpu.dimension_semantics<parallel>], iteration_bounds = array<i64: 4>, scalar_prefetch = 0 : i64, scratch_operands = 1 : i64, tpu.core_type = #tpu.core_type<tc>, window_params = [{transform_indices = @transform_0, window_bounds = array<i64: 1, 4, 8, 192>}, {pipeline_mode = #tpu.pipeline_mode<synchronous>, transform_indices = @transform_1, window_bounds = array<i64: 3, 192, 128>}, {pipeline_mode = #tpu.pipeline_mode<synchronous>, transform_indices = @transform_2, window_bounds = array<i64: 1, 128>}, {pipeline_mode = #tpu.pipeline_mode<synchronous>, transform_indices = @transform_3, window_bounds = array<i64: 1, 128>}, {transform_indices = @transform_4, window_bounds = array<i64: 1, 1, 4, 128>}]} {
    %c0 = arith.constant 0 : index
    %c0_0 = arith.constant 0 : index
    %c0_1 = arith.constant 0 : index
    %c0_2 = arith.constant 0 : index
    %0 = vector.load %arg1[%c0, %c0_0, %c0_1, %c0_2] : memref<1x4x8x192xf32, #tpu.memory_space<vmem>>, vector<1x4x8x192xf32>
    %1 = vector.shape_cast %0 : vector<1x4x8x192xf32> to vector<4x8x192xf32>
    %2 = arith.truncf %1 : vector<4x8x192xf32> to vector<4x8x192xbf16>
    %cst = arith.constant 0.000000e+00 : f32
    %3 = vector.broadcast %cst : f32 to vector<16x128xf32>
    %4 = vector.extract_strided_slice %2 {offsets = [0, 0, 0], sizes = [2, 8, 192], strides = [1, 1, 1]} : vector<4x8x192xbf16> to vector<2x8x192xbf16>
    %5 = vector.shape_cast %4 : vector<2x8x192xbf16> to vector<16x192xbf16>
    %c0_3 = arith.constant 0 : index
    %c0_4 = arith.constant 0 : index
    %c0_5 = arith.constant 0 : index
    %6 = vector.load %arg2[%c0_3, %c0_4, %c0_5] : memref<3x192x128xbf16, #tpu.memory_space<vmem>>, vector<1x192x128xbf16>
    %7 = vector.shape_cast %6 : vector<1x192x128xbf16> to vector<192x128xbf16>
    %cst_6 = arith.constant dense<0.000000e+00> : vector<16x128xf32>
    %8 = tpu.matmul %5, %7, %cst_6 {dimension_numbers = #tpu.dot_dimension_numbers<[1], [0], [0], [1], [0, 0, 1, 1], [], []>} : vector<16x192xbf16>, vector<192x128xbf16>, vector<16x128xf32> -> vector<16x128xf32>
    %9 = arith.addf %3, %8 : vector<16x128xf32>
    %10 = vector.extract_strided_slice %2 {offsets = [1, 0, 0], sizes = [2, 8, 192], strides = [1, 1, 1]} : vector<4x8x192xbf16> to vector<2x8x192xbf16>
    %11 = vector.shape_cast %10 : vector<2x8x192xbf16> to vector<16x192xbf16>
    %c1 = arith.constant 1 : index
    %c0_7 = arith.constant 0 : index
    %c0_8 = arith.constant 0 : index
    %12 = vector.load %arg2[%c1, %c0_7, %c0_8] : memref<3x192x128xbf16, #tpu.memory_space<vmem>>, vector<1x192x128xbf16>
    %13 = vector.shape_cast %12 : vector<1x192x128xbf16> to vector<192x128xbf16>
    %cst_9 = arith.constant dense<0.000000e+00> : vector<16x128xf32>
    %14 = tpu.matmul %11, %13, %cst_9 {dimension_numbers = #tpu.dot_dimension_numbers<[1], [0], [0], [1], [0, 0, 1, 1], [], []>} : vector<16x192xbf16>, vector<192x128xbf16>, vector<16x128xf32> -> vector<16x128xf32>
    %15 = arith.addf %9, %14 : vector<16x128xf32>
    %16 = vector.extract_strided_slice %2 {offsets = [2, 0, 0], sizes = [2, 8, 192], strides = [1, 1, 1]} : vector<4x8x192xbf16> to vector<2x8x192xbf16>
    %17 = vector.shape_cast %16 : vector<2x8x192xbf16> to vector<16x192xbf16>
    %c2 = arith.constant 2 : index
    %c0_10 = arith.constant 0 : index
    %c0_11 = arith.constant 0 : index
    %18 = vector.load %arg2[%c2, %c0_10, %c0_11] : memref<3x192x128xbf16, #tpu.memory_space<vmem>>, vector<1x192x128xbf16>
    %19 = vector.shape_cast %18 : vector<1x192x128xbf16> to vector<192x128xbf16>
    %cst_12 = arith.constant dense<0.000000e+00> : vector<16x128xf32>
    %20 = tpu.matmul %17, %19, %cst_12 {dimension_numbers = #tpu.dot_dimension_numbers<[1], [0], [0], [1], [0, 0, 1, 1], [], []>} : vector<16x192xbf16>, vector<192x128xbf16>, vector<16x128xf32> -> vector<16x128xf32>
    %21 = arith.addf %15, %20 : vector<16x128xf32>
    %c0_13 = arith.constant 0 : index
    %c0_14 = arith.constant 0 : index
    %22 = vector.load %arg3[%c0_13, %c0_14] : memref<1x128xf32, #tpu.memory_space<vmem>>, vector<1x128xf32>
    %23 = vector.broadcast %22 : vector<1x128xf32> to vector<16x128xf32>
    %24 = arith.mulf %21, %23 : vector<16x128xf32>
    %c0_15 = arith.constant 0 : index
    %c0_16 = arith.constant 0 : index
    %25 = vector.load %arg4[%c0_15, %c0_16] : memref<1x128xf32, #tpu.memory_space<vmem>>, vector<1x128xf32>
    %26 = vector.broadcast %25 : vector<1x128xf32> to vector<16x128xf32>
    %27 = arith.addf %24, %26 : vector<16x128xf32>
    %cst_17 = arith.constant 0.000000e+00 : f32
    %28 = vector.broadcast %cst_17 : f32 to vector<16x128xf32>
    %29 = arith.maximumf %27, %28 : vector<16x128xf32>
    %30 = vector.shape_cast %29 : vector<16x128xf32> to vector<2x8x128xf32>
    %31 = vector.shape_cast %30 : vector<2x8x128xf32> to vector<1x2x8x128xf32>
    %32 = vector.extract_strided_slice %31 {offsets = [0, 0, 0, 0], sizes = [1, 1, 8, 128], strides = [1, 1, 1, 1]} : vector<1x2x8x128xf32> to vector<1x1x8x128xf32>
    %33 = vector.shape_cast %32 : vector<1x1x8x128xf32> to vector<1x8x128xf32>
    %34 = vector.extract_strided_slice %31 {offsets = [0, 1, 0, 0], sizes = [1, 1, 8, 128], strides = [1, 1, 1, 1]} : vector<1x2x8x128xf32> to vector<1x1x8x128xf32>
    %35 = vector.shape_cast %34 : vector<1x1x8x128xf32> to vector<1x8x128xf32>
    %36 = arith.maximumf %33, %35 : vector<1x8x128xf32>
    %c0_18 = arith.constant 0 : index
    %c0_19 = arith.constant 0 : index
    %c0_20 = arith.constant 0 : index
    %37 = vector.load %arg6[%c0_18, %c0_19, %c0_20] : memref<1x8x128xf32, #tpu.memory_space<vmem>>, vector<1x8x128xf32>
    tpu.vector_store %arg6[%c0_18, %c0_19, %c0_20], %36 {strides = array<i32>} : memref<1x8x128xf32, #tpu.memory_space<vmem>>, vector<1x8x128xf32>,
    %c0_21 = arith.constant 0 : index
    %c0_22 = arith.constant 0 : index
    %c0_23 = arith.constant 0 : index
    %38 = tpu.strided_load %arg6[%c0_21, %c0_22, %c0_23] {strides = array<i32: 1, 2, 1>} : memref<1x8x128xf32, #tpu.memory_space<vmem>>, vector<1x4x128xf32>
    %c0_24 = arith.constant 0 : index
    %c1_25 = arith.constant 1 : index
    %c0_26 = arith.constant 0 : index
    %39 = tpu.strided_load %arg6[%c0_24, %c1_25, %c0_26] {strides = array<i32: 1, 2, 1>} : memref<1x8x128xf32, #tpu.memory_space<vmem>>, vector<1x4x128xf32>
    %40 = arith.maximumf %38, %39 : vector<1x4x128xf32>
    %c0_27 = arith.constant 0 : index
    %c0_28 = arith.constant 0 : index
    %c0_29 = arith.constant 0 : index
    %c0_30 = arith.constant 0 : index
    %41 = vector.load %arg5[%c0_27, %c0_28, %c0_29, %c0_30] : memref<1x1x4x128xf32, #tpu.memory_space<vmem>>, vector<1x1x4x128xf32>
    %42 = vector.shape_cast %41 : vector<1x1x4x128xf32> to vector<1x4x128xf32>
    %43 = vector.shape_cast %40 : vector<1x4x128xf32> to vector<1x1x4x128xf32>
    tpu.vector_store %arg5[%c0_27, %c0_28, %c0_29, %c0_30], %43 {strides = array<i32>} : memref<1x1x4x128xf32, #tpu.memory_space<vmem>>, vector<1x1x4x128xf32>,
    return
  }
  func.func @transform_0(%arg0: i32) -> (i32, i32, i32, i32) {
    %c0_i32 = arith.constant 0 : i32
    %c0_i32_0 = arith.constant 0 : i32
    %c0_i32_1 = arith.constant 0 : i32
    %c0_i32_2 = arith.constant 0 : i32
    return %arg0, %c0_i32, %c0_i32_0, %c0_i32_1 : i32, i32, i32, i32
  }
  func.func @transform_1(%arg0: i32) -> (i32, i32, i32) {
    %c0_i32 = arith.constant 0 : i32
    %c0_i32_0 = arith.constant 0 : i32
    %c0_i32_1 = arith.constant 0 : i32
    %c0_i32_2 = arith.constant 0 : i32
    return %c0_i32, %c0_i32_0, %c0_i32_1 : i32, i32, i32
  }
  func.func @transform_2(%arg0: i32) -> (i32, i32) {
    %c0_i32 = arith.constant 0 : i32
    %c0_i32_0 = arith.constant 0 : i32
    %c0_i32_1 = arith.constant 0 : i32
    return %c0_i32, %c0_i32_0 : i32, i32
  }
  func.func @transform_3(%arg0: i32) -> (i32, i32) {
    %c0_i32 = arith.constant 0 : i32
    %c0_i32_0 = arith.constant 0 : i32
    %c0_i32_1 = arith.constant 0 : i32
    return %c0_i32, %c0_i32_0 : i32, i32
  }
  func.func @transform_4(%arg0: i32) -> (i32, i32, i32, i32) {
    %c0_i32 = arith.constant 0 : i32
    %c0_i32_0 = arith.constant 0 : i32
    %c0_i32_1 = arith.constant 0 : i32
    %c0_i32_2 = arith.constant 0 : i32
    return %arg0, %c0_i32, %c0_i32_0, %c0_i32_1 : i32, i32, i32, i32
  }
}

module attributes {stable_mosaic.version = 11 : i64} {
  func.func @_conv_group_kernel(%arg0: i32, %arg1: memref<1x3x4x384xf32, #tpu.memory_space<vmem>>, %arg2: memref<3x384x256xbf16, #tpu.memory_space<vmem>>, %arg3: memref<1x256xf32, #tpu.memory_space<vmem>>, %arg4: memref<1x256xf32, #tpu.memory_space<vmem>>, %arg5: memref<1x1x4x256xf32, #tpu.memory_space<vmem>>, %arg6: memref<1x4x256xf32, #tpu.memory_space<vmem>>) attributes {dimension_semantics = [#tpu.dimension_semantics<parallel>], iteration_bounds = array<i64: 4>, scalar_prefetch = 0 : i64, scratch_operands = 1 : i64, tpu.core_type = #tpu.core_type<tc>, window_params = [{transform_indices = @transform_0, window_bounds = array<i64: 1, 3, 4, 384>}, {pipeline_mode = #tpu.pipeline_mode<synchronous>, transform_indices = @transform_1, window_bounds = array<i64: 3, 384, 256>}, {pipeline_mode = #tpu.pipeline_mode<synchronous>, transform_indices = @transform_2, window_bounds = array<i64: 1, 256>}, {pipeline_mode = #tpu.pipeline_mode<synchronous>, transform_indices = @transform_3, window_bounds = array<i64: 1, 256>}, {transform_indices = @transform_4, window_bounds = array<i64: 1, 1, 4, 256>}]} {
    %c0 = arith.constant 0 : index
    %c0_0 = arith.constant 0 : index
    %c0_1 = arith.constant 0 : index
    %c0_2 = arith.constant 0 : index
    %0 = vector.load %arg1[%c0, %c0_0, %c0_1, %c0_2] : memref<1x3x4x384xf32, #tpu.memory_space<vmem>>, vector<1x3x4x384xf32>
    %1 = vector.shape_cast %0 : vector<1x3x4x384xf32> to vector<3x4x384xf32>
    %2 = arith.truncf %1 : vector<3x4x384xf32> to vector<3x4x384xbf16>
    %cst = arith.constant 0.000000e+00 : f32
    %3 = vector.broadcast %cst : f32 to vector<4x256xf32>
    %4 = vector.extract_strided_slice %2 {offsets = [0, 0, 0], sizes = [1, 4, 384], strides = [1, 1, 1]} : vector<3x4x384xbf16> to vector<1x4x384xbf16>
    %5 = vector.shape_cast %4 : vector<1x4x384xbf16> to vector<4x384xbf16>
    %c0_3 = arith.constant 0 : index
    %c0_4 = arith.constant 0 : index
    %c0_5 = arith.constant 0 : index
    %6 = vector.load %arg2[%c0_3, %c0_4, %c0_5] : memref<3x384x256xbf16, #tpu.memory_space<vmem>>, vector<1x384x256xbf16>
    %7 = vector.shape_cast %6 : vector<1x384x256xbf16> to vector<384x256xbf16>
    %cst_6 = arith.constant dense<0.000000e+00> : vector<4x256xf32>
    %8 = tpu.matmul %5, %7, %cst_6 {dimension_numbers = #tpu.dot_dimension_numbers<[1], [0], [0], [1], [0, 0, 1, 1], [], []>} : vector<4x384xbf16>, vector<384x256xbf16>, vector<4x256xf32> -> vector<4x256xf32>
    %9 = arith.addf %3, %8 : vector<4x256xf32>
    %10 = vector.extract_strided_slice %2 {offsets = [1, 0, 0], sizes = [1, 4, 384], strides = [1, 1, 1]} : vector<3x4x384xbf16> to vector<1x4x384xbf16>
    %11 = vector.shape_cast %10 : vector<1x4x384xbf16> to vector<4x384xbf16>
    %c1 = arith.constant 1 : index
    %c0_7 = arith.constant 0 : index
    %c0_8 = arith.constant 0 : index
    %12 = vector.load %arg2[%c1, %c0_7, %c0_8] : memref<3x384x256xbf16, #tpu.memory_space<vmem>>, vector<1x384x256xbf16>
    %13 = vector.shape_cast %12 : vector<1x384x256xbf16> to vector<384x256xbf16>
    %cst_9 = arith.constant dense<0.000000e+00> : vector<4x256xf32>
    %14 = tpu.matmul %11, %13, %cst_9 {dimension_numbers = #tpu.dot_dimension_numbers<[1], [0], [0], [1], [0, 0, 1, 1], [], []>} : vector<4x384xbf16>, vector<384x256xbf16>, vector<4x256xf32> -> vector<4x256xf32>
    %15 = arith.addf %9, %14 : vector<4x256xf32>
    %16 = vector.extract_strided_slice %2 {offsets = [2, 0, 0], sizes = [1, 4, 384], strides = [1, 1, 1]} : vector<3x4x384xbf16> to vector<1x4x384xbf16>
    %17 = vector.shape_cast %16 : vector<1x4x384xbf16> to vector<4x384xbf16>
    %c2 = arith.constant 2 : index
    %c0_10 = arith.constant 0 : index
    %c0_11 = arith.constant 0 : index
    %18 = vector.load %arg2[%c2, %c0_10, %c0_11] : memref<3x384x256xbf16, #tpu.memory_space<vmem>>, vector<1x384x256xbf16>
    %19 = vector.shape_cast %18 : vector<1x384x256xbf16> to vector<384x256xbf16>
    %cst_12 = arith.constant dense<0.000000e+00> : vector<4x256xf32>
    %20 = tpu.matmul %17, %19, %cst_12 {dimension_numbers = #tpu.dot_dimension_numbers<[1], [0], [0], [1], [0, 0, 1, 1], [], []>} : vector<4x384xbf16>, vector<384x256xbf16>, vector<4x256xf32> -> vector<4x256xf32>
    %21 = arith.addf %15, %20 : vector<4x256xf32>
    %c0_13 = arith.constant 0 : index
    %c0_14 = arith.constant 0 : index
    %22 = vector.load %arg3[%c0_13, %c0_14] : memref<1x256xf32, #tpu.memory_space<vmem>>, vector<1x256xf32>
    %23 = vector.broadcast %22 : vector<1x256xf32> to vector<4x256xf32>
    %24 = arith.mulf %21, %23 : vector<4x256xf32>
    %c0_15 = arith.constant 0 : index
    %c0_16 = arith.constant 0 : index
    %25 = vector.load %arg4[%c0_15, %c0_16] : memref<1x256xf32, #tpu.memory_space<vmem>>, vector<1x256xf32>
    %26 = vector.broadcast %25 : vector<1x256xf32> to vector<4x256xf32>
    %27 = arith.addf %24, %26 : vector<4x256xf32>
    %cst_17 = arith.constant 0.000000e+00 : f32
    %28 = vector.broadcast %cst_17 : f32 to vector<4x256xf32>
    %29 = arith.maximumf %27, %28 : vector<4x256xf32>
    %30 = vector.shape_cast %29 : vector<4x256xf32> to vector<1x4x256xf32>
    %c0_18 = arith.constant 0 : index
    %c0_19 = arith.constant 0 : index
    %c0_20 = arith.constant 0 : index
    %c0_21 = arith.constant 0 : index
    %31 = vector.load %arg5[%c0_18, %c0_19, %c0_20, %c0_21] : memref<1x1x4x256xf32, #tpu.memory_space<vmem>>, vector<1x1x4x256xf32>
    %32 = vector.shape_cast %31 : vector<1x1x4x256xf32> to vector<1x4x256xf32>
    %33 = vector.shape_cast %30 : vector<1x4x256xf32> to vector<1x1x4x256xf32>
    tpu.vector_store %arg5[%c0_18, %c0_19, %c0_20, %c0_21], %33 {strides = array<i32>} : memref<1x1x4x256xf32, #tpu.memory_space<vmem>>, vector<1x1x4x256xf32>,
    return
  }
  func.func @transform_0(%arg0: i32) -> (i32, i32, i32, i32) {
    %c0_i32 = arith.constant 0 : i32
    %c0_i32_0 = arith.constant 0 : i32
    %c0_i32_1 = arith.constant 0 : i32
    %c0_i32_2 = arith.constant 0 : i32
    return %arg0, %c0_i32, %c0_i32_0, %c0_i32_1 : i32, i32, i32, i32
  }
  func.func @transform_1(%arg0: i32) -> (i32, i32, i32) {
    %c0_i32 = arith.constant 0 : i32
    %c0_i32_0 = arith.constant 0 : i32
    %c0_i32_1 = arith.constant 0 : i32
    %c0_i32_2 = arith.constant 0 : i32
    return %c0_i32, %c0_i32_0, %c0_i32_1 : i32, i32, i32
  }
  func.func @transform_2(%arg0: i32) -> (i32, i32) {
    %c0_i32 = arith.constant 0 : i32
    %c0_i32_0 = arith.constant 0 : i32
    %c0_i32_1 = arith.constant 0 : i32
    return %c0_i32, %c0_i32_0 : i32, i32
  }
  func.func @transform_3(%arg0: i32) -> (i32, i32) {
    %c0_i32 = arith.constant 0 : i32
    %c0_i32_0 = arith.constant 0 : i32
    %c0_i32_1 = arith.constant 0 : i32
    return %c0_i32, %c0_i32_0 : i32, i32
  }
  func.func @transform_4(%arg0: i32) -> (i32, i32, i32, i32) {
    %c0_i32 = arith.constant 0 : i32
    %c0_i32_0 = arith.constant 0 : i32
    %c0_i32_1 = arith.constant 0 : i32
    %c0_i32_2 = arith.constant 0 : i32
    return %arg0, %c0_i32, %c0_i32_0, %c0_i32_1 : i32, i32, i32, i32
  }
}

</mosaic_0001>

<llo_original>
// kernel: imagenet_large_frames_forward.5
$region0: #{imagenet_large_frames_forward.5}
  #allocation0 [shape = 'u32[]', space=smem, size = 0x4, offset = 0x4, fixed_abs, tag = 'smem constant byte address 0x4 - core index']
  #allocation1 [shape = 'u32[144,128]{1,0:T(1,128)}', space=vmem, size = 0x12000, scoped, tag = 'internal scratch']
  #allocation2 [shape = 'f32[14,16,16]{2,1,0:T(8,128)}', space=vmem, size = 0x1c000, scoped, tag = 'scratch operand']
  %s0 = inlined_call_operand.vmem [shape: f32[4,32,16,3], index: 0, kind: input, shape index: {}]
  %s1 = inlined_call_operand.vmem [shape: bf16[5,3,16], index: 1, kind: input, shape index: {}]
  %s2 = inlined_call_operand.vmem [shape: f32[1,16], index: 2, kind: input, shape index: {}]
  %s3 = inlined_call_operand.vmem [shape: f32[1,16], index: 3, kind: input, shape index: {}]
  %s4 = inlined_call_operand.vmem [shape: f32[4,14,16,16], index: 4, kind: output, shape index: {}]
  %s5 = sld [smem:[#allocation0]]
  $region49: #{imagenet_large_frames_forward.5} parent=0
    _
  %s7 = ssub.s32 1, %s5
  %s8 = scalar_select 0, %s7, %s5
  loop: start=0, step=1, limit=6
  $region2: #{imagenet_large_frames_forward.5} parent=0 // loop_pre_header
    _
  $region3: #{imagenet_large_frames_forward.5} parent=0 // loop_header
    %s10 = sphi 0, %s14
    %p11 = scmp.ge.s32.totalorder %s10, 6
    %s20 = sphi 0, %s22
    %s23 = sphi 0, %s20
    %s24 = sphi 0, %s23
    %s40 = sphi 0, %s24
    %s44 = sphi 0, %s44
    %s46 = sphi 0, %s44
    %s47 = sphi 0, %s46
    %s61 = sphi 0, %s47
    %s65 = sphi 0, %s65
    %s67 = sphi 0, %s65
    %s68 = sphi 0, %s67
    %s82 = sphi 0, %s68
    %s86 = sphi 0, %s86
    %s88 = sphi 0, %s86
    %s89 = sphi 0, %s88
    %s103 = sphi 0, %s89
    %s109 = sphi 0, %s111
    %s112 = sphi 0, %s109
    %s113 = sphi 0, %s112
    %s129 = sphi 0, %s113
  $region4: #{imagenet_large_frames_forward.5} parent=0 // loop_header_branch
    %13 = sbr.rel (%p11) target = $region8
  $region5: #{imagenet_large_frames_forward.5} parent=0 // loop_body
    %s15 = ssub.s32 %s10, 1
    %s16 = ssub.s32 %s10, 2
    %s17 = sadd.s32 %s10, 1
    %s18 = ssub.s32 %s10, %s17
    %p19 = scmp.eq.s32.totalorder %s18, 0
    %s21 = sadd.s32 %s20, 1
    %s22 = scalar_select %p19, %s20, %s21
    %p25 = pneg %p19
    %p26 = scmp.eq.s32.totalorder %s10, 3
    %p27 = por %p25, %p26
    %p28 = scmp.ne.s32.totalorder %s20, %s23
    %p29 = scmp.eq.s32.totalorder %s10, 0
    %p30 = por %p28, %p29
    %p31 = scmp.ne.s32.totalorder %s20, %s23
    %p32 = scmp.eq.s32.totalorder %s15, 3
    %p33 = por %p31, %p32
    %p34 = scmp.ne.s32.totalorder %s23, %s24
    %p35 = scmp.eq.s32.totalorder %s15, 0
    %p36 = por %p34, %p35
    %p37 = scmp.ne.s32.totalorder %s23, %s24
    %p38 = scmp.eq.s32.totalorder %s16, 3
    %p39 = por %p37, %p38
    %p41 = scmp.ne.s32.totalorder %s24, %s40
    %p42 = scmp.eq.s32.totalorder %s16, 0
    %p43 = por %p41, %p42
    %s45 = sadd.s32 %s44, 1
    %p48 = scmp.eq.s32.totalorder %s10, 3
    %p49 = scmp.ne.s32.totalorder %s44, %s46
    %p50 = scmp.eq.s32.totalorder %s10, 0
    %p51 = por %p49, %p50
    %p52 = scmp.ne.s32.totalorder %s44, %s46
    %p53 = scmp.eq.s32.totalorder %s15, 3
    %p54 = por %p52, %p53
    %p55 = scmp.ne.s32.totalorder %s46, %s47
    %p56 = scmp.eq.s32.totalorder %s15, 0
    %p57 = por %p55, %p56
    %p58 = scmp.ne.s32.totalorder %s46, %s47
    %p59 = scmp.eq.s32.totalorder %s16, 3
    %p60 = por %p58, %p59
    %p62 = scmp.ne.s32.totalorder %s47, %s61
    %p63 = scmp.eq.s32.totalorder %s16, 0
    %p64 = por %p62, %p63
    %s66 = sadd.s32 %s65, 1
    %p69 = scmp.eq.s32.totalorder %s10, 3
    %p70 = scmp.ne.s32.totalorder %s65, %s67
    %p71 = scmp.eq.s32.totalorder %s10, 0
    %p72 = por %p70, %p71
    %p73 = scmp.ne.s32.totalorder %s65, %s67
    %p74 = scmp.eq.s32.totalorder %s15, 3
    %p75 = por %p73, %p74
    %p76 = scmp.ne.s32.totalorder %s67, %s68
    %p77 = scmp.eq.s32.totalorder %s15, 0
    %p78 = por %p76, %p77
    %p79 = scmp.ne.s32.totalorder %s67, %s68
    %p80 = scmp.eq.s32.totalorder %s16, 3
    %p81 = por %p79, %p80
    %p83 = scmp.ne.s32.totalorder %s68, %s82
    %p84 = scmp.eq.s32.totalorder %s16, 0
    %p85 = por %p83, %p84
    %s87 = sadd.s32 %s86, 1
    %p90 = scmp.eq.s32.totalorder %s10, 3
    %p91 = scmp.ne.s32.totalorder %s86, %s88
    %p92 = scmp.eq.s32.totalorder %s10, 0
    %p93 = por %p91, %p92
    %p94 = scmp.ne.s32.totalorder %s86, %s88
    %p95 = scmp.eq.s32.totalorder %s15, 3
    %p96 = por %p94, %p95
    %p97 = scmp.ne.s32.totalorder %s88, %s89
    %p98 = scmp.eq.s32.totalorder %s15, 0
    %p99 = por %p97, %p98
    %p100 = scmp.ne.s32.totalorder %s88, %s89
    %p101 = scmp.eq.s32.totalorder %s16, 3
    %p102 = por %p100, %p101
    %p104 = scmp.ne.s32.totalorder %s89, %s103
    %p105 = scmp.eq.s32.totalorder %s16, 0
    %p106 = por %p104, %p105
    %s107 = ssub.s32 %s10, %s17
    %p108 = scmp.eq.s32.totalorder %s107, 0
    %s110 = sadd.s32 %s109, 1
    %s111 = scalar_select %p108, %s109, %s110
    %p114 = pneg %p108
    %p115 = scmp.eq.s32.totalorder %s10, 3
    %p116 = por %p114, %p115
    %p117 = scmp.ne.s32.totalorder %s109, %s112
    %p118 = scmp.eq.s32.totalorder %s10, 0
    %p119 = por %p117, %p118
    %p120 = scmp.ne.s32.totalorder %s109, %s112
    %p121 = scmp.eq.s32.totalorder %s15, 3
    %p122 = por %p120, %p121
    %p123 = scmp.ne.s32.totalorder %s112, %s113
    %p124 = scmp.eq.s32.totalorder %s15, 0
    %p125 = por %p123, %p124
    %p126 = scmp.ne.s32.totalorder %s112, %s113
    %p127 = scmp.eq.s32.totalorder %s16, 3
    %p128 = por %p126, %p127
    %p130 = scmp.ne.s32.totalorder %s113, %s129
    %p131 = scmp.eq.s32.totalorder %s16, 0
    %p132 = por %p130, %p131
    %p133 = scmp.le.s32.totalorder 1, %s10
    %p134 = scmp.lt.s32.totalorder %s10, 5
    %p135 = pnand %p133, %p134
    %p136 = pneg %p135
    // Predicated region
    $region9: #{imagenet_large_frames_forward.5} parent=5 // pred_check
      _
    $region10: #{imagenet_large_frames_forward.5} parent=5 // pred_check_branch
      %138 = sbr.rel (%p135) target = $region12
    $region11: #{imagenet_large_frames_forward.5} parent=5 // pred_region
      %s139 = ssub.s32 %s10, 1
      // Predicated region
      $region13: #{imagenet_large_frames_forward.5} parent=11 // pred_check
        %p140 = pneg %p57
      $region14: #{imagenet_large_frames_forward.5} parent=11 // pred_check_branch
        %142 = sbr.rel (%p140) target = $region16
      $region15: #{imagenet_large_frames_forward.5} parent=11 // pred_region
        _
      $region16: #{imagenet_large_frames_forward.5} parent=11 // pred_fallthru
        _
      // Predicated region
      $region17: #{imagenet_large_frames_forward.5} parent=11 // pred_check
        %p143 = pneg %p78
      $region18: #{imagenet_large_frames_forward.5} parent=11 // pred_check_branch
        %145 = sbr.rel (%p143) target = $region20
      $region19: #{imagenet_large_frames_forward.5} parent=11 // pred_region
        _
      $region20: #{imagenet_large_frames_forward.5} parent=11 // pred_fallthru
        _
      // Predicated region
      $region21: #{imagenet_large_frames_forward.5} parent=11 // pred_check
        %p146 = pneg %p99
      $region22: #{imagenet_large_frames_forward.5} parent=11 // pred_check_branch
        %148 = sbr.rel (%p146) target = $region24
      $region23: #{imagenet_large_frames_forward.5} parent=11 // pred_region
        _
      $region24: #{imagenet_large_frames_forward.5} parent=11 // pred_fallthru
        _
    $region12: #{imagenet_large_frames_forward.5} parent=5 // pred_fallthru
      _
    %p149 = scmp.lt.s32.totalorder %s10, 4
    // Predicated region
    $region25: #{imagenet_large_frames_forward.5} parent=5 // pred_check
      %p150 = pneg %p149
    $region26: #{imagenet_large_frames_forward.5} parent=5 // pred_check_branch
      %152 = sbr.rel (%p150) target = $region28
    $region27: #{imagenet_large_frames_forward.5} parent=5 // pred_region
      // Predicated region
      $region29: #{imagenet_large_frames_forward.5} parent=27 // pred_check
        %p153 = pneg %p30
      $region30: #{imagenet_large_frames_forward.5} parent=27 // pred_check_branch
        %155 = sbr.rel (%p153) target = $region32
      $region31: #{imagenet_large_frames_forward.5} parent=27 // pred_region
        %p156 = scmp.lt.s32.totalorder %s10, 3
        %s157 = scalar_select %p156, %s10, 3
        %s158 = smul.addr %s157, 64
        %s159 = smul.addr %s158, 8
        %s160 = scalar_lea.vmem %s0, %s159
      $region32: #{imagenet_large_frames_forward.5} parent=27 // pred_fallthru
        _
    $region28: #{imagenet_large_frames_forward.5} parent=5 // pred_fallthru
      _
    %p161 = scmp.le.s32.totalorder 1, %s10
    %p162 = scmp.lt.s32.totalorder %s10, 5
    %p163 = pnand %p161, %p162
    %p164 = pneg %p163
    // Predicated region
    $region33: #{imagenet_large_frames_forward.5} parent=5 // pred_check
      _
    $region34: #{imagenet_large_frames_forward.5} parent=5 // pred_check_branch
      %166 = sbr.rel (%p163) target = $region36
    $region35: #{imagenet_large_frames_forward.5} parent=5 // pred_region
      %s167 = ssub.s32 %s10, 1
      %p168 = scmp.lt.s32.totalorder %s15, 3
      %s169 = scalar_select %p168, %s15, 3
      %s170 = smul.addr %s169, 64
      %s171 = smul.addr %s170, 8
      %s172 = scalar_lea.vmem %s0, %s171
      %p173 = pneg %p36
      %p174 = pneg %p33
      %p175 = pneg %p57
      %p176 = pneg %p54
      %p177 = pneg %p78
      %p178 = pneg %p75
      %p179 = pneg %p99
      %p180 = pneg %p96
      %p181 = pneg %p125
      %p182 = pneg %p122
      %p183 = scmp.lt.s32.totalorder %s15, 3
      %s184 = scalar_select %p183, %s15, 3
      %s185 = smul.addr %s184, 28
      %s186 = smul.addr %s185, 8
      %s187 = scalar_lea.vmem %s4, %s186
      %p188 = scmp.lt.s32.totalorder %s15, 3
      %s189 = scalar_select %p188, %s15, 3
      %s190 = smul.addr %s189, 64
      %s191 = smul.addr %s190, 8
      %s192 = scalar_lea.vmem %s0, %s191
      %p193 = scmp.lt.s32.totalorder %s15, 3
      %s194 = scalar_select %p193, %s15, 3
      %s195 = smul.addr %s194, 28
      %s196 = smul.addr %s195, 8
      %s197 = scalar_lea.vmem %s4, %s196
      %v199 = vld [vmem:[%s192] sm:$0xff]
      %v200 = vld [vmem:[%s192 + $0x8] sm:$0xff]
      %v201 = vld [vmem:[%s192 + $0x10] sm:$0xff]
      %v202 = vld [vmem:[%s192 + $0x18] sm:$0xff]
      %v203 = vld [vmem:[%s192 + $0x20] sm:$0xff]
      %v204 = vld [vmem:[%s192 + $0x28] sm:$0xff]
      %v205 = vld [vmem:[%s192 + $0x30] sm:$0xff]
      %v206 = vld [vmem:[%s192 + $0x38] sm:$0xff]
      %v207 = vld [vmem:[%s192 + $0x40] sm:$0xff]
      %v208 = vld [vmem:[%s192 + $0x48] sm:$0xff]
      %v209 = vld [vmem:[%s192 + $0x50] sm:$0xff]
      %v210 = vld [vmem:[%s192 + $0x58] sm:$0xff]
      %v211 = vld [vmem:[%s192 + $0x60] sm:$0xff]
      %v212 = vld [vmem:[%s192 + $0x68] sm:$0xff]
      %v213 = vld [vmem:[%s192 + $0x70] sm:$0xff]
      %v214 = vld [vmem:[%s192 + $0x78] sm:$0xff]
      %v215 = vld [vmem:[%s192 + $0x80] sm:$0xff]
      %v216 = vld [vmem:[%s192 + $0x88] sm:$0xff]
      %v217 = vld [vmem:[%s192 + $0x90] sm:$0xff]
      %v218 = vld [vmem:[%s192 + $0x98] sm:$0xff]
      %v219 = vld [vmem:[%s192 + $0xa0] sm:$0xff]
      %v220 = vld [vmem:[%s192 + $0xa8] sm:$0xff]
      %v221 = vld [vmem:[%s192 + $0xb0] sm:$0xff]
      %v222 = vld [vmem:[%s192 + $0xb8] sm:$0xff]
      %v223 = vld [vmem:[%s192 + $0xc0] sm:$0xff]
      %v224 = vld [vmem:[%s192 + $0xc8] sm:$0xff]
      %v225 = vld [vmem:[%s192 + $0xd0] sm:$0xff]
      %v226 = vld [vmem:[%s192 + $0xd8] sm:$0xff]
      %v227 = vld [vmem:[%s192 + $0xe0] sm:$0xff]
      %v228 = vld [vmem:[%s192 + $0xe8] sm:$0xff]
      %v229 = vld [vmem:[%s192 + $0xf0] sm:$0xff]
      %v230 = vld [vmem:[%s192 + $0xf8] sm:$0xff]
      %v231 = vld [vmem:[%s192 + $0x100] sm:$0xff]
      %v232 = vld [vmem:[%s192 + $0x108] sm:$0xff]
      %v233 = vld [vmem:[%s192 + $0x110] sm:$0xff]
      %v234 = vld [vmem:[%s192 + $0x118] sm:$0xff]
      %v235 = vld [vmem:[%s192 + $0x120] sm:$0xff]
      %v236 = vld [vmem:[%s192 + $0x128] sm:$0xff]
      %v237 = vld [vmem:[%s192 + $0x130] sm:$0xff]
      %v238 = vld [vmem:[%s192 + $0x138] sm:$0xff]
      %v239 = vld [vmem:[%s192 + $0x140] sm:$0xff]
      %v240 = vld [vmem:[%s192 + $0x148] sm:$0xff]
      %v241 = vld [vmem:[%s192 + $0x150] sm:$0xff]
      %v242 = vld [vmem:[%s192 + $0x158] sm:$0xff]
      %v243 = vld [vmem:[%s192 + $0x160] sm:$0xff]
      %v244 = vld [vmem:[%s192 + $0x168] sm:$0xff]
      %v245 = vld [vmem:[%s192 + $0x170] sm:$0xff]
      %v246 = vld [vmem:[%s192 + $0x178] sm:$0xff]
      %v247 = vld [vmem:[%s192 + $0x180] sm:$0xff]
      %v248 = vld [vmem:[%s192 + $0x188] sm:$0xff]
      %v249 = vld [vmem:[%s192 + $0x190] sm:$0xff]
      %v250 = vld [vmem:[%s192 + $0x198] sm:$0xff]
      %v251 = vld [vmem:[%s192 + $0x1a0] sm:$0xff]
      %v252 = vld [vmem:[%s192 + $0x1a8] sm:$0xff]
      %v253 = vld [vmem:[%s192 + $0x1b0] sm:$0xff]
      %v254 = vld [vmem:[%s192 + $0x1b8] sm:$0xff]
      %v255 = vld [vmem:[%s192 + $0x1c0] sm:$0xff]
      %v256 = vld [vmem:[%s192 + $0x1c8] sm:$0xff]
      %v257 = vld [vmem:[%s192 + $0x1d0] sm:$0xff]
      %v258 = vld [vmem:[%s192 + $0x1d8] sm:$0xff]
      %v259 = vld [vmem:[%s192 + $0x1e0] sm:$0xff]
      %v260 = vld [vmem:[%s192 + $0x1e8] sm:$0xff]
      %v261 = vld [vmem:[%s192 + $0x1f0] sm:$0xff]
      %v262 = vld [vmem:[%s192 + $0x1f8] sm:$0xff]
      %v263 = vpack.c.bf16 %v200, %v199
      %v264 = vpack.c.bf16 %v202, %v201
      %v265 = vpack.c.bf16 %v204, %v203
      %v266 = vpack.c.bf16 %v206, %v205
      %v267 = vpack.c.bf16 %v208, %v207
      %v268 = vpack.c.bf16 %v210, %v209
      %v269 = vpack.c.bf16 %v212, %v211
      %v270 = vpack.c.bf16 %v214, %v213
      %v271 = vpack.c.bf16 %v216, %v215
      %v272 = vpack.c.bf16 %v218, %v217
      %v273 = vpack.c.bf16 %v220, %v219
      %v274 = vpack.c.bf16 %v222, %v221
      %v275 = vpack.c.bf16 %v224, %v223
      %v276 = vpack.c.bf16 %v226, %v225
      %v277 = vpack.c.bf16 %v228, %v227
      %v278 = vpack.c.bf16 %v230, %v229
      %v279 = vpack.c.bf16 %v232, %v231
      %v280 = vpack.c.bf16 %v234, %v233
      %v281 = vpack.c.bf16 %v236, %v235
      %v282 = vpack.c.bf16 %v238, %v237
      %v283 = vpack.c.bf16 %v240, %v239
      %v284 = vpack.c.bf16 %v242, %v241
      %v285 = vpack.c.bf16 %v244, %v243
      %v286 = vpack.c.bf16 %v246, %v245
      %v287 = vpack.c.bf16 %v248, %v247
      %v288 = vpack.c.bf16 %v250, %v249
      %v289 = vpack.c.bf16 %v252, %v251
      %v290 = vpack.c.bf16 %v254, %v253
      %v291 = vpack.c.bf16 %v256, %v255
      %v292 = vpack.c.bf16 %v258, %v257
      %v293 = vpack.c.bf16 %v260, %v259
      %v294 = vpack.c.bf16 %v262, %v261
      %v295 = vld [vmem:[%s1] sm:$0x3]
      %s296 = scalar_lea.vmem %s1, 2
      %v297 = vld [vmem:[%s296] sm:$0x3]
      %vm298 = vcmask 23552
      %v300 = vsel %vm298, %v264, 0
      %v303 = vsel %vm298, %v265, 0
      %v306 = vsel %vm298, %v266, 0
      %v309 = vsel %vm298, %v267, 0
      %v312 = vsel %vm298, %v268, 0
      %v315 = vsel %vm298, %v269, 0
      %v318 = vsel %vm298, %v270, 0
      %v321 = vsel %vm298, %v271, 0
      %v324 = vsel %vm298, %v272, 0
      %v327 = vsel %vm298, %v273, 0
      %v330 = vsel %vm298, %v274, 0
      %v333 = vsel %vm298, %v275, 0
      %v336 = vsel %vm298, %v276, 0
      %v339 = vsel %vm298, %v277, 0
      %v342 = vsel %vm298, %v278, 0
      %v345 = vsel %vm298, %v279, 0
      %v348 = vsel %vm298, %v280, 0
      %v351 = vsel %vm298, %v281, 0
      %v354 = vsel %vm298, %v282, 0
      %v357 = vsel %vm298, %v283, 0
      %v360 = vsel %vm298, %v284, 0
      %v363 = vsel %vm298, %v285, 0
      %v366 = vsel %vm298, %v286, 0
      %v369 = vsel %vm298, %v287, 0
      %v372 = vsel %vm298, %v288, 0
      %v375 = vsel %vm298, %v289, 0
      %v378 = vsel %vm298, %v290, 0
      %v381 = vsel %vm298, %v291, 0
      %vm383 = vcmask 1040384
      %vm384 = vcmask 1041408
      %v385 = vsel %vm383, 4294967295, 65535
      %v386 = vsel %vm384, %v385, 0
      %v388 = vand.u32 %v297, %v386
      %390 = vmatprep.subr.bf16.mxu0 0
      %391 = vmatpush1.bf16.msra.mxu0 0
      %392 = vmatprep.subr.bf16.mxu0 0
      %393 = vmatpush1.bf16.msra.mxu0 0
      %394 = vmatprep.subr.bf16.mxu0 0
      %395 = vmatpush1.bf16.msra.mxu0 0
      %396 = vmatprep.subr.bf16.mxu0 0
      %397 = vmatpush1.bf16.msra.mxu0 0
      %398 = vmatprep.subr.bf16.mxu0 0
      %399 = vmatpush1.bf16.msra.mxu0 0
      %400 = vmatprep.subr.bf16.mxu0 0
      %401 = vmatpush1.bf16.msra.mxu0 0
      %402 = vmatprep.subr.bf16.mxu0 0
      %403 = vmatpush1.bf16.msra.mxu0 0
      %404 = vmatprep.subr.bf16.mxu0 0
      %405 = vmatpush1.bf16.msra.mxu0 %v388
      %406 = vmatprep.subr.bf16.mxu0 0
      %407 = vmatpush2.bf16.msra.mxu0 0
      %408 = vmatprep.subr.bf16.mxu0 0
      %409 = vmatpush2.bf16.msra.mxu0 0
      %410 = vmatprep.subr.bf16.mxu0 0
      %411 = vmatpush2.bf16.msra.mxu0 0
      %412 = vmatprep.subr.bf16.mxu0 0
      %413 = vmatpush2.bf16.msra.mxu0 0
      %414 = vmatprep.subr.bf16.mxu0 0
      %415 = vmatpush2.bf16.msra.mxu0 0
      %416 = vmatprep.subr.bf16.mxu0 0
      %417 = vmatpush2.bf16.msra.mxu0 0
      %418 = vmatprep.subr.bf16.mxu0 0
      %419 = vmatpush2.bf16.msra.mxu0 0
      %420 = vmatprep.subr.bf16.mxu0 0
      %421 = vmatpush2.bf16.msra.mxu0 0
      %422 = vmatprep.mubr.bf16.mxu0 0
      %423 = vmatmul.mubr.bf16.gmra.mxu0 %v300
      %v424 = vpop.f32.mrf.mxu0
      %v425 = vadd.f32 0.0, %v424
      %v426 = vpop.f32.mrf.mxu0
      %v427 = vpop.f32.mrf.mxu0
      %v428 = vadd.f32 0.0, %v427
      %v429 = vpop.f32.mrf.mxu0
      %430 = vmatprep.mubr.bf16.mxu0 0
      %431 = vmatmul.mubr.bf16.gmra.mxu0 %v303
      %v432 = vpop.f32.mrf.mxu0
      %v433 = vadd.f32 0.0, %v432
      %v434 = vpop.f32.mrf.mxu0
      %v435 = vpop.f32.mrf.mxu0
      %v436 = vadd.f32 0.0, %v435
      %v437 = vpop.f32.mrf.mxu0
      %438 = vmatprep.mubr.bf16.mxu0 0
      %439 = vmatmul.mubr.bf16.gmra.mxu0 %v306
      %v440 = vpop.f32.mrf.mxu0
      %v441 = vadd.f32 0.0, %v440
      %v442 = vpop.f32.mrf.mxu0
      %v443 = vpop.f32.mrf.mxu0
      %v444 = vadd.f32 0.0, %v443
      %v445 = vpop.f32.mrf.mxu0
      %446 = vmatprep.mubr.bf16.mxu0 0
      %447 = vmatmul.mubr.bf16.gmra.mxu0 %v309
      %v448 = vpop.f32.mrf.mxu0
      %v449 = vadd.f32 0.0, %v448
      %v450 = vpop.f32.mrf.mxu0
      %v451 = vpop.f32.mrf.mxu0
      %v452 = vadd.f32 0.0, %v451
      %v453 = vpop.f32.mrf.mxu0
      %454 = vmatprep.mubr.bf16.mxu0 0
      %455 = vmatmul.mubr.bf16.gmra.mxu0 %v312
      %v456 = vpop.f32.mrf.mxu0
      %v457 = vadd.f32 0.0, %v456
      %v458 = vpop.f32.mrf.mxu0
      %v459 = vpop.f32.mrf.mxu0
      %v460 = vadd.f32 0.0, %v459
      %v461 = vpop.f32.mrf.mxu0
      %462 = vmatprep.mubr.bf16.mxu0 0
      %463 = vmatmul.mubr.bf16.gmra.mxu0 %v315
      %v464 = vpop.f32.mrf.mxu0
      %v465 = vadd.f32 0.0, %v464
      %v466 = vpop.f32.mrf.mxu0
      %v467 = vpop.f32.mrf.mxu0
      %v468 = vadd.f32 0.0, %v467
      %v469 = vpop.f32.mrf.mxu0
      %470 = vmatprep.mubr.bf16.mxu0 0
      %471 = vmatmul.mubr.bf16.gmra.mxu0 %v318
      %v472 = vpop.f32.mrf.mxu0
      %v473 = vadd.f32 0.0, %v472
      %v474 = vpop.f32.mrf.mxu0
      %v475 = vpop.f32.mrf.mxu0
      %v476 = vadd.f32 0.0, %v475
      %v477 = vpop.f32.mrf.mxu0
      %478 = vmatprep.mubr.bf16.mxu0 0
      %479 = vmatmul.mubr.bf16.gmra.mxu0 %v321
      %v480 = vpop.f32.mrf.mxu0
      %v481 = vadd.f32 0.0, %v480
      %v482 = vpop.f32.mrf.mxu0
      %v483 = vpop.f32.mrf.mxu0
      %v484 = vadd.f32 0.0, %v483
      %v485 = vpop.f32.mrf.mxu0
      %486 = vmatprep.mubr.bf16.mxu0 0
      %487 = vmatmul.mubr.bf16.gmra.mxu0 %v324
      %v488 = vpop.f32.mrf.mxu0
      %v489 = vadd.f32 0.0, %v488
      %v490 = vpop.f32.mrf.mxu0
      %v491 = vpop.f32.mrf.mxu0
      %v492 = vadd.f32 0.0, %v491
      %v493 = vpop.f32.mrf.mxu0
      %494 = vmatprep.mubr.bf16.mxu0 0
      %495 = vmatmul.mubr.bf16.gmra.mxu0 %v327
      %v496 = vpop.f32.mrf.mxu0
      %v497 = vadd.f32 0.0, %v496
      %v498 = vpop.f32.mrf.mxu0
      %v499 = vpop.f32.mrf.mxu0
      %v500 = vadd.f32 0.0, %v499
      %v501 = vpop.f32.mrf.mxu0
      %502 = vmatprep.mubr.bf16.mxu0 0
      %503 = vmatmul.mubr.bf16.gmra.mxu0 %v330
      %v504 = vpop.f32.mrf.mxu0
      %v505 = vadd.f32 0.0, %v504
      %v506 = vpop.f32.mrf.mxu0
      %v507 = vpop.f32.mrf.mxu0
      %v508 = vadd.f32 0.0, %v507
      %v509 = vpop.f32.mrf.mxu0
      %510 = vmatprep.mubr.bf16.mxu0 0
      %511 = vmatmul.mubr.bf16.gmra.mxu0 %v333
      %v512 = vpop.f32.mrf.mxu0
      %v513 = vadd.f32 0.0, %v512
      %v514 = vpop.f32.mrf.mxu0
      %v515 = vpop.f32.mrf.mxu0
      %v516 = vadd.f32 0.0, %v515
      %v517 = vpop.f32.mrf.mxu0
      %518 = vmatprep.mubr.bf16.mxu0 0
      %519 = vmatmul.mubr.bf16.gmra.mxu0 %v336
      %v520 = vpop.f32.mrf.mxu0
      %v521 = vadd.f32 0.0, %v520
      %v522 = vpop.f32.mrf.mxu0
      %v523 = vpop.f32.mrf.mxu0
      %v524 = vadd.f32 0.0, %v523
      %v525 = vpop.f32.mrf.mxu0
      %526 = vmatprep.mubr.bf16.mxu0 0
      %527 = vmatmul.mubr.bf16.gmra.mxu0 %v339
      %v528 = vpop.f32.mrf.mxu0
      %v529 = vadd.f32 0.0, %v528
      %v530 = vpop.f32.mrf.mxu0
      %v531 = vpop.f32.mrf.mxu0
      %v532 = vadd.f32 0.0, %v531
      %v533 = vpop.f32.mrf.mxu0
      %534 = vmatprep.mubr.bf16.mxu0 0
      %535 = vmatmul.mubr.bf16.gmra.mxu0 %v342
      %v536 = vpop.f32.mrf.mxu0
      %v537 = vadd.f32 0.0, %v536
      %v538 = vpop.f32.mrf.mxu0
      %v539 = vpop.f32.mrf.mxu0
      %v540 = vadd.f32 0.0, %v539
      %v541 = vpop.f32.mrf.mxu0
      %542 = vmatprep.mubr.bf16.mxu0 0
      %543 = vmatmul.mubr.bf16.gmra.mxu0 %v345
      %v544 = vpop.f32.mrf.mxu0
      %v545 = vadd.f32 0.0, %v544
      %v546 = vpop.f32.mrf.mxu0
      %v547 = vpop.f32.mrf.mxu0
      %v548 = vadd.f32 0.0, %v547
      %v549 = vpop.f32.mrf.mxu0
      %550 = vmatprep.mubr.bf16.mxu0 0
      %551 = vmatmul.mubr.bf16.gmra.mxu0 %v348
      %v552 = vpop.f32.mrf.mxu0
      %v553 = vadd.f32 0.0, %v552
      %v554 = vpop.f32.mrf.mxu0
      %v555 = vpop.f32.mrf.mxu0
      %v556 = vadd.f32 0.0, %v555
      %v557 = vpop.f32.mrf.mxu0
      %558 = vmatprep.mubr.bf16.mxu0 0
      %559 = vmatmul.mubr.bf16.gmra.mxu0 %v351
      %v560 = vpop.f32.mrf.mxu0
      %v561 = vadd.f32 0.0, %v560
      %v562 = vpop.f32.mrf.mxu0
      %v563 = vpop.f32.mrf.mxu0
      %v564 = vadd.f32 0.0, %v563
      %v565 = vpop.f32.mrf.mxu0
      %566 = vmatprep.mubr.bf16.mxu0 0
      %567 = vmatmul.mubr.bf16.gmra.mxu0 %v354
      %v568 = vpop.f32.mrf.mxu0
      %v569 = vadd.f32 0.0, %v568
      %v570 = vpop.f32.mrf.mxu0
      %v571 = vpop.f32.mrf.mxu0
      %v572 = vadd.f32 0.0, %v571
      %v573 = vpop.f32.mrf.mxu0
      %574 = vmatprep.mubr.bf16.mxu0 0
      %575 = vmatmul.mubr.bf16.gmra.mxu0 %v357
      %v576 = vpop.f32.mrf.mxu0
      %v577 = vadd.f32 0.0, %v576
      %v578 = vpop.f32.mrf.mxu0
      %v579 = vpop.f32.mrf.mxu0
      %v580 = vadd.f32 0.0, %v579
      %v581 = vpop.f32.mrf.mxu0
      %582 = vmatprep.mubr.bf16.mxu0 0
      %583 = vmatmul.mubr.bf16.gmra.mxu0 %v360
      %v584 = vpop.f32.mrf.mxu0
      %v585 = vadd.f32 0.0, %v584
      %v586 = vpop.f32.mrf.mxu0
      %v587 = vpop.f32.mrf.mxu0
      %v588 = vadd.f32 0.0, %v587
      %v589 = vpop.f32.mrf.mxu0
      %590 = vmatprep.mubr.bf16.mxu0 0
      %591 = vmatmul.mubr.bf16.gmra.mxu0 %v363
      %v592 = vpop.f32.mrf.mxu0
      %v593 = vadd.f32 0.0, %v592
      %v594 = vpop.f32.mrf.mxu0
      %v595 = vpop.f32.mrf.mxu0
      %v596 = vadd.f32 0.0, %v595
      %v597 = vpop.f32.mrf.mxu0
      %598 = vmatprep.mubr.bf16.mxu0 0
      %599 = vmatmul.mubr.bf16.gmra.mxu0 %v366
      %v600 = vpop.f32.mrf.mxu0
      %v601 = vadd.f32 0.0, %v600
      %v602 = vpop.f32.mrf.mxu0
      %v603 = vpop.f32.mrf.mxu0
      %v604 = vadd.f32 0.0, %v603
      %v605 = vpop.f32.mrf.mxu0
      %606 = vmatprep.mubr.bf16.mxu0 0
      %607 = vmatmul.mubr.bf16.gmra.mxu0 %v369
      %v608 = vpop.f32.mrf.mxu0
      %v609 = vadd.f32 0.0, %v608
      %v610 = vpop.f32.mrf.mxu0
      %v611 = vpop.f32.mrf.mxu0
      %v612 = vadd.f32 0.0, %v611
      %v613 = vpop.f32.mrf.mxu0
      %614 = vmatprep.mubr.bf16.mxu0 0
      %615 = vmatmul.mubr.bf16.gmra.mxu0 %v372
      %v616 = vpop.f32.mrf.mxu0
      %v617 = vadd.f32 0.0, %v616
      %v618 = vpop.f32.mrf.mxu0
      %v619 = vpop.f32.mrf.mxu0
      %v620 = vadd.f32 0.0, %v619
      %v621 = vpop.f32.mrf.mxu0
      %622 = vmatprep.mubr.bf16.mxu0 0
      %623 = vmatmul.mubr.bf16.gmra.mxu0 %v375
      %v624 = vpop.f32.mrf.mxu0
      %v625 = vadd.f32 0.0, %v624
      %v626 = vpop.f32.mrf.mxu0
      %v627 = vpop.f32.mrf.mxu0
      %v628 = vadd.f32 0.0, %v627
      %v629 = vpop.f32.mrf.mxu0
      %630 = vmatprep.mubr.bf16.mxu0 0
      %631 = vmatmul.mubr.bf16.gmra.mxu0 %v378
      %v632 = vpop.f32.mrf.mxu0
      %v633 = vadd.f32 0.0, %v632
      %v634 = vpop.f32.mrf.mxu0
      %v635 = vpop.f32.mrf.mxu0
      %v636 = vadd.f32 0.0, %v635
      %v637 = vpop.f32.mrf.mxu0
      %638 = vmatprep.mubr.bf16.mxu0 0
      %639 = vmatmul.mubr.bf16.gmra.mxu0 %v381
      %v640 = vpop.f32.mrf.mxu0
      %v641 = vadd.f32 0.0, %v640
      %v642 = vpop.f32.mrf.mxu0
      %v643 = vpop.f32.mrf.mxu0
      %v644 = vadd.f32 0.0, %v643
      %v645 = vpop.f32.mrf.mxu0
      %646 = vdwg.mxu0
      %v648 = vsel %vm298, %v263, 0
      %v651 = vand.u32 %v295, %v386
      %653 = vmatprep.subr.bf16.mxu0 0
      %654 = vmatpush1.bf16.msra.mxu0 0
      %655 = vmatprep.subr.bf16.mxu0 0
      %656 = vmatpush1.bf16.msra.mxu0 0
      %657 = vmatprep.subr.bf16.mxu0 0
      %658 = vmatpush1.bf16.msra.mxu0 0
      %659 = vmatprep.subr.bf16.mxu0 0
      %660 = vmatpush1.bf16.msra.mxu0 0
      %661 = vmatprep.subr.bf16.mxu0 0
      %662 = vmatpush1.bf16.msra.mxu0 0
      %663 = vmatprep.subr.bf16.mxu0 0
      %664 = vmatpush1.bf16.msra.mxu0 0
      %665 = vmatprep.subr.bf16.mxu0 0
      %666 = vmatpush1.bf16.msra.mxu0 0
      %667 = vmatprep.subr.bf16.mxu0 0
      %668 = vmatpush1.bf16.msra.mxu0 %v651
      %669 = vmatprep.subr.bf16.mxu0 0
      %670 = vmatpush2.bf16.msra.mxu0 0
      %671 = vmatprep.subr.bf16.mxu0 0
      %672 = vmatpush2.bf16.msra.mxu0 0
      %673 = vmatprep.subr.bf16.mxu0 0
      %674 = vmatpush2.bf16.msra.mxu0 0
      %675 = vmatprep.subr.bf16.mxu0 0
      %676 = vmatpush2.bf16.msra.mxu0 0
      %677 = vmatprep.subr.bf16.mxu0 0
      %678 = vmatpush2.bf16.msra.mxu0 0
      %679 = vmatprep.subr.bf16.mxu0 0
      %680 = vmatpush2.bf16.msra.mxu0 0
      %681 = vmatprep.subr.bf16.mxu0 0
      %682 = vmatpush2.bf16.msra.mxu0 0
      %683 = vmatprep.subr.bf16.mxu0 0
      %684 = vmatpush2.bf16.msra.mxu0 0
      %685 = vmatprep.mubr.bf16.mxu0 0
      %686 = vmatmul.mubr.bf16.gmra.mxu0 %v648
      %v687 = vpop.f32.mrf.mxu0
      %v688 = vadd.f32 %v425, %v687
      %v689 = vpop.f32.mrf.mxu0
      %v690 = vpop.f32.mrf.mxu0
      %v691 = vadd.f32 %v428, %v690
      %v692 = vpop.f32.mrf.mxu0
      %693 = vmatprep.mubr.bf16.mxu0 0
      %694 = vmatmul.mubr.bf16.gmra.mxu0 %v300
      %v695 = vpop.f32.mrf.mxu0
      %v696 = vadd.f32 %v433, %v695
      %v697 = vpop.f32.mrf.mxu0
      %v698 = vpop.f32.mrf.mxu0
      %v699 = vadd.f32 %v436, %v698
      %v700 = vpop.f32.mrf.mxu0
      %701 = vmatprep.mubr.bf16.mxu0 0
      %702 = vmatmul.mubr.bf16.gmra.mxu0 %v303
      %v703 = vpop.f32.mrf.mxu0
      %v704 = vadd.f32 %v441, %v703
      %v705 = vpop.f32.mrf.mxu0
      %v706 = vpop.f32.mrf.mxu0
      %v707 = vadd.f32 %v444, %v706
      %v708 = vpop.f32.mrf.mxu0
      %709 = vmatprep.mubr.bf16.mxu0 0
      %710 = vmatmul.mubr.bf16.gmra.mxu0 %v306
      %v711 = vpop.f32.mrf.mxu0
      %v712 = vadd.f32 %v449, %v711
      %v713 = vpop.f32.mrf.mxu0
      %v714 = vpop.f32.mrf.mxu0
      %v715 = vadd.f32 %v452, %v714
      %v716 = vpop.f32.mrf.mxu0
      %717 = vmatprep.mubr.bf16.mxu0 0
      %718 = vmatmul.mubr.bf16.gmra.mxu0 %v309
      %v719 = vpop.f32.mrf.mxu0
      %v720 = vadd.f32 %v457, %v719
      %v721 = vpop.f32.mrf.mxu0
      %v722 = vpop.f32.mrf.mxu0
      %v723 = vadd.f32 %v460, %v722
      %v724 = vpop.f32.mrf.mxu0
      %725 = vmatprep.mubr.bf16.mxu0 0
      %726 = vmatmul.mubr.bf16.gmra.mxu0 %v312
      %v727 = vpop.f32.mrf.mxu0
      %v728 = vadd.f32 %v465, %v727
      %v729 = vpop.f32.mrf.mxu0
      %v730 = vpop.f32.mrf.mxu0
      %v731 = vadd.f32 %v468, %v730
      %v732 = vpop.f32.mrf.mxu0
      %733 = vmatprep.mubr.bf16.mxu0 0
      %734 = vmatmul.mubr.bf16.gmra.mxu0 %v315
      %v735 = vpop.f32.mrf.mxu0
      %v736 = vadd.f32 %v473, %v735
      %v737 = vpop.f32.mrf.mxu0
      %v738 = vpop.f32.mrf.mxu0
      %v739 = vadd.f32 %v476, %v738
      %v740 = vpop.f32.mrf.mxu0
      %741 = vmatprep.mubr.bf16.mxu0 0
      %742 = vmatmul.mubr.bf16.gmra.mxu0 %v318
      %v743 = vpop.f32.mrf.mxu0
      %v744 = vadd.f32 %v481, %v743
      %v745 = vpop.f32.mrf.mxu0
      %v746 = vpop.f32.mrf.mxu0
      %v747 = vadd.f32 %v484, %v746
      %v748 = vpop.f32.mrf.mxu0
      %749 = vmatprep.mubr.bf16.mxu0 0
      %750 = vmatmul.mubr.bf16.gmra.mxu0 %v321
      %v751 = vpop.f32.mrf.mxu0
      %v752 = vadd.f32 %v489, %v751
      %v753 = vpop.f32.mrf.mxu0
      %v754 = vpop.f32.mrf.mxu0
      %v755 = vadd.f32 %v492, %v754
      %v756 = vpop.f32.mrf.mxu0
      %757 = vmatprep.mubr.bf16.mxu0 0
      %758 = vmatmul.mubr.bf16.gmra.mxu0 %v324
      %v759 = vpop.f32.mrf.mxu0
      %v760 = vadd.f32 %v497, %v759
      %v761 = vpop.f32.mrf.mxu0
      %v762 = vpop.f32.mrf.mxu0
      %v763 = vadd.f32 %v500, %v762
      %v764 = vpop.f32.mrf.mxu0
      %765 = vmatprep.mubr.bf16.mxu0 0
      %766 = vmatmul.mubr.bf16.gmra.mxu0 %v327
      %v767 = vpop.f32.mrf.mxu0
      %v768 = vadd.f32 %v505, %v767
      %v769 = vpop.f32.mrf.mxu0
      %v770 = vpop.f32.mrf.mxu0
      %v771 = vadd.f32 %v508, %v770
      %v772 = vpop.f32.mrf.mxu0
      %773 = vmatprep.mubr.bf16.mxu0 0
      %774 = vmatmul.mubr.bf16.gmra.mxu0 %v330
      %v775 = vpop.f32.mrf.mxu0
      %v776 = vadd.f32 %v513, %v775
      %v777 = vpop.f32.mrf.mxu0
      %v778 = vpop.f32.mrf.mxu0
      %v779 = vadd.f32 %v516, %v778
      %v780 = vpop.f32.mrf.mxu0
      %781 = vmatprep.mubr.bf16.mxu0 0
      %782 = vmatmul.mubr.bf16.gmra.mxu0 %v333
      %v783 = vpop.f32.mrf.mxu0
      %v784 = vadd.f32 %v521, %v783
      %v785 = vpop.f32.mrf.mxu0
      %v786 = vpop.f32.mrf.mxu0
      %v787 = vadd.f32 %v524, %v786
      %v788 = vpop.f32.mrf.mxu0
      %789 = vmatprep.mubr.bf16.mxu0 0
      %790 = vmatmul.mubr.bf16.gmra.mxu0 %v336
      %v791 = vpop.f32.mrf.mxu0
      %v792 = vadd.f32 %v529, %v791
      %v793 = vpop.f32.mrf.mxu0
      %v794 = vpop.f32.mrf.mxu0
      %v795 = vadd.f32 %v532, %v794
      %v796 = vpop.f32.mrf.mxu0
      %797 = vmatprep.mubr.bf16.mxu0 0
      %798 = vmatmul.mubr.bf16.gmra.mxu0 %v339
      %v799 = vpop.f32.mrf.mxu0
      %v800 = vadd.f32 %v537, %v799
      %v801 = vpop.f32.mrf.mxu0
      %v802 = vpop.f32.mrf.mxu0
      %v803 = vadd.f32 %v540, %v802
      %v804 = vpop.f32.mrf.mxu0
      %805 = vmatprep.mubr.bf16.mxu0 0
      %806 = vmatmul.mubr.bf16.gmra.mxu0 %v342
      %v807 = vpop.f32.mrf.mxu0
      %v808 = vadd.f32 %v545, %v807
      %v809 = vpop.f32.mrf.mxu0
      %v810 = vpop.f32.mrf.mxu0
      %v811 = vadd.f32 %v548, %v810
      %v812 = vpop.f32.mrf.mxu0
      %813 = vmatprep.mubr.bf16.mxu0 0
      %814 = vmatmul.mubr.bf16.gmra.mxu0 %v345
      %v815 = vpop.f32.mrf.mxu0
      %v816 = vadd.f32 %v553, %v815
      %v817 = vpop.f32.mrf.mxu0
      %v818 = vpop.f32.mrf.mxu0
      %v819 = vadd.f32 %v556, %v818
      %v820 = vpop.f32.mrf.mxu0
      %821 = vmatprep.mubr.bf16.mxu0 0
      %822 = vmatmul.mubr.bf16.gmra.mxu0 %v348
      %v823 = vpop.f32.mrf.mxu0
      %v824 = vadd.f32 %v561, %v823
      %v825 = vpop.f32.mrf.mxu0
      %v826 = vpop.f32.mrf.mxu0
      %v827 = vadd.f32 %v564, %v826
      %v828 = vpop.f32.mrf.mxu0
      %829 = vmatprep.mubr.bf16.mxu0 0
      %830 = vmatmul.mubr.bf16.gmra.mxu0 %v351
      %v831 = vpop.f32.mrf.mxu0
      %v832 = vadd.f32 %v569, %v831
      %v833 = vpop.f32.mrf.mxu0
      %v834 = vpop.f32.mrf.mxu0
      %v835 = vadd.f32 %v572, %v834
      %v836 = vpop.f32.mrf.mxu0
      %837 = vmatprep.mubr.bf16.mxu0 0
      %838 = vmatmul.mubr.bf16.gmra.mxu0 %v354
      %v839 = vpop.f32.mrf.mxu0
      %v840 = vadd.f32 %v577, %v839
      %v841 = vpop.f32.mrf.mxu0
      %v842 = vpop.f32.mrf.mxu0
      %v843 = vadd.f32 %v580, %v842
      %v844 = vpop.f32.mrf.mxu0
      %845 = vmatprep.mubr.bf16.mxu0 0
      %846 = vmatmul.mubr.bf16.gmra.mxu0 %v357
      %v847 = vpop.f32.mrf.mxu0
      %v848 = vadd.f32 %v585, %v847
      %v849 = vpop.f32.mrf.mxu0
      %v850 = vpop.f32.mrf.mxu0
      %v851 = vadd.f32 %v588, %v850
      %v852 = vpop.f32.mrf.mxu0
      %853 = vmatprep.mubr.bf16.mxu0 0
      %854 = vmatmul.mubr.bf16.gmra.mxu0 %v360
      %v855 = vpop.f32.mrf.mxu0
      %v856 = vadd.f32 %v593, %v855
      %v857 = vpop.f32.mrf.mxu0
      %v858 = vpop.f32.mrf.mxu0
      %v859 = vadd.f32 %v596, %v858
      %v860 = vpop.f32.mrf.mxu0
      %861 = vmatprep.mubr.bf16.mxu0 0
      %862 = vmatmul.mubr.bf16.gmra.mxu0 %v363
      %v863 = vpop.f32.mrf.mxu0
      %v864 = vadd.f32 %v601, %v863
      %v865 = vpop.f32.mrf.mxu0
      %v866 = vpop.f32.mrf.mxu0
      %v867 = vadd.f32 %v604, %v866
      %v868 = vpop.f32.mrf.mxu0
      %869 = vmatprep.mubr.bf16.mxu0 0
      %870 = vmatmul.mubr.bf16.gmra.mxu0 %v366
      %v871 = vpop.f32.mrf.mxu0
      %v872 = vadd.f32 %v609, %v871
      %v873 = vpop.f32.mrf.mxu0
      %v874 = vpop.f32.mrf.mxu0
      %v875 = vadd.f32 %v612, %v874
      %v876 = vpop.f32.mrf.mxu0
      %877 = vmatprep.mubr.bf16.mxu0 0
      %878 = vmatmul.mubr.bf16.gmra.mxu0 %v369
      %v879 = vpop.f32.mrf.mxu0
      %v880 = vadd.f32 %v617, %v879
      %v881 = vpop.f32.mrf.mxu0
      %v882 = vpop.f32.mrf.mxu0
      %v883 = vadd.f32 %v620, %v882
      %v884 = vpop.f32.mrf.mxu0
      %885 = vmatprep.mubr.bf16.mxu0 0
      %886 = vmatmul.mubr.bf16.gmra.mxu0 %v372
      %v887 = vpop.f32.mrf.mxu0
      %v888 = vadd.f32 %v625, %v887
      %v889 = vpop.f32.mrf.mxu0
      %v890 = vpop.f32.mrf.mxu0
      %v891 = vadd.f32 %v628, %v890
      %v892 = vpop.f32.mrf.mxu0
      %893 = vmatprep.mubr.bf16.mxu0 0
      %894 = vmatmul.mubr.bf16.gmra.mxu0 %v375
      %v895 = vpop.f32.mrf.mxu0
      %v896 = vadd.f32 %v633, %v895
      %v897 = vpop.f32.mrf.mxu0
      %v898 = vpop.f32.mrf.mxu0
      %v899 = vadd.f32 %v636, %v898
      %v900 = vpop.f32.mrf.mxu0
      %901 = vmatprep.mubr.bf16.mxu0 0
      %902 = vmatmul.mubr.bf16.gmra.mxu0 %v378
      %v903 = vpop.f32.mrf.mxu0
      %v904 = vadd.f32 %v641, %v903
      %v905 = vpop.f32.mrf.mxu0
      %v906 = vpop.f32.mrf.mxu0
      %v907 = vadd.f32 %v644, %v906
      %v908 = vpop.f32.mrf.mxu0
      %909 = vdwg.mxu0
      %s910 = scalar_lea.vmem %s1, 4
      %v911 = vld [vmem:[%s910] sm:$0x3]
      %v913 = vsel %vm298, %v292, 0
      %v916 = vand.u32 %v911, %v386
      %918 = vmatprep.subr.bf16.mxu0 0
      %919 = vmatpush1.bf16.msra.mxu0 0
      %920 = vmatprep.subr.bf16.mxu0 0
      %921 = vmatpush1.bf16.msra.mxu0 0
      %922 = vmatprep.subr.bf16.mxu0 0
      %923 = vmatpush1.bf16.msra.mxu0 0
      %924 = vmatprep.subr.bf16.mxu0 0
      %925 = vmatpush1.bf16.msra.mxu0 0
      %926 = vmatprep.subr.bf16.mxu0 0
      %927 = vmatpush1.bf16.msra.mxu0 0
      %928 = vmatprep.subr.bf16.mxu0 0
      %929 = vmatpush1.bf16.msra.mxu0 0
      %930 = vmatprep.subr.bf16.mxu0 0
      %931 = vmatpush1.bf16.msra.mxu0 0
      %932 = vmatprep.subr.bf16.mxu0 0
      %933 = vmatpush1.bf16.msra.mxu0 %v916
      %934 = vmatprep.subr.bf16.mxu0 0
      %935 = vmatpush2.bf16.msra.mxu0 0
      %936 = vmatprep.subr.bf16.mxu0 0
      %937 = vmatpush2.bf16.msra.mxu0 0
      %938 = vmatprep.subr.bf16.mxu0 0
      %939 = vmatpush2.bf16.msra.mxu0 0
      %940 = vmatprep.subr.bf16.mxu0 0
      %941 = vmatpush2.bf16.msra.mxu0 0
      %942 = vmatprep.subr.bf16.mxu0 0
      %943 = vmatpush2.bf16.msra.mxu0 0
      %944 = vmatprep.subr.bf16.mxu0 0
      %945 = vmatpush2.bf16.msra.mxu0 0
      %946 = vmatprep.subr.bf16.mxu0 0
      %947 = vmatpush2.bf16.msra.mxu0 0
      %948 = vmatprep.subr.bf16.mxu0 0
      %949 = vmatpush2.bf16.msra.mxu0 0
      %950 = vmatprep.mubr.bf16.mxu0 0
      %951 = vmatmul.mubr.bf16.gmra.mxu0 %v303
      %v952 = vpop.f32.mrf.mxu0
      %v953 = vadd.f32 0.0, %v952
      %v954 = vpop.f32.mrf.mxu0
      %v955 = vpop.f32.mrf.mxu0
      %v956 = vadd.f32 0.0, %v955
      %v957 = vpop.f32.mrf.mxu0
      %958 = vmatprep.mubr.bf16.mxu0 0
      %959 = vmatmul.mubr.bf16.gmra.mxu0 %v306
      %v960 = vpop.f32.mrf.mxu0
      %v961 = vadd.f32 0.0, %v960
      %v962 = vpop.f32.mrf.mxu0
      %v963 = vpop.f32.mrf.mxu0
      %v964 = vadd.f32 0.0, %v963
      %v965 = vpop.f32.mrf.mxu0
      %966 = vmatprep.mubr.bf16.mxu0 0
      %967 = vmatmul.mubr.bf16.gmra.mxu0 %v309
      %v968 = vpop.f32.mrf.mxu0
      %v969 = vadd.f32 0.0, %v968
      %v970 = vpop.f32.mrf.mxu0
      %v971 = vpop.f32.mrf.mxu0
      %v972 = vadd.f32 0.0, %v971
      %v973 = vpop.f32.mrf.mxu0
      %974 = vmatprep.mubr.bf16.mxu0 0
      %975 = vmatmul.mubr.bf16.gmra.mxu0 %v312
      %v976 = vpop.f32.mrf.mxu0
      %v977 = vadd.f32 0.0, %v976
      %v978 = vpop.f32.mrf.mxu0
      %v979 = vpop.f32.mrf.mxu0
      %v980 = vadd.f32 0.0, %v979
      %v981 = vpop.f32.mrf.mxu0
      %982 = vmatprep.mubr.bf16.mxu0 0
      %983 = vmatmul.mubr.bf16.gmra.mxu0 %v315
      %v984 = vpop.f32.mrf.mxu0
      %v985 = vadd.f32 0.0, %v984
      %v986 = vpop.f32.mrf.mxu0
      %v987 = vpop.f32.mrf.mxu0
      %v988 = vadd.f32 0.0, %v987
      %v989 = vpop.f32.mrf.mxu0
      %990 = vmatprep.mubr.bf16.mxu0 0
      %991 = vmatmul.mubr.bf16.gmra.mxu0 %v318
      %v992 = vpop.f32.mrf.mxu0
      %v993 = vadd.f32 0.0, %v992
      %v994 = vpop.f32.mrf.mxu0
      %v995 = vpop.f32.mrf.mxu0
      %v996 = vadd.f32 0.0, %v995
      %v997 = vpop.f32.mrf.mxu0
      %998 = vmatprep.mubr.bf16.mxu0 0
      %999 = vmatmul.mubr.bf16.gmra.mxu0 %v321
      %v1000 = vpop.f32.mrf.mxu0
      %v1001 = vadd.f32 0.0, %v1000
      %v1002 = vpop.f32.mrf.mxu0
      %v1003 = vpop.f32.mrf.mxu0
      %v1004 = vadd.f32 0.0, %v1003
      %v1005 = vpop.f32.mrf.mxu0
      %1006 = vmatprep.mubr.bf16.mxu0 0
      %1007 = vmatmul.mubr.bf16.gmra.mxu0 %v324
      %v1008 = vpop.f32.mrf.mxu0
      %v1009 = vadd.f32 0.0, %v1008
      %v1010 = vpop.f32.mrf.mxu0
      %v1011 = vpop.f32.mrf.mxu0
      %v1012 = vadd.f32 0.0, %v1011
      %v1013 = vpop.f32.mrf.mxu0
      %1014 = vmatprep.mubr.bf16.mxu0 0
      %1015 = vmatmul.mubr.bf16.gmra.mxu0 %v327
      %v1016 = vpop.f32.mrf.mxu0
      %v1017 = vadd.f32 0.0, %v1016
      %v1018 = vpop.f32.mrf.mxu0
      %v1019 = vpop.f32.mrf.mxu0
      %v1020 = vadd.f32 0.0, %v1019
      %v1021 = vpop.f32.mrf.mxu0
      %1022 = vmatprep.mubr.bf16.mxu0 0
      %1023 = vmatmul.mubr.bf16.gmra.mxu0 %v330
      %v1024 = vpop.f32.mrf.mxu0
      %v1025 = vadd.f32 0.0, %v1024
      %v1026 = vpop.f32.mrf.mxu0
      %v1027 = vpop.f32.mrf.mxu0
      %v1028 = vadd.f32 0.0, %v1027
      %v1029 = vpop.f32.mrf.mxu0
      %1030 = vmatprep.mubr.bf16.mxu0 0
      %1031 = vmatmul.mubr.bf16.gmra.mxu0 %v333
      %v1032 = vpop.f32.mrf.mxu0
      %v1033 = vadd.f32 0.0, %v1032
      %v1034 = vpop.f32.mrf.mxu0
      %v1035 = vpop.f32.mrf.mxu0
      %v1036 = vadd.f32 0.0, %v1035
      %v1037 = vpop.f32.mrf.mxu0
      %1038 = vmatprep.mubr.bf16.mxu0 0
      %1039 = vmatmul.mubr.bf16.gmra.mxu0 %v336
      %v1040 = vpop.f32.mrf.mxu0
      %v1041 = vadd.f32 0.0, %v1040
      %v1042 = vpop.f32.mrf.mxu0
      %v1043 = vpop.f32.mrf.mxu0
      %v1044 = vadd.f32 0.0, %v1043
      %v1045 = vpop.f32.mrf.mxu0
      %1046 = vmatprep.mubr.bf16.mxu0 0
      %1047 = vmatmul.mubr.bf16.gmra.mxu0 %v339
      %v1048 = vpop.f32.mrf.mxu0
      %v1049 = vadd.f32 0.0, %v1048
      %v1050 = vpop.f32.mrf.mxu0
      %v1051 = vpop.f32.mrf.mxu0
      %v1052 = vadd.f32 0.0, %v1051
      %v1053 = vpop.f32.mrf.mxu0
      %1054 = vmatprep.mubr.bf16.mxu0 0
      %1055 = vmatmul.mubr.bf16.gmra.mxu0 %v342
      %v1056 = vpop.f32.mrf.mxu0
      %v1057 = vadd.f32 0.0, %v1056
      %v1058 = vpop.f32.mrf.mxu0
      %v1059 = vpop.f32.mrf.mxu0
      %v1060 = vadd.f32 0.0, %v1059
      %v1061 = vpop.f32.mrf.mxu0
      %1062 = vmatprep.mubr.bf16.mxu0 0
      %1063 = vmatmul.mubr.bf16.gmra.mxu0 %v345
      %v1064 = vpop.f32.mrf.mxu0
      %v1065 = vadd.f32 0.0, %v1064
      %v1066 = vpop.f32.mrf.mxu0
      %v1067 = vpop.f32.mrf.mxu0
      %v1068 = vadd.f32 0.0, %v1067
      %v1069 = vpop.f32.mrf.mxu0
      %1070 = vmatprep.mubr.bf16.mxu0 0
      %1071 = vmatmul.mubr.bf16.gmra.mxu0 %v348
      %v1072 = vpop.f32.mrf.mxu0
      %v1073 = vadd.f32 0.0, %v1072
      %v1074 = vpop.f32.mrf.mxu0
      %v1075 = vpop.f32.mrf.mxu0
      %v1076 = vadd.f32 0.0, %v1075
      %v1077 = vpop.f32.mrf.mxu0
      %1078 = vmatprep.mubr.bf16.mxu0 0
      %1079 = vmatmul.mubr.bf16.gmra.mxu0 %v351
      %v1080 = vpop.f32.mrf.mxu0
      %v1081 = vadd.f32 0.0, %v1080
      %v1082 = vpop.f32.mrf.mxu0
      %v1083 = vpop.f32.mrf.mxu0
      %v1084 = vadd.f32 0.0, %v1083
      %v1085 = vpop.f32.mrf.mxu0
      %1086 = vmatprep.mubr.bf16.mxu0 0
      %1087 = vmatmul.mubr.bf16.gmra.mxu0 %v354
      %v1088 = vpop.f32.mrf.mxu0
      %v1089 = vadd.f32 0.0, %v1088
      %v1090 = vpop.f32.mrf.mxu0
      %v1091 = vpop.f32.mrf.mxu0
      %v1092 = vadd.f32 0.0, %v1091
      %v1093 = vpop.f32.mrf.mxu0
      %1094 = vmatprep.mubr.bf16.mxu0 0
      %1095 = vmatmul.mubr.bf16.gmra.mxu0 %v357
      %v1096 = vpop.f32.mrf.mxu0
      %v1097 = vadd.f32 0.0, %v1096
      %v1098 = vpop.f32.mrf.mxu0
      %v1099 = vpop.f32.mrf.mxu0
      %v1100 = vadd.f32 0.0, %v1099
      %v1101 = vpop.f32.mrf.mxu0
      %1102 = vmatprep.mubr.bf16.mxu0 0
      %1103 = vmatmul.mubr.bf16.gmra.mxu0 %v360
      %v1104 = vpop.f32.mrf.mxu0
      %v1105 = vadd.f32 0.0, %v1104
      %v1106 = vpop.f32.mrf.mxu0
      %v1107 = vpop.f32.mrf.mxu0
      %v1108 = vadd.f32 0.0, %v1107
      %v1109 = vpop.f32.mrf.mxu0
      %1110 = vmatprep.mubr.bf16.mxu0 0
      %1111 = vmatmul.mubr.bf16.gmra.mxu0 %v363
      %v1112 = vpop.f32.mrf.mxu0
      %v1113 = vadd.f32 0.0, %v1112
      %v1114 = vpop.f32.mrf.mxu0
      %v1115 = vpop.f32.mrf.mxu0
      %v1116 = vadd.f32 0.0, %v1115
      %v1117 = vpop.f32.mrf.mxu0
      %1118 = vmatprep.mubr.bf16.mxu0 0
      %1119 = vmatmul.mubr.bf16.gmra.mxu0 %v366
      %v1120 = vpop.f32.mrf.mxu0
      %v1121 = vadd.f32 0.0, %v1120
      %v1122 = vpop.f32.mrf.mxu0
      %v1123 = vpop.f32.mrf.mxu0
      %v1124 = vadd.f32 0.0, %v1123
      %v1125 = vpop.f32.mrf.mxu0
      %1126 = vmatprep.mubr.bf16.mxu0 0
      %1127 = vmatmul.mubr.bf16.gmra.mxu0 %v369
      %v1128 = vpop.f32.mrf.mxu0
      %v1129 = vadd.f32 0.0, %v1128
      %v1130 = vpop.f32.mrf.mxu0
      %v1131 = vpop.f32.mrf.mxu0
      %v1132 = vadd.f32 0.0, %v1131
      %v1133 = vpop.f32.mrf.mxu0
      %1134 = vmatprep.mubr.bf16.mxu0 0
      %1135 = vmatmul.mubr.bf16.gmra.mxu0 %v372
      %v1136 = vpop.f32.mrf.mxu0
      %v1137 = vadd.f32 0.0, %v1136
      %v1138 = vpop.f32.mrf.mxu0
      %v1139 = vpop.f32.mrf.mxu0
      %v1140 = vadd.f32 0.0, %v1139
      %v1141 = vpop.f32.mrf.mxu0
      %1142 = vmatprep.mubr.bf16.mxu0 0
      %1143 = vmatmul.mubr.bf16.gmra.mxu0 %v375
      %v1144 = vpop.f32.mrf.mxu0
      %v1145 = vadd.f32 0.0, %v1144
      %v1146 = vpop.f32.mrf.mxu0
      %v1147 = vpop.f32.mrf.mxu0
      %v1148 = vadd.f32 0.0, %v1147
      %v1149 = vpop.f32.mrf.mxu0
      %1150 = vmatprep.mubr.bf16.mxu0 0
      %1151 = vmatmul.mubr.bf16.gmra.mxu0 %v378
      %v1152 = vpop.f32.mrf.mxu0
      %v1153 = vadd.f32 0.0, %v1152
      %v1154 = vpop.f32.mrf.mxu0
      %v1155 = vpop.f32.mrf.mxu0
      %v1156 = vadd.f32 0.0, %v1155
      %v1157 = vpop.f32.mrf.mxu0
      %1158 = vmatprep.mubr.bf16.mxu0 0
      %1159 = vmatmul.mubr.bf16.gmra.mxu0 %v381
      %v1160 = vpop.f32.mrf.mxu0
      %v1161 = vadd.f32 0.0, %v1160
      %v1162 = vpop.f32.mrf.mxu0
      %v1163 = vpop.f32.mrf.mxu0
      %v1164 = vadd.f32 0.0, %v1163
      %v1165 = vpop.f32.mrf.mxu0
      %1166 = vmatprep.mubr.bf16.mxu0 0
      %1167 = vmatmul.mubr.bf16.gmra.mxu0 %v913
      %v1168 = vpop.f32.mrf.mxu0
      %v1169 = vadd.f32 0.0, %v1168
      %v1170 = vpop.f32.mrf.mxu0
      %v1171 = vpop.f32.mrf.mxu0
      %v1172 = vadd.f32 0.0, %v1171
      %v1173 = vpop.f32.mrf.mxu0
      %1174 = vdwg.mxu0
      %v1175 = vadd.f32 %v688, %v953
      %v1176 = vadd.f32 %v691, %v956
      %v1177 = vadd.f32 %v696, %v961
      %v1178 = vadd.f32 %v699, %v964
      %v1179 = vadd.f32 %v704, %v969
      %v1180 = vadd.f32 %v707, %v972
      %v1181 = vadd.f32 %v712, %v977
      %v1182 = vadd.f32 %v715, %v980
      %v1183 = vadd.f32 %v720, %v985
      %v1184 = vadd.f32 %v723, %v988
      %v1185 = vadd.f32 %v728, %v993
      %v1186 = vadd.f32 %v731, %v996
      %v1187 = vadd.f32 %v736, %v1001
      %v1188 = vadd.f32 %v739, %v1004
      %v1189 = vadd.f32 %v744, %v1009
      %v1190 = vadd.f32 %v747, %v1012
      %v1191 = vadd.f32 %v752, %v1017
      %v1192 = vadd.f32 %v755, %v1020
      %v1193 = vadd.f32 %v760, %v1025
      %v1194 = vadd.f32 %v763, %v1028
      %v1195 = vadd.f32 %v768, %v1033
      %v1196 = vadd.f32 %v771, %v1036
      %v1197 = vadd.f32 %v776, %v1041
      %v1198 = vadd.f32 %v779, %v1044
      %v1199 = vadd.f32 %v784, %v1049
      %v1200 = vadd.f32 %v787, %v1052
      %v1201 = vadd.f32 %v792, %v1057
      %v1202 = vadd.f32 %v795, %v1060
      %v1203 = vadd.f32 %v800, %v1065
      %v1204 = vadd.f32 %v803, %v1068
      %v1205 = vadd.f32 %v808, %v1073
      %v1206 = vadd.f32 %v811, %v1076
      %v1207 = vadd.f32 %v816, %v1081
      %v1208 = vadd.f32 %v819, %v1084
      %v1209 = vadd.f32 %v824, %v1089
      %v1210 = vadd.f32 %v827, %v1092
      %v1211 = vadd.f32 %v832, %v1097
      %v1212 = vadd.f32 %v835, %v1100
      %v1213 = vadd.f32 %v840, %v1105
      %v1214 = vadd.f32 %v843, %v1108
      %v1215 = vadd.f32 %v848, %v1113
      %v1216 = vadd.f32 %v851, %v1116
      %v1217 = vadd.f32 %v856, %v1121
      %v1218 = vadd.f32 %v859, %v1124
      %v1219 = vadd.f32 %v864, %v1129
      %v1220 = vadd.f32 %v867, %v1132
      %v1221 = vadd.f32 %v872, %v1137
      %v1222 = vadd.f32 %v875, %v1140
      %v1223 = vadd.f32 %v880, %v1145
      %v1224 = vadd.f32 %v883, %v1148
      %v1225 = vadd.f32 %v888, %v1153
      %v1226 = vadd.f32 %v891, %v1156
      %v1227 = vadd.f32 %v896, %v1161
      %v1228 = vadd.f32 %v899, %v1164
      %v1229 = vadd.f32 %v904, %v1169
      %v1230 = vadd.f32 %v907, %v1172
      %s1231 = scalar_lea.vmem %s1, 6
      %v1232 = vld [vmem:[%s1231] sm:$0x3]
      %v1234 = vsel %vm298, %v293, 0
      %v1237 = vand.u32 %v1232, %v386
      %1239 = vmatprep.subr.bf16.mxu0 0
      %1240 = vmatpush1.bf16.msra.mxu0 0
      %1241 = vmatprep.subr.bf16.mxu0 0
      %1242 = vmatpush1.bf16.msra.mxu0 0
      %1243 = vmatprep.subr.bf16.mxu0 0
      %1244 = vmatpush1.bf16.msra.mxu0 0
      %1245 = vmatprep.subr.bf16.mxu0 0
      %1246 = vmatpush1.bf16.msra.mxu0 0
      %1247 = vmatprep.subr.bf16.mxu0 0
      %1248 = vmatpush1.bf16.msra.mxu0 0
      %1249 = vmatprep.subr.bf16.mxu0 0
      %1250 = vmatpush1.bf16.msra.mxu0 0
      %1251 = vmatprep.subr.bf16.mxu0 0
      %1252 = vmatpush1.bf16.msra.mxu0 0
      %1253 = vmatprep.subr.bf16.mxu0 0
      %1254 = vmatpush1.bf16.msra.mxu0 %v1237
      %1255 = vmatprep.subr.bf16.mxu0 0
      %1256 = vmatpush2.bf16.msra.mxu0 0
      %1257 = vmatprep.subr.bf16.mxu0 0
      %1258 = vmatpush2.bf16.msra.mxu0 0
      %1259 = vmatprep.subr.bf16.mxu0 0
      %1260 = vmatpush2.bf16.msra.mxu0 0
      %1261 = vmatprep.subr.bf16.mxu0 0
      %1262 = vmatpush2.bf16.msra.mxu0 0
      %1263 = vmatprep.subr.bf16.mxu0 0
      %1264 = vmatpush2.bf16.msra.mxu0 0
      %1265 = vmatprep.subr.bf16.mxu0 0
      %1266 = vmatpush2.bf16.msra.mxu0 0
      %1267 = vmatprep.subr.bf16.mxu0 0
      %1268 = vmatpush2.bf16.msra.mxu0 0
      %1269 = vmatprep.subr.bf16.mxu0 0
      %1270 = vmatpush2.bf16.msra.mxu0 0
      %1271 = vmatprep.mubr.bf16.mxu0 0
      %1272 = vmatmul.mubr.bf16.gmra.mxu0 %v306
      %v1273 = vpop.f32.mrf.mxu0
      %v1274 = vadd.f32 0.0, %v1273
      %v1275 = vpop.f32.mrf.mxu0
      %v1276 = vpop.f32.mrf.mxu0
      %v1277 = vadd.f32 0.0, %v1276
      %v1278 = vpop.f32.mrf.mxu0
      %1279 = vmatprep.mubr.bf16.mxu0 0
      %1280 = vmatmul.mubr.bf16.gmra.mxu0 %v309
      %v1281 = vpop.f32.mrf.mxu0
      %v1282 = vadd.f32 0.0, %v1281
      %v1283 = vpop.f32.mrf.mxu0
      %v1284 = vpop.f32.mrf.mxu0
      %v1285 = vadd.f32 0.0, %v1284
      %v1286 = vpop.f32.mrf.mxu0
      %1287 = vmatprep.mubr.bf16.mxu0 0
      %1288 = vmatmul.mubr.bf16.gmra.mxu0 %v312
      %v1289 = vpop.f32.mrf.mxu0
      %v1290 = vadd.f32 0.0, %v1289
      %v1291 = vpop.f32.mrf.mxu0
      %v1292 = vpop.f32.mrf.mxu0
      %v1293 = vadd.f32 0.0, %v1292
      %v1294 = vpop.f32.mrf.mxu0
      %1295 = vmatprep.mubr.bf16.mxu0 0
      %1296 = vmatmul.mubr.bf16.gmra.mxu0 %v315
      %v1297 = vpop.f32.mrf.mxu0
      %v1298 = vadd.f32 0.0, %v1297
      %v1299 = vpop.f32.mrf.mxu0
      %v1300 = vpop.f32.mrf.mxu0
      %v1301 = vadd.f32 0.0, %v1300
      %v1302 = vpop.f32.mrf.mxu0
      %1303 = vmatprep.mubr.bf16.mxu0 0
      %1304 = vmatmul.mubr.bf16.gmra.mxu0 %v318
      %v1305 = vpop.f32.mrf.mxu0
      %v1306 = vadd.f32 0.0, %v1305
      %v1307 = vpop.f32.mrf.mxu0
      %v1308 = vpop.f32.mrf.mxu0
      %v1309 = vadd.f32 0.0, %v1308
      %v1310 = vpop.f32.mrf.mxu0
      %1311 = vmatprep.mubr.bf16.mxu0 0
      %1312 = vmatmul.mubr.bf16.gmra.mxu0 %v321
      %v1313 = vpop.f32.mrf.mxu0
      %v1314 = vadd.f32 0.0, %v1313
      %v1315 = vpop.f32.mrf.mxu0
      %v1316 = vpop.f32.mrf.mxu0
      %v1317 = vadd.f32 0.0, %v1316
      %v1318 = vpop.f32.mrf.mxu0
      %1319 = vmatprep.mubr.bf16.mxu0 0
      %1320 = vmatmul.mubr.bf16.gmra.mxu0 %v324
      %v1321 = vpop.f32.mrf.mxu0
      %v1322 = vadd.f32 0.0, %v1321
      %v1323 = vpop.f32.mrf.mxu0
      %v1324 = vpop.f32.mrf.mxu0
      %v1325 = vadd.f32 0.0, %v1324
      %v1326 = vpop.f32.mrf.mxu0
      %1327 = vmatprep.mubr.bf16.mxu0 0
      %1328 = vmatmul.mubr.bf16.gmra.mxu0 %v327
      %v1329 = vpop.f32.mrf.mxu0
      %v1330 = vadd.f32 0.0, %v1329
      %v1331 = vpop.f32.mrf.mxu0
      %v1332 = vpop.f32.mrf.mxu0
      %v1333 = vadd.f32 0.0, %v1332
      %v1334 = vpop.f32.mrf.mxu0
      %1335 = vmatprep.mubr.bf16.mxu0 0
      %1336 = vmatmul.mubr.bf16.gmra.mxu0 %v330
      %v1337 = vpop.f32.mrf.mxu0
      %v1338 = vadd.f32 0.0, %v1337
      %v1339 = vpop.f32.mrf.mxu0
      %v1340 = vpop.f32.mrf.mxu0
      %v1341 = vadd.f32 0.0, %v1340
      %v1342 = vpop.f32.mrf.mxu0
      %1343 = vmatprep.mubr.bf16.mxu0 0
      %1344 = vmatmul.mubr.bf16.gmra.mxu0 %v333
      %v1345 = vpop.f32.mrf.mxu0
      %v1346 = vadd.f32 0.0, %v1345
      %v1347 = vpop.f32.mrf.mxu0
      %v1348 = vpop.f32.mrf.mxu0
      %v1349 = vadd.f32 0.0, %v1348
      %v1350 = vpop.f32.mrf.mxu0
      %1351 = vmatprep.mubr.bf16.mxu0 0
      %1352 = vmatmul.mubr.bf16.gmra.mxu0 %v336
      %v1353 = vpop.f32.mrf.mxu0
      %v1354 = vadd.f32 0.0, %v1353
      %v1355 = vpop.f32.mrf.mxu0
      %v1356 = vpop.f32.mrf.mxu0
      %v1357 = vadd.f32 0.0, %v1356
      %v1358 = vpop.f32.mrf.mxu0
      %1359 = vmatprep.mubr.bf16.mxu0 0
      %1360 = vmatmul.mubr.bf16.gmra.mxu0 %v339
      %v1361 = vpop.f32.mrf.mxu0
      %v1362 = vadd.f32 0.0, %v1361
      %v1363 = vpop.f32.mrf.mxu0
      %v1364 = vpop.f32.mrf.mxu0
      %v1365 = vadd.f32 0.0, %v1364
      %v1366 = vpop.f32.mrf.mxu0
      %1367 = vmatprep.mubr.bf16.mxu0 0
      %1368 = vmatmul.mubr.bf16.gmra.mxu0 %v342
      %v1369 = vpop.f32.mrf.mxu0
      %v1370 = vadd.f32 0.0, %v1369
      %v1371 = vpop.f32.mrf.mxu0
      %v1372 = vpop.f32.mrf.mxu0
      %v1373 = vadd.f32 0.0, %v1372
      %v1374 = vpop.f32.mrf.mxu0
      %1375 = vmatprep.mubr.bf16.mxu0 0
      %1376 = vmatmul.mubr.bf16.gmra.mxu0 %v345
      %v1377 = vpop.f32.mrf.mxu0
      %v1378 = vadd.f32 0.0, %v1377
      %v1379 = vpop.f32.mrf.mxu0
      %v1380 = vpop.f32.mrf.mxu0
      %v1381 = vadd.f32 0.0, %v1380
      %v1382 = vpop.f32.mrf.mxu0
      %1383 = vmatprep.mubr.bf16.mxu0 0
      %1384 = vmatmul.mubr.bf16.gmra.mxu0 %v348
      %v1385 = vpop.f32.mrf.mxu0
      %v1386 = vadd.f32 0.0, %v1385
      %v1387 = vpop.f32.mrf.mxu0
      %v1388 = vpop.f32.mrf.mxu0
      %v1389 = vadd.f32 0.0, %v1388
      %v1390 = vpop.f32.mrf.mxu0
      %1391 = vmatprep.mubr.bf16.mxu0 0
      %1392 = vmatmul.mubr.bf16.gmra.mxu0 %v351
      %v1393 = vpop.f32.mrf.mxu0
      %v1394 = vadd.f32 0.0, %v1393
      %v1395 = vpop.f32.mrf.mxu0
      %v1396 = vpop.f32.mrf.mxu0
      %v1397 = vadd.f32 0.0, %v1396
      %v1398 = vpop.f32.mrf.mxu0
      %1399 = vmatprep.mubr.bf16.mxu0 0
      %1400 = vmatmul.mubr.bf16.gmra.mxu0 %v354
      %v1401 = vpop.f32.mrf.mxu0
      %v1402 = vadd.f32 0.0, %v1401
      %v1403 = vpop.f32.mrf.mxu0
      %v1404 = vpop.f32.mrf.mxu0
      %v1405 = vadd.f32 0.0, %v1404
      %v1406 = vpop.f32.mrf.mxu0
      %1407 = vmatprep.mubr.bf16.mxu0 0
      %1408 = vmatmul.mubr.bf16.gmra.mxu0 %v357
      %v1409 = vpop.f32.mrf.mxu0
      %v1410 = vadd.f32 0.0, %v1409
      %v1411 = vpop.f32.mrf.mxu0
      %v1412 = vpop.f32.mrf.mxu0
      %v1413 = vadd.f32 0.0, %v1412
      %v1414 = vpop.f32.mrf.mxu0
      %1415 = vmatprep.mubr.bf16.mxu0 0
      %1416 = vmatmul.mubr.bf16.gmra.mxu0 %v360
      %v1417 = vpop.f32.mrf.mxu0
      %v1418 = vadd.f32 0.0, %v1417
      %v1419 = vpop.f32.mrf.mxu0
      %v1420 = vpop.f32.mrf.mxu0
      %v1421 = vadd.f32 0.0, %v1420
      %v1422 = vpop.f32.mrf.mxu0
      %1423 = vmatprep.mubr.bf16.mxu0 0
      %1424 = vmatmul.mubr.bf16.gmra.mxu0 %v363
      %v1425 = vpop.f32.mrf.mxu0
      %v1426 = vadd.f32 0.0, %v1425
      %v1427 = vpop.f32.mrf.mxu0
      %v1428 = vpop.f32.mrf.mxu0
      %v1429 = vadd.f32 0.0, %v1428
      %v1430 = vpop.f32.mrf.mxu0
      %1431 = vmatprep.mubr.bf16.mxu0 0
      %1432 = vmatmul.mubr.bf16.gmra.mxu0 %v366
      %v1433 = vpop.f32.mrf.mxu0
      %v1434 = vadd.f32 0.0, %v1433
      %v1435 = vpop.f32.mrf.mxu0
      %v1436 = vpop.f32.mrf.mxu0
      %v1437 = vadd.f32 0.0, %v1436
      %v1438 = vpop.f32.mrf.mxu0
      %1439 = vmatprep.mubr.bf16.mxu0 0
      %1440 = vmatmul.mubr.bf16.gmra.mxu0 %v369
      %v1441 = vpop.f32.mrf.mxu0
      %v1442 = vadd.f32 0.0, %v1441
      %v1443 = vpop.f32.mrf.mxu0
      %v1444 = vpop.f32.mrf.mxu0
      %v1445 = vadd.f32 0.0, %v1444
      %v1446 = vpop.f32.mrf.mxu0
      %1447 = vmatprep.mubr.bf16.mxu0 0
      %1448 = vmatmul.mubr.bf16.gmra.mxu0 %v372
      %v1449 = vpop.f32.mrf.mxu0
      %v1450 = vadd.f32 0.0, %v1449
      %v1451 = vpop.f32.mrf.mxu0
      %v1452 = vpop.f32.mrf.mxu0
      %v1453 = vadd.f32 0.0, %v1452
      %v1454 = vpop.f32.mrf.mxu0
      %1455 = vmatprep.mubr.bf16.mxu0 0
      %1456 = vmatmul.mubr.bf16.gmra.mxu0 %v375
      %v1457 = vpop.f32.mrf.mxu0
      %v1458 = vadd.f32 0.0, %v1457
      %v1459 = vpop.f32.mrf.mxu0
      %v1460 = vpop.f32.mrf.mxu0
      %v1461 = vadd.f32 0.0, %v1460
      %v1462 = vpop.f32.mrf.mxu0
      %1463 = vmatprep.mubr.bf16.mxu0 0
      %1464 = vmatmul.mubr.bf16.gmra.mxu0 %v378
      %v1465 = vpop.f32.mrf.mxu0
      %v1466 = vadd.f32 0.0, %v1465
      %v1467 = vpop.f32.mrf.mxu0
      %v1468 = vpop.f32.mrf.mxu0
      %v1469 = vadd.f32 0.0, %v1468
      %v1470 = vpop.f32.mrf.mxu0
      %1471 = vmatprep.mubr.bf16.mxu0 0
      %1472 = vmatmul.mubr.bf16.gmra.mxu0 %v381
      %v1473 = vpop.f32.mrf.mxu0
      %v1474 = vadd.f32 0.0, %v1473
      %v1475 = vpop.f32.mrf.mxu0
      %v1476 = vpop.f32.mrf.mxu0
      %v1477 = vadd.f32 0.0, %v1476
      %v1478 = vpop.f32.mrf.mxu0
      %1479 = vmatprep.mubr.bf16.mxu0 0
      %1480 = vmatmul.mubr.bf16.gmra.mxu0 %v913
      %v1481 = vpop.f32.mrf.mxu0
      %v1482 = vadd.f32 0.0, %v1481
      %v1483 = vpop.f32.mrf.mxu0
      %v1484 = vpop.f32.mrf.mxu0
      %v1485 = vadd.f32 0.0, %v1484
      %v1486 = vpop.f32.mrf.mxu0
      %1487 = vmatprep.mubr.bf16.mxu0 0
      %1488 = vmatmul.mubr.bf16.gmra.mxu0 %v1234
      %v1489 = vpop.f32.mrf.mxu0
      %v1490 = vadd.f32 0.0, %v1489
      %v1491 = vpop.f32.mrf.mxu0
      %v1492 = vpop.f32.mrf.mxu0
      %v1493 = vadd.f32 0.0, %v1492
      %v1494 = vpop.f32.mrf.mxu0
      %1495 = vdwg.mxu0
      %v1496 = vadd.f32 %v1175, %v1274
      %v1497 = vadd.f32 %v1176, %v1277
      %v1498 = vadd.f32 %v1177, %v1282
      %v1499 = vadd.f32 %v1178, %v1285
      %v1500 = vadd.f32 %v1179, %v1290
      %v1501 = vadd.f32 %v1180, %v1293
      %v1502 = vadd.f32 %v1181, %v1298
      %v1503 = vadd.f32 %v1182, %v1301
      %v1504 = vadd.f32 %v1183, %v1306
      %v1505 = vadd.f32 %v1184, %v1309
      %v1506 = vadd.f32 %v1185, %v1314
      %v1507 = vadd.f32 %v1186, %v1317
      %v1508 = vadd.f32 %v1187, %v1322
      %v1509 = vadd.f32 %v1188, %v1325
      %v1510 = vadd.f32 %v1189, %v1330
      %v1511 = vadd.f32 %v1190, %v1333
      %v1512 = vadd.f32 %v1191, %v1338
      %v1513 = vadd.f32 %v1192, %v1341
      %v1514 = vadd.f32 %v1193, %v1346
      %v1515 = vadd.f32 %v1194, %v1349
      %v1516 = vadd.f32 %v1195, %v1354
      %v1517 = vadd.f32 %v1196, %v1357
      %v1518 = vadd.f32 %v1197, %v1362
      %v1519 = vadd.f32 %v1198, %v1365
      %v1520 = vadd.f32 %v1199, %v1370
      %v1521 = vadd.f32 %v1200, %v1373
      %v1522 = vadd.f32 %v1201, %v1378
      %v1523 = vadd.f32 %v1202, %v1381
      %v1524 = vadd.f32 %v1203, %v1386
      %v1525 = vadd.f32 %v1204, %v1389
      %v1526 = vadd.f32 %v1205, %v1394
      %v1527 = vadd.f32 %v1206, %v1397
      %v1528 = vadd.f32 %v1207, %v1402
      %v1529 = vadd.f32 %v1208, %v1405
      %v1530 = vadd.f32 %v1209, %v1410
      %v1531 = vadd.f32 %v1210, %v1413
      %v1532 = vadd.f32 %v1211, %v1418
      %v1533 = vadd.f32 %v1212, %v1421
      %v1534 = vadd.f32 %v1213, %v1426
      %v1535 = vadd.f32 %v1214, %v1429
      %v1536 = vadd.f32 %v1215, %v1434
      %v1537 = vadd.f32 %v1216, %v1437
      %v1538 = vadd.f32 %v1217, %v1442
      %v1539 = vadd.f32 %v1218, %v1445
      %v1540 = vadd.f32 %v1219, %v1450
      %v1541 = vadd.f32 %v1220, %v1453
      %v1542 = vadd.f32 %v1221, %v1458
      %v1543 = vadd.f32 %v1222, %v1461
      %v1544 = vadd.f32 %v1223, %v1466
      %v1545 = vadd.f32 %v1224, %v1469
      %v1546 = vadd.f32 %v1225, %v1474
      %v1547 = vadd.f32 %v1226, %v1477
      %v1548 = vadd.f32 %v1227, %v1482
      %v1549 = vadd.f32 %v1228, %v1485
      %v1550 = vadd.f32 %v1229, %v1490
      %v1551 = vadd.f32 %v1230, %v1493
      %s1552 = scalar_lea.vmem %s1, 8
      %v1553 = vld [vmem:[%s1552] sm:$0x3]
      %v1555 = vsel %vm298, %v294, 0
      %v1558 = vand.u32 %v1553, %v386
      %1560 = vmatprep.subr.bf16.mxu0 0
      %1561 = vmatpush1.bf16.msra.mxu0 0
      %1562 = vmatprep.subr.bf16.mxu0 0
      %1563 = vmatpush1.bf16.msra.mxu0 0
      %1564 = vmatprep.subr.bf16.mxu0 0
      %1565 = vmatpush1.bf16.msra.mxu0 0
      %1566 = vmatprep.subr.bf16.mxu0 0
      %1567 = vmatpush1.bf16.msra.mxu0 0
      %1568 = vmatprep.subr.bf16.mxu0 0
      %1569 = vmatpush1.bf16.msra.mxu0 0
      %1570 = vmatprep.subr.bf16.mxu0 0
      %1571 = vmatpush1.bf16.msra.mxu0 0
      %1572 = vmatprep.subr.bf16.mxu0 0
      %1573 = vmatpush1.bf16.msra.mxu0 0
      %1574 = vmatprep.subr.bf16.mxu0 0
      %1575 = vmatpush1.bf16.msra.mxu0 %v1558
      %1576 = vmatprep.subr.bf16.mxu0 0
      %1577 = vmatpush2.bf16.msra.mxu0 0
      %1578 = vmatprep.subr.bf16.mxu0 0
      %1579 = vmatpush2.bf16.msra.mxu0 0
      %1580 = vmatprep.subr.bf16.mxu0 0
      %1581 = vmatpush2.bf16.msra.mxu0 0
      %1582 = vmatprep.subr.bf16.mxu0 0
      %1583 = vmatpush2.bf16.msra.mxu0 0
      %1584 = vmatprep.subr.bf16.mxu0 0
      %1585 = vmatpush2.bf16.msra.mxu0 0
      %1586 = vmatprep.subr.bf16.mxu0 0
      %1587 = vmatpush2.bf16.msra.mxu0 0
      %1588 = vmatprep.subr.bf16.mxu0 0
      %1589 = vmatpush2.bf16.msra.mxu0 0
      %1590 = vmatprep.subr.bf16.mxu0 0
      %1591 = vmatpush2.bf16.msra.mxu0 0
      %1592 = vmatprep.mubr.bf16.mxu0 0
      %1593 = vmatmul.mubr.bf16.gmra.mxu0 %v309
      %v1594 = vpop.f32.mrf.mxu0
      %v1595 = vadd.f32 0.0, %v1594
      %v1596 = vpop.f32.mrf.mxu0
      %v1597 = vpop.f32.mrf.mxu0
      %v1598 = vadd.f32 0.0, %v1597
      %v1599 = vpop.f32.mrf.mxu0
      %1600 = vmatprep.mubr.bf16.mxu0 0
      %1601 = vmatmul.mubr.bf16.gmra.mxu0 %v312
      %v1602 = vpop.f32.mrf.mxu0
      %v1603 = vadd.f32 0.0, %v1602
      %v1604 = vpop.f32.mrf.mxu0
      %v1605 = vpop.f32.mrf.mxu0
      %v1606 = vadd.f32 0.0, %v1605
      %v1607 = vpop.f32.mrf.mxu0
      %1608 = vmatprep.mubr.bf16.mxu0 0
      %1609 = vmatmul.mubr.bf16.gmra.mxu0 %v315
      %v1610 = vpop.f32.mrf.mxu0
      %v1611 = vadd.f32 0.0, %v1610
      %v1612 = vpop.f32.mrf.mxu0
      %v1613 = vpop.f32.mrf.mxu0
      %v1614 = vadd.f32 0.0, %v1613
      %v1615 = vpop.f32.mrf.mxu0
      %1616 = vmatprep.mubr.bf16.mxu0 0
      %1617 = vmatmul.mubr.bf16.gmra.mxu0 %v318
      %v1618 = vpop.f32.mrf.mxu0
      %v1619 = vadd.f32 0.0, %v1618
      %v1620 = vpop.f32.mrf.mxu0
      %v1621 = vpop.f32.mrf.mxu0
      %v1622 = vadd.f32 0.0, %v1621
      %v1623 = vpop.f32.mrf.mxu0
      %1624 = vmatprep.mubr.bf16.mxu0 0
      %1625 = vmatmul.mubr.bf16.gmra.mxu0 %v321
      %v1626 = vpop.f32.mrf.mxu0
      %v1627 = vadd.f32 0.0, %v1626
      %v1628 = vpop.f32.mrf.mxu0
      %v1629 = vpop.f32.mrf.mxu0
      %v1630 = vadd.f32 0.0, %v1629
      %v1631 = vpop.f32.mrf.mxu0
      %1632 = vmatprep.mubr.bf16.mxu0 0
      %1633 = vmatmul.mubr.bf16.gmra.mxu0 %v324
      %v1634 = vpop.f32.mrf.mxu0
      %v1635 = vadd.f32 0.0, %v1634
      %v1636 = vpop.f32.mrf.mxu0
      %v1637 = vpop.f32.mrf.mxu0
      %v1638 = vadd.f32 0.0, %v1637
      %v1639 = vpop.f32.mrf.mxu0
      %1640 = vmatprep.mubr.bf16.mxu0 0
      %1641 = vmatmul.mubr.bf16.gmra.mxu0 %v327
      %v1642 = vpop.f32.mrf.mxu0
      %v1643 = vadd.f32 0.0, %v1642
      %v1644 = vpop.f32.mrf.mxu0
      %v1645 = vpop.f32.mrf.mxu0
      %v1646 = vadd.f32 0.0, %v1645
      %v1647 = vpop.f32.mrf.mxu0
      %1648 = vmatprep.mubr.bf16.mxu0 0
      %1649 = vmatmul.mubr.bf16.gmra.mxu0 %v330
      %v1650 = vpop.f32.mrf.mxu0
      %v1651 = vadd.f32 0.0, %v1650
      %v1652 = vpop.f32.mrf.mxu0
      %v1653 = vpop.f32.mrf.mxu0
      %v1654 = vadd.f32 0.0, %v1653
      %v1655 = vpop.f32.mrf.mxu0
      %1656 = vmatprep.mubr.bf16.mxu0 0
      %1657 = vmatmul.mubr.bf16.gmra.mxu0 %v333
      %v1658 = vpop.f32.mrf.mxu0
      %v1659 = vadd.f32 0.0, %v1658
      %v1660 = vpop.f32.mrf.mxu0
      %v1661 = vpop.f32.mrf.mxu0
      %v1662 = vadd.f32 0.0, %v1661
      %v1663 = vpop.f32.mrf.mxu0
      %1664 = vmatprep.mubr.bf16.mxu0 0
      %1665 = vmatmul.mubr.bf16.gmra.mxu0 %v336
      %v1666 = vpop.f32.mrf.mxu0
      %v1667 = vadd.f32 0.0, %v1666
      %v1668 = vpop.f32.mrf.mxu0
      %v1669 = vpop.f32.mrf.mxu0
      %v1670 = vadd.f32 0.0, %v1669
      %v1671 = vpop.f32.mrf.mxu0
      %1672 = vmatprep.mubr.bf16.mxu0 0
      %1673 = vmatmul.mubr.bf16.gmra.mxu0 %v339
      %v1674 = vpop.f32.mrf.mxu0
      %v1675 = vadd.f32 0.0, %v1674
      %v1676 = vpop.f32.mrf.mxu0
      %v1677 = vpop.f32.mrf.mxu0
      %v1678 = vadd.f32 0.0, %v1677
      %v1679 = vpop.f32.mrf.mxu0
      %1680 = vmatprep.mubr.bf16.mxu0 0
      %1681 = vmatmul.mubr.bf16.gmra.mxu0 %v342
      %v1682 = vpop.f32.mrf.mxu0
      %v1683 = vadd.f32 0.0, %v1682
      %v1684 = vpop.f32.mrf.mxu0
      %v1685 = vpop.f32.mrf.mxu0
      %v1686 = vadd.f32 0.0, %v1685
      %v1687 = vpop.f32.mrf.mxu0
      %1688 = vmatprep.mubr.bf16.mxu0 0
      %1689 = vmatmul.mubr.bf16.gmra.mxu0 %v345
      %v1690 = vpop.f32.mrf.mxu0
      %v1691 = vadd.f32 0.0, %v1690
      %v1692 = vpop.f32.mrf.mxu0
      %v1693 = vpop.f32.mrf.mxu0
      %v1694 = vadd.f32 0.0, %v1693
      %v1695 = vpop.f32.mrf.mxu0
      %1696 = vmatprep.mubr.bf16.mxu0 0
      %1697 = vmatmul.mubr.bf16.gmra.mxu0 %v348
      %v1698 = vpop.f32.mrf.mxu0
      %v1699 = vadd.f32 0.0, %v1698
      %v1700 = vpop.f32.mrf.mxu0
      %v1701 = vpop.f32.mrf.mxu0
      %v1702 = vadd.f32 0.0, %v1701
      %v1703 = vpop.f32.mrf.mxu0
      %1704 = vmatprep.mubr.bf16.mxu0 0
      %1705 = vmatmul.mubr.bf16.gmra.mxu0 %v351
      %v1706 = vpop.f32.mrf.mxu0
      %v1707 = vadd.f32 0.0, %v1706
      %v1708 = vpop.f32.mrf.mxu0
      %v1709 = vpop.f32.mrf.mxu0
      %v1710 = vadd.f32 0.0, %v1709
      %v1711 = vpop.f32.mrf.mxu0
      %1712 = vmatprep.mubr.bf16.mxu0 0
      %1713 = vmatmul.mubr.bf16.gmra.mxu0 %v354
      %v1714 = vpop.f32.mrf.mxu0
      %v1715 = vadd.f32 0.0, %v1714
      %v1716 = vpop.f32.mrf.mxu0
      %v1717 = vpop.f32.mrf.mxu0
      %v1718 = vadd.f32 0.0, %v1717
      %v1719 = vpop.f32.mrf.mxu0
      %1720 = vmatprep.mubr.bf16.mxu0 0
      %1721 = vmatmul.mubr.bf16.gmra.mxu0 %v357
      %v1722 = vpop.f32.mrf.mxu0
      %v1723 = vadd.f32 0.0, %v1722
      %v1724 = vpop.f32.mrf.mxu0
      %v1725 = vpop.f32.mrf.mxu0
      %v1726 = vadd.f32 0.0, %v1725
      %v1727 = vpop.f32.mrf.mxu0
      %1728 = vmatprep.mubr.bf16.mxu0 0
      %1729 = vmatmul.mubr.bf16.gmra.mxu0 %v360
      %v1730 = vpop.f32.mrf.mxu0
      %v1731 = vadd.f32 0.0, %v1730
      %v1732 = vpop.f32.mrf.mxu0
      %v1733 = vpop.f32.mrf.mxu0
      %v1734 = vadd.f32 0.0, %v1733
      %v1735 = vpop.f32.mrf.mxu0
      %1736 = vmatprep.mubr.bf16.mxu0 0
      %1737 = vmatmul.mubr.bf16.gmra.mxu0 %v363
      %v1738 = vpop.f32.mrf.mxu0
      %v1739 = vadd.f32 0.0, %v1738
      %v1740 = vpop.f32.mrf.mxu0
      %v1741 = vpop.f32.mrf.mxu0
      %v1742 = vadd.f32 0.0, %v1741
      %v1743 = vpop.f32.mrf.mxu0
      %1744 = vmatprep.mubr.bf16.mxu0 0
      %1745 = vmatmul.mubr.bf16.gmra.mxu0 %v366
      %v1746 = vpop.f32.mrf.mxu0
      %v1747 = vadd.f32 0.0, %v1746
      %v1748 = vpop.f32.mrf.mxu0
      %v1749 = vpop.f32.mrf.mxu0
      %v1750 = vadd.f32 0.0, %v1749
      %v1751 = vpop.f32.mrf.mxu0
      %1752 = vmatprep.mubr.bf16.mxu0 0
      %1753 = vmatmul.mubr.bf16.gmra.mxu0 %v369
      %v1754 = vpop.f32.mrf.mxu0
      %v1755 = vadd.f32 0.0, %v1754
      %v1756 = vpop.f32.mrf.mxu0
      %v1757 = vpop.f32.mrf.mxu0
      %v1758 = vadd.f32 0.0, %v1757
      %v1759 = vpop.f32.mrf.mxu0
      %1760 = vmatprep.mubr.bf16.mxu0 0
      %1761 = vmatmul.mubr.bf16.gmra.mxu0 %v372
      %v1762 = vpop.f32.mrf.mxu0
      %v1763 = vadd.f32 0.0, %v1762
      %v1764 = vpop.f32.mrf.mxu0
      %v1765 = vpop.f32.mrf.mxu0
      %v1766 = vadd.f32 0.0, %v1765
      %v1767 = vpop.f32.mrf.mxu0
      %1768 = vmatprep.mubr.bf16.mxu0 0
      %1769 = vmatmul.mubr.bf16.gmra.mxu0 %v375
      %v1770 = vpop.f32.mrf.mxu0
      %v1771 = vadd.f32 0.0, %v1770
      %v1772 = vpop.f32.mrf.mxu0
      %v1773 = vpop.f32.mrf.mxu0
      %v1774 = vadd.f32 0.0, %v1773
      %v1775 = vpop.f32.mrf.mxu0
      %1776 = vmatprep.mubr.bf16.mxu0 0
      %1777 = vmatmul.mubr.bf16.gmra.mxu0 %v378
      %v1778 = vpop.f32.mrf.mxu0
      %v1779 = vadd.f32 0.0, %v1778
      %v1780 = vpop.f32.mrf.mxu0
      %v1781 = vpop.f32.mrf.mxu0
      %v1782 = vadd.f32 0.0, %v1781
      %v1783 = vpop.f32.mrf.mxu0
      %1784 = vmatprep.mubr.bf16.mxu0 0
      %1785 = vmatmul.mubr.bf16.gmra.mxu0 %v381
      %v1786 = vpop.f32.mrf.mxu0
      %v1787 = vadd.f32 0.0, %v1786
      %v1788 = vpop.f32.mrf.mxu0
      %v1789 = vpop.f32.mrf.mxu0
      %v1790 = vadd.f32 0.0, %v1789
      %v1791 = vpop.f32.mrf.mxu0
      %1792 = vmatprep.mubr.bf16.mxu0 0
      %1793 = vmatmul.mubr.bf16.gmra.mxu0 %v913
      %v1794 = vpop.f32.mrf.mxu0
      %v1795 = vadd.f32 0.0, %v1794
      %v1796 = vpop.f32.mrf.mxu0
      %v1797 = vpop.f32.mrf.mxu0
      %v1798 = vadd.f32 0.0, %v1797
      %v1799 = vpop.f32.mrf.mxu0
      %1800 = vmatprep.mubr.bf16.mxu0 0
      %1801 = vmatmul.mubr.bf16.gmra.mxu0 %v1234
      %v1802 = vpop.f32.mrf.mxu0
      %v1803 = vadd.f32 0.0, %v1802
      %v1804 = vpop.f32.mrf.mxu0
      %v1805 = vpop.f32.mrf.mxu0
      %v1806 = vadd.f32 0.0, %v1805
      %v1807 = vpop.f32.mrf.mxu0
      %1808 = vmatprep.mubr.bf16.mxu0 0
      %1809 = vmatmul.mubr.bf16.gmra.mxu0 %v1555
      %v1810 = vpop.f32.mrf.mxu0
      %v1811 = vadd.f32 0.0, %v1810
      %v1812 = vpop.f32.mrf.mxu0
      %v1813 = vpop.f32.mrf.mxu0
      %v1814 = vadd.f32 0.0, %v1813
      %v1815 = vpop.f32.mrf.mxu0
      %1816 = vdwg.mxu0
      %v1817 = vadd.f32 %v1496, %v1595
      %v1818 = vadd.f32 %v1497, %v1598
      %v1819 = vadd.f32 %v1498, %v1603
      %v1820 = vadd.f32 %v1499, %v1606
      %v1821 = vadd.f32 %v1500, %v1611
      %v1822 = vadd.f32 %v1501, %v1614
      %v1823 = vadd.f32 %v1502, %v1619
      %v1824 = vadd.f32 %v1503, %v1622
      %v1825 = vadd.f32 %v1504, %v1627
      %v1826 = vadd.f32 %v1505, %v1630
      %v1827 = vadd.f32 %v1506, %v1635
      %v1828 = vadd.f32 %v1507, %v1638
      %v1829 = vadd.f32 %v1508, %v1643
      %v1830 = vadd.f32 %v1509, %v1646
      %v1831 = vadd.f32 %v1510, %v1651
      %v1832 = vadd.f32 %v1511, %v1654
      %v1833 = vadd.f32 %v1512, %v1659
      %v1834 = vadd.f32 %v1513, %v1662
      %v1835 = vadd.f32 %v1514, %v1667
      %v1836 = vadd.f32 %v1515, %v1670
      %v1837 = vadd.f32 %v1516, %v1675
      %v1838 = vadd.f32 %v1517, %v1678
      %v1839 = vadd.f32 %v1518, %v1683
      %v1840 = vadd.f32 %v1519, %v1686
      %v1841 = vadd.f32 %v1520, %v1691
      %v1842 = vadd.f32 %v1521, %v1694
      %v1843 = vadd.f32 %v1522, %v1699
      %v1844 = vadd.f32 %v1523, %v1702
      %v1845 = vadd.f32 %v1524, %v1707
      %v1846 = vadd.f32 %v1525, %v1710
      %v1847 = vadd.f32 %v1526, %v1715
      %v1848 = vadd.f32 %v1527, %v1718
      %v1849 = vadd.f32 %v1528, %v1723
      %v1850 = vadd.f32 %v1529, %v1726
      %v1851 = vadd.f32 %v1530, %v1731
      %v1852 = vadd.f32 %v1531, %v1734
      %v1853 = vadd.f32 %v1532, %v1739
      %v1854 = vadd.f32 %v1533, %v1742
      %v1855 = vadd.f32 %v1534, %v1747
      %v1856 = vadd.f32 %v1535, %v1750
      %v1857 = vadd.f32 %v1536, %v1755
      %v1858 = vadd.f32 %v1537, %v1758
      %v1859 = vadd.f32 %v1538, %v1763
      %v1860 = vadd.f32 %v1539, %v1766
      %v1861 = vadd.f32 %v1540, %v1771
      %v1862 = vadd.f32 %v1541, %v1774
      %v1863 = vadd.f32 %v1542, %v1779
      %v1864 = vadd.f32 %v1543, %v1782
      %v1865 = vadd.f32 %v1544, %v1787
      %v1866 = vadd.f32 %v1545, %v1790
      %v1867 = vadd.f32 %v1546, %v1795
      %v1868 = vadd.f32 %v1547, %v1798
      %v1869 = vadd.f32 %v1548, %v1803
      %v1870 = vadd.f32 %v1549, %v1806
      %v1871 = vadd.f32 %v1550, %v1811
      %v1872 = vadd.f32 %v1551, %v1814
      %v1873 = vld [vmem:[%s2] sm:$0x1]
      %v1875 = vlaneseq
      %v1876 = vshrl.u32 %v1875, 7
      %v1877 = vsub.s32 0, %v1876
      %v1878 = vrot.slane %v1873, %v1877
      %v1880 = vmul.f32 %v1817, %v1878
      %v1881 = vmul.f32 %v1818, %v1878
      %v1882 = vmul.f32 %v1819, %v1878
      %v1883 = vmul.f32 %v1820, %v1878
      %v1884 = vmul.f32 %v1821, %v1878
      %v1885 = vmul.f32 %v1822, %v1878
      %v1886 = vmul.f32 %v1823, %v1878
      %v1887 = vmul.f32 %v1824, %v1878
      %v1888 = vmul.f32 %v1825, %v1878
      %v1889 = vmul.f32 %v1826, %v1878
      %v1890 = vmul.f32 %v1827, %v1878
      %v1891 = vmul.f32 %v1828, %v1878
      %v1892 = vmul.f32 %v1829, %v1878
      %v1893 = vmul.f32 %v1830, %v1878
      %v1894 = vmul.f32 %v1831, %v1878
      %v1895 = vmul.f32 %v1832, %v1878
      %v1896 = vmul.f32 %v1833, %v1878
      %v1897 = vmul.f32 %v1834, %v1878
      %v1898 = vmul.f32 %v1835, %v1878
      %v1899 = vmul.f32 %v1836, %v1878
      %v1900 = vmul.f32 %v1837, %v1878
      %v1901 = vmul.f32 %v1838, %v1878
      %v1902 = vmul.f32 %v1839, %v1878
      %v1903 = vmul.f32 %v1840, %v1878
      %v1904 = vmul.f32 %v1841, %v1878
      %v1905 = vmul.f32 %v1842, %v1878
      %v1906 = vmul.f32 %v1843, %v1878
      %v1907 = vmul.f32 %v1844, %v1878
      %v1908 = vmul.f32 %v1845, %v1878
      %v1909 = vmul.f32 %v1846, %v1878
      %v1910 = vmul.f32 %v1847, %v1878
      %v1911 = vmul.f32 %v1848, %v1878
      %v1912 = vmul.f32 %v1849, %v1878
      %v1913 = vmul.f32 %v1850, %v1878
      %v1914 = vmul.f32 %v1851, %v1878
      %v1915 = vmul.f32 %v1852, %v1878
      %v1916 = vmul.f32 %v1853, %v1878
      %v1917 = vmul.f32 %v1854, %v1878
      %v1918 = vmul.f32 %v1855, %v1878
      %v1919 = vmul.f32 %v1856, %v1878
      %v1920 = vmul.f32 %v1857, %v1878
      %v1921 = vmul.f32 %v1858, %v1878
      %v1922 = vmul.f32 %v1859, %v1878
      %v1923 = vmul.f32 %v1860, %v1878
      %v1924 = vmul.f32 %v1861, %v1878
      %v1925 = vmul.f32 %v1862, %v1878
      %v1926 = vmul.f32 %v1863, %v1878
      %v1927 = vmul.f32 %v1864, %v1878
      %v1928 = vmul.f32 %v1865, %v1878
      %v1929 = vmul.f32 %v1866, %v1878
      %v1930 = vmul.f32 %v1867, %v1878
      %v1931 = vmul.f32 %v1868, %v1878
      %v1932 = vmul.f32 %v1869, %v1878
      %v1933 = vmul.f32 %v1870, %v1878
      %v1934 = vmul.f32 %v1871, %v1878
      %v1935 = vmul.f32 %v1872, %v1878
      %v1936 = vld [vmem:[%s3] sm:$0x1]
      %v1938 = vlaneseq
      %v1939 = vshrl.u32 %v1938, 7
      %v1940 = vsub.s32 0, %v1939
      %v1941 = vrot.slane %v1936, %v1940
      %v1943 = vadd.f32 %v1880, %v1941
      %v1944 = vadd.f32 %v1881, %v1941
      %v1945 = vadd.f32 %v1882, %v1941
      %v1946 = vadd.f32 %v1883, %v1941
      %v1947 = vadd.f32 %v1884, %v1941
      %v1948 = vadd.f32 %v1885, %v1941
      %v1949 = vadd.f32 %v1886, %v1941
      %v1950 = vadd.f32 %v1887, %v1941
      %v1951 = vadd.f32 %v1888, %v1941
      %v1952 = vadd.f32 %v1889, %v1941
      %v1953 = vadd.f32 %v1890, %v1941
      %v1954 = vadd.f32 %v1891, %v1941
      %v1955 = vadd.f32 %v1892, %v1941
      %v1956 = vadd.f32 %v1893, %v1941
      %v1957 = vadd.f32 %v1894, %v1941
      %v1958 = vadd.f32 %v1895, %v1941
      %v1959 = vadd.f32 %v1896, %v1941
      %v1960 = vadd.f32 %v1897, %v1941
      %v1961 = vadd.f32 %v1898, %v1941
      %v1962 = vadd.f32 %v1899, %v1941
      %v1963 = vadd.f32 %v1900, %v1941
      %v1964 = vadd.f32 %v1901, %v1941
      %v1965 = vadd.f32 %v1902, %v1941
      %v1966 = vadd.f32 %v1903, %v1941
      %v1967 = vadd.f32 %v1904, %v1941
      %v1968 = vadd.f32 %v1905, %v1941
      %v1969 = vadd.f32 %v1906, %v1941
      %v1970 = vadd.f32 %v1907, %v1941
      %v1971 = vadd.f32 %v1908, %v1941
      %v1972 = vadd.f32 %v1909, %v1941
      %v1973 = vadd.f32 %v1910, %v1941
      %v1974 = vadd.f32 %v1911, %v1941
      %v1975 = vadd.f32 %v1912, %v1941
      %v1976 = vadd.f32 %v1913, %v1941
      %v1977 = vadd.f32 %v1914, %v1941
      %v1978 = vadd.f32 %v1915, %v1941
      %v1979 = vadd.f32 %v1916, %v1941
      %v1980 = vadd.f32 %v1917, %v1941
      %v1981 = vadd.f32 %v1918, %v1941
      %v1982 = vadd.f32 %v1919, %v1941
      %v1983 = vadd.f32 %v1920, %v1941
      %v1984 = vadd.f32 %v1921, %v1941
      %v1985 = vadd.f32 %v1922, %v1941
      %v1986 = vadd.f32 %v1923, %v1941
      %v1987 = vadd.f32 %v1924, %v1941
      %v1988 = vadd.f32 %v1925, %v1941
      %v1989 = vadd.f32 %v1926, %v1941
      %v1990 = vadd.f32 %v1927, %v1941
      %v1991 = vadd.f32 %v1928, %v1941
      %v1992 = vadd.f32 %v1929, %v1941
      %v1993 = vadd.f32 %v1930, %v1941
      %v1994 = vadd.f32 %v1931, %v1941
      %v1995 = vadd.f32 %v1932, %v1941
      %v1996 = vadd.f32 %v1933, %v1941
      %v1997 = vadd.f32 %v1934, %v1941
      %v1998 = vadd.f32 %v1935, %v1941
      %v1999 = vmax.f32 %v1943, 0.0
      %v2000 = vmax.f32 %v1944, 0.0
      %v2001 = vmax.f32 %v1945, 0.0
      %v2002 = vmax.f32 %v1946, 0.0
      %v2003 = vmax.f32 %v1947, 0.0
      %v2004 = vmax.f32 %v1948, 0.0
      %v2005 = vmax.f32 %v1949, 0.0
      %v2006 = vmax.f32 %v1950, 0.0
      %v2007 = vmax.f32 %v1951, 0.0
      %v2008 = vmax.f32 %v1952, 0.0
      %v2009 = vmax.f32 %v1953, 0.0
      %v2010 = vmax.f32 %v1954, 0.0
      %v2011 = vmax.f32 %v1955, 0.0
      %v2012 = vmax.f32 %v1956, 0.0
      %v2013 = vmax.f32 %v1957, 0.0
      %v2014 = vmax.f32 %v1958, 0.0
      %v2015 = vmax.f32 %v1959, 0.0
      %v2016 = vmax.f32 %v1960, 0.0
      %v2017 = vmax.f32 %v1961, 0.0
      %v2018 = vmax.f32 %v1962, 0.0
      %v2019 = vmax.f32 %v1963, 0.0
      %v2020 = vmax.f32 %v1964, 0.0
      %v2021 = vmax.f32 %v1965, 0.0
      %v2022 = vmax.f32 %v1966, 0.0
      %v2023 = vmax.f32 %v1967, 0.0
      %v2024 = vmax.f32 %v1968, 0.0
      %v2025 = vmax.f32 %v1969, 0.0
      %v2026 = vmax.f32 %v1970, 0.0
      %v2027 = vmax.f32 %v1971, 0.0
      %v2028 = vmax.f32 %v1972, 0.0
      %v2029 = vmax.f32 %v1973, 0.0
      %v2030 = vmax.f32 %v1974, 0.0
      %v2031 = vmax.f32 %v1975, 0.0
      %v2032 = vmax.f32 %v1976, 0.0
      %v2033 = vmax.f32 %v1977, 0.0
      %v2034 = vmax.f32 %v1978, 0.0
      %v2035 = vmax.f32 %v1979, 0.0
      %v2036 = vmax.f32 %v1980, 0.0
      %v2037 = vmax.f32 %v1981, 0.0
      %v2038 = vmax.f32 %v1982, 0.0
      %v2039 = vmax.f32 %v1983, 0.0
      %v2040 = vmax.f32 %v1984, 0.0
      %v2041 = vmax.f32 %v1985, 0.0
      %v2042 = vmax.f32 %v1986, 0.0
      %v2043 = vmax.f32 %v1987, 0.0
      %v2044 = vmax.f32 %v1988, 0.0
      %v2045 = vmax.f32 %v1989, 0.0
      %v2046 = vmax.f32 %v1990, 0.0
      %v2047 = vmax.f32 %v1991, 0.0
      %v2048 = vmax.f32 %v1992, 0.0
      %v2049 = vmax.f32 %v1993, 0.0
      %v2050 = vmax.f32 %v1994, 0.0
      %v2051 = vmax.f32 %v1995, 0.0
      %v2052 = vmax.f32 %v1996, 0.0
      %v2053 = vmax.f32 %v1997, 0.0
      %v2054 = vmax.f32 %v1998, 0.0
      %v2055 = vmax.f32 %v1999, %v2001
      %v2056 = vmax.f32 %v2000, %v2002
      %v2057 = vmax.f32 %v2003, %v2005
      %v2058 = vmax.f32 %v2004, %v2006
      %v2059 = vmax.f32 %v2007, %v2009
      %v2060 = vmax.f32 %v2008, %v2010
      %v2061 = vmax.f32 %v2011, %v2013
      %v2062 = vmax.f32 %v2012, %v2014
      %v2063 = vmax.f32 %v2015, %v2017
      %v2064 = vmax.f32 %v2016, %v2018
      %v2065 = vmax.f32 %v2019, %v2021
      %v2066 = vmax.f32 %v2020, %v2022
      %v2067 = vmax.f32 %v2023, %v2025
      %v2068 = vmax.f32 %v2024, %v2026
      %v2069 = vmax.f32 %v2027, %v2029
      %v2070 = vmax.f32 %v2028, %v2030
      %v2071 = vmax.f32 %v2031, %v2033
      %v2072 = vmax.f32 %v2032, %v2034
      %v2073 = vmax.f32 %v2035, %v2037
      %v2074 = vmax.f32 %v2036, %v2038
      %v2075 = vmax.f32 %v2039, %v2041
      %v2076 = vmax.f32 %v2040, %v2042
      %v2077 = vmax.f32 %v2043, %v2045
      %v2078 = vmax.f32 %v2044, %v2046
      %v2079 = vmax.f32 %v2047, %v2049
      %v2080 = vmax.f32 %v2048, %v2050
      %v2081 = vmax.f32 %v2051, %v2053
      %v2082 = vmax.f32 %v2052, %v2054
      %vm2083 = vcmask 130048
      %2084 = vst.msk [vmem:[%s197] sm:$0xff] %vm2083, %v2055
      %2085 = vst.msk [vmem:[%s197 + $0x8] sm:$0xff] %vm2083, %v2056
      %2086 = vst.msk [vmem:[%s197 + $0x10] sm:$0xff] %vm2083, %v2057
      %2087 = vst.msk [vmem:[%s197 + $0x18] sm:$0xff] %vm2083, %v2058
      %2088 = vst.msk [vmem:[%s197 + $0x20] sm:$0xff] %vm2083, %v2059
      %2089 = vst.msk [vmem:[%s197 + $0x28] sm:$0xff] %vm2083, %v2060
      %2090 = vst.msk [vmem:[%s197 + $0x30] sm:$0xff] %vm2083, %v2061
      %2091 = vst.msk [vmem:[%s197 + $0x38] sm:$0xff] %vm2083, %v2062
      %2092 = vst.msk [vmem:[%s197 + $0x40] sm:$0xff] %vm2083, %v2063
      %2093 = vst.msk [vmem:[%s197 + $0x48] sm:$0xff] %vm2083, %v2064
      %2094 = vst.msk [vmem:[%s197 + $0x50] sm:$0xff] %vm2083, %v2065
      %2095 = vst.msk [vmem:[%s197 + $0x58] sm:$0xff] %vm2083, %v2066
      %2096 = vst.msk [vmem:[%s197 + $0x60] sm:$0xff] %vm2083, %v2067
      %2097 = vst.msk [vmem:[%s197 + $0x68] sm:$0xff] %vm2083, %v2068
      %2098 = vst.msk [vmem:[%s197 + $0x70] sm:$0xff] %vm2083, %v2069
      %2099 = vst.msk [vmem:[%s197 + $0x78] sm:$0xff] %vm2083, %v2070
      %2100 = vst.msk [vmem:[%s197 + $0x80] sm:$0xff] %vm2083, %v2071
      %2101 = vst.msk [vmem:[%s197 + $0x88] sm:$0xff] %vm2083, %v2072
      %2102 = vst.msk [vmem:[%s197 + $0x90] sm:$0xff] %vm2083, %v2073
      %2103 = vst.msk [vmem:[%s197 + $0x98] sm:$0xff] %vm2083, %v2074
      %2104 = vst.msk [vmem:[%s197 + $0xa0] sm:$0xff] %vm2083, %v2075
      %2105 = vst.msk [vmem:[%s197 + $0xa8] sm:$0xff] %vm2083, %v2076
      %2106 = vst.msk [vmem:[%s197 + $0xb0] sm:$0xff] %vm2083, %v2077
      %2107 = vst.msk [vmem:[%s197 + $0xb8] sm:$0xff] %vm2083, %v2078
      %2108 = vst.msk [vmem:[%s197 + $0xc0] sm:$0xff] %vm2083, %v2079
      %2109 = vst.msk [vmem:[%s197 + $0xc8] sm:$0xff] %vm2083, %v2080
      %2110 = vst.msk [vmem:[%s197 + $0xd0] sm:$0xff] %vm2083, %v2081
      %2111 = vst.msk [vmem:[%s197 + $0xd8] sm:$0xff] %vm2083, %v2082
      %p2112 = scmp.lt.s32.totalorder %s15, 3
      %s2113 = scalar_select %p2112, %s15, 3
      %s2114 = smul.addr %s2113, 28
      %s2115 = smul.addr %s2114, 8
      %s2116 = scalar_lea.vmem %s4, %s2115
      // Predicated region
      $region37: #{imagenet_large_frames_forward.5} parent=35 // pred_check
        %p2117 = pneg %p122
      $region38: #{imagenet_large_frames_forward.5} parent=35 // pred_check_branch
        %2119 = sbr.rel (%p2117) target = $region40
      $region39: #{imagenet_large_frames_forward.5} parent=35 // pred_region
        _
      $region40: #{imagenet_large_frames_forward.5} parent=35 // pred_fallthru
        _
    $region36: #{imagenet_large_frames_forward.5} parent=5 // pred_fallthru
      _
    %p2120 = scmp.le.s32.totalorder 2, %s10
    // Predicated region
    $region41: #{imagenet_large_frames_forward.5} parent=5 // pred_check
      %p2121 = pneg %p2120
    $region42: #{imagenet_large_frames_forward.5} parent=5 // pred_check_branch
      %2123 = sbr.rel (%p2121) target = $region44
    $region43: #{imagenet_large_frames_forward.5} parent=5 // pred_region
      %s2124 = ssub.s32 %s10, 2
      // Predicated region
      $region45: #{imagenet_large_frames_forward.5} parent=43 // pred_check
        %p2125 = pneg %p128
      $region46: #{imagenet_large_frames_forward.5} parent=43 // pred_check_branch
        %2127 = sbr.rel (%p2125) target = $region48
      $region47: #{imagenet_large_frames_forward.5} parent=43 // pred_region
        %p2128 = scmp.lt.s32.totalorder %s16, 3
        %s2129 = scalar_select %p2128, %s16, 3
        %s2130 = smul.addr %s2129, 28
        %s2131 = smul.addr %s2130, 8
        %s2132 = scalar_lea.vmem %s4, %s2131
      $region48: #{imagenet_large_frames_forward.5} parent=43 // pred_fallthru
        _
    $region44: #{imagenet_large_frames_forward.5} parent=5 // pred_fallthru
      _
  $region6: #{imagenet_large_frames_forward.5} parent=0 // loop_footer
    %s14 = sadd.s32 1, %s10
  $region7: #{imagenet_large_frames_forward.5} parent=0 // loop_footer_branch
    %9 = sbr.rel target = $region3
  $region8: #{imagenet_large_frames_forward.5} parent=0 // loop_exit
    _

// kernel: imagenet_large_frames_forward.6
$region0: #{imagenet_large_frames_forward.6}
  #allocation0 [shape = 'u32[]', space=smem, size = 0x4, offset = 0x4, fixed_abs, tag = 'smem constant byte address 0x4 - core index']
  #allocation1 [shape = 'u32[144,128]{1,0:T(1,128)}', space=vmem, size = 0x12000, scoped, tag = 'internal scratch']
  #allocation2 [shape = 'f32[6,16,32]{2,1,0:T(8,128)}', space=vmem, size = 0xc000, scoped, tag = 'scratch operand']
  %s0 = inlined_call_operand.vmem [shape: f32[4,16,16,48], index: 0, kind: input, shape index: {}]
  %s1 = inlined_call_operand.vmem [shape: bf16[5,48,32], index: 1, kind: input, shape index: {}]
  %s2 = inlined_call_operand.vmem [shape: f32[1,32], index: 2, kind: input, shape index: {}]
  %s3 = inlined_call_operand.vmem [shape: f32[1,32], index: 3, kind: input, shape index: {}]
  %s4 = inlined_call_operand.vmem [shape: f32[4,6,8,32], index: 4, kind: output, shape index: {}]
  %s5 = sld [smem:[#allocation0]]
  $region49: #{imagenet_large_frames_forward.6} parent=0
    _
  %s7 = ssub.s32 1, %s5
  %s8 = scalar_select 0, %s7, %s5
  loop: start=0, step=1, limit=6
  $region2: #{imagenet_large_frames_forward.6} parent=0 // loop_pre_header
    _
  $region3: #{imagenet_large_frames_forward.6} parent=0 // loop_header
    %s10 = sphi 0, %s14
    %p11 = scmp.ge.s32.totalorder %s10, 6
    %s20 = sphi 0, %s22
    %s23 = sphi 0, %s20
    %s24 = sphi 0, %s23
    %s40 = sphi 0, %s24
    %s44 = sphi 0, %s44
    %s46 = sphi 0, %s44
    %s47 = sphi 0, %s46
    %s61 = sphi 0, %s47
    %s65 = sphi 0, %s65
    %s67 = sphi 0, %s65
    %s68 = sphi 0, %s67
    %s82 = sphi 0, %s68
    %s86 = sphi 0, %s86
    %s88 = sphi 0, %s86
    %s89 = sphi 0, %s88
    %s103 = sphi 0, %s89
    %s109 = sphi 0, %s111
    %s112 = sphi 0, %s109
    %s113 = sphi 0, %s112
    %s129 = sphi 0, %s113
  $region4: #{imagenet_large_frames_forward.6} parent=0 // loop_header_branch
    %13 = sbr.rel (%p11) target = $region8
  $region5: #{imagenet_large_frames_forward.6} parent=0 // loop_body
    %s15 = ssub.s32 %s10, 1
    %s16 = ssub.s32 %s10, 2
    %s17 = sadd.s32 %s10, 1
    %s18 = ssub.s32 %s10, %s17
    %p19 = scmp.eq.s32.totalorder %s18, 0
    %s21 = sadd.s32 %s20, 1
    %s22 = scalar_select %p19, %s20, %s21
    %p25 = pneg %p19
    %p26 = scmp.eq.s32.totalorder %s10, 3
    %p27 = por %p25, %p26
    %p28 = scmp.ne.s32.totalorder %s20, %s23
    %p29 = scmp.eq.s32.totalorder %s10, 0
    %p30 = por %p28, %p29
    %p31 = scmp.ne.s32.totalorder %s20, %s23
    %p32 = scmp.eq.s32.totalorder %s15, 3
    %p33 = por %p31, %p32
    %p34 = scmp.ne.s32.totalorder %s23, %s24
    %p35 = scmp.eq.s32.totalorder %s15, 0
    %p36 = por %p34, %p35
    %p37 = scmp.ne.s32.totalorder %s23, %s24
    %p38 = scmp.eq.s32.totalorder %s16, 3
    %p39 = por %p37, %p38
    %p41 = scmp.ne.s32.totalorder %s24, %s40
    %p42 = scmp.eq.s32.totalorder %s16, 0
    %p43 = por %p41, %p42
    %s45 = sadd.s32 %s44, 1
    %p48 = scmp.eq.s32.totalorder %s10, 3
    %p49 = scmp.ne.s32.totalorder %s44, %s46
    %p50 = scmp.eq.s32.totalorder %s10, 0
    %p51 = por %p49, %p50
    %p52 = scmp.ne.s32.totalorder %s44, %s46
    %p53 = scmp.eq.s32.totalorder %s15, 3
    %p54 = por %p52, %p53
    %p55 = scmp.ne.s32.totalorder %s46, %s47
    %p56 = scmp.eq.s32.totalorder %s15, 0
    %p57 = por %p55, %p56
    %p58 = scmp.ne.s32.totalorder %s46, %s47
    %p59 = scmp.eq.s32.totalorder %s16, 3
    %p60 = por %p58, %p59
    %p62 = scmp.ne.s32.totalorder %s47, %s61
    %p63 = scmp.eq.s32.totalorder %s16, 0
    %p64 = por %p62, %p63
    %s66 = sadd.s32 %s65, 1
    %p69 = scmp.eq.s32.totalorder %s10, 3
    %p70 = scmp.ne.s32.totalorder %s65, %s67
    %p71 = scmp.eq.s32.totalorder %s10, 0
    %p72 = por %p70, %p71
    %p73 = scmp.ne.s32.totalorder %s65, %s67
    %p74 = scmp.eq.s32.totalorder %s15, 3
    %p75 = por %p73, %p74
    %p76 = scmp.ne.s32.totalorder %s67, %s68
    %p77 = scmp.eq.s32.totalorder %s15, 0
    %p78 = por %p76, %p77
    %p79 = scmp.ne.s32.totalorder %s67, %s68
    %p80 = scmp.eq.s32.totalorder %s16, 3
    %p81 = por %p79, %p80
    %p83 = scmp.ne.s32.totalorder %s68, %s82
    %p84 = scmp.eq.s32.totalorder %s16, 0
    %p85 = por %p83, %p84
    %s87 = sadd.s32 %s86, 1
    %p90 = scmp.eq.s32.totalorder %s10, 3
    %p91 = scmp.ne.s32.totalorder %s86, %s88
    %p92 = scmp.eq.s32.totalorder %s10, 0
    %p93 = por %p91, %p92
    %p94 = scmp.ne.s32.totalorder %s86, %s88
    %p95 = scmp.eq.s32.totalorder %s15, 3
    %p96 = por %p94, %p95
    %p97 = scmp.ne.s32.totalorder %s88, %s89
    %p98 = scmp.eq.s32.totalorder %s15, 0
    %p99 = por %p97, %p98
    %p100 = scmp.ne.s32.totalorder %s88, %s89
    %p101 = scmp.eq.s32.totalorder %s16, 3
    %p102 = por %p100, %p101
    %p104 = scmp.ne.s32.totalorder %s89, %s103
    %p105 = scmp.eq.s32.totalorder %s16, 0
    %p106 = por %p104, %p105
    %s107 = ssub.s32 %s10, %s17
    %p108 = scmp.eq.s32.totalorder %s107, 0
    %s110 = sadd.s32 %s109, 1
    %s111 = scalar_select %p108, %s109, %s110
    %p114 = pneg %p108
    %p115 = scmp.eq.s32.totalorder %s10, 3
    %p116 = por %p114, %p115
    %p117 = scmp.ne.s32.totalorder %s109, %s112
    %p118 = scmp.eq.s32.totalorder %s10, 0
    %p119 = por %p117, %p118
    %p120 = scmp.ne.s32.totalorder %s109, %s112
    %p121 = scmp.eq.s32.totalorder %s15, 3
    %p122 = por %p120, %p121
    %p123 = scmp.ne.s32.totalorder %s112, %s113
    %p124 = scmp.eq.s32.totalorder %s15, 0
    %p125 = por %p123, %p124
    %p126 = scmp.ne.s32.totalorder %s112, %s113
    %p127 = scmp.eq.s32.totalorder %s16, 3
    %p128 = por %p126, %p127
    %p130 = scmp.ne.s32.totalorder %s113, %s129
    %p131 = scmp.eq.s32.totalorder %s16, 0
    %p132 = por %p130, %p131
    %p133 = scmp.le.s32.totalorder 1, %s10
    %p134 = scmp.lt.s32.totalorder %s10, 5
    %p135 = pnand %p133, %p134
    %p136 = pneg %p135
    // Predicated region
    $region9: #{imagenet_large_frames_forward.6} parent=5 // pred_check
      _
    $region10: #{imagenet_large_frames_forward.6} parent=5 // pred_check_branch
      %138 = sbr.rel (%p135) target = $region12
    $region11: #{imagenet_large_frames_forward.6} parent=5 // pred_region
      %s139 = ssub.s32 %s10, 1
      // Predicated region
      $region13: #{imagenet_large_frames_forward.6} parent=11 // pred_check
        %p140 = pneg %p57
      $region14: #{imagenet_large_frames_forward.6} parent=11 // pred_check_branch
        %142 = sbr.rel (%p140) target = $region16
      $region15: #{imagenet_large_frames_forward.6} parent=11 // pred_region
        _
      $region16: #{imagenet_large_frames_forward.6} parent=11 // pred_fallthru
        _
      // Predicated region
      $region17: #{imagenet_large_frames_forward.6} parent=11 // pred_check
        %p143 = pneg %p78
      $region18: #{imagenet_large_frames_forward.6} parent=11 // pred_check_branch
        %145 = sbr.rel (%p143) target = $region20
      $region19: #{imagenet_large_frames_forward.6} parent=11 // pred_region
        _
      $region20: #{imagenet_large_frames_forward.6} parent=11 // pred_fallthru
        _
      // Predicated region
      $region21: #{imagenet_large_frames_forward.6} parent=11 // pred_check
        %p146 = pneg %p99
      $region22: #{imagenet_large_frames_forward.6} parent=11 // pred_check_branch
        %148 = sbr.rel (%p146) target = $region24
      $region23: #{imagenet_large_frames_forward.6} parent=11 // pred_region
        _
      $region24: #{imagenet_large_frames_forward.6} parent=11 // pred_fallthru
        _
    $region12: #{imagenet_large_frames_forward.6} parent=5 // pred_fallthru
      _
    %p149 = scmp.lt.s32.totalorder %s10, 4
    // Predicated region
    $region25: #{imagenet_large_frames_forward.6} parent=5 // pred_check
      %p150 = pneg %p149
    $region26: #{imagenet_large_frames_forward.6} parent=5 // pred_check_branch
      %152 = sbr.rel (%p150) target = $region28
    $region27: #{imagenet_large_frames_forward.6} parent=5 // pred_region
      // Predicated region
      $region29: #{imagenet_large_frames_forward.6} parent=27 // pred_check
        %p153 = pneg %p30
      $region30: #{imagenet_large_frames_forward.6} parent=27 // pred_check_branch
        %155 = sbr.rel (%p153) target = $region32
      $region31: #{imagenet_large_frames_forward.6} parent=27 // pred_region
        %p156 = scmp.lt.s32.totalorder %s10, 3
        %s157 = scalar_select %p156, %s10, 3
        %s158 = smul.addr %s157, 32
        %s159 = smul.addr %s158, 8
        %s160 = scalar_lea.vmem %s0, %s159
      $region32: #{imagenet_large_frames_forward.6} parent=27 // pred_fallthru
        _
    $region28: #{imagenet_large_frames_forward.6} parent=5 // pred_fallthru
      _
    %p161 = scmp.le.s32.totalorder 1, %s10
    %p162 = scmp.lt.s32.totalorder %s10, 5
    %p163 = pnand %p161, %p162
    %p164 = pneg %p163
    // Predicated region
    $region33: #{imagenet_large_frames_forward.6} parent=5 // pred_check
      _
    $region34: #{imagenet_large_frames_forward.6} parent=5 // pred_check_branch
      %166 = sbr.rel (%p163) target = $region36
    $region35: #{imagenet_large_frames_forward.6} parent=5 // pred_region
      %s167 = ssub.s32 %s10, 1
      %p168 = scmp.lt.s32.totalorder %s15, 3
      %s169 = scalar_select %p168, %s15, 3
      %s170 = smul.addr %s169, 32
      %s171 = smul.addr %s170, 8
      %s172 = scalar_lea.vmem %s0, %s171
      %p173 = pneg %p36
      %p174 = pneg %p33
      %p175 = pneg %p57
      %p176 = pneg %p54
      %p177 = pneg %p78
      %p178 = pneg %p75
      %p179 = pneg %p99
      %p180 = pneg %p96
      %p181 = pneg %p125
      %p182 = pneg %p122
      %p183 = scmp.lt.s32.totalorder %s15, 3
      %s184 = scalar_select %p183, %s15, 3
      %s185 = smul.addr %s184, 6
      %s186 = smul.addr %s185, 8
      %s187 = scalar_lea.vmem %s4, %s186
      %p188 = scmp.lt.s32.totalorder %s15, 3
      %s189 = scalar_select %p188, %s15, 3
      %s190 = smul.addr %s189, 32
      %s191 = smul.addr %s190, 8
      %s192 = scalar_lea.vmem %s0, %s191
      %p193 = scmp.lt.s32.totalorder %s15, 3
      %s194 = scalar_select %p193, %s15, 3
      %s195 = smul.addr %s194, 6
      %s196 = smul.addr %s195, 8
      %s197 = scalar_lea.vmem %s4, %s196
      %v199 = vld [vmem:[%s192] sm:$0xff]
      %v200 = vld [vmem:[%s192 + $0x8] sm:$0xff]
      %v201 = vld [vmem:[%s192 + $0x10] sm:$0xff]
      %v202 = vld [vmem:[%s192 + $0x18] sm:$0xff]
      %v203 = vld [vmem:[%s192 + $0x20] sm:$0xff]
      %v204 = vld [vmem:[%s192 + $0x28] sm:$0xff]
      %v205 = vld [vmem:[%s192 + $0x30] sm:$0xff]
      %v206 = vld [vmem:[%s192 + $0x38] sm:$0xff]
      %v207 = vld [vmem:[%s192 + $0x40] sm:$0xff]
      %v208 = vld [vmem:[%s192 + $0x48] sm:$0xff]
      %v209 = vld [vmem:[%s192 + $0x50] sm:$0xff]
      %v210 = vld [vmem:[%s192 + $0x58] sm:$0xff]
      %v211 = vld [vmem:[%s192 + $0x60] sm:$0xff]
      %v212 = vld [vmem:[%s192 + $0x68] sm:$0xff]
      %v213 = vld [vmem:[%s192 + $0x70] sm:$0xff]
      %v214 = vld [vmem:[%s192 + $0x78] sm:$0xff]
      %v215 = vld [vmem:[%s192 + $0x80] sm:$0xff]
      %v216 = vld [vmem:[%s192 + $0x88] sm:$0xff]
      %v217 = vld [vmem:[%s192 + $0x90] sm:$0xff]
      %v218 = vld [vmem:[%s192 + $0x98] sm:$0xff]
      %v219 = vld [vmem:[%s192 + $0xa0] sm:$0xff]
      %v220 = vld [vmem:[%s192 + $0xa8] sm:$0xff]
      %v221 = vld [vmem:[%s192 + $0xb0] sm:$0xff]
      %v222 = vld [vmem:[%s192 + $0xb8] sm:$0xff]
      %v223 = vld [vmem:[%s192 + $0xc0] sm:$0xff]
      %v224 = vld [vmem:[%s192 + $0xc8] sm:$0xff]
      %v225 = vld [vmem:[%s192 + $0xd0] sm:$0xff]
      %v226 = vld [vmem:[%s192 + $0xd8] sm:$0xff]
      %v227 = vld [vmem:[%s192 + $0xe0] sm:$0xff]
      %v228 = vld [vmem:[%s192 + $0xe8] sm:$0xff]
      %v229 = vld [vmem:[%s192 + $0xf0] sm:$0xff]
      %v230 = vld [vmem:[%s192 + $0xf8] sm:$0xff]
      %v231 = vpack.c.bf16 %v200, %v199
      %v232 = vpack.c.bf16 %v202, %v201
      %v233 = vpack.c.bf16 %v204, %v203
      %v234 = vpack.c.bf16 %v206, %v205
      %v235 = vpack.c.bf16 %v208, %v207
      %v236 = vpack.c.bf16 %v210, %v209
      %v237 = vpack.c.bf16 %v212, %v211
      %v238 = vpack.c.bf16 %v214, %v213
      %v239 = vpack.c.bf16 %v216, %v215
      %v240 = vpack.c.bf16 %v218, %v217
      %v241 = vpack.c.bf16 %v220, %v219
      %v242 = vpack.c.bf16 %v222, %v221
      %v243 = vpack.c.bf16 %v224, %v223
      %v244 = vpack.c.bf16 %v226, %v225
      %v245 = vpack.c.bf16 %v228, %v227
      %v246 = vpack.c.bf16 %v230, %v229
      %v247 = vld [vmem:[%s1] sm:$0xf]
      %v248 = vld [vmem:[%s1 + $0x4] sm:$0xf]
      %v249 = vld [vmem:[%s1 + $0x8] sm:$0xf]
      %v250 = vld [vmem:[%s1 + $0xc] sm:$0xf]
      %v251 = vld [vmem:[%s1 + $0x10] sm:$0xf]
      %v252 = vld [vmem:[%s1 + $0x14] sm:$0xf]
      %s253 = scalar_lea.vmem %s1, 24
      %v254 = vld [vmem:[%s253] sm:$0xf]
      %v255 = vld [vmem:[%s253 + $0x4] sm:$0xf]
      %v256 = vld [vmem:[%s253 + $0x8] sm:$0xf]
      %v257 = vld [vmem:[%s253 + $0xc] sm:$0xf]
      %v258 = vld [vmem:[%s253 + $0x10] sm:$0xf]
      %v259 = vld [vmem:[%s253 + $0x14] sm:$0xf]
      %v266 = vunpack.c.l.b16 %v254
      %v267 = vunpack.c.l.b16 %v255
      %v268 = vunpack.c.l.b16 %v256
      %v269 = vunpack.c.l.b16 %v257
      %v270 = vunpack.c.l.b16 %v258
      %v271 = vunpack.c.l.b16 %v259
      %v272 = vpack.c.b16 %v267, %v266
      %v273 = vpack.c.b16 %v269, %v268
      %v274 = vpack.c.b16 %v271, %v270
      %vm278 = vcmask 392192
      %v280 = vsel %vm278, %v232, 0
      %v283 = vsel %vm278, %v233, 0
      %v286 = vsel %vm278, %v234, 0
      %v289 = vsel %vm278, %v235, 0
      %v292 = vsel %vm278, %v236, 0
      %v295 = vsel %vm278, %v237, 0
      %v298 = vsel %vm278, %v238, 0
      %v301 = vsel %vm278, %v239, 0
      %v304 = vsel %vm278, %v240, 0
      %v307 = vsel %vm278, %v241, 0
      %v310 = vsel %vm278, %v242, 0
      %v313 = vsel %vm278, %v243, 0
      %315 = vmatprep.subr.bf16.mxu0 0
      %316 = vmatpush1.bf16.msra.mxu0 0
      %317 = vmatprep.subr.bf16.mxu0 0
      %318 = vmatpush1.bf16.msra.mxu0 0
      %319 = vmatprep.subr.bf16.mxu0 0
      %320 = vmatpush1.bf16.msra.mxu0 0
      %321 = vmatprep.subr.bf16.mxu0 0
      %322 = vmatpush1.bf16.msra.mxu0 0
      %323 = vmatprep.subr.bf16.mxu0 0
      %324 = vmatpush1.bf16.msra.mxu0 0
      %325 = vmatprep.subr.bf16.mxu0 0
      %326 = vmatpush1.bf16.msra.mxu0 %v274
      %327 = vmatprep.subr.bf16.mxu0 0
      %328 = vmatpush1.bf16.msra.mxu0 %v273
      %329 = vmatprep.subr.bf16.mxu0 0
      %330 = vmatpush1.bf16.msra.mxu0 %v272
      %331 = vmatprep.subr.bf16.mxu0 0
      %332 = vmatpush2.bf16.msra.mxu0 0
      %333 = vmatprep.subr.bf16.mxu0 0
      %334 = vmatpush2.bf16.msra.mxu0 0
      %335 = vmatprep.subr.bf16.mxu0 0
      %336 = vmatpush2.bf16.msra.mxu0 0
      %337 = vmatprep.subr.bf16.mxu0 0
      %338 = vmatpush2.bf16.msra.mxu0 0
      %339 = vmatprep.subr.bf16.mxu0 0
      %340 = vmatpush2.bf16.msra.mxu0 0
      %341 = vmatprep.subr.bf16.mxu0 0
      %342 = vmatpush2.bf16.msra.mxu0 0
      %343 = vmatprep.subr.bf16.mxu0 0
      %344 = vmatpush2.bf16.msra.mxu0 0
      %345 = vmatprep.subr.bf16.mxu0 0
      %346 = vmatpush2.bf16.msra.mxu0 0
      %347 = vmatprep.mubr.bf16.mxu0 0
      %348 = vmatmul.mubr.bf16.gmra.mxu0 %v280
      %v349 = vpop.f32.mrf.mxu0
      %v350 = vadd.f32 0.0, %v349
      %v351 = vpop.f32.mrf.mxu0
      %v352 = vpop.f32.mrf.mxu0
      %v353 = vadd.f32 0.0, %v352
      %v354 = vpop.f32.mrf.mxu0
      %355 = vmatprep.mubr.bf16.mxu0 0
      %356 = vmatmul.mubr.bf16.gmra.mxu0 %v283
      %v357 = vpop.f32.mrf.mxu0
      %v358 = vadd.f32 0.0, %v357
      %v359 = vpop.f32.mrf.mxu0
      %v360 = vpop.f32.mrf.mxu0
      %v361 = vadd.f32 0.0, %v360
      %v362 = vpop.f32.mrf.mxu0
      %363 = vmatprep.mubr.bf16.mxu0 0
      %364 = vmatmul.mubr.bf16.gmra.mxu0 %v286
      %v365 = vpop.f32.mrf.mxu0
      %v366 = vadd.f32 0.0, %v365
      %v367 = vpop.f32.mrf.mxu0
      %v368 = vpop.f32.mrf.mxu0
      %v369 = vadd.f32 0.0, %v368
      %v370 = vpop.f32.mrf.mxu0
      %371 = vmatprep.mubr.bf16.mxu0 0
      %372 = vmatmul.mubr.bf16.gmra.mxu0 %v289
      %v373 = vpop.f32.mrf.mxu0
      %v374 = vadd.f32 0.0, %v373
      %v375 = vpop.f32.mrf.mxu0
      %v376 = vpop.f32.mrf.mxu0
      %v377 = vadd.f32 0.0, %v376
      %v378 = vpop.f32.mrf.mxu0
      %379 = vmatprep.mubr.bf16.mxu0 0
      %380 = vmatmul.mubr.bf16.gmra.mxu0 %v292
      %v381 = vpop.f32.mrf.mxu0
      %v382 = vadd.f32 0.0, %v381
      %v383 = vpop.f32.mrf.mxu0
      %v384 = vpop.f32.mrf.mxu0
      %v385 = vadd.f32 0.0, %v384
      %v386 = vpop.f32.mrf.mxu0
      %387 = vmatprep.mubr.bf16.mxu0 0
      %388 = vmatmul.mubr.bf16.gmra.mxu0 %v295
      %v389 = vpop.f32.mrf.mxu0
      %v390 = vadd.f32 0.0, %v389
      %v391 = vpop.f32.mrf.mxu0
      %v392 = vpop.f32.mrf.mxu0
      %v393 = vadd.f32 0.0, %v392
      %v394 = vpop.f32.mrf.mxu0
      %395 = vmatprep.mubr.bf16.mxu0 0
      %396 = vmatmul.mubr.bf16.gmra.mxu0 %v298
      %v397 = vpop.f32.mrf.mxu0
      %v398 = vadd.f32 0.0, %v397
      %v399 = vpop.f32.mrf.mxu0
      %v400 = vpop.f32.mrf.mxu0
      %v401 = vadd.f32 0.0, %v400
      %v402 = vpop.f32.mrf.mxu0
      %403 = vmatprep.mubr.bf16.mxu0 0
      %404 = vmatmul.mubr.bf16.gmra.mxu0 %v301
      %v405 = vpop.f32.mrf.mxu0
      %v406 = vadd.f32 0.0, %v405
      %v407 = vpop.f32.mrf.mxu0
      %v408 = vpop.f32.mrf.mxu0
      %v409 = vadd.f32 0.0, %v408
      %v410 = vpop.f32.mrf.mxu0
      %411 = vmatprep.mubr.bf16.mxu0 0
      %412 = vmatmul.mubr.bf16.gmra.mxu0 %v304
      %v413 = vpop.f32.mrf.mxu0
      %v414 = vadd.f32 0.0, %v413
      %v415 = vpop.f32.mrf.mxu0
      %v416 = vpop.f32.mrf.mxu0
      %v417 = vadd.f32 0.0, %v416
      %v418 = vpop.f32.mrf.mxu0
      %419 = vmatprep.mubr.bf16.mxu0 0
      %420 = vmatmul.mubr.bf16.gmra.mxu0 %v307
      %v421 = vpop.f32.mrf.mxu0
      %v422 = vadd.f32 0.0, %v421
      %v423 = vpop.f32.mrf.mxu0
      %v424 = vpop.f32.mrf.mxu0
      %v425 = vadd.f32 0.0, %v424
      %v426 = vpop.f32.mrf.mxu0
      %427 = vmatprep.mubr.bf16.mxu0 0
      %428 = vmatmul.mubr.bf16.gmra.mxu0 %v310
      %v429 = vpop.f32.mrf.mxu0
      %v430 = vadd.f32 0.0, %v429
      %v431 = vpop.f32.mrf.mxu0
      %v432 = vpop.f32.mrf.mxu0
      %v433 = vadd.f32 0.0, %v432
      %v434 = vpop.f32.mrf.mxu0
      %435 = vmatprep.mubr.bf16.mxu0 0
      %436 = vmatmul.mubr.bf16.gmra.mxu0 %v313
      %v437 = vpop.f32.mrf.mxu0
      %v438 = vadd.f32 0.0, %v437
      %v439 = vpop.f32.mrf.mxu0
      %v440 = vpop.f32.mrf.mxu0
      %v441 = vadd.f32 0.0, %v440
      %v442 = vpop.f32.mrf.mxu0
      %443 = vdwg.mxu0
      %v450 = vunpack.c.l.b16 %v247
      %v451 = vunpack.c.l.b16 %v248
      %v452 = vunpack.c.l.b16 %v249
      %v453 = vunpack.c.l.b16 %v250
      %v454 = vunpack.c.l.b16 %v251
      %v455 = vunpack.c.l.b16 %v252
      %v456 = vpack.c.b16 %v451, %v450
      %v457 = vpack.c.b16 %v453, %v452
      %v458 = vpack.c.b16 %v455, %v454
      %v463 = vsel %vm278, %v231, 0
      %465 = vmatprep.subr.bf16.mxu0 0
      %466 = vmatpush1.bf16.msra.mxu0 0
      %467 = vmatprep.subr.bf16.mxu0 0
      %468 = vmatpush1.bf16.msra.mxu0 0
      %469 = vmatprep.subr.bf16.mxu0 0
      %470 = vmatpush1.bf16.msra.mxu0 0
      %471 = vmatprep.subr.bf16.mxu0 0
      %472 = vmatpush1.bf16.msra.mxu0 0
      %473 = vmatprep.subr.bf16.mxu0 0
      %474 = vmatpush1.bf16.msra.mxu0 0
      %475 = vmatprep.subr.bf16.mxu0 0
      %476 = vmatpush1.bf16.msra.mxu0 %v458
      %477 = vmatprep.subr.bf16.mxu0 0
      %478 = vmatpush1.bf16.msra.mxu0 %v457
      %479 = vmatprep.subr.bf16.mxu0 0
      %480 = vmatpush1.bf16.msra.mxu0 %v456
      %481 = vmatprep.subr.bf16.mxu0 0
      %482 = vmatpush2.bf16.msra.mxu0 0
      %483 = vmatprep.subr.bf16.mxu0 0
      %484 = vmatpush2.bf16.msra.mxu0 0
      %485 = vmatprep.subr.bf16.mxu0 0
      %486 = vmatpush2.bf16.msra.mxu0 0
      %487 = vmatprep.subr.bf16.mxu0 0
      %488 = vmatpush2.bf16.msra.mxu0 0
      %489 = vmatprep.subr.bf16.mxu0 0
      %490 = vmatpush2.bf16.msra.mxu0 0
      %491 = vmatprep.subr.bf16.mxu0 0
      %492 = vmatpush2.bf16.msra.mxu0 0
      %493 = vmatprep.subr.bf16.mxu0 0
      %494 = vmatpush2.bf16.msra.mxu0 0
      %495 = vmatprep.subr.bf16.mxu0 0
      %496 = vmatpush2.bf16.msra.mxu0 0
      %497 = vmatprep.mubr.bf16.mxu0 0
      %498 = vmatmul.mubr.bf16.gmra.mxu0 %v463
      %v499 = vpop.f32.mrf.mxu0
      %v500 = vadd.f32 %v350, %v499
      %v501 = vpop.f32.mrf.mxu0
      %v502 = vpop.f32.mrf.mxu0
      %v503 = vadd.f32 %v353, %v502
      %v504 = vpop.f32.mrf.mxu0
      %505 = vmatprep.mubr.bf16.mxu0 0
      %506 = vmatmul.mubr.bf16.gmra.mxu0 %v280
      %v507 = vpop.f32.mrf.mxu0
      %v508 = vadd.f32 %v358, %v507
      %v509 = vpop.f32.mrf.mxu0
      %v510 = vpop.f32.mrf.mxu0
      %v511 = vadd.f32 %v361, %v510
      %v512 = vpop.f32.mrf.mxu0
      %513 = vmatprep.mubr.bf16.mxu0 0
      %514 = vmatmul.mubr.bf16.gmra.mxu0 %v283
      %v515 = vpop.f32.mrf.mxu0
      %v516 = vadd.f32 %v366, %v515
      %v517 = vpop.f32.mrf.mxu0
      %v518 = vpop.f32.mrf.mxu0
      %v519 = vadd.f32 %v369, %v518
      %v520 = vpop.f32.mrf.mxu0
      %521 = vmatprep.mubr.bf16.mxu0 0
      %522 = vmatmul.mubr.bf16.gmra.mxu0 %v286
      %v523 = vpop.f32.mrf.mxu0
      %v524 = vadd.f32 %v374, %v523
      %v525 = vpop.f32.mrf.mxu0
      %v526 = vpop.f32.mrf.mxu0
      %v527 = vadd.f32 %v377, %v526
      %v528 = vpop.f32.mrf.mxu0
      %529 = vmatprep.mubr.bf16.mxu0 0
      %530 = vmatmul.mubr.bf16.gmra.mxu0 %v289
      %v531 = vpop.f32.mrf.mxu0
      %v532 = vadd.f32 %v382, %v531
      %v533 = vpop.f32.mrf.mxu0
      %v534 = vpop.f32.mrf.mxu0
      %v535 = vadd.f32 %v385, %v534
      %v536 = vpop.f32.mrf.mxu0
      %537 = vmatprep.mubr.bf16.mxu0 0
      %538 = vmatmul.mubr.bf16.gmra.mxu0 %v292
      %v539 = vpop.f32.mrf.mxu0
      %v540 = vadd.f32 %v390, %v539
      %v541 = vpop.f32.mrf.mxu0
      %v542 = vpop.f32.mrf.mxu0
      %v543 = vadd.f32 %v393, %v542
      %v544 = vpop.f32.mrf.mxu0
      %545 = vmatprep.mubr.bf16.mxu0 0
      %546 = vmatmul.mubr.bf16.gmra.mxu0 %v295
      %v547 = vpop.f32.mrf.mxu0
      %v548 = vadd.f32 %v398, %v547
      %v549 = vpop.f32.mrf.mxu0
      %v550 = vpop.f32.mrf.mxu0
      %v551 = vadd.f32 %v401, %v550
      %v552 = vpop.f32.mrf.mxu0
      %553 = vmatprep.mubr.bf16.mxu0 0
      %554 = vmatmul.mubr.bf16.gmra.mxu0 %v298
      %v555 = vpop.f32.mrf.mxu0
      %v556 = vadd.f32 %v406, %v555
      %v557 = vpop.f32.mrf.mxu0
      %v558 = vpop.f32.mrf.mxu0
      %v559 = vadd.f32 %v409, %v558
      %v560 = vpop.f32.mrf.mxu0
      %561 = vmatprep.mubr.bf16.mxu0 0
      %562 = vmatmul.mubr.bf16.gmra.mxu0 %v301
      %v563 = vpop.f32.mrf.mxu0
      %v564 = vadd.f32 %v414, %v563
      %v565 = vpop.f32.mrf.mxu0
      %v566 = vpop.f32.mrf.mxu0
      %v567 = vadd.f32 %v417, %v566
      %v568 = vpop.f32.mrf.mxu0
      %569 = vmatprep.mubr.bf16.mxu0 0
      %570 = vmatmul.mubr.bf16.gmra.mxu0 %v304
      %v571 = vpop.f32.mrf.mxu0
      %v572 = vadd.f32 %v422, %v571
      %v573 = vpop.f32.mrf.mxu0
      %v574 = vpop.f32.mrf.mxu0
      %v575 = vadd.f32 %v425, %v574
      %v576 = vpop.f32.mrf.mxu0
      %577 = vmatprep.mubr.bf16.mxu0 0
      %578 = vmatmul.mubr.bf16.gmra.mxu0 %v307
      %v579 = vpop.f32.mrf.mxu0
      %v580 = vadd.f32 %v430, %v579
      %v581 = vpop.f32.mrf.mxu0
      %v582 = vpop.f32.mrf.mxu0
      %v583 = vadd.f32 %v433, %v582
      %v584 = vpop.f32.mrf.mxu0
      %585 = vmatprep.mubr.bf16.mxu0 0
      %586 = vmatmul.mubr.bf16.gmra.mxu0 %v310
      %v587 = vpop.f32.mrf.mxu0
      %v588 = vadd.f32 %v438, %v587
      %v589 = vpop.f32.mrf.mxu0
      %v590 = vpop.f32.mrf.mxu0
      %v591 = vadd.f32 %v441, %v590
      %v592 = vpop.f32.mrf.mxu0
      %593 = vdwg.mxu0
      %s594 = scalar_lea.vmem %s1, 48
      %v595 = vld [vmem:[%s594] sm:$0xf]
      %v596 = vld [vmem:[%s594 + $0x4] sm:$0xf]
      %v597 = vld [vmem:[%s594 + $0x8] sm:$0xf]
      %v598 = vld [vmem:[%s594 + $0xc] sm:$0xf]
      %v599 = vld [vmem:[%s594 + $0x10] sm:$0xf]
      %v600 = vld [vmem:[%s594 + $0x14] sm:$0xf]
      %v607 = vunpack.c.l.b16 %v595
      %v608 = vunpack.c.l.b16 %v596
      %v609 = vunpack.c.l.b16 %v597
      %v610 = vunpack.c.l.b16 %v598
      %v611 = vunpack.c.l.b16 %v599
      %v612 = vunpack.c.l.b16 %v600
      %v613 = vpack.c.b16 %v608, %v607
      %v614 = vpack.c.b16 %v610, %v609
      %v615 = vpack.c.b16 %v612, %v611
      %v620 = vsel %vm278, %v244, 0
      %622 = vmatprep.subr.bf16.mxu0 0
      %623 = vmatpush1.bf16.msra.mxu0 0
      %624 = vmatprep.subr.bf16.mxu0 0
      %625 = vmatpush1.bf16.msra.mxu0 0
      %626 = vmatprep.subr.bf16.mxu0 0
      %627 = vmatpush1.bf16.msra.mxu0 0
      %628 = vmatprep.subr.bf16.mxu0 0
      %629 = vmatpush1.bf16.msra.mxu0 0
      %630 = vmatprep.subr.bf16.mxu0 0
      %631 = vmatpush1.bf16.msra.mxu0 0
      %632 = vmatprep.subr.bf16.mxu0 0
      %633 = vmatpush1.bf16.msra.mxu0 %v615
      %634 = vmatprep.subr.bf16.mxu0 0
      %635 = vmatpush1.bf16.msra.mxu0 %v614
      %636 = vmatprep.subr.bf16.mxu0 0
      %637 = vmatpush1.bf16.msra.mxu0 %v613
      %638 = vmatprep.subr.bf16.mxu0 0
      %639 = vmatpush2.bf16.msra.mxu0 0
      %640 = vmatprep.subr.bf16.mxu0 0
      %641 = vmatpush2.bf16.msra.mxu0 0
      %642 = vmatprep.subr.bf16.mxu0 0
      %643 = vmatpush2.bf16.msra.mxu0 0
      %644 = vmatprep.subr.bf16.mxu0 0
      %645 = vmatpush2.bf16.msra.mxu0 0
      %646 = vmatprep.subr.bf16.mxu0 0
      %647 = vmatpush2.bf16.msra.mxu0 0
      %648 = vmatprep.subr.bf16.mxu0 0
      %649 = vmatpush2.bf16.msra.mxu0 0
      %650 = vmatprep.subr.bf16.mxu0 0
      %651 = vmatpush2.bf16.msra.mxu0 0
      %652 = vmatprep.subr.bf16.mxu0 0
      %653 = vmatpush2.bf16.msra.mxu0 0
      %654 = vmatprep.mubr.bf16.mxu0 0
      %655 = vmatmul.mubr.bf16.gmra.mxu0 %v283
      %v656 = vpop.f32.mrf.mxu0
      %v657 = vadd.f32 0.0, %v656
      %v658 = vpop.f32.mrf.mxu0
      %v659 = vpop.f32.mrf.mxu0
      %v660 = vadd.f32 0.0, %v659
      %v661 = vpop.f32.mrf.mxu0
      %662 = vmatprep.mubr.bf16.mxu0 0
      %663 = vmatmul.mubr.bf16.gmra.mxu0 %v286
      %v664 = vpop.f32.mrf.mxu0
      %v665 = vadd.f32 0.0, %v664
      %v666 = vpop.f32.mrf.mxu0
      %v667 = vpop.f32.mrf.mxu0
      %v668 = vadd.f32 0.0, %v667
      %v669 = vpop.f32.mrf.mxu0
      %670 = vmatprep.mubr.bf16.mxu0 0
      %671 = vmatmul.mubr.bf16.gmra.mxu0 %v289
      %v672 = vpop.f32.mrf.mxu0
      %v673 = vadd.f32 0.0, %v672
      %v674 = vpop.f32.mrf.mxu0
      %v675 = vpop.f32.mrf.mxu0
      %v676 = vadd.f32 0.0, %v675
      %v677 = vpop.f32.mrf.mxu0
      %678 = vmatprep.mubr.bf16.mxu0 0
      %679 = vmatmul.mubr.bf16.gmra.mxu0 %v292
      %v680 = vpop.f32.mrf.mxu0
      %v681 = vadd.f32 0.0, %v680
      %v682 = vpop.f32.mrf.mxu0
      %v683 = vpop.f32.mrf.mxu0
      %v684 = vadd.f32 0.0, %v683
      %v685 = vpop.f32.mrf.mxu0
      %686 = vmatprep.mubr.bf16.mxu0 0
      %687 = vmatmul.mubr.bf16.gmra.mxu0 %v295
      %v688 = vpop.f32.mrf.mxu0
      %v689 = vadd.f32 0.0, %v688
      %v690 = vpop.f32.mrf.mxu0
      %v691 = vpop.f32.mrf.mxu0
      %v692 = vadd.f32 0.0, %v691
      %v693 = vpop.f32.mrf.mxu0
      %694 = vmatprep.mubr.bf16.mxu0 0
      %695 = vmatmul.mubr.bf16.gmra.mxu0 %v298
      %v696 = vpop.f32.mrf.mxu0
      %v697 = vadd.f32 0.0, %v696
      %v698 = vpop.f32.mrf.mxu0
      %v699 = vpop.f32.mrf.mxu0
      %v700 = vadd.f32 0.0, %v699
      %v701 = vpop.f32.mrf.mxu0
      %702 = vmatprep.mubr.bf16.mxu0 0
      %703 = vmatmul.mubr.bf16.gmra.mxu0 %v301
      %v704 = vpop.f32.mrf.mxu0
      %v705 = vadd.f32 0.0, %v704
      %v706 = vpop.f32.mrf.mxu0
      %v707 = vpop.f32.mrf.mxu0
      %v708 = vadd.f32 0.0, %v707
      %v709 = vpop.f32.mrf.mxu0
      %710 = vmatprep.mubr.bf16.mxu0 0
      %711 = vmatmul.mubr.bf16.gmra.mxu0 %v304
      %v712 = vpop.f32.mrf.mxu0
      %v713 = vadd.f32 0.0, %v712
      %v714 = vpop.f32.mrf.mxu0
      %v715 = vpop.f32.mrf.mxu0
      %v716 = vadd.f32 0.0, %v715
      %v717 = vpop.f32.mrf.mxu0
      %718 = vmatprep.mubr.bf16.mxu0 0
      %719 = vmatmul.mubr.bf16.gmra.mxu0 %v307
      %v720 = vpop.f32.mrf.mxu0
      %v721 = vadd.f32 0.0, %v720
      %v722 = vpop.f32.mrf.mxu0
      %v723 = vpop.f32.mrf.mxu0
      %v724 = vadd.f32 0.0, %v723
      %v725 = vpop.f32.mrf.mxu0
      %726 = vmatprep.mubr.bf16.mxu0 0
      %727 = vmatmul.mubr.bf16.gmra.mxu0 %v310
      %v728 = vpop.f32.mrf.mxu0
      %v729 = vadd.f32 0.0, %v728
      %v730 = vpop.f32.mrf.mxu0
      %v731 = vpop.f32.mrf.mxu0
      %v732 = vadd.f32 0.0, %v731
      %v733 = vpop.f32.mrf.mxu0
      %734 = vmatprep.mubr.bf16.mxu0 0
      %735 = vmatmul.mubr.bf16.gmra.mxu0 %v313
      %v736 = vpop.f32.mrf.mxu0
      %v737 = vadd.f32 0.0, %v736
      %v738 = vpop.f32.mrf.mxu0
      %v739 = vpop.f32.mrf.mxu0
      %v740 = vadd.f32 0.0, %v739
      %v741 = vpop.f32.mrf.mxu0
      %742 = vmatprep.mubr.bf16.mxu0 0
      %743 = vmatmul.mubr.bf16.gmra.mxu0 %v620
      %v744 = vpop.f32.mrf.mxu0
      %v745 = vadd.f32 0.0, %v744
      %v746 = vpop.f32.mrf.mxu0
      %v747 = vpop.f32.mrf.mxu0
      %v748 = vadd.f32 0.0, %v747
      %v749 = vpop.f32.mrf.mxu0
      %750 = vdwg.mxu0
      %v751 = vadd.f32 %v500, %v657
      %v752 = vadd.f32 %v503, %v660
      %v753 = vadd.f32 %v508, %v665
      %v754 = vadd.f32 %v511, %v668
      %v755 = vadd.f32 %v516, %v673
      %v756 = vadd.f32 %v519, %v676
      %v757 = vadd.f32 %v524, %v681
      %v758 = vadd.f32 %v527, %v684
      %v759 = vadd.f32 %v532, %v689
      %v760 = vadd.f32 %v535, %v692
      %v761 = vadd.f32 %v540, %v697
      %v762 = vadd.f32 %v543, %v700
      %v763 = vadd.f32 %v548, %v705
      %v764 = vadd.f32 %v551, %v708
      %v765 = vadd.f32 %v556, %v713
      %v766 = vadd.f32 %v559, %v716
      %v767 = vadd.f32 %v564, %v721
      %v768 = vadd.f32 %v567, %v724
      %v769 = vadd.f32 %v572, %v729
      %v770 = vadd.f32 %v575, %v732
      %v771 = vadd.f32 %v580, %v737
      %v772 = vadd.f32 %v583, %v740
      %v773 = vadd.f32 %v588, %v745
      %v774 = vadd.f32 %v591, %v748
      %s775 = scalar_lea.vmem %s1, 72
      %v776 = vld [vmem:[%s775] sm:$0xf]
      %v777 = vld [vmem:[%s775 + $0x4] sm:$0xf]
      %v778 = vld [vmem:[%s775 + $0x8] sm:$0xf]
      %v779 = vld [vmem:[%s775 + $0xc] sm:$0xf]
      %v780 = vld [vmem:[%s775 + $0x10] sm:$0xf]
      %v781 = vld [vmem:[%s775 + $0x14] sm:$0xf]
      %v788 = vunpack.c.l.b16 %v776
      %v789 = vunpack.c.l.b16 %v777
      %v790 = vunpack.c.l.b16 %v778
      %v791 = vunpack.c.l.b16 %v779
      %v792 = vunpack.c.l.b16 %v780
      %v793 = vunpack.c.l.b16 %v781
      %v794 = vpack.c.b16 %v789, %v788
      %v795 = vpack.c.b16 %v791, %v790
      %v796 = vpack.c.b16 %v793, %v792
      %v801 = vsel %vm278, %v245, 0
      %803 = vmatprep.subr.bf16.mxu0 0
      %804 = vmatpush1.bf16.msra.mxu0 0
      %805 = vmatprep.subr.bf16.mxu0 0
      %806 = vmatpush1.bf16.msra.mxu0 0
      %807 = vmatprep.subr.bf16.mxu0 0
      %808 = vmatpush1.bf16.msra.mxu0 0
      %809 = vmatprep.subr.bf16.mxu0 0
      %810 = vmatpush1.bf16.msra.mxu0 0
      %811 = vmatprep.subr.bf16.mxu0 0
      %812 = vmatpush1.bf16.msra.mxu0 0
      %813 = vmatprep.subr.bf16.mxu0 0
      %814 = vmatpush1.bf16.msra.mxu0 %v796
      %815 = vmatprep.subr.bf16.mxu0 0
      %816 = vmatpush1.bf16.msra.mxu0 %v795
      %817 = vmatprep.subr.bf16.mxu0 0
      %818 = vmatpush1.bf16.msra.mxu0 %v794
      %819 = vmatprep.subr.bf16.mxu0 0
      %820 = vmatpush2.bf16.msra.mxu0 0
      %821 = vmatprep.subr.bf16.mxu0 0
      %822 = vmatpush2.bf16.msra.mxu0 0
      %823 = vmatprep.subr.bf16.mxu0 0
      %824 = vmatpush2.bf16.msra.mxu0 0
      %825 = vmatprep.subr.bf16.mxu0 0
      %826 = vmatpush2.bf16.msra.mxu0 0
      %827 = vmatprep.subr.bf16.mxu0 0
      %828 = vmatpush2.bf16.msra.mxu0 0
      %829 = vmatprep.subr.bf16.mxu0 0
      %830 = vmatpush2.bf16.msra.mxu0 0
      %831 = vmatprep.subr.bf16.mxu0 0
      %832 = vmatpush2.bf16.msra.mxu0 0
      %833 = vmatprep.subr.bf16.mxu0 0
      %834 = vmatpush2.bf16.msra.mxu0 0
      %835 = vmatprep.mubr.bf16.mxu0 0
      %836 = vmatmul.mubr.bf16.gmra.mxu0 %v286
      %v837 = vpop.f32.mrf.mxu0
      %v838 = vadd.f32 0.0, %v837
      %v839 = vpop.f32.mrf.mxu0
      %v840 = vpop.f32.mrf.mxu0
      %v841 = vadd.f32 0.0, %v840
      %v842 = vpop.f32.mrf.mxu0
      %843 = vmatprep.mubr.bf16.mxu0 0
      %844 = vmatmul.mubr.bf16.gmra.mxu0 %v289
      %v845 = vpop.f32.mrf.mxu0
      %v846 = vadd.f32 0.0, %v845
      %v847 = vpop.f32.mrf.mxu0
      %v848 = vpop.f32.mrf.mxu0
      %v849 = vadd.f32 0.0, %v848
      %v850 = vpop.f32.mrf.mxu0
      %851 = vmatprep.mubr.bf16.mxu0 0
      %852 = vmatmul.mubr.bf16.gmra.mxu0 %v292
      %v853 = vpop.f32.mrf.mxu0
      %v854 = vadd.f32 0.0, %v853
      %v855 = vpop.f32.mrf.mxu0
      %v856 = vpop.f32.mrf.mxu0
      %v857 = vadd.f32 0.0, %v856
      %v858 = vpop.f32.mrf.mxu0
      %859 = vmatprep.mubr.bf16.mxu0 0
      %860 = vmatmul.mubr.bf16.gmra.mxu0 %v295
      %v861 = vpop.f32.mrf.mxu0
      %v862 = vadd.f32 0.0, %v861
      %v863 = vpop.f32.mrf.mxu0
      %v864 = vpop.f32.mrf.mxu0
      %v865 = vadd.f32 0.0, %v864
      %v866 = vpop.f32.mrf.mxu0
      %867 = vmatprep.mubr.bf16.mxu0 0
      %868 = vmatmul.mubr.bf16.gmra.mxu0 %v298
      %v869 = vpop.f32.mrf.mxu0
      %v870 = vadd.f32 0.0, %v869
      %v871 = vpop.f32.mrf.mxu0
      %v872 = vpop.f32.mrf.mxu0
      %v873 = vadd.f32 0.0, %v872
      %v874 = vpop.f32.mrf.mxu0
      %875 = vmatprep.mubr.bf16.mxu0 0
      %876 = vmatmul.mubr.bf16.gmra.mxu0 %v301
      %v877 = vpop.f32.mrf.mxu0
      %v878 = vadd.f32 0.0, %v877
      %v879 = vpop.f32.mrf.mxu0
      %v880 = vpop.f32.mrf.mxu0
      %v881 = vadd.f32 0.0, %v880
      %v882 = vpop.f32.mrf.mxu0
      %883 = vmatprep.mubr.bf16.mxu0 0
      %884 = vmatmul.mubr.bf16.gmra.mxu0 %v304
      %v885 = vpop.f32.mrf.mxu0
      %v886 = vadd.f32 0.0, %v885
      %v887 = vpop.f32.mrf.mxu0
      %v888 = vpop.f32.mrf.mxu0
      %v889 = vadd.f32 0.0, %v888
      %v890 = vpop.f32.mrf.mxu0
      %891 = vmatprep.mubr.bf16.mxu0 0
      %892 = vmatmul.mubr.bf16.gmra.mxu0 %v307
      %v893 = vpop.f32.mrf.mxu0
      %v894 = vadd.f32 0.0, %v893
      %v895 = vpop.f32.mrf.mxu0
      %v896 = vpop.f32.mrf.mxu0
      %v897 = vadd.f32 0.0, %v896
      %v898 = vpop.f32.mrf.mxu0
      %899 = vmatprep.mubr.bf16.mxu0 0
      %900 = vmatmul.mubr.bf16.gmra.mxu0 %v310
      %v901 = vpop.f32.mrf.mxu0
      %v902 = vadd.f32 0.0, %v901
      %v903 = vpop.f32.mrf.mxu0
      %v904 = vpop.f32.mrf.mxu0
      %v905 = vadd.f32 0.0, %v904
      %v906 = vpop.f32.mrf.mxu0
      %907 = vmatprep.mubr.bf16.mxu0 0
      %908 = vmatmul.mubr.bf16.gmra.mxu0 %v313
      %v909 = vpop.f32.mrf.mxu0
      %v910 = vadd.f32 0.0, %v909
      %v911 = vpop.f32.mrf.mxu0
      %v912 = vpop.f32.mrf.mxu0
      %v913 = vadd.f32 0.0, %v912
      %v914 = vpop.f32.mrf.mxu0
      %915 = vmatprep.mubr.bf16.mxu0 0
      %916 = vmatmul.mubr.bf16.gmra.mxu0 %v620
      %v917 = vpop.f32.mrf.mxu0
      %v918 = vadd.f32 0.0, %v917
      %v919 = vpop.f32.mrf.mxu0
      %v920 = vpop.f32.mrf.mxu0
      %v921 = vadd.f32 0.0, %v920
      %v922 = vpop.f32.mrf.mxu0
      %923 = vmatprep.mubr.bf16.mxu0 0
      %924 = vmatmul.mubr.bf16.gmra.mxu0 %v801
      %v925 = vpop.f32.mrf.mxu0
      %v926 = vadd.f32 0.0, %v925
      %v927 = vpop.f32.mrf.mxu0
      %v928 = vpop.f32.mrf.mxu0
      %v929 = vadd.f32 0.0, %v928
      %v930 = vpop.f32.mrf.mxu0
      %931 = vdwg.mxu0
      %v932 = vadd.f32 %v751, %v838
      %v933 = vadd.f32 %v752, %v841
      %v934 = vadd.f32 %v753, %v846
      %v935 = vadd.f32 %v754, %v849
      %v936 = vadd.f32 %v755, %v854
      %v937 = vadd.f32 %v756, %v857
      %v938 = vadd.f32 %v757, %v862
      %v939 = vadd.f32 %v758, %v865
      %v940 = vadd.f32 %v759, %v870
      %v941 = vadd.f32 %v760, %v873
      %v942 = vadd.f32 %v761, %v878
      %v943 = vadd.f32 %v762, %v881
      %v944 = vadd.f32 %v763, %v886
      %v945 = vadd.f32 %v764, %v889
      %v946 = vadd.f32 %v765, %v894
      %v947 = vadd.f32 %v766, %v897
      %v948 = vadd.f32 %v767, %v902
      %v949 = vadd.f32 %v768, %v905
      %v950 = vadd.f32 %v769, %v910
      %v951 = vadd.f32 %v770, %v913
      %v952 = vadd.f32 %v771, %v918
      %v953 = vadd.f32 %v772, %v921
      %v954 = vadd.f32 %v773, %v926
      %v955 = vadd.f32 %v774, %v929
      %s956 = scalar_lea.vmem %s1, 96
      %v957 = vld [vmem:[%s956] sm:$0xf]
      %v958 = vld [vmem:[%s956 + $0x4] sm:$0xf]
      %v959 = vld [vmem:[%s956 + $0x8] sm:$0xf]
      %v960 = vld [vmem:[%s956 + $0xc] sm:$0xf]
      %v961 = vld [vmem:[%s956 + $0x10] sm:$0xf]
      %v962 = vld [vmem:[%s956 + $0x14] sm:$0xf]
      %v969 = vunpack.c.l.b16 %v957
      %v970 = vunpack.c.l.b16 %v958
      %v971 = vunpack.c.l.b16 %v959
      %v972 = vunpack.c.l.b16 %v960
      %v973 = vunpack.c.l.b16 %v961
      %v974 = vunpack.c.l.b16 %v962
      %v975 = vpack.c.b16 %v970, %v969
      %v976 = vpack.c.b16 %v972, %v971
      %v977 = vpack.c.b16 %v974, %v973
      %v982 = vsel %vm278, %v246, 0
      %984 = vmatprep.subr.bf16.mxu0 0
      %985 = vmatpush1.bf16.msra.mxu0 0
      %986 = vmatprep.subr.bf16.mxu0 0
      %987 = vmatpush1.bf16.msra.mxu0 0
      %988 = vmatprep.subr.bf16.mxu0 0
      %989 = vmatpush1.bf16.msra.mxu0 0
      %990 = vmatprep.subr.bf16.mxu0 0
      %991 = vmatpush1.bf16.msra.mxu0 0
      %992 = vmatprep.subr.bf16.mxu0 0
      %993 = vmatpush1.bf16.msra.mxu0 0
      %994 = vmatprep.subr.bf16.mxu0 0
      %995 = vmatpush1.bf16.msra.mxu0 %v977
      %996 = vmatprep.subr.bf16.mxu0 0
      %997 = vmatpush1.bf16.msra.mxu0 %v976
      %998 = vmatprep.subr.bf16.mxu0 0
      %999 = vmatpush1.bf16.msra.mxu0 %v975
      %1000 = vmatprep.subr.bf16.mxu0 0
      %1001 = vmatpush2.bf16.msra.mxu0 0
      %1002 = vmatprep.subr.bf16.mxu0 0
      %1003 = vmatpush2.bf16.msra.mxu0 0
      %1004 = vmatprep.subr.bf16.mxu0 0
      %1005 = vmatpush2.bf16.msra.mxu0 0
      %1006 = vmatprep.subr.bf16.mxu0 0
      %1007 = vmatpush2.bf16.msra.mxu0 0
      %1008 = vmatprep.subr.bf16.mxu0 0
      %1009 = vmatpush2.bf16.msra.mxu0 0
      %1010 = vmatprep.subr.bf16.mxu0 0
      %1011 = vmatpush2.bf16.msra.mxu0 0
      %1012 = vmatprep.subr.bf16.mxu0 0
      %1013 = vmatpush2.bf16.msra.mxu0 0
      %1014 = vmatprep.subr.bf16.mxu0 0
      %1015 = vmatpush2.bf16.msra.mxu0 0
      %1016 = vmatprep.mubr.bf16.mxu0 0
      %1017 = vmatmul.mubr.bf16.gmra.mxu0 %v289
      %v1018 = vpop.f32.mrf.mxu0
      %v1019 = vadd.f32 0.0, %v1018
      %v1020 = vpop.f32.mrf.mxu0
      %v1021 = vpop.f32.mrf.mxu0
      %v1022 = vadd.f32 0.0, %v1021
      %v1023 = vpop.f32.mrf.mxu0
      %1024 = vmatprep.mubr.bf16.mxu0 0
      %1025 = vmatmul.mubr.bf16.gmra.mxu0 %v292
      %v1026 = vpop.f32.mrf.mxu0
      %v1027 = vadd.f32 0.0, %v1026
      %v1028 = vpop.f32.mrf.mxu0
      %v1029 = vpop.f32.mrf.mxu0
      %v1030 = vadd.f32 0.0, %v1029
      %v1031 = vpop.f32.mrf.mxu0
      %1032 = vmatprep.mubr.bf16.mxu0 0
      %1033 = vmatmul.mubr.bf16.gmra.mxu0 %v295
      %v1034 = vpop.f32.mrf.mxu0
      %v1035 = vadd.f32 0.0, %v1034
      %v1036 = vpop.f32.mrf.mxu0
      %v1037 = vpop.f32.mrf.mxu0
      %v1038 = vadd.f32 0.0, %v1037
      %v1039 = vpop.f32.mrf.mxu0
      %1040 = vmatprep.mubr.bf16.mxu0 0
      %1041 = vmatmul.mubr.bf16.gmra.mxu0 %v298
      %v1042 = vpop.f32.mrf.mxu0
      %v1043 = vadd.f32 0.0, %v1042
      %v1044 = vpop.f32.mrf.mxu0
      %v1045 = vpop.f32.mrf.mxu0
      %v1046 = vadd.f32 0.0, %v1045
      %v1047 = vpop.f32.mrf.mxu0
      %1048 = vmatprep.mubr.bf16.mxu0 0
      %1049 = vmatmul.mubr.bf16.gmra.mxu0 %v301
      %v1050 = vpop.f32.mrf.mxu0
      %v1051 = vadd.f32 0.0, %v1050
      %v1052 = vpop.f32.mrf.mxu0
      %v1053 = vpop.f32.mrf.mxu0
      %v1054 = vadd.f32 0.0, %v1053
      %v1055 = vpop.f32.mrf.mxu0
      %1056 = vmatprep.mubr.bf16.mxu0 0
      %1057 = vmatmul.mubr.bf16.gmra.mxu0 %v304
      %v1058 = vpop.f32.mrf.mxu0
      %v1059 = vadd.f32 0.0, %v1058
      %v1060 = vpop.f32.mrf.mxu0
      %v1061 = vpop.f32.mrf.mxu0
      %v1062 = vadd.f32 0.0, %v1061
      %v1063 = vpop.f32.mrf.mxu0
      %1064 = vmatprep.mubr.bf16.mxu0 0
      %1065 = vmatmul.mubr.bf16.gmra.mxu0 %v307
      %v1066 = vpop.f32.mrf.mxu0
      %v1067 = vadd.f32 0.0, %v1066
      %v1068 = vpop.f32.mrf.mxu0
      %v1069 = vpop.f32.mrf.mxu0
      %v1070 = vadd.f32 0.0, %v1069
      %v1071 = vpop.f32.mrf.mxu0
      %1072 = vmatprep.mubr.bf16.mxu0 0
      %1073 = vmatmul.mubr.bf16.gmra.mxu0 %v310
      %v1074 = vpop.f32.mrf.mxu0
      %v1075 = vadd.f32 0.0, %v1074
      %v1076 = vpop.f32.mrf.mxu0
      %v1077 = vpop.f32.mrf.mxu0
      %v1078 = vadd.f32 0.0, %v1077
      %v1079 = vpop.f32.mrf.mxu0
      %1080 = vmatprep.mubr.bf16.mxu0 0
      %1081 = vmatmul.mubr.bf16.gmra.mxu0 %v313
      %v1082 = vpop.f32.mrf.mxu0
      %v1083 = vadd.f32 0.0, %v1082
      %v1084 = vpop.f32.mrf.mxu0
      %v1085 = vpop.f32.mrf.mxu0
      %v1086 = vadd.f32 0.0, %v1085
      %v1087 = vpop.f32.mrf.mxu0
      %1088 = vmatprep.mubr.bf16.mxu0 0
      %1089 = vmatmul.mubr.bf16.gmra.mxu0 %v620
      %v1090 = vpop.f32.mrf.mxu0
      %v1091 = vadd.f32 0.0, %v1090
      %v1092 = vpop.f32.mrf.mxu0
      %v1093 = vpop.f32.mrf.mxu0
      %v1094 = vadd.f32 0.0, %v1093
      %v1095 = vpop.f32.mrf.mxu0
      %1096 = vmatprep.mubr.bf16.mxu0 0
      %1097 = vmatmul.mubr.bf16.gmra.mxu0 %v801
      %v1098 = vpop.f32.mrf.mxu0
      %v1099 = vadd.f32 0.0, %v1098
      %v1100 = vpop.f32.mrf.mxu0
      %v1101 = vpop.f32.mrf.mxu0
      %v1102 = vadd.f32 0.0, %v1101
      %v1103 = vpop.f32.mrf.mxu0
      %1104 = vmatprep.mubr.bf16.mxu0 0
      %1105 = vmatmul.mubr.bf16.gmra.mxu0 %v982
      %v1106 = vpop.f32.mrf.mxu0
      %v1107 = vadd.f32 0.0, %v1106
      %v1108 = vpop.f32.mrf.mxu0
      %v1109 = vpop.f32.mrf.mxu0
      %v1110 = vadd.f32 0.0, %v1109
      %v1111 = vpop.f32.mrf.mxu0
      %1112 = vdwg.mxu0
      %v1113 = vadd.f32 %v932, %v1019
      %v1114 = vadd.f32 %v933, %v1022
      %v1115 = vadd.f32 %v934, %v1027
      %v1116 = vadd.f32 %v935, %v1030
      %v1117 = vadd.f32 %v936, %v1035
      %v1118 = vadd.f32 %v937, %v1038
      %v1119 = vadd.f32 %v938, %v1043
      %v1120 = vadd.f32 %v939, %v1046
      %v1121 = vadd.f32 %v940, %v1051
      %v1122 = vadd.f32 %v941, %v1054
      %v1123 = vadd.f32 %v942, %v1059
      %v1124 = vadd.f32 %v943, %v1062
      %v1125 = vadd.f32 %v944, %v1067
      %v1126 = vadd.f32 %v945, %v1070
      %v1127 = vadd.f32 %v946, %v1075
      %v1128 = vadd.f32 %v947, %v1078
      %v1129 = vadd.f32 %v948, %v1083
      %v1130 = vadd.f32 %v949, %v1086
      %v1131 = vadd.f32 %v950, %v1091
      %v1132 = vadd.f32 %v951, %v1094
      %v1133 = vadd.f32 %v952, %v1099
      %v1134 = vadd.f32 %v953, %v1102
      %v1135 = vadd.f32 %v954, %v1107
      %v1136 = vadd.f32 %v955, %v1110
      %v1137 = vld [vmem:[%s2] sm:$0x1]
      %v1139 = vlaneseq
      %v1140 = vshrl.u32 %v1139, 7
      %v1141 = vsub.s32 0, %v1140
      %v1142 = vrot.slane %v1137, %v1141
      %v1144 = vmul.f32 %v1113, %v1142
      %v1145 = vmul.f32 %v1114, %v1142
      %v1146 = vmul.f32 %v1115, %v1142
      %v1147 = vmul.f32 %v1116, %v1142
      %v1148 = vmul.f32 %v1117, %v1142
      %v1149 = vmul.f32 %v1118, %v1142
      %v1150 = vmul.f32 %v1119, %v1142
      %v1151 = vmul.f32 %v1120, %v1142
      %v1152 = vmul.f32 %v1121, %v1142
      %v1153 = vmul.f32 %v1122, %v1142
      %v1154 = vmul.f32 %v1123, %v1142
      %v1155 = vmul.f32 %v1124, %v1142
      %v1156 = vmul.f32 %v1125, %v1142
      %v1157 = vmul.f32 %v1126, %v1142
      %v1158 = vmul.f32 %v1127, %v1142
      %v1159 = vmul.f32 %v1128, %v1142
      %v1160 = vmul.f32 %v1129, %v1142
      %v1161 = vmul.f32 %v1130, %v1142
      %v1162 = vmul.f32 %v1131, %v1142
      %v1163 = vmul.f32 %v1132, %v1142
      %v1164 = vmul.f32 %v1133, %v1142
      %v1165 = vmul.f32 %v1134, %v1142
      %v1166 = vmul.f32 %v1135, %v1142
      %v1167 = vmul.f32 %v1136, %v1142
      %v1168 = vld [vmem:[%s3] sm:$0x1]
      %v1170 = vlaneseq
      %v1171 = vshrl.u32 %v1170, 7
      %v1172 = vsub.s32 0, %v1171
      %v1173 = vrot.slane %v1168, %v1172
      %v1175 = vadd.f32 %v1144, %v1173
      %v1176 = vadd.f32 %v1145, %v1173
      %v1177 = vadd.f32 %v1146, %v1173
      %v1178 = vadd.f32 %v1147, %v1173
      %v1179 = vadd.f32 %v1148, %v1173
      %v1180 = vadd.f32 %v1149, %v1173
      %v1181 = vadd.f32 %v1150, %v1173
      %v1182 = vadd.f32 %v1151, %v1173
      %v1183 = vadd.f32 %v1152, %v1173
      %v1184 = vadd.f32 %v1153, %v1173
      %v1185 = vadd.f32 %v1154, %v1173
      %v1186 = vadd.f32 %v1155, %v1173
      %v1187 = vadd.f32 %v1156, %v1173
      %v1188 = vadd.f32 %v1157, %v1173
      %v1189 = vadd.f32 %v1158, %v1173
      %v1190 = vadd.f32 %v1159, %v1173
      %v1191 = vadd.f32 %v1160, %v1173
      %v1192 = vadd.f32 %v1161, %v1173
      %v1193 = vadd.f32 %v1162, %v1173
      %v1194 = vadd.f32 %v1163, %v1173
      %v1195 = vadd.f32 %v1164, %v1173
      %v1196 = vadd.f32 %v1165, %v1173
      %v1197 = vadd.f32 %v1166, %v1173
      %v1198 = vadd.f32 %v1167, %v1173
      %v1199 = vmax.f32 %v1175, 0.0
      %v1200 = vmax.f32 %v1176, 0.0
      %v1201 = vmax.f32 %v1177, 0.0
      %v1202 = vmax.f32 %v1178, 0.0
      %v1203 = vmax.f32 %v1179, 0.0
      %v1204 = vmax.f32 %v1180, 0.0
      %v1205 = vmax.f32 %v1181, 0.0
      %v1206 = vmax.f32 %v1182, 0.0
      %v1207 = vmax.f32 %v1183, 0.0
      %v1208 = vmax.f32 %v1184, 0.0
      %v1209 = vmax.f32 %v1185, 0.0
      %v1210 = vmax.f32 %v1186, 0.0
      %v1211 = vmax.f32 %v1187, 0.0
      %v1212 = vmax.f32 %v1188, 0.0
      %v1213 = vmax.f32 %v1189, 0.0
      %v1214 = vmax.f32 %v1190, 0.0
      %v1215 = vmax.f32 %v1191, 0.0
      %v1216 = vmax.f32 %v1192, 0.0
      %v1217 = vmax.f32 %v1193, 0.0
      %v1218 = vmax.f32 %v1194, 0.0
      %v1219 = vmax.f32 %v1195, 0.0
      %v1220 = vmax.f32 %v1196, 0.0
      %v1221 = vmax.f32 %v1197, 0.0
      %v1222 = vmax.f32 %v1198, 0.0
      %v1223 = vmax.f32 %v1199, %v1201
      %v1224 = vmax.f32 %v1200, %v1202
      %v1225 = vmax.f32 %v1203, %v1205
      %v1226 = vmax.f32 %v1204, %v1206
      %v1227 = vmax.f32 %v1207, %v1209
      %v1228 = vmax.f32 %v1208, %v1210
      %v1229 = vmax.f32 %v1211, %v1213
      %v1230 = vmax.f32 %v1212, %v1214
      %v1231 = vmax.f32 %v1215, %v1217
      %v1232 = vmax.f32 %v1216, %v1218
      %v1233 = vmax.f32 %v1219, %v1221
      %v1234 = vmax.f32 %v1220, %v1222
      %vm1235 = vcmask 261120
      %1236 = vst.msk [vmem:[#allocation2] sm:$0xff] %vm1235, %v1223
      %1237 = vst.msk [vmem:[#allocation2 + $0x8] sm:$0xff] %vm1235, %v1224
      %1238 = vst.msk [vmem:[#allocation2 + $0x10] sm:$0xff] %vm1235, %v1225
      %1239 = vst.msk [vmem:[#allocation2 + $0x18] sm:$0xff] %vm1235, %v1226
      %1240 = vst.msk [vmem:[#allocation2 + $0x20] sm:$0xff] %vm1235, %v1227
      %1241 = vst.msk [vmem:[#allocation2 + $0x28] sm:$0xff] %vm1235, %v1228
      %1242 = vst.msk [vmem:[#allocation2 + $0x30] sm:$0xff] %vm1235, %v1229
      %1243 = vst.msk [vmem:[#allocation2 + $0x38] sm:$0xff] %vm1235, %v1230
      %1244 = vst.msk [vmem:[#allocation2 + $0x40] sm:$0xff] %vm1235, %v1231
      %1245 = vst.msk [vmem:[#allocation2 + $0x48] sm:$0xff] %vm1235, %v1232
      %1246 = vst.msk [vmem:[#allocation2 + $0x50] sm:$0xff] %vm1235, %v1233
      %1247 = vst.msk [vmem:[#allocation2 + $0x58] sm:$0xff] %vm1235, %v1234
      %v1248 = vld [vmem:[#allocation2] ss:$2 sm:$0xff]
      %s1249 = scalar_lea.vmem [#allocation2], 16
      %v1250 = vld [vmem:[%s1249] ss:$2 sm:$0xff]
      %s1251 = scalar_lea.vmem [#allocation2], 32
      %v1252 = vld [vmem:[%s1251] ss:$2 sm:$0xff]
      %s1253 = scalar_lea.vmem [#allocation2], 48
      %v1254 = vld [vmem:[%s1253] ss:$2 sm:$0xff]
      %s1255 = scalar_lea.vmem [#allocation2], 64
      %v1256 = vld [vmem:[%s1255] ss:$2 sm:$0xff]
      %s1257 = scalar_lea.vmem [#allocation2], 80
      %v1258 = vld [vmem:[%s1257] ss:$2 sm:$0xff]
      %s1259 = scalar_lea.vmem [#allocation2], 1
      %v1260 = vld [vmem:[%s1259] ss:$2 sm:$0xff]
      %s1261 = scalar_lea.vmem [#allocation2], 17
      %v1262 = vld [vmem:[%s1261] ss:$2 sm:$0xff]
      %s1263 = scalar_lea.vmem [#allocation2], 33
      %v1264 = vld [vmem:[%s1263] ss:$2 sm:$0xff]
      %s1265 = scalar_lea.vmem [#allocation2], 49
      %v1266 = vld [vmem:[%s1265] ss:$2 sm:$0xff]
      %s1267 = scalar_lea.vmem [#allocation2], 65
      %v1268 = vld [vmem:[%s1267] ss:$2 sm:$0xff]
      %s1269 = scalar_lea.vmem [#allocation2], 81
      %v1270 = vld [vmem:[%s1269] ss:$2 sm:$0xff]
      %v1271 = vmax.f32 %v1248, %v1260
      %v1272 = vmax.f32 %v1250, %v1262
      %v1273 = vmax.f32 %v1252, %v1264
      %v1274 = vmax.f32 %v1254, %v1266
      %v1275 = vmax.f32 %v1256, %v1268
      %v1276 = vmax.f32 %v1258, %v1270
      %1277 = vst.msk [vmem:[%s197] sm:$0xff] %vm1235, %v1271
      %1278 = vst.msk [vmem:[%s197 + $0x8] sm:$0xff] %vm1235, %v1272
      %1279 = vst.msk [vmem:[%s197 + $0x10] sm:$0xff] %vm1235, %v1273
      %1280 = vst.msk [vmem:[%s197 + $0x18] sm:$0xff] %vm1235, %v1274
      %1281 = vst.msk [vmem:[%s197 + $0x20] sm:$0xff] %vm1235, %v1275
      %1282 = vst.msk [vmem:[%s197 + $0x28] sm:$0xff] %vm1235, %v1276
      %p1283 = scmp.lt.s32.totalorder %s15, 3
      %s1284 = scalar_select %p1283, %s15, 3
      %s1285 = smul.addr %s1284, 6
      %s1286 = smul.addr %s1285, 8
      %s1287 = scalar_lea.vmem %s4, %s1286
      // Predicated region
      $region37: #{imagenet_large_frames_forward.6} parent=35 // pred_check
        %p1288 = pneg %p122
      $region38: #{imagenet_large_frames_forward.6} parent=35 // pred_check_branch
        %1290 = sbr.rel (%p1288) target = $region40
      $region39: #{imagenet_large_frames_forward.6} parent=35 // pred_region
        _
      $region40: #{imagenet_large_frames_forward.6} parent=35 // pred_fallthru
        _
    $region36: #{imagenet_large_frames_forward.6} parent=5 // pred_fallthru
      _
    %p1291 = scmp.le.s32.totalorder 2, %s10
    // Predicated region
    $region41: #{imagenet_large_frames_forward.6} parent=5 // pred_check
      %p1292 = pneg %p1291
    $region42: #{imagenet_large_frames_forward.6} parent=5 // pred_check_branch
      %1294 = sbr.rel (%p1292) target = $region44
    $region43: #{imagenet_large_frames_forward.6} parent=5 // pred_region
      %s1295 = ssub.s32 %s10, 2
      // Predicated region
      $region45: #{imagenet_large_frames_forward.6} parent=43 // pred_check
        %p1296 = pneg %p128
      $region46: #{imagenet_large_frames_forward.6} parent=43 // pred_check_branch
        %1298 = sbr.rel (%p1296) target = $region48
      $region47: #{imagenet_large_frames_forward.6} parent=43 // pred_region
        %p1299 = scmp.lt.s32.totalorder %s16, 3
        %s1300 = scalar_select %p1299, %s16, 3
        %s1301 = smul.addr %s1300, 6
        %s1302 = smul.addr %s1301, 8
        %s1303 = scalar_lea.vmem %s4, %s1302
      $region48: #{imagenet_large_frames_forward.6} parent=43 // pred_fallthru
        _
    $region44: #{imagenet_large_frames_forward.6} parent=5 // pred_fallthru
      _
  $region6: #{imagenet_large_frames_forward.6} parent=0 // loop_footer
    %s14 = sadd.s32 1, %s10
  $region7: #{imagenet_large_frames_forward.6} parent=0 // loop_footer_branch
    %9 = sbr.rel target = $region3
  $region8: #{imagenet_large_frames_forward.6} parent=0 // loop_exit
    _

// kernel: imagenet_large_frames_forward.7
$region0: #{imagenet_large_frames_forward.7}
  #allocation0 [shape = 'u32[]', space=smem, size = 0x4, offset = 0x4, fixed_abs, tag = 'smem constant byte address 0x4 - core index']
  #allocation1 [shape = 'u32[144,128]{1,0:T(1,128)}', space=vmem, size = 0x12000, scoped, tag = 'internal scratch']
  #allocation2 [shape = 'f32[2,8,64]{2,1,0:T(8,128)}', space=vmem, size = 0x2000, scoped, tag = 'scratch operand']
  %s0 = inlined_call_operand.vmem [shape: f32[4,8,8,96], index: 0, kind: input, shape index: {}]
  %s1 = inlined_call_operand.vmem [shape: bf16[5,96,64], index: 1, kind: input, shape index: {}]
  %s2 = inlined_call_operand.vmem [shape: f32[1,64], index: 2, kind: input, shape index: {}]
  %s3 = inlined_call_operand.vmem [shape: f32[1,64], index: 3, kind: input, shape index: {}]
  %s4 = inlined_call_operand.vmem [shape: f32[4,2,8,64], index: 4, kind: output, shape index: {}]
  %s5 = sld [smem:[#allocation0]]
  $region49: #{imagenet_large_frames_forward.7} parent=0
    _
  %s7 = ssub.s32 1, %s5
  %s8 = scalar_select 0, %s7, %s5
  loop: start=0, step=1, limit=6
  $region2: #{imagenet_large_frames_forward.7} parent=0 // loop_pre_header
    _
  $region3: #{imagenet_large_frames_forward.7} parent=0 // loop_header
    %s10 = sphi 0, %s14
    %p11 = scmp.ge.s32.totalorder %s10, 6
    %s20 = sphi 0, %s22
    %s23 = sphi 0, %s20
    %s24 = sphi 0, %s23
    %s40 = sphi 0, %s24
    %s44 = sphi 0, %s44
    %s46 = sphi 0, %s44
    %s47 = sphi 0, %s46
    %s61 = sphi 0, %s47
    %s65 = sphi 0, %s65
    %s67 = sphi 0, %s65
    %s68 = sphi 0, %s67
    %s82 = sphi 0, %s68
    %s86 = sphi 0, %s86
    %s88 = sphi 0, %s86
    %s89 = sphi 0, %s88
    %s103 = sphi 0, %s89
    %s109 = sphi 0, %s111
    %s112 = sphi 0, %s109
    %s113 = sphi 0, %s112
    %s129 = sphi 0, %s113
  $region4: #{imagenet_large_frames_forward.7} parent=0 // loop_header_branch
    %13 = sbr.rel (%p11) target = $region8
  $region5: #{imagenet_large_frames_forward.7} parent=0 // loop_body
    %s15 = ssub.s32 %s10, 1
    %s16 = ssub.s32 %s10, 2
    %s17 = sadd.s32 %s10, 1
    %s18 = ssub.s32 %s10, %s17
    %p19 = scmp.eq.s32.totalorder %s18, 0
    %s21 = sadd.s32 %s20, 1
    %s22 = scalar_select %p19, %s20, %s21
    %p25 = pneg %p19
    %p26 = scmp.eq.s32.totalorder %s10, 3
    %p27 = por %p25, %p26
    %p28 = scmp.ne.s32.totalorder %s20, %s23
    %p29 = scmp.eq.s32.totalorder %s10, 0
    %p30 = por %p28, %p29
    %p31 = scmp.ne.s32.totalorder %s20, %s23
    %p32 = scmp.eq.s32.totalorder %s15, 3
    %p33 = por %p31, %p32
    %p34 = scmp.ne.s32.totalorder %s23, %s24
    %p35 = scmp.eq.s32.totalorder %s15, 0
    %p36 = por %p34, %p35
    %p37 = scmp.ne.s32.totalorder %s23, %s24
    %p38 = scmp.eq.s32.totalorder %s16, 3
    %p39 = por %p37, %p38
    %p41 = scmp.ne.s32.totalorder %s24, %s40
    %p42 = scmp.eq.s32.totalorder %s16, 0
    %p43 = por %p41, %p42
    %s45 = sadd.s32 %s44, 1
    %p48 = scmp.eq.s32.totalorder %s10, 3
    %p49 = scmp.ne.s32.totalorder %s44, %s46
    %p50 = scmp.eq.s32.totalorder %s10, 0
    %p51 = por %p49, %p50
    %p52 = scmp.ne.s32.totalorder %s44, %s46
    %p53 = scmp.eq.s32.totalorder %s15, 3
    %p54 = por %p52, %p53
    %p55 = scmp.ne.s32.totalorder %s46, %s47
    %p56 = scmp.eq.s32.totalorder %s15, 0
    %p57 = por %p55, %p56
    %p58 = scmp.ne.s32.totalorder %s46, %s47
    %p59 = scmp.eq.s32.totalorder %s16, 3
    %p60 = por %p58, %p59
    %p62 = scmp.ne.s32.totalorder %s47, %s61
    %p63 = scmp.eq.s32.totalorder %s16, 0
    %p64 = por %p62, %p63
    %s66 = sadd.s32 %s65, 1
    %p69 = scmp.eq.s32.totalorder %s10, 3
    %p70 = scmp.ne.s32.totalorder %s65, %s67
    %p71 = scmp.eq.s32.totalorder %s10, 0
    %p72 = por %p70, %p71
    %p73 = scmp.ne.s32.totalorder %s65, %s67
    %p74 = scmp.eq.s32.totalorder %s15, 3
    %p75 = por %p73, %p74
    %p76 = scmp.ne.s32.totalorder %s67, %s68
    %p77 = scmp.eq.s32.totalorder %s15, 0
    %p78 = por %p76, %p77
    %p79 = scmp.ne.s32.totalorder %s67, %s68
    %p80 = scmp.eq.s32.totalorder %s16, 3
    %p81 = por %p79, %p80
    %p83 = scmp.ne.s32.totalorder %s68, %s82
    %p84 = scmp.eq.s32.totalorder %s16, 0
    %p85 = por %p83, %p84
    %s87 = sadd.s32 %s86, 1
    %p90 = scmp.eq.s32.totalorder %s10, 3
    %p91 = scmp.ne.s32.totalorder %s86, %s88
    %p92 = scmp.eq.s32.totalorder %s10, 0
    %p93 = por %p91, %p92
    %p94 = scmp.ne.s32.totalorder %s86, %s88
    %p95 = scmp.eq.s32.totalorder %s15, 3
    %p96 = por %p94, %p95
    %p97 = scmp.ne.s32.totalorder %s88, %s89
    %p98 = scmp.eq.s32.totalorder %s15, 0
    %p99 = por %p97, %p98
    %p100 = scmp.ne.s32.totalorder %s88, %s89
    %p101 = scmp.eq.s32.totalorder %s16, 3
    %p102 = por %p100, %p101
    %p104 = scmp.ne.s32.totalorder %s89, %s103
    %p105 = scmp.eq.s32.totalorder %s16, 0
    %p106 = por %p104, %p105
    %s107 = ssub.s32 %s10, %s17
    %p108 = scmp.eq.s32.totalorder %s107, 0
    %s110 = sadd.s32 %s109, 1
    %s111 = scalar_select %p108, %s109, %s110
    %p114 = pneg %p108
    %p115 = scmp.eq.s32.totalorder %s10, 3
    %p116 = por %p114, %p115
    %p117 = scmp.ne.s32.totalorder %s109, %s112
    %p118 = scmp.eq.s32.totalorder %s10, 0
    %p119 = por %p117, %p118
    %p120 = scmp.ne.s32.totalorder %s109, %s112
    %p121 = scmp.eq.s32.totalorder %s15, 3
    %p122 = por %p120, %p121
    %p123 = scmp.ne.s32.totalorder %s112, %s113
    %p124 = scmp.eq.s32.totalorder %s15, 0
    %p125 = por %p123, %p124
    %p126 = scmp.ne.s32.totalorder %s112, %s113
    %p127 = scmp.eq.s32.totalorder %s16, 3
    %p128 = por %p126, %p127
    %p130 = scmp.ne.s32.totalorder %s113, %s129
    %p131 = scmp.eq.s32.totalorder %s16, 0
    %p132 = por %p130, %p131
    %p133 = scmp.le.s32.totalorder 1, %s10
    %p134 = scmp.lt.s32.totalorder %s10, 5
    %p135 = pnand %p133, %p134
    %p136 = pneg %p135
    // Predicated region
    $region9: #{imagenet_large_frames_forward.7} parent=5 // pred_check
      _
    $region10: #{imagenet_large_frames_forward.7} parent=5 // pred_check_branch
      %138 = sbr.rel (%p135) target = $region12
    $region11: #{imagenet_large_frames_forward.7} parent=5 // pred_region
      %s139 = ssub.s32 %s10, 1
      // Predicated region
      $region13: #{imagenet_large_frames_forward.7} parent=11 // pred_check
        %p140 = pneg %p57
      $region14: #{imagenet_large_frames_forward.7} parent=11 // pred_check_branch
        %142 = sbr.rel (%p140) target = $region16
      $region15: #{imagenet_large_frames_forward.7} parent=11 // pred_region
        _
      $region16: #{imagenet_large_frames_forward.7} parent=11 // pred_fallthru
        _
      // Predicated region
      $region17: #{imagenet_large_frames_forward.7} parent=11 // pred_check
        %p143 = pneg %p78
      $region18: #{imagenet_large_frames_forward.7} parent=11 // pred_check_branch
        %145 = sbr.rel (%p143) target = $region20
      $region19: #{imagenet_large_frames_forward.7} parent=11 // pred_region
        _
      $region20: #{imagenet_large_frames_forward.7} parent=11 // pred_fallthru
        _
      // Predicated region
      $region21: #{imagenet_large_frames_forward.7} parent=11 // pred_check
        %p146 = pneg %p99
      $region22: #{imagenet_large_frames_forward.7} parent=11 // pred_check_branch
        %148 = sbr.rel (%p146) target = $region24
      $region23: #{imagenet_large_frames_forward.7} parent=11 // pred_region
        _
      $region24: #{imagenet_large_frames_forward.7} parent=11 // pred_fallthru
        _
    $region12: #{imagenet_large_frames_forward.7} parent=5 // pred_fallthru
      _
    %p149 = scmp.lt.s32.totalorder %s10, 4
    // Predicated region
    $region25: #{imagenet_large_frames_forward.7} parent=5 // pred_check
      %p150 = pneg %p149
    $region26: #{imagenet_large_frames_forward.7} parent=5 // pred_check_branch
      %152 = sbr.rel (%p150) target = $region28
    $region27: #{imagenet_large_frames_forward.7} parent=5 // pred_region
      // Predicated region
      $region29: #{imagenet_large_frames_forward.7} parent=27 // pred_check
        %p153 = pneg %p30
      $region30: #{imagenet_large_frames_forward.7} parent=27 // pred_check_branch
        %155 = sbr.rel (%p153) target = $region32
      $region31: #{imagenet_large_frames_forward.7} parent=27 // pred_region
        %p156 = scmp.lt.s32.totalorder %s10, 3
        %s157 = scalar_select %p156, %s10, 3
        %s158 = smul.addr %s157, 8
        %s159 = smul.addr %s158, 8
        %s160 = scalar_lea.vmem %s0, %s159
      $region32: #{imagenet_large_frames_forward.7} parent=27 // pred_fallthru
        _
    $region28: #{imagenet_large_frames_forward.7} parent=5 // pred_fallthru
      _
    %p161 = scmp.le.s32.totalorder 1, %s10
    %p162 = scmp.lt.s32.totalorder %s10, 5
    %p163 = pnand %p161, %p162
    %p164 = pneg %p163
    // Predicated region
    $region33: #{imagenet_large_frames_forward.7} parent=5 // pred_check
      _
    $region34: #{imagenet_large_frames_forward.7} parent=5 // pred_check_branch
      %166 = sbr.rel (%p163) target = $region36
    $region35: #{imagenet_large_frames_forward.7} parent=5 // pred_region
      %s167 = ssub.s32 %s10, 1
      %p168 = scmp.lt.s32.totalorder %s15, 3
      %s169 = scalar_select %p168, %s15, 3
      %s170 = smul.addr %s169, 8
      %s171 = smul.addr %s170, 8
      %s172 = scalar_lea.vmem %s0, %s171
      %p173 = pneg %p36
      %p174 = pneg %p33
      %p175 = pneg %p57
      %p176 = pneg %p54
      %p177 = pneg %p78
      %p178 = pneg %p75
      %p179 = pneg %p99
      %p180 = pneg %p96
      %p181 = pneg %p125
      %p182 = pneg %p122
      %p183 = scmp.lt.s32.totalorder %s15, 3
      %s184 = scalar_select %p183, %s15, 3
      %s185 = smul.addr %s184, 2
      %s186 = smul.addr %s185, 8
      %s187 = scalar_lea.vmem %s4, %s186
      %p188 = scmp.lt.s32.totalorder %s15, 3
      %s189 = scalar_select %p188, %s15, 3
      %s190 = smul.addr %s189, 8
      %s191 = smul.addr %s190, 8
      %s192 = scalar_lea.vmem %s0, %s191
      %p193 = scmp.lt.s32.totalorder %s15, 3
      %s194 = scalar_select %p193, %s15, 3
      %s195 = smul.addr %s194, 2
      %s196 = smul.addr %s195, 8
      %s197 = scalar_lea.vmem %s4, %s196
      %v199 = vld [vmem:[%s192] sm:$0xff]
      %v200 = vld [vmem:[%s192 + $0x8] sm:$0xff]
      %v201 = vld [vmem:[%s192 + $0x10] sm:$0xff]
      %v202 = vld [vmem:[%s192 + $0x18] sm:$0xff]
      %v203 = vld [vmem:[%s192 + $0x20] sm:$0xff]
      %v204 = vld [vmem:[%s192 + $0x28] sm:$0xff]
      %v205 = vld [vmem:[%s192 + $0x30] sm:$0xff]
      %v206 = vld [vmem:[%s192 + $0x38] sm:$0xff]
      %v207 = vpack.c.bf16 %v199, %v199
      %v208 = vpack.c.bf16 %v200, %v200
      %v209 = vpack.c.bf16 %v201, %v201
      %v210 = vpack.c.bf16 %v202, %v202
      %v211 = vpack.c.bf16 %v203, %v203
      %v212 = vpack.c.bf16 %v204, %v204
      %v213 = vpack.c.bf16 %v205, %v205
      %v214 = vpack.c.bf16 %v206, %v206
      %v215 = vld [vmem:[%s1] sm:$0xf]
      %v216 = vld [vmem:[%s1 + $0x4] sm:$0xf]
      %v217 = vld [vmem:[%s1 + $0x8] sm:$0xf]
      %v218 = vld [vmem:[%s1 + $0xc] sm:$0xf]
      %v219 = vld [vmem:[%s1 + $0x10] sm:$0xf]
      %v220 = vld [vmem:[%s1 + $0x14] sm:$0xf]
      %v221 = vld [vmem:[%s1 + $0x18] sm:$0xf]
      %v222 = vld [vmem:[%s1 + $0x1c] sm:$0xf]
      %v223 = vld [vmem:[%s1 + $0x20] sm:$0xf]
      %v224 = vld [vmem:[%s1 + $0x24] sm:$0xf]
      %v225 = vld [vmem:[%s1 + $0x28] sm:$0xf]
      %v226 = vld [vmem:[%s1 + $0x2c] sm:$0xf]
      %s227 = scalar_lea.vmem %s1, 48
      %v228 = vld [vmem:[%s227] sm:$0xf]
      %v229 = vld [vmem:[%s227 + $0x4] sm:$0xf]
      %v230 = vld [vmem:[%s227 + $0x8] sm:$0xf]
      %v231 = vld [vmem:[%s227 + $0xc] sm:$0xf]
      %v232 = vld [vmem:[%s227 + $0x10] sm:$0xf]
      %v233 = vld [vmem:[%s227 + $0x14] sm:$0xf]
      %v234 = vld [vmem:[%s227 + $0x18] sm:$0xf]
      %v235 = vld [vmem:[%s227 + $0x1c] sm:$0xf]
      %v236 = vld [vmem:[%s227 + $0x20] sm:$0xf]
      %v237 = vld [vmem:[%s227 + $0x24] sm:$0xf]
      %v238 = vld [vmem:[%s227 + $0x28] sm:$0xf]
      %v239 = vld [vmem:[%s227 + $0x2c] sm:$0xf]
      %v244 = vunpack.c.l.b16 %v208
      %v245 = vunpack.c.l.b16 %v209
      %v246 = vunpack.c.l.b16 %v210
      %v247 = vunpack.c.l.b16 %v211
      %v248 = vpack.c.b16 %v245, %v244
      %v249 = vpack.c.b16 %v247, %v246
      %v262 = vunpack.c.l.b16 %v228
      %v263 = vunpack.c.l.b16 %v229
      %v264 = vunpack.c.l.b16 %v230
      %v265 = vunpack.c.l.b16 %v231
      %v266 = vunpack.c.l.b16 %v232
      %v267 = vunpack.c.l.b16 %v233
      %v268 = vunpack.c.l.b16 %v234
      %v269 = vunpack.c.l.b16 %v235
      %v270 = vunpack.c.l.b16 %v236
      %v271 = vunpack.c.l.b16 %v237
      %v272 = vunpack.c.l.b16 %v238
      %v273 = vunpack.c.l.b16 %v239
      %v274 = vpack.c.b16 %v263, %v262
      %v275 = vpack.c.b16 %v265, %v264
      %v276 = vpack.c.b16 %v267, %v266
      %v277 = vpack.c.b16 %v269, %v268
      %v278 = vpack.c.b16 %v271, %v270
      %v279 = vpack.c.b16 %v273, %v272
      %vm286 = vcmask 785408
      %v288 = vsel %vm286, %v248, 0
      %v291 = vsel %vm286, %v249, 0
      %293 = vmatprep.subr.bf16.mxu0 0
      %294 = vmatpush1.bf16.msra.mxu0 0
      %295 = vmatprep.subr.bf16.mxu0 0
      %296 = vmatpush1.bf16.msra.mxu0 0
      %297 = vmatprep.subr.bf16.mxu0 0
      %298 = vmatpush1.bf16.msra.mxu0 %v279
      %299 = vmatprep.subr.bf16.mxu0 0
      %300 = vmatpush1.bf16.msra.mxu0 %v278
      %301 = vmatprep.subr.bf16.mxu0 0
      %302 = vmatpush1.bf16.msra.mxu0 %v277
      %303 = vmatprep.subr.bf16.mxu0 0
      %304 = vmatpush1.bf16.msra.mxu0 %v276
      %305 = vmatprep.subr.bf16.mxu0 0
      %306 = vmatpush1.bf16.msra.mxu0 %v275
      %307 = vmatprep.subr.bf16.mxu0 0
      %308 = vmatpush1.bf16.msra.mxu0 %v274
      %309 = vmatprep.subr.bf16.mxu0 0
      %310 = vmatpush2.bf16.msra.mxu0 0
      %311 = vmatprep.subr.bf16.mxu0 0
      %312 = vmatpush2.bf16.msra.mxu0 0
      %313 = vmatprep.subr.bf16.mxu0 0
      %314 = vmatpush2.bf16.msra.mxu0 0
      %315 = vmatprep.subr.bf16.mxu0 0
      %316 = vmatpush2.bf16.msra.mxu0 0
      %317 = vmatprep.subr.bf16.mxu0 0
      %318 = vmatpush2.bf16.msra.mxu0 0
      %319 = vmatprep.subr.bf16.mxu0 0
      %320 = vmatpush2.bf16.msra.mxu0 0
      %321 = vmatprep.subr.bf16.mxu0 0
      %322 = vmatpush2.bf16.msra.mxu0 0
      %323 = vmatprep.subr.bf16.mxu0 0
      %324 = vmatpush2.bf16.msra.mxu0 0
      %325 = vmatprep.mubr.bf16.mxu0 0
      %326 = vmatmul.mubr.bf16.gmra.mxu0 %v288
      %v327 = vpop.f32.mrf.mxu0
      %v328 = vadd.f32 0.0, %v327
      %v329 = vpop.f32.mrf.mxu0
      %v330 = vpop.f32.mrf.mxu0
      %v331 = vadd.f32 0.0, %v330
      %v332 = vpop.f32.mrf.mxu0
      %333 = vmatprep.mubr.bf16.mxu0 0
      %334 = vmatmul.mubr.bf16.gmra.mxu0 %v291
      %v335 = vpop.f32.mrf.mxu0
      %v336 = vadd.f32 0.0, %v335
      %v337 = vpop.f32.mrf.mxu0
      %v338 = vpop.f32.mrf.mxu0
      %v339 = vadd.f32 0.0, %v338
      %v340 = vpop.f32.mrf.mxu0
      %341 = vdwg.mxu0
      %v343 = vunpack.c.l.b16 %v207
      %v344 = vpack.c.b16 %v244, %v343
      %v345 = vpack.c.b16 %v246, %v245
      %v358 = vunpack.c.l.b16 %v215
      %v359 = vunpack.c.l.b16 %v216
      %v360 = vunpack.c.l.b16 %v217
      %v361 = vunpack.c.l.b16 %v218
      %v362 = vunpack.c.l.b16 %v219
      %v363 = vunpack.c.l.b16 %v220
      %v364 = vunpack.c.l.b16 %v221
      %v365 = vunpack.c.l.b16 %v222
      %v366 = vunpack.c.l.b16 %v223
      %v367 = vunpack.c.l.b16 %v224
      %v368 = vunpack.c.l.b16 %v225
      %v369 = vunpack.c.l.b16 %v226
      %v370 = vpack.c.b16 %v359, %v358
      %v371 = vpack.c.b16 %v361, %v360
      %v372 = vpack.c.b16 %v363, %v362
      %v373 = vpack.c.b16 %v365, %v364
      %v374 = vpack.c.b16 %v367, %v366
      %v375 = vpack.c.b16 %v369, %v368
      %v383 = vsel %vm286, %v344, 0
      %v386 = vsel %vm286, %v345, 0
      %388 = vmatprep.subr.bf16.mxu0 0
      %389 = vmatpush1.bf16.msra.mxu0 0
      %390 = vmatprep.subr.bf16.mxu0 0
      %391 = vmatpush1.bf16.msra.mxu0 0
      %392 = vmatprep.subr.bf16.mxu0 0
      %393 = vmatpush1.bf16.msra.mxu0 %v375
      %394 = vmatprep.subr.bf16.mxu0 0
      %395 = vmatpush1.bf16.msra.mxu0 %v374
      %396 = vmatprep.subr.bf16.mxu0 0
      %397 = vmatpush1.bf16.msra.mxu0 %v373
      %398 = vmatprep.subr.bf16.mxu0 0
      %399 = vmatpush1.bf16.msra.mxu0 %v372
      %400 = vmatprep.subr.bf16.mxu0 0
      %401 = vmatpush1.bf16.msra.mxu0 %v371
      %402 = vmatprep.subr.bf16.mxu0 0
      %403 = vmatpush1.bf16.msra.mxu0 %v370
      %404 = vmatprep.subr.bf16.mxu0 0
      %405 = vmatpush2.bf16.msra.mxu0 0
      %406 = vmatprep.subr.bf16.mxu0 0
      %407 = vmatpush2.bf16.msra.mxu0 0
      %408 = vmatprep.subr.bf16.mxu0 0
      %409 = vmatpush2.bf16.msra.mxu0 0
      %410 = vmatprep.subr.bf16.mxu0 0
      %411 = vmatpush2.bf16.msra.mxu0 0
      %412 = vmatprep.subr.bf16.mxu0 0
      %413 = vmatpush2.bf16.msra.mxu0 0
      %414 = vmatprep.subr.bf16.mxu0 0
      %415 = vmatpush2.bf16.msra.mxu0 0
      %416 = vmatprep.subr.bf16.mxu0 0
      %417 = vmatpush2.bf16.msra.mxu0 0
      %418 = vmatprep.subr.bf16.mxu0 0
      %419 = vmatpush2.bf16.msra.mxu0 0
      %420 = vmatprep.mubr.bf16.mxu0 0
      %421 = vmatmul.mubr.bf16.gmra.mxu0 %v383
      %v422 = vpop.f32.mrf.mxu0
      %v423 = vadd.f32 %v328, %v422
      %v424 = vpop.f32.mrf.mxu0
      %v425 = vpop.f32.mrf.mxu0
      %v426 = vadd.f32 %v331, %v425
      %v427 = vpop.f32.mrf.mxu0
      %428 = vmatprep.mubr.bf16.mxu0 0
      %429 = vmatmul.mubr.bf16.gmra.mxu0 %v386
      %v430 = vpop.f32.mrf.mxu0
      %v431 = vadd.f32 %v336, %v430
      %v432 = vpop.f32.mrf.mxu0
      %v433 = vpop.f32.mrf.mxu0
      %v434 = vadd.f32 %v339, %v433
      %v435 = vpop.f32.mrf.mxu0
      %436 = vdwg.mxu0
      %s437 = scalar_lea.vmem %s1, 96
      %v438 = vld [vmem:[%s437] sm:$0xf]
      %v439 = vld [vmem:[%s437 + $0x4] sm:$0xf]
      %v440 = vld [vmem:[%s437 + $0x8] sm:$0xf]
      %v441 = vld [vmem:[%s437 + $0xc] sm:$0xf]
      %v442 = vld [vmem:[%s437 + $0x10] sm:$0xf]
      %v443 = vld [vmem:[%s437 + $0x14] sm:$0xf]
      %v444 = vld [vmem:[%s437 + $0x18] sm:$0xf]
      %v445 = vld [vmem:[%s437 + $0x1c] sm:$0xf]
      %v446 = vld [vmem:[%s437 + $0x20] sm:$0xf]
      %v447 = vld [vmem:[%s437 + $0x24] sm:$0xf]
      %v448 = vld [vmem:[%s437 + $0x28] sm:$0xf]
      %v449 = vld [vmem:[%s437 + $0x2c] sm:$0xf]
      %v451 = vunpack.c.l.b16 %v212
      %v452 = vpack.c.b16 %v451, %v247
      %v465 = vunpack.c.l.b16 %v438
      %v466 = vunpack.c.l.b16 %v439
      %v467 = vunpack.c.l.b16 %v440
      %v468 = vunpack.c.l.b16 %v441
      %v469 = vunpack.c.l.b16 %v442
      %v470 = vunpack.c.l.b16 %v443
      %v471 = vunpack.c.l.b16 %v444
      %v472 = vunpack.c.l.b16 %v445
      %v473 = vunpack.c.l.b16 %v446
      %v474 = vunpack.c.l.b16 %v447
      %v475 = vunpack.c.l.b16 %v448
      %v476 = vunpack.c.l.b16 %v449
      %v477 = vpack.c.b16 %v466, %v465
      %v478 = vpack.c.b16 %v468, %v467
      %v479 = vpack.c.b16 %v470, %v469
      %v480 = vpack.c.b16 %v472, %v471
      %v481 = vpack.c.b16 %v474, %v473
      %v482 = vpack.c.b16 %v476, %v475
      %v490 = vsel %vm286, %v452, 0
      %492 = vmatprep.subr.bf16.mxu0 0
      %493 = vmatpush1.bf16.msra.mxu0 0
      %494 = vmatprep.subr.bf16.mxu0 0
      %495 = vmatpush1.bf16.msra.mxu0 0
      %496 = vmatprep.subr.bf16.mxu0 0
      %497 = vmatpush1.bf16.msra.mxu0 %v482
      %498 = vmatprep.subr.bf16.mxu0 0
      %499 = vmatpush1.bf16.msra.mxu0 %v481
      %500 = vmatprep.subr.bf16.mxu0 0
      %501 = vmatpush1.bf16.msra.mxu0 %v480
      %502 = vmatprep.subr.bf16.mxu0 0
      %503 = vmatpush1.bf16.msra.mxu0 %v479
      %504 = vmatprep.subr.bf16.mxu0 0
      %505 = vmatpush1.bf16.msra.mxu0 %v478
      %506 = vmatprep.subr.bf16.mxu0 0
      %507 = vmatpush1.bf16.msra.mxu0 %v477
      %508 = vmatprep.subr.bf16.mxu0 0
      %509 = vmatpush2.bf16.msra.mxu0 0
      %510 = vmatprep.subr.bf16.mxu0 0
      %511 = vmatpush2.bf16.msra.mxu0 0
      %512 = vmatprep.subr.bf16.mxu0 0
      %513 = vmatpush2.bf16.msra.mxu0 0
      %514 = vmatprep.subr.bf16.mxu0 0
      %515 = vmatpush2.bf16.msra.mxu0 0
      %516 = vmatprep.subr.bf16.mxu0 0
      %517 = vmatpush2.bf16.msra.mxu0 0
      %518 = vmatprep.subr.bf16.mxu0 0
      %519 = vmatpush2.bf16.msra.mxu0 0
      %520 = vmatprep.subr.bf16.mxu0 0
      %521 = vmatpush2.bf16.msra.mxu0 0
      %522 = vmatprep.subr.bf16.mxu0 0
      %523 = vmatpush2.bf16.msra.mxu0 0
      %524 = vmatprep.mubr.bf16.mxu0 0
      %525 = vmatmul.mubr.bf16.gmra.mxu0 %v386
      %v526 = vpop.f32.mrf.mxu0
      %v527 = vadd.f32 0.0, %v526
      %v528 = vpop.f32.mrf.mxu0
      %v529 = vpop.f32.mrf.mxu0
      %v530 = vadd.f32 0.0, %v529
      %v531 = vpop.f32.mrf.mxu0
      %532 = vmatprep.mubr.bf16.mxu0 0
      %533 = vmatmul.mubr.bf16.gmra.mxu0 %v490
      %v534 = vpop.f32.mrf.mxu0
      %v535 = vadd.f32 0.0, %v534
      %v536 = vpop.f32.mrf.mxu0
      %v537 = vpop.f32.mrf.mxu0
      %v538 = vadd.f32 0.0, %v537
      %v539 = vpop.f32.mrf.mxu0
      %540 = vdwg.mxu0
      %v541 = vadd.f32 %v423, %v527
      %v542 = vadd.f32 %v426, %v530
      %v543 = vadd.f32 %v431, %v535
      %v544 = vadd.f32 %v434, %v538
      %s545 = scalar_lea.vmem %s1, 144
      %v546 = vld [vmem:[%s545] sm:$0xf]
      %v547 = vld [vmem:[%s545 + $0x4] sm:$0xf]
      %v548 = vld [vmem:[%s545 + $0x8] sm:$0xf]
      %v549 = vld [vmem:[%s545 + $0xc] sm:$0xf]
      %v550 = vld [vmem:[%s545 + $0x10] sm:$0xf]
      %v551 = vld [vmem:[%s545 + $0x14] sm:$0xf]
      %v552 = vld [vmem:[%s545 + $0x18] sm:$0xf]
      %v553 = vld [vmem:[%s545 + $0x1c] sm:$0xf]
      %v554 = vld [vmem:[%s545 + $0x20] sm:$0xf]
      %v555 = vld [vmem:[%s545 + $0x24] sm:$0xf]
      %v556 = vld [vmem:[%s545 + $0x28] sm:$0xf]
      %v557 = vld [vmem:[%s545 + $0x2c] sm:$0xf]
      %v559 = vunpack.c.l.b16 %v213
      %v560 = vpack.c.b16 %v559, %v451
      %v573 = vunpack.c.l.b16 %v546
      %v574 = vunpack.c.l.b16 %v547
      %v575 = vunpack.c.l.b16 %v548
      %v576 = vunpack.c.l.b16 %v549
      %v577 = vunpack.c.l.b16 %v550
      %v578 = vunpack.c.l.b16 %v551
      %v579 = vunpack.c.l.b16 %v552
      %v580 = vunpack.c.l.b16 %v553
      %v581 = vunpack.c.l.b16 %v554
      %v582 = vunpack.c.l.b16 %v555
      %v583 = vunpack.c.l.b16 %v556
      %v584 = vunpack.c.l.b16 %v557
      %v585 = vpack.c.b16 %v574, %v573
      %v586 = vpack.c.b16 %v576, %v575
      %v587 = vpack.c.b16 %v578, %v577
      %v588 = vpack.c.b16 %v580, %v579
      %v589 = vpack.c.b16 %v582, %v581
      %v590 = vpack.c.b16 %v584, %v583
      %v598 = vsel %vm286, %v560, 0
      %600 = vmatprep.subr.bf16.mxu0 0
      %601 = vmatpush1.bf16.msra.mxu0 0
      %602 = vmatprep.subr.bf16.mxu0 0
      %603 = vmatpush1.bf16.msra.mxu0 0
      %604 = vmatprep.subr.bf16.mxu0 0
      %605 = vmatpush1.bf16.msra.mxu0 %v590
      %606 = vmatprep.subr.bf16.mxu0 0
      %607 = vmatpush1.bf16.msra.mxu0 %v589
      %608 = vmatprep.subr.bf16.mxu0 0
      %609 = vmatpush1.bf16.msra.mxu0 %v588
      %610 = vmatprep.subr.bf16.mxu0 0
      %611 = vmatpush1.bf16.msra.mxu0 %v587
      %612 = vmatprep.subr.bf16.mxu0 0
      %613 = vmatpush1.bf16.msra.mxu0 %v586
      %614 = vmatprep.subr.bf16.mxu0 0
      %615 = vmatpush1.bf16.msra.mxu0 %v585
      %616 = vmatprep.subr.bf16.mxu0 0
      %617 = vmatpush2.bf16.msra.mxu0 0
      %618 = vmatprep.subr.bf16.mxu0 0
      %619 = vmatpush2.bf16.msra.mxu0 0
      %620 = vmatprep.subr.bf16.mxu0 0
      %621 = vmatpush2.bf16.msra.mxu0 0
      %622 = vmatprep.subr.bf16.mxu0 0
      %623 = vmatpush2.bf16.msra.mxu0 0
      %624 = vmatprep.subr.bf16.mxu0 0
      %625 = vmatpush2.bf16.msra.mxu0 0
      %626 = vmatprep.subr.bf16.mxu0 0
      %627 = vmatpush2.bf16.msra.mxu0 0
      %628 = vmatprep.subr.bf16.mxu0 0
      %629 = vmatpush2.bf16.msra.mxu0 0
      %630 = vmatprep.subr.bf16.mxu0 0
      %631 = vmatpush2.bf16.msra.mxu0 0
      %632 = vmatprep.mubr.bf16.mxu0 0
      %633 = vmatmul.mubr.bf16.gmra.mxu0 %v291
      %v634 = vpop.f32.mrf.mxu0
      %v635 = vadd.f32 0.0, %v634
      %v636 = vpop.f32.mrf.mxu0
      %v637 = vpop.f32.mrf.mxu0
      %v638 = vadd.f32 0.0, %v637
      %v639 = vpop.f32.mrf.mxu0
      %640 = vmatprep.mubr.bf16.mxu0 0
      %641 = vmatmul.mubr.bf16.gmra.mxu0 %v598
      %v642 = vpop.f32.mrf.mxu0
      %v643 = vadd.f32 0.0, %v642
      %v644 = vpop.f32.mrf.mxu0
      %v645 = vpop.f32.mrf.mxu0
      %v646 = vadd.f32 0.0, %v645
      %v647 = vpop.f32.mrf.mxu0
      %648 = vdwg.mxu0
      %v649 = vadd.f32 %v541, %v635
      %v650 = vadd.f32 %v542, %v638
      %v651 = vadd.f32 %v543, %v643
      %v652 = vadd.f32 %v544, %v646
      %s653 = scalar_lea.vmem %s1, 192
      %v654 = vld [vmem:[%s653] sm:$0xf]
      %v655 = vld [vmem:[%s653 + $0x4] sm:$0xf]
      %v656 = vld [vmem:[%s653 + $0x8] sm:$0xf]
      %v657 = vld [vmem:[%s653 + $0xc] sm:$0xf]
      %v658 = vld [vmem:[%s653 + $0x10] sm:$0xf]
      %v659 = vld [vmem:[%s653 + $0x14] sm:$0xf]
      %v660 = vld [vmem:[%s653 + $0x18] sm:$0xf]
      %v661 = vld [vmem:[%s653 + $0x1c] sm:$0xf]
      %v662 = vld [vmem:[%s653 + $0x20] sm:$0xf]
      %v663 = vld [vmem:[%s653 + $0x24] sm:$0xf]
      %v664 = vld [vmem:[%s653 + $0x28] sm:$0xf]
      %v665 = vld [vmem:[%s653 + $0x2c] sm:$0xf]
      %v667 = vunpack.c.l.b16 %v214
      %v668 = vpack.c.b16 %v667, %v559
      %v681 = vunpack.c.l.b16 %v654
      %v682 = vunpack.c.l.b16 %v655
      %v683 = vunpack.c.l.b16 %v656
      %v684 = vunpack.c.l.b16 %v657
      %v685 = vunpack.c.l.b16 %v658
      %v686 = vunpack.c.l.b16 %v659
      %v687 = vunpack.c.l.b16 %v660
      %v688 = vunpack.c.l.b16 %v661
      %v689 = vunpack.c.l.b16 %v662
      %v690 = vunpack.c.l.b16 %v663
      %v691 = vunpack.c.l.b16 %v664
      %v692 = vunpack.c.l.b16 %v665
      %v693 = vpack.c.b16 %v682, %v681
      %v694 = vpack.c.b16 %v684, %v683
      %v695 = vpack.c.b16 %v686, %v685
      %v696 = vpack.c.b16 %v688, %v687
      %v697 = vpack.c.b16 %v690, %v689
      %v698 = vpack.c.b16 %v692, %v691
      %v706 = vsel %vm286, %v668, 0
      %708 = vmatprep.subr.bf16.mxu0 0
      %709 = vmatpush1.bf16.msra.mxu0 0
      %710 = vmatprep.subr.bf16.mxu0 0
      %711 = vmatpush1.bf16.msra.mxu0 0
      %712 = vmatprep.subr.bf16.mxu0 0
      %713 = vmatpush1.bf16.msra.mxu0 %v698
      %714 = vmatprep.subr.bf16.mxu0 0
      %715 = vmatpush1.bf16.msra.mxu0 %v697
      %716 = vmatprep.subr.bf16.mxu0 0
      %717 = vmatpush1.bf16.msra.mxu0 %v696
      %718 = vmatprep.subr.bf16.mxu0 0
      %719 = vmatpush1.bf16.msra.mxu0 %v695
      %720 = vmatprep.subr.bf16.mxu0 0
      %721 = vmatpush1.bf16.msra.mxu0 %v694
      %722 = vmatprep.subr.bf16.mxu0 0
      %723 = vmatpush1.bf16.msra.mxu0 %v693
      %724 = vmatprep.subr.bf16.mxu0 0
      %725 = vmatpush2.bf16.msra.mxu0 0
      %726 = vmatprep.subr.bf16.mxu0 0
      %727 = vmatpush2.bf16.msra.mxu0 0
      %728 = vmatprep.subr.bf16.mxu0 0
      %729 = vmatpush2.bf16.msra.mxu0 0
      %730 = vmatprep.subr.bf16.mxu0 0
      %731 = vmatpush2.bf16.msra.mxu0 0
      %732 = vmatprep.subr.bf16.mxu0 0
      %733 = vmatpush2.bf16.msra.mxu0 0
      %734 = vmatprep.subr.bf16.mxu0 0
      %735 = vmatpush2.bf16.msra.mxu0 0
      %736 = vmatprep.subr.bf16.mxu0 0
      %737 = vmatpush2.bf16.msra.mxu0 0
      %738 = vmatprep.subr.bf16.mxu0 0
      %739 = vmatpush2.bf16.msra.mxu0 0
      %740 = vmatprep.mubr.bf16.mxu0 0
      %741 = vmatmul.mubr.bf16.gmra.mxu0 %v490
      %v742 = vpop.f32.mrf.mxu0
      %v743 = vadd.f32 0.0, %v742
      %v744 = vpop.f32.mrf.mxu0
      %v745 = vpop.f32.mrf.mxu0
      %v746 = vadd.f32 0.0, %v745
      %v747 = vpop.f32.mrf.mxu0
      %748 = vmatprep.mubr.bf16.mxu0 0
      %749 = vmatmul.mubr.bf16.gmra.mxu0 %v706
      %v750 = vpop.f32.mrf.mxu0
      %v751 = vadd.f32 0.0, %v750
      %v752 = vpop.f32.mrf.mxu0
      %v753 = vpop.f32.mrf.mxu0
      %v754 = vadd.f32 0.0, %v753
      %v755 = vpop.f32.mrf.mxu0
      %756 = vdwg.mxu0
      %v757 = vadd.f32 %v649, %v743
      %v758 = vadd.f32 %v650, %v746
      %v759 = vadd.f32 %v651, %v751
      %v760 = vadd.f32 %v652, %v754
      %v761 = vld [vmem:[%s2] sm:$0x1]
      %v763 = vlaneseq
      %v764 = vshrl.u32 %v763, 7
      %v765 = vsub.s32 0, %v764
      %v766 = vrot.slane %v761, %v765
      %v768 = vmul.f32 %v757, %v766
      %v769 = vmul.f32 %v758, %v766
      %v770 = vmul.f32 %v759, %v766
      %v771 = vmul.f32 %v760, %v766
      %v772 = vld [vmem:[%s3] sm:$0x1]
      %v774 = vlaneseq
      %v775 = vshrl.u32 %v774, 7
      %v776 = vsub.s32 0, %v775
      %v777 = vrot.slane %v772, %v776
      %v779 = vadd.f32 %v768, %v777
      %v780 = vadd.f32 %v769, %v777
      %v781 = vadd.f32 %v770, %v777
      %v782 = vadd.f32 %v771, %v777
      %v783 = vmax.f32 %v779, 0.0
      %v784 = vmax.f32 %v780, 0.0
      %v785 = vmax.f32 %v781, 0.0
      %v786 = vmax.f32 %v782, 0.0
      %v787 = vmax.f32 %v783, %v784
      %v788 = vmax.f32 %v785, %v786
      %vm789 = vcmask 523264
      %790 = vst.msk [vmem:[%s197] sm:$0xff] %vm789, %v787
      %791 = vst.msk [vmem:[%s197 + $0x8] sm:$0xff] %vm789, %v788
      %p792 = scmp.lt.s32.totalorder %s15, 3
      %s793 = scalar_select %p792, %s15, 3
      %s794 = smul.addr %s793, 2
      %s795 = smul.addr %s794, 8
      %s796 = scalar_lea.vmem %s4, %s795
      // Predicated region
      $region37: #{imagenet_large_frames_forward.7} parent=35 // pred_check
        %p797 = pneg %p122
      $region38: #{imagenet_large_frames_forward.7} parent=35 // pred_check_branch
        %799 = sbr.rel (%p797) target = $region40
      $region39: #{imagenet_large_frames_forward.7} parent=35 // pred_region
        _
      $region40: #{imagenet_large_frames_forward.7} parent=35 // pred_fallthru
        _
    $region36: #{imagenet_large_frames_forward.7} parent=5 // pred_fallthru
      _
    %p800 = scmp.le.s32.totalorder 2, %s10
    // Predicated region
    $region41: #{imagenet_large_frames_forward.7} parent=5 // pred_check
      %p801 = pneg %p800
    $region42: #{imagenet_large_frames_forward.7} parent=5 // pred_check_branch
      %803 = sbr.rel (%p801) target = $region44
    $region43: #{imagenet_large_frames_forward.7} parent=5 // pred_region
      %s804 = ssub.s32 %s10, 2
      // Predicated region
      $region45: #{imagenet_large_frames_forward.7} parent=43 // pred_check
        %p805 = pneg %p128
      $region46: #{imagenet_large_frames_forward.7} parent=43 // pred_check_branch
        %807 = sbr.rel (%p805) target = $region48
      $region47: #{imagenet_large_frames_forward.7} parent=43 // pred_region
        %p808 = scmp.lt.s32.totalorder %s16, 3
        %s809 = scalar_select %p808, %s16, 3
        %s810 = smul.addr %s809, 2
        %s811 = smul.addr %s810, 8
        %s812 = scalar_lea.vmem %s4, %s811
      $region48: #{imagenet_large_frames_forward.7} parent=43 // pred_fallthru
        _
    $region44: #{imagenet_large_frames_forward.7} parent=5 // pred_fallthru
      _
  $region6: #{imagenet_large_frames_forward.7} parent=0 // loop_footer
    %s14 = sadd.s32 1, %s10
  $region7: #{imagenet_large_frames_forward.7} parent=0 // loop_footer_branch
    %9 = sbr.rel target = $region3
  $region8: #{imagenet_large_frames_forward.7} parent=0 // loop_exit
    _

// kernel: imagenet_large_frames_forward.8
$region0: #{imagenet_large_frames_forward.8}
  #allocation0 [shape = 'u32[]', space=smem, size = 0x4, offset = 0x4, fixed_abs, tag = 'smem constant byte address 0x4 - core index']
  #allocation1 [shape = 'u32[144,128]{1,0:T(1,128)}', space=vmem, size = 0x12000, scoped, tag = 'internal scratch']
  #allocation2 [shape = 'f32[1,8,128]{2,1,0:T(8,128)}', space=vmem, size = 0x1000, scoped, tag = 'scratch operand']
  %s0 = inlined_call_operand.vmem [shape: f32[4,4,8,192], index: 0, kind: input, shape index: {}]
  %s1 = inlined_call_operand.vmem [shape: bf16[3,192,128], index: 1, kind: input, shape index: {}]
  %s2 = inlined_call_operand.vmem [shape: f32[1,128], index: 2, kind: input, shape index: {}]
  %s3 = inlined_call_operand.vmem [shape: f32[1,128], index: 3, kind: input, shape index: {}]
  %s4 = inlined_call_operand.vmem [shape: f32[4,1,4,128], index: 4, kind: output, shape index: {}]
  %s5 = sld [smem:[#allocation0]]
  $region49: #{imagenet_large_frames_forward.8} parent=0
    _
  %s7 = ssub.s32 1, %s5
  %s8 = scalar_select 0, %s7, %s5
  loop: start=0, step=1, limit=6
  $region2: #{imagenet_large_frames_forward.8} parent=0 // loop_pre_header
    _
  $region3: #{imagenet_large_frames_forward.8} parent=0 // loop_header
    %s10 = sphi 0, %s14
    %p11 = scmp.ge.s32.totalorder %s10, 6
    %s20 = sphi 0, %s22
    %s23 = sphi 0, %s20
    %s24 = sphi 0, %s23
    %s40 = sphi 0, %s24
    %s44 = sphi 0, %s44
    %s46 = sphi 0, %s44
    %s47 = sphi 0, %s46
    %s61 = sphi 0, %s47
    %s65 = sphi 0, %s65
    %s67 = sphi 0, %s65
    %s68 = sphi 0, %s67
    %s82 = sphi 0, %s68
    %s86 = sphi 0, %s86
    %s88 = sphi 0, %s86
    %s89 = sphi 0, %s88
    %s103 = sphi 0, %s89
    %s109 = sphi 0, %s111
    %s112 = sphi 0, %s109
    %s113 = sphi 0, %s112
    %s129 = sphi 0, %s113
  $region4: #{imagenet_large_frames_forward.8} parent=0 // loop_header_branch
    %13 = sbr.rel (%p11) target = $region8
  $region5: #{imagenet_large_frames_forward.8} parent=0 // loop_body
    %s15 = ssub.s32 %s10, 1
    %s16 = ssub.s32 %s10, 2
    %s17 = sadd.s32 %s10, 1
    %s18 = ssub.s32 %s10, %s17
    %p19 = scmp.eq.s32.totalorder %s18, 0
    %s21 = sadd.s32 %s20, 1
    %s22 = scalar_select %p19, %s20, %s21
    %p25 = pneg %p19
    %p26 = scmp.eq.s32.totalorder %s10, 3
    %p27 = por %p25, %p26
    %p28 = scmp.ne.s32.totalorder %s20, %s23
    %p29 = scmp.eq.s32.totalorder %s10, 0
    %p30 = por %p28, %p29
    %p31 = scmp.ne.s32.totalorder %s20, %s23
    %p32 = scmp.eq.s32.totalorder %s15, 3
    %p33 = por %p31, %p32
    %p34 = scmp.ne.s32.totalorder %s23, %s24
    %p35 = scmp.eq.s32.totalorder %s15, 0
    %p36 = por %p34, %p35
    %p37 = scmp.ne.s32.totalorder %s23, %s24
    %p38 = scmp.eq.s32.totalorder %s16, 3
    %p39 = por %p37, %p38
    %p41 = scmp.ne.s32.totalorder %s24, %s40
    %p42 = scmp.eq.s32.totalorder %s16, 0
    %p43 = por %p41, %p42
    %s45 = sadd.s32 %s44, 1
    %p48 = scmp.eq.s32.totalorder %s10, 3
    %p49 = scmp.ne.s32.totalorder %s44, %s46
    %p50 = scmp.eq.s32.totalorder %s10, 0
    %p51 = por %p49, %p50
    %p52 = scmp.ne.s32.totalorder %s44, %s46
    %p53 = scmp.eq.s32.totalorder %s15, 3
    %p54 = por %p52, %p53
    %p55 = scmp.ne.s32.totalorder %s46, %s47
    %p56 = scmp.eq.s32.totalorder %s15, 0
    %p57 = por %p55, %p56
    %p58 = scmp.ne.s32.totalorder %s46, %s47
    %p59 = scmp.eq.s32.totalorder %s16, 3
    %p60 = por %p58, %p59
    %p62 = scmp.ne.s32.totalorder %s47, %s61
    %p63 = scmp.eq.s32.totalorder %s16, 0
    %p64 = por %p62, %p63
    %s66 = sadd.s32 %s65, 1
    %p69 = scmp.eq.s32.totalorder %s10, 3
    %p70 = scmp.ne.s32.totalorder %s65, %s67
    %p71 = scmp.eq.s32.totalorder %s10, 0
    %p72 = por %p70, %p71
    %p73 = scmp.ne.s32.totalorder %s65, %s67
    %p74 = scmp.eq.s32.totalorder %s15, 3
    %p75 = por %p73, %p74
    %p76 = scmp.ne.s32.totalorder %s67, %s68
    %p77 = scmp.eq.s32.totalorder %s15, 0
    %p78 = por %p76, %p77
    %p79 = scmp.ne.s32.totalorder %s67, %s68
    %p80 = scmp.eq.s32.totalorder %s16, 3
    %p81 = por %p79, %p80
    %p83 = scmp.ne.s32.totalorder %s68, %s82
    %p84 = scmp.eq.s32.totalorder %s16, 0
    %p85 = por %p83, %p84
    %s87 = sadd.s32 %s86, 1
    %p90 = scmp.eq.s32.totalorder %s10, 3
    %p91 = scmp.ne.s32.totalorder %s86, %s88
    %p92 = scmp.eq.s32.totalorder %s10, 0
    %p93 = por %p91, %p92
    %p94 = scmp.ne.s32.totalorder %s86, %s88
    %p95 = scmp.eq.s32.totalorder %s15, 3
    %p96 = por %p94, %p95
    %p97 = scmp.ne.s32.totalorder %s88, %s89
    %p98 = scmp.eq.s32.totalorder %s15, 0
    %p99 = por %p97, %p98
    %p100 = scmp.ne.s32.totalorder %s88, %s89
    %p101 = scmp.eq.s32.totalorder %s16, 3
    %p102 = por %p100, %p101
    %p104 = scmp.ne.s32.totalorder %s89, %s103
    %p105 = scmp.eq.s32.totalorder %s16, 0
    %p106 = por %p104, %p105
    %s107 = ssub.s32 %s10, %s17
    %p108 = scmp.eq.s32.totalorder %s107, 0
    %s110 = sadd.s32 %s109, 1
    %s111 = scalar_select %p108, %s109, %s110
    %p114 = pneg %p108
    %p115 = scmp.eq.s32.totalorder %s10, 3
    %p116 = por %p114, %p115
    %p117 = scmp.ne.s32.totalorder %s109, %s112
    %p118 = scmp.eq.s32.totalorder %s10, 0
    %p119 = por %p117, %p118
    %p120 = scmp.ne.s32.totalorder %s109, %s112
    %p121 = scmp.eq.s32.totalorder %s15, 3
    %p122 = por %p120, %p121
    %p123 = scmp.ne.s32.totalorder %s112, %s113
    %p124 = scmp.eq.s32.totalorder %s15, 0
    %p125 = por %p123, %p124
    %p126 = scmp.ne.s32.totalorder %s112, %s113
    %p127 = scmp.eq.s32.totalorder %s16, 3
    %p128 = por %p126, %p127
    %p130 = scmp.ne.s32.totalorder %s113, %s129
    %p131 = scmp.eq.s32.totalorder %s16, 0
    %p132 = por %p130, %p131
    %p133 = scmp.le.s32.totalorder 1, %s10
    %p134 = scmp.lt.s32.totalorder %s10, 5
    %p135 = pnand %p133, %p134
    %p136 = pneg %p135
    // Predicated region
    $region9: #{imagenet_large_frames_forward.8} parent=5 // pred_check
      _
    $region10: #{imagenet_large_frames_forward.8} parent=5 // pred_check_branch
      %138 = sbr.rel (%p135) target = $region12
    $region11: #{imagenet_large_frames_forward.8} parent=5 // pred_region
      %s139 = ssub.s32 %s10, 1
      // Predicated region
      $region13: #{imagenet_large_frames_forward.8} parent=11 // pred_check
        %p140 = pneg %p57
      $region14: #{imagenet_large_frames_forward.8} parent=11 // pred_check_branch
        %142 = sbr.rel (%p140) target = $region16
      $region15: #{imagenet_large_frames_forward.8} parent=11 // pred_region
        _
      $region16: #{imagenet_large_frames_forward.8} parent=11 // pred_fallthru
        _
      // Predicated region
      $region17: #{imagenet_large_frames_forward.8} parent=11 // pred_check
        %p143 = pneg %p78
      $region18: #{imagenet_large_frames_forward.8} parent=11 // pred_check_branch
        %145 = sbr.rel (%p143) target = $region20
      $region19: #{imagenet_large_frames_forward.8} parent=11 // pred_region
        _
      $region20: #{imagenet_large_frames_forward.8} parent=11 // pred_fallthru
        _
      // Predicated region
      $region21: #{imagenet_large_frames_forward.8} parent=11 // pred_check
        %p146 = pneg %p99
      $region22: #{imagenet_large_frames_forward.8} parent=11 // pred_check_branch
        %148 = sbr.rel (%p146) target = $region24
      $region23: #{imagenet_large_frames_forward.8} parent=11 // pred_region
        _
      $region24: #{imagenet_large_frames_forward.8} parent=11 // pred_fallthru
        _
    $region12: #{imagenet_large_frames_forward.8} parent=5 // pred_fallthru
      _
    %p149 = scmp.lt.s32.totalorder %s10, 4
    // Predicated region
    $region25: #{imagenet_large_frames_forward.8} parent=5 // pred_check
      %p150 = pneg %p149
    $region26: #{imagenet_large_frames_forward.8} parent=5 // pred_check_branch
      %152 = sbr.rel (%p150) target = $region28
    $region27: #{imagenet_large_frames_forward.8} parent=5 // pred_region
      // Predicated region
      $region29: #{imagenet_large_frames_forward.8} parent=27 // pred_check
        %p153 = pneg %p30
      $region30: #{imagenet_large_frames_forward.8} parent=27 // pred_check_branch
        %155 = sbr.rel (%p153) target = $region32
      $region31: #{imagenet_large_frames_forward.8} parent=27 // pred_region
        %p156 = scmp.lt.s32.totalorder %s10, 3
        %s157 = scalar_select %p156, %s10, 3
        %s158 = smul.addr %s157, 8
        %s159 = smul.addr %s158, 8
        %s160 = scalar_lea.vmem %s0, %s159
      $region32: #{imagenet_large_frames_forward.8} parent=27 // pred_fallthru
        _
    $region28: #{imagenet_large_frames_forward.8} parent=5 // pred_fallthru
      _
    %p161 = scmp.le.s32.totalorder 1, %s10
    %p162 = scmp.lt.s32.totalorder %s10, 5
    %p163 = pnand %p161, %p162
    %p164 = pneg %p163
    // Predicated region
    $region33: #{imagenet_large_frames_forward.8} parent=5 // pred_check
      _
    $region34: #{imagenet_large_frames_forward.8} parent=5 // pred_check_branch
      %166 = sbr.rel (%p163) target = $region36
    $region35: #{imagenet_large_frames_forward.8} parent=5 // pred_region
      %s167 = ssub.s32 %s10, 1
      %p168 = scmp.lt.s32.totalorder %s15, 3
      %s169 = scalar_select %p168, %s15, 3
      %s170 = smul.addr %s169, 8
      %s171 = smul.addr %s170, 8
      %s172 = scalar_lea.vmem %s0, %s171
      %p173 = pneg %p36
      %p174 = pneg %p33
      %p175 = pneg %p57
      %p176 = pneg %p54
      %p177 = pneg %p78
      %p178 = pneg %p75
      %p179 = pneg %p99
      %p180 = pneg %p96
      %p181 = pneg %p125
      %p182 = pneg %p122
      %p183 = scmp.lt.s32.totalorder %s15, 3
      %s184 = scalar_select %p183, %s15, 3
      %s185 = smul.addr %s184, 4
      %s186 = scalar_lea.vmem %s4, %s185
      %p187 = scmp.lt.s32.totalorder %s15, 3
      %s188 = scalar_select %p187, %s15, 3
      %s189 = smul.addr %s188, 8
      %s190 = smul.addr %s189, 8
      %s191 = scalar_lea.vmem %s0, %s190
      %p192 = scmp.lt.s32.totalorder %s15, 3
      %s193 = scalar_select %p192, %s15, 3
      %s194 = smul.addr %s193, 4
      %s195 = scalar_lea.vmem %s4, %s194
      %v197 = vld [vmem:[%s191] sm:$0xff]
      %v198 = vld [vmem:[%s191 + $0x8] sm:$0xff]
      %v199 = vld [vmem:[%s191 + $0x10] sm:$0xff]
      %v200 = vld [vmem:[%s191 + $0x18] sm:$0xff]
      %v201 = vld [vmem:[%s191 + $0x20] sm:$0xff]
      %v202 = vld [vmem:[%s191 + $0x28] sm:$0xff]
      %v203 = vld [vmem:[%s191 + $0x30] sm:$0xff]
      %v204 = vld [vmem:[%s191 + $0x38] sm:$0xff]
      %v205 = vpack.c.bf16 %v197, %v197
      %v206 = vpack.c.bf16 %v198, %v198
      %v207 = vpack.c.bf16 %v199, %v199
      %v208 = vpack.c.bf16 %v200, %v200
      %v209 = vpack.c.bf16 %v201, %v201
      %v210 = vpack.c.bf16 %v202, %v202
      %v211 = vpack.c.bf16 %v203, %v203
      %v212 = vpack.c.bf16 %v204, %v204
      %v217 = vunpack.c.l.b16 %v205
      %v218 = vunpack.c.l.b16 %v206
      %v219 = vunpack.c.l.b16 %v207
      %v220 = vunpack.c.l.b16 %v208
      %v221 = vld [vmem:[%s1] sm:$0xf]
      %v222 = vld [vmem:[%s1 + $0x4] sm:$0xf]
      %v223 = vld [vmem:[%s1 + $0x8] sm:$0xf]
      %v224 = vld [vmem:[%s1 + $0xc] sm:$0xf]
      %v225 = vld [vmem:[%s1 + $0x10] sm:$0xf]
      %v226 = vld [vmem:[%s1 + $0x14] sm:$0xf]
      %v227 = vld [vmem:[%s1 + $0x18] sm:$0xf]
      %v228 = vld [vmem:[%s1 + $0x1c] sm:$0xf]
      %v229 = vld [vmem:[%s1 + $0x20] sm:$0xf]
      %v230 = vld [vmem:[%s1 + $0x24] sm:$0xf]
      %v231 = vld [vmem:[%s1 + $0x28] sm:$0xf]
      %v232 = vld [vmem:[%s1 + $0x2c] sm:$0xf]
      %v233 = vld [vmem:[%s1 + $0x30] sm:$0xf]
      %v234 = vld [vmem:[%s1 + $0x34] sm:$0xf]
      %v235 = vld [vmem:[%s1 + $0x38] sm:$0xf]
      %v236 = vld [vmem:[%s1 + $0x3c] sm:$0xf]
      %v237 = vld [vmem:[%s1 + $0x40] sm:$0xf]
      %v238 = vld [vmem:[%s1 + $0x44] sm:$0xf]
      %v239 = vld [vmem:[%s1 + $0x48] sm:$0xf]
      %v240 = vld [vmem:[%s1 + $0x4c] sm:$0xf]
      %v241 = vld [vmem:[%s1 + $0x50] sm:$0xf]
      %v242 = vld [vmem:[%s1 + $0x54] sm:$0xf]
      %v243 = vld [vmem:[%s1 + $0x58] sm:$0xf]
      %v244 = vld [vmem:[%s1 + $0x5c] sm:$0xf]
      %v247 = vunpack.c.l.b16 %v209
      %v248 = vunpack.c.l.b16 %v210
      %s249 = scalar_lea.vmem %s1, 96
      %v250 = vld [vmem:[%s249] sm:$0xf]
      %v251 = vld [vmem:[%s249 + $0x4] sm:$0xf]
      %v252 = vld [vmem:[%s249 + $0x8] sm:$0xf]
      %v253 = vld [vmem:[%s249 + $0xc] sm:$0xf]
      %v254 = vld [vmem:[%s249 + $0x10] sm:$0xf]
      %v255 = vld [vmem:[%s249 + $0x14] sm:$0xf]
      %v256 = vld [vmem:[%s249 + $0x18] sm:$0xf]
      %v257 = vld [vmem:[%s249 + $0x1c] sm:$0xf]
      %v258 = vld [vmem:[%s249 + $0x20] sm:$0xf]
      %v259 = vld [vmem:[%s249 + $0x24] sm:$0xf]
      %v260 = vld [vmem:[%s249 + $0x28] sm:$0xf]
      %v261 = vld [vmem:[%s249 + $0x2c] sm:$0xf]
      %v262 = vld [vmem:[%s249 + $0x30] sm:$0xf]
      %v263 = vld [vmem:[%s249 + $0x34] sm:$0xf]
      %v264 = vld [vmem:[%s249 + $0x38] sm:$0xf]
      %v265 = vld [vmem:[%s249 + $0x3c] sm:$0xf]
      %v266 = vld [vmem:[%s249 + $0x40] sm:$0xf]
      %v267 = vld [vmem:[%s249 + $0x44] sm:$0xf]
      %v268 = vld [vmem:[%s249 + $0x48] sm:$0xf]
      %v269 = vld [vmem:[%s249 + $0x4c] sm:$0xf]
      %v270 = vld [vmem:[%s249 + $0x50] sm:$0xf]
      %v271 = vld [vmem:[%s249 + $0x54] sm:$0xf]
      %v272 = vld [vmem:[%s249 + $0x58] sm:$0xf]
      %v273 = vld [vmem:[%s249 + $0x5c] sm:$0xf]
      %v274 = vpack.c.b16 %v247, %v219
      %v275 = vpack.c.b16 %v248, %v220
      %v301 = vunpack.c.l.b16 %v250
      %v302 = vunpack.c.l.b16 %v251
      %v303 = vunpack.c.l.b16 %v252
      %v304 = vunpack.c.l.b16 %v253
      %v305 = vunpack.c.l.b16 %v254
      %v306 = vunpack.c.l.b16 %v255
      %v307 = vunpack.c.l.b16 %v256
      %v308 = vunpack.c.l.b16 %v257
      %v309 = vunpack.c.l.b16 %v258
      %v310 = vunpack.c.l.b16 %v259
      %v311 = vunpack.c.l.b16 %v260
      %v312 = vunpack.c.l.b16 %v261
      %v313 = vunpack.c.l.b16 %v262
      %v314 = vunpack.c.l.b16 %v263
      %v315 = vunpack.c.l.b16 %v264
      %v316 = vunpack.c.l.b16 %v265
      %v317 = vunpack.c.l.b16 %v266
      %v318 = vunpack.c.l.b16 %v267
      %v319 = vunpack.c.l.b16 %v268
      %v320 = vunpack.c.l.b16 %v269
      %v321 = vunpack.c.l.b16 %v270
      %v322 = vunpack.c.l.b16 %v271
      %v323 = vunpack.c.l.b16 %v272
      %v324 = vunpack.c.l.b16 %v273
      %v325 = vpack.c.b16 %v302, %v301
      %v326 = vpack.c.b16 %v304, %v303
      %v327 = vpack.c.b16 %v306, %v305
      %v328 = vpack.c.b16 %v308, %v307
      %v329 = vpack.c.b16 %v310, %v309
      %v330 = vpack.c.b16 %v312, %v311
      %v331 = vpack.c.b16 %v314, %v313
      %v332 = vpack.c.b16 %v316, %v315
      %v333 = vpack.c.b16 %v318, %v317
      %v334 = vpack.c.b16 %v320, %v319
      %v335 = vpack.c.b16 %v322, %v321
      %v336 = vpack.c.b16 %v324, %v323
      %vm349 = vcmask 523264
      %v351 = vsel %vm349, %v275, 0
      %353 = vmatprep.subr.bf16.mxu0 0
      %354 = vmatpush1.bf16.msra.mxu0 %v332
      %355 = vmatprep.subr.bf16.mxu0 0
      %356 = vmatpush1.bf16.msra.mxu0 %v331
      %357 = vmatprep.subr.bf16.mxu0 0
      %358 = vmatpush1.bf16.msra.mxu0 %v330
      %359 = vmatprep.subr.bf16.mxu0 0
      %360 = vmatpush1.bf16.msra.mxu0 %v329
      %361 = vmatprep.subr.bf16.mxu0 0
      %362 = vmatpush1.bf16.msra.mxu0 %v328
      %363 = vmatprep.subr.bf16.mxu0 0
      %364 = vmatpush1.bf16.msra.mxu0 %v327
      %365 = vmatprep.subr.bf16.mxu0 0
      %366 = vmatpush1.bf16.msra.mxu0 %v326
      %367 = vmatprep.subr.bf16.mxu0 0
      %368 = vmatpush1.bf16.msra.mxu0 %v325
      %369 = vmatprep.subr.bf16.mxu0 0
      %370 = vmatpush2.bf16.msra.mxu0 0
      %371 = vmatprep.subr.bf16.mxu0 0
      %372 = vmatpush2.bf16.msra.mxu0 0
      %373 = vmatprep.subr.bf16.mxu0 0
      %374 = vmatpush2.bf16.msra.mxu0 0
      %375 = vmatprep.subr.bf16.mxu0 0
      %376 = vmatpush2.bf16.msra.mxu0 0
      %377 = vmatprep.subr.bf16.mxu0 0
      %378 = vmatpush2.bf16.msra.mxu0 %v336
      %379 = vmatprep.subr.bf16.mxu0 0
      %380 = vmatpush2.bf16.msra.mxu0 %v335
      %381 = vmatprep.subr.bf16.mxu0 0
      %382 = vmatpush2.bf16.msra.mxu0 %v334
      %383 = vmatprep.subr.bf16.mxu0 0
      %384 = vmatpush2.bf16.msra.mxu0 %v333
      %385 = vmatprep.mubr.bf16.mxu0 %v351
      %386 = vmatmul.mubr.bf16.gmra.mxu0 %v274
      %v387 = vpop.f32.mrf.mxu0
      %v388 = vadd.f32 0.0, %v387
      %v389 = vpop.f32.mrf.mxu0
      %v390 = vpop.f32.mrf.mxu0
      %v391 = vadd.f32 0.0, %v390
      %v392 = vpop.f32.mrf.mxu0
      %393 = vdwg.mxu0
      %v394 = vpack.c.b16 %v219, %v217
      %v395 = vpack.c.b16 %v220, %v218
      %v421 = vunpack.c.l.b16 %v221
      %v422 = vunpack.c.l.b16 %v222
      %v423 = vunpack.c.l.b16 %v223
      %v424 = vunpack.c.l.b16 %v224
      %v425 = vunpack.c.l.b16 %v225
      %v426 = vunpack.c.l.b16 %v226
      %v427 = vunpack.c.l.b16 %v227
      %v428 = vunpack.c.l.b16 %v228
      %v429 = vunpack.c.l.b16 %v229
      %v430 = vunpack.c.l.b16 %v230
      %v431 = vunpack.c.l.b16 %v231
      %v432 = vunpack.c.l.b16 %v232
      %v433 = vunpack.c.l.b16 %v233
      %v434 = vunpack.c.l.b16 %v234
      %v435 = vunpack.c.l.b16 %v235
      %v436 = vunpack.c.l.b16 %v236
      %v437 = vunpack.c.l.b16 %v237
      %v438 = vunpack.c.l.b16 %v238
      %v439 = vunpack.c.l.b16 %v239
      %v440 = vunpack.c.l.b16 %v240
      %v441 = vunpack.c.l.b16 %v241
      %v442 = vunpack.c.l.b16 %v242
      %v443 = vunpack.c.l.b16 %v243
      %v444 = vunpack.c.l.b16 %v244
      %v445 = vpack.c.b16 %v422, %v421
      %v446 = vpack.c.b16 %v424, %v423
      %v447 = vpack.c.b16 %v426, %v425
      %v448 = vpack.c.b16 %v428, %v427
      %v449 = vpack.c.b16 %v430, %v429
      %v450 = vpack.c.b16 %v432, %v431
      %v451 = vpack.c.b16 %v434, %v433
      %v452 = vpack.c.b16 %v436, %v435
      %v453 = vpack.c.b16 %v438, %v437
      %v454 = vpack.c.b16 %v440, %v439
      %v455 = vpack.c.b16 %v442, %v441
      %v456 = vpack.c.b16 %v444, %v443
      %v470 = vsel %vm349, %v395, 0
      %472 = vmatprep.subr.bf16.mxu0 0
      %473 = vmatpush1.bf16.msra.mxu0 %v452
      %474 = vmatprep.subr.bf16.mxu0 0
      %475 = vmatpush1.bf16.msra.mxu0 %v451
      %476 = vmatprep.subr.bf16.mxu0 0
      %477 = vmatpush1.bf16.msra.mxu0 %v450
      %478 = vmatprep.subr.bf16.mxu0 0
      %479 = vmatpush1.bf16.msra.mxu0 %v449
      %480 = vmatprep.subr.bf16.mxu0 0
      %481 = vmatpush1.bf16.msra.mxu0 %v448
      %482 = vmatprep.subr.bf16.mxu0 0
      %483 = vmatpush1.bf16.msra.mxu0 %v447
      %484 = vmatprep.subr.bf16.mxu0 0
      %485 = vmatpush1.bf16.msra.mxu0 %v446
      %486 = vmatprep.subr.bf16.mxu0 0
      %487 = vmatpush1.bf16.msra.mxu0 %v445
      %488 = vmatprep.subr.bf16.mxu0 0
      %489 = vmatpush2.bf16.msra.mxu0 0
      %490 = vmatprep.subr.bf16.mxu0 0
      %491 = vmatpush2.bf16.msra.mxu0 0
      %492 = vmatprep.subr.bf16.mxu0 0
      %493 = vmatpush2.bf16.msra.mxu0 0
      %494 = vmatprep.subr.bf16.mxu0 0
      %495 = vmatpush2.bf16.msra.mxu0 0
      %496 = vmatprep.subr.bf16.mxu0 0
      %497 = vmatpush2.bf16.msra.mxu0 %v456
      %498 = vmatprep.subr.bf16.mxu0 0
      %499 = vmatpush2.bf16.msra.mxu0 %v455
      %500 = vmatprep.subr.bf16.mxu0 0
      %501 = vmatpush2.bf16.msra.mxu0 %v454
      %502 = vmatprep.subr.bf16.mxu0 0
      %503 = vmatpush2.bf16.msra.mxu0 %v453
      %504 = vmatprep.mubr.bf16.mxu0 %v470
      %505 = vmatmul.mubr.bf16.gmra.mxu0 %v394
      %v506 = vpop.f32.mrf.mxu0
      %v507 = vadd.f32 %v388, %v506
      %v508 = vpop.f32.mrf.mxu0
      %v509 = vpop.f32.mrf.mxu0
      %v510 = vadd.f32 %v391, %v509
      %v511 = vpop.f32.mrf.mxu0
      %512 = vdwg.mxu0
      %v515 = vunpack.c.l.b16 %v211
      %v516 = vunpack.c.l.b16 %v212
      %s517 = scalar_lea.vmem %s1, 192
      %v518 = vld [vmem:[%s517] sm:$0xf]
      %v519 = vld [vmem:[%s517 + $0x4] sm:$0xf]
      %v520 = vld [vmem:[%s517 + $0x8] sm:$0xf]
      %v521 = vld [vmem:[%s517 + $0xc] sm:$0xf]
      %v522 = vld [vmem:[%s517 + $0x10] sm:$0xf]
      %v523 = vld [vmem:[%s517 + $0x14] sm:$0xf]
      %v524 = vld [vmem:[%s517 + $0x18] sm:$0xf]
      %v525 = vld [vmem:[%s517 + $0x1c] sm:$0xf]
      %v526 = vld [vmem:[%s517 + $0x20] sm:$0xf]
      %v527 = vld [vmem:[%s517 + $0x24] sm:$0xf]
      %v528 = vld [vmem:[%s517 + $0x28] sm:$0xf]
      %v529 = vld [vmem:[%s517 + $0x2c] sm:$0xf]
      %v530 = vld [vmem:[%s517 + $0x30] sm:$0xf]
      %v531 = vld [vmem:[%s517 + $0x34] sm:$0xf]
      %v532 = vld [vmem:[%s517 + $0x38] sm:$0xf]
      %v533 = vld [vmem:[%s517 + $0x3c] sm:$0xf]
      %v534 = vld [vmem:[%s517 + $0x40] sm:$0xf]
      %v535 = vld [vmem:[%s517 + $0x44] sm:$0xf]
      %v536 = vld [vmem:[%s517 + $0x48] sm:$0xf]
      %v537 = vld [vmem:[%s517 + $0x4c] sm:$0xf]
      %v538 = vld [vmem:[%s517 + $0x50] sm:$0xf]
      %v539 = vld [vmem:[%s517 + $0x54] sm:$0xf]
      %v540 = vld [vmem:[%s517 + $0x58] sm:$0xf]
      %v541 = vld [vmem:[%s517 + $0x5c] sm:$0xf]
      %v542 = vpack.c.b16 %v515, %v247
      %v543 = vpack.c.b16 %v516, %v248
      %v569 = vunpack.c.l.b16 %v518
      %v570 = vunpack.c.l.b16 %v519
      %v571 = vunpack.c.l.b16 %v520
      %v572 = vunpack.c.l.b16 %v521
      %v573 = vunpack.c.l.b16 %v522
      %v574 = vunpack.c.l.b16 %v523
      %v575 = vunpack.c.l.b16 %v524
      %v576 = vunpack.c.l.b16 %v525
      %v577 = vunpack.c.l.b16 %v526
      %v578 = vunpack.c.l.b16 %v527
      %v579 = vunpack.c.l.b16 %v528
      %v580 = vunpack.c.l.b16 %v529
      %v581 = vunpack.c.l.b16 %v530
      %v582 = vunpack.c.l.b16 %v531
      %v583 = vunpack.c.l.b16 %v532
      %v584 = vunpack.c.l.b16 %v533
      %v585 = vunpack.c.l.b16 %v534
      %v586 = vunpack.c.l.b16 %v535
      %v587 = vunpack.c.l.b16 %v536
      %v588 = vunpack.c.l.b16 %v537
      %v589 = vunpack.c.l.b16 %v538
      %v590 = vunpack.c.l.b16 %v539
      %v591 = vunpack.c.l.b16 %v540
      %v592 = vunpack.c.l.b16 %v541
      %v593 = vpack.c.b16 %v570, %v569
      %v594 = vpack.c.b16 %v572, %v571
      %v595 = vpack.c.b16 %v574, %v573
      %v596 = vpack.c.b16 %v576, %v575
      %v597 = vpack.c.b16 %v578, %v577
      %v598 = vpack.c.b16 %v580, %v579
      %v599 = vpack.c.b16 %v582, %v581
      %v600 = vpack.c.b16 %v584, %v583
      %v601 = vpack.c.b16 %v586, %v585
      %v602 = vpack.c.b16 %v588, %v587
      %v603 = vpack.c.b16 %v590, %v589
      %v604 = vpack.c.b16 %v592, %v591
      %v618 = vsel %vm349, %v543, 0
      %620 = vmatprep.subr.bf16.mxu0 0
      %621 = vmatpush1.bf16.msra.mxu0 %v600
      %622 = vmatprep.subr.bf16.mxu0 0
      %623 = vmatpush1.bf16.msra.mxu0 %v599
      %624 = vmatprep.subr.bf16.mxu0 0
      %625 = vmatpush1.bf16.msra.mxu0 %v598
      %626 = vmatprep.subr.bf16.mxu0 0
      %627 = vmatpush1.bf16.msra.mxu0 %v597
      %628 = vmatprep.subr.bf16.mxu0 0
      %629 = vmatpush1.bf16.msra.mxu0 %v596
      %630 = vmatprep.subr.bf16.mxu0 0
      %631 = vmatpush1.bf16.msra.mxu0 %v595
      %632 = vmatprep.subr.bf16.mxu0 0
      %633 = vmatpush1.bf16.msra.mxu0 %v594
      %634 = vmatprep.subr.bf16.mxu0 0
      %635 = vmatpush1.bf16.msra.mxu0 %v593
      %636 = vmatprep.subr.bf16.mxu0 0
      %637 = vmatpush2.bf16.msra.mxu0 0
      %638 = vmatprep.subr.bf16.mxu0 0
      %639 = vmatpush2.bf16.msra.mxu0 0
      %640 = vmatprep.subr.bf16.mxu0 0
      %641 = vmatpush2.bf16.msra.mxu0 0
      %642 = vmatprep.subr.bf16.mxu0 0
      %643 = vmatpush2.bf16.msra.mxu0 0
      %644 = vmatprep.subr.bf16.mxu0 0
      %645 = vmatpush2.bf16.msra.mxu0 %v604
      %646 = vmatprep.subr.bf16.mxu0 0
      %647 = vmatpush2.bf16.msra.mxu0 %v603
      %648 = vmatprep.subr.bf16.mxu0 0
      %649 = vmatpush2.bf16.msra.mxu0 %v602
      %650 = vmatprep.subr.bf16.mxu0 0
      %651 = vmatpush2.bf16.msra.mxu0 %v601
      %652 = vmatprep.mubr.bf16.mxu0 %v618
      %653 = vmatmul.mubr.bf16.gmra.mxu0 %v542
      %v654 = vpop.f32.mrf.mxu0
      %v655 = vadd.f32 0.0, %v654
      %v656 = vpop.f32.mrf.mxu0
      %v657 = vpop.f32.mrf.mxu0
      %v658 = vadd.f32 0.0, %v657
      %v659 = vpop.f32.mrf.mxu0
      %660 = vdwg.mxu0
      %v661 = vadd.f32 %v507, %v655
      %v662 = vadd.f32 %v510, %v658
      %v663 = vld [vmem:[%s2] sm:$0x1]
      %v665 = vlaneseq
      %v666 = vshrl.u32 %v665, 7
      %v667 = vsub.s32 0, %v666
      %v668 = vrot.slane %v663, %v667
      %v670 = vmul.f32 %v661, %v668
      %v671 = vmul.f32 %v662, %v668
      %v672 = vld [vmem:[%s3] sm:$0x1]
      %v674 = vlaneseq
      %v675 = vshrl.u32 %v674, 7
      %v676 = vsub.s32 0, %v675
      %v677 = vrot.slane %v672, %v676
      %v679 = vadd.f32 %v670, %v677
      %v680 = vadd.f32 %v671, %v677
      %v681 = vmax.f32 %v679, 0.0
      %v682 = vmax.f32 %v680, 0.0
      %v683 = vmax.f32 %v681, %v682
      %684 = vst [vmem:[#allocation2] sm:$0xff] %v683
      %v685 = vld [vmem:[#allocation2] ss:$2 sm:$0xf]
      %s686 = scalar_lea.vmem [#allocation2], 1
      %v687 = vld [vmem:[%s686] ss:$2 sm:$0xf]
      %v688 = vmax.f32 %v685, %v687
      %689 = vst [vmem:[%s195] sm:$0xf] %v688
      %p690 = scmp.lt.s32.totalorder %s15, 3
      %s691 = scalar_select %p690, %s15, 3
      %s692 = smul.addr %s691, 4
      %s693 = scalar_lea.vmem %s4, %s692
      // Predicated region
      $region37: #{imagenet_large_frames_forward.8} parent=35 // pred_check
        %p694 = pneg %p122
      $region38: #{imagenet_large_frames_forward.8} parent=35 // pred_check_branch
        %696 = sbr.rel (%p694) target = $region40
      $region39: #{imagenet_large_frames_forward.8} parent=35 // pred_region
        _
      $region40: #{imagenet_large_frames_forward.8} parent=35 // pred_fallthru
        _
    $region36: #{imagenet_large_frames_forward.8} parent=5 // pred_fallthru
      _
    %p697 = scmp.le.s32.totalorder 2, %s10
    // Predicated region
    $region41: #{imagenet_large_frames_forward.8} parent=5 // pred_check
      %p698 = pneg %p697
    $region42: #{imagenet_large_frames_forward.8} parent=5 // pred_check_branch
      %700 = sbr.rel (%p698) target = $region44
    $region43: #{imagenet_large_frames_forward.8} parent=5 // pred_region
      %s701 = ssub.s32 %s10, 2
      // Predicated region
      $region45: #{imagenet_large_frames_forward.8} parent=43 // pred_check
        %p702 = pneg %p128
      $region46: #{imagenet_large_frames_forward.8} parent=43 // pred_check_branch
        %704 = sbr.rel (%p702) target = $region48
      $region47: #{imagenet_large_frames_forward.8} parent=43 // pred_region
        %p705 = scmp.lt.s32.totalorder %s16, 3
        %s706 = scalar_select %p705, %s16, 3
        %s707 = smul.addr %s706, 4
        %s708 = scalar_lea.vmem %s4, %s707
      $region48: #{imagenet_large_frames_forward.8} parent=43 // pred_fallthru
        _
    $region44: #{imagenet_large_frames_forward.8} parent=5 // pred_fallthru
      _
  $region6: #{imagenet_large_frames_forward.8} parent=0 // loop_footer
    %s14 = sadd.s32 1, %s10
  $region7: #{imagenet_large_frames_forward.8} parent=0 // loop_footer_branch
    %9 = sbr.rel target = $region3
  $region8: #{imagenet_large_frames_forward.8} parent=0 // loop_exit
    _

// kernel: imagenet_large_frames_forward.9
$region0: #{imagenet_large_frames_forward.9}
  #allocation0 [shape = 'u32[]', space=smem, size = 0x4, offset = 0x4, fixed_abs, tag = 'smem constant byte address 0x4 - core index']
  #allocation1 [shape = 'u32[144,128]{1,0:T(1,128)}', space=vmem, size = 0x12000, scoped, tag = 'internal scratch']
  #allocation2 [shape = 'f32[1,4,256]{2,1,0:T(4,128)}', space=vmem, size = 0x1000, scoped, tag = 'scratch operand']
  %s0 = inlined_call_operand.vmem [shape: f32[4,3,4,384], index: 0, kind: input, shape index: {}]
  %s1 = inlined_call_operand.vmem [shape: bf16[3,384,256], index: 1, kind: input, shape index: {}]
  %s2 = inlined_call_operand.vmem [shape: f32[1,256], index: 2, kind: input, shape index: {}]
  %s3 = inlined_call_operand.vmem [shape: f32[1,256], index: 3, kind: input, shape index: {}]
  %s4 = inlined_call_operand.hbm [shape: f32[4,1,4,256], index: 4, kind: output, shape index: {}]
  %s5 = sld [smem:[#allocation0]]
  $region49: #{imagenet_large_frames_forward.9} parent=0
    _
  %s7 = ssub.s32 1, %s5
  %s8 = scalar_select 0, %s7, %s5
  $region1: #{imagenet_large_frames_forward.9} parent=0
    #allocation3 [shape = 'u8[8192]{0}', space=vmem, size = 0x2000, scoped, tag = 'output window, operand 0']
    #allocation4 [shape = 's32[2]{0}', space=sflag, size = 0x8, scoped, tag = 'scoped memory for imagenet_large_frames_forward.9']
    %9 = vsyncpa [#allocation4], 0
    %s10 = scalar_lea.sflag [#allocation4], 1
    %11 = vsyncpa %s10, 0
    loop: start=0, step=1, limit=6
    $region2: #{imagenet_large_frames_forward.9} parent=1 // loop_pre_header
      _
    $region3: #{imagenet_large_frames_forward.9} parent=1 // loop_header
      %s13 = sphi 0, %s17
      %p14 = scmp.ge.s32.totalorder %s13, 6
      %s23 = sphi 0, %s25
      %s26 = sphi 0, %s23
      %s27 = sphi 0, %s26
      %s43 = sphi 0, %s27
      %s47 = sphi 0, %s47
      %s49 = sphi 0, %s47
      %s50 = sphi 0, %s49
      %s64 = sphi 0, %s50
      %s68 = sphi 0, %s68
      %s70 = sphi 0, %s68
      %s71 = sphi 0, %s70
      %s85 = sphi 0, %s71
      %s89 = sphi 0, %s89
      %s91 = sphi 0, %s89
      %s92 = sphi 0, %s91
      %s106 = sphi 0, %s92
      %s112 = sphi 0, %s114
      %s115 = sphi 0, %s112
      %s116 = sphi 0, %s115
      %s132 = sphi 0, %s116
    $region4: #{imagenet_large_frames_forward.9} parent=1 // loop_header_branch
      %16 = sbr.rel (%p14) target = $region8
    $region5: #{imagenet_large_frames_forward.9} parent=1 // loop_body
      %s18 = ssub.s32 %s13, 1
      %s19 = ssub.s32 %s13, 2
      %s20 = sadd.s32 %s13, 1
      %s21 = ssub.s32 %s13, %s20
      %p22 = scmp.eq.s32.totalorder %s21, 0
      %s24 = sadd.s32 %s23, 1
      %s25 = scalar_select %p22, %s23, %s24
      %p28 = pneg %p22
      %p29 = scmp.eq.s32.totalorder %s13, 3
      %p30 = por %p28, %p29
      %p31 = scmp.ne.s32.totalorder %s23, %s26
      %p32 = scmp.eq.s32.totalorder %s13, 0
      %p33 = por %p31, %p32
      %p34 = scmp.ne.s32.totalorder %s23, %s26
      %p35 = scmp.eq.s32.totalorder %s18, 3
      %p36 = por %p34, %p35
      %p37 = scmp.ne.s32.totalorder %s26, %s27
      %p38 = scmp.eq.s32.totalorder %s18, 0
      %p39 = por %p37, %p38
      %p40 = scmp.ne.s32.totalorder %s26, %s27
      %p41 = scmp.eq.s32.totalorder %s19, 3
      %p42 = por %p40, %p41
      %p44 = scmp.ne.s32.totalorder %s27, %s43
      %p45 = scmp.eq.s32.totalorder %s19, 0
      %p46 = por %p44, %p45
      %s48 = sadd.s32 %s47, 1
      %p51 = scmp.eq.s32.totalorder %s13, 3
      %p52 = scmp.ne.s32.totalorder %s47, %s49
      %p53 = scmp.eq.s32.totalorder %s13, 0
      %p54 = por %p52, %p53
      %p55 = scmp.ne.s32.totalorder %s47, %s49
      %p56 = scmp.eq.s32.totalorder %s18, 3
      %p57 = por %p55, %p56
      %p58 = scmp.ne.s32.totalorder %s49, %s50
      %p59 = scmp.eq.s32.totalorder %s18, 0
      %p60 = por %p58, %p59
      %p61 = scmp.ne.s32.totalorder %s49, %s50
      %p62 = scmp.eq.s32.totalorder %s19, 3
      %p63 = por %p61, %p62
      %p65 = scmp.ne.s32.totalorder %s50, %s64
      %p66 = scmp.eq.s32.totalorder %s19, 0
      %p67 = por %p65, %p66
      %s69 = sadd.s32 %s68, 1
      %p72 = scmp.eq.s32.totalorder %s13, 3
      %p73 = scmp.ne.s32.totalorder %s68, %s70
      %p74 = scmp.eq.s32.totalorder %s13, 0
      %p75 = por %p73, %p74
      %p76 = scmp.ne.s32.totalorder %s68, %s70
      %p77 = scmp.eq.s32.totalorder %s18, 3
      %p78 = por %p76, %p77
      %p79 = scmp.ne.s32.totalorder %s70, %s71
      %p80 = scmp.eq.s32.totalorder %s18, 0
      %p81 = por %p79, %p80
      %p82 = scmp.ne.s32.totalorder %s70, %s71
      %p83 = scmp.eq.s32.totalorder %s19, 3
      %p84 = por %p82, %p83
      %p86 = scmp.ne.s32.totalorder %s71, %s85
      %p87 = scmp.eq.s32.totalorder %s19, 0
      %p88 = por %p86, %p87
      %s90 = sadd.s32 %s89, 1
      %p93 = scmp.eq.s32.totalorder %s13, 3
      %p94 = scmp.ne.s32.totalorder %s89, %s91
      %p95 = scmp.eq.s32.totalorder %s13, 0
      %p96 = por %p94, %p95
      %p97 = scmp.ne.s32.totalorder %s89, %s91
      %p98 = scmp.eq.s32.totalorder %s18, 3
      %p99 = por %p97, %p98
      %p100 = scmp.ne.s32.totalorder %s91, %s92
      %p101 = scmp.eq.s32.totalorder %s18, 0
      %p102 = por %p100, %p101
      %p103 = scmp.ne.s32.totalorder %s91, %s92
      %p104 = scmp.eq.s32.totalorder %s19, 3
      %p105 = por %p103, %p104
      %p107 = scmp.ne.s32.totalorder %s92, %s106
      %p108 = scmp.eq.s32.totalorder %s19, 0
      %p109 = por %p107, %p108
      %s110 = ssub.s32 %s13, %s20
      %p111 = scmp.eq.s32.totalorder %s110, 0
      %s113 = sadd.s32 %s112, 1
      %s114 = scalar_select %p111, %s112, %s113
      %p117 = pneg %p111
      %p118 = scmp.eq.s32.totalorder %s13, 3
      %p119 = por %p117, %p118
      %p120 = scmp.ne.s32.totalorder %s112, %s115
      %p121 = scmp.eq.s32.totalorder %s13, 0
      %p122 = por %p120, %p121
      %p123 = scmp.ne.s32.totalorder %s112, %s115
      %p124 = scmp.eq.s32.totalorder %s18, 3
      %p125 = por %p123, %p124
      %p126 = scmp.ne.s32.totalorder %s115, %s116
      %p127 = scmp.eq.s32.totalorder %s18, 0
      %p128 = por %p126, %p127
      %p129 = scmp.ne.s32.totalorder %s115, %s116
      %p130 = scmp.eq.s32.totalorder %s19, 3
      %p131 = por %p129, %p130
      %p133 = scmp.ne.s32.totalorder %s116, %s132
      %p134 = scmp.eq.s32.totalorder %s19, 0
      %p135 = por %p133, %p134
      %p136 = scmp.le.s32.totalorder 1, %s13
      %p137 = scmp.lt.s32.totalorder %s13, 5
      %p138 = pnand %p136, %p137
      %p139 = pneg %p138
      // Predicated region
      $region9: #{imagenet_large_frames_forward.9} parent=5 // pred_check
        _
      $region10: #{imagenet_large_frames_forward.9} parent=5 // pred_check_branch
        %141 = sbr.rel (%p138) target = $region12
      $region11: #{imagenet_large_frames_forward.9} parent=5 // pred_region
        %s142 = ssub.s32 %s13, 1
        // Predicated region
        $region13: #{imagenet_large_frames_forward.9} parent=11 // pred_check
          %p143 = pneg %p60
        $region14: #{imagenet_large_frames_forward.9} parent=11 // pred_check_branch
          %145 = sbr.rel (%p143) target = $region16
        $region15: #{imagenet_large_frames_forward.9} parent=11 // pred_region
          _
        $region16: #{imagenet_large_frames_forward.9} parent=11 // pred_fallthru
          _
        // Predicated region
        $region17: #{imagenet_large_frames_forward.9} parent=11 // pred_check
          %p146 = pneg %p81
        $region18: #{imagenet_large_frames_forward.9} parent=11 // pred_check_branch
          %148 = sbr.rel (%p146) target = $region20
        $region19: #{imagenet_large_frames_forward.9} parent=11 // pred_region
          _
        $region20: #{imagenet_large_frames_forward.9} parent=11 // pred_fallthru
          _
        // Predicated region
        $region21: #{imagenet_large_frames_forward.9} parent=11 // pred_check
          %p149 = pneg %p102
        $region22: #{imagenet_large_frames_forward.9} parent=11 // pred_check_branch
          %151 = sbr.rel (%p149) target = $region24
        $region23: #{imagenet_large_frames_forward.9} parent=11 // pred_region
          _
        $region24: #{imagenet_large_frames_forward.9} parent=11 // pred_fallthru
          _
      $region12: #{imagenet_large_frames_forward.9} parent=5 // pred_fallthru
        _
      %p152 = scmp.lt.s32.totalorder %s13, 4
      // Predicated region
      $region25: #{imagenet_large_frames_forward.9} parent=5 // pred_check
        %p153 = pneg %p152
      $region26: #{imagenet_large_frames_forward.9} parent=5 // pred_check_branch
        %155 = sbr.rel (%p153) target = $region28
      $region27: #{imagenet_large_frames_forward.9} parent=5 // pred_region
        // Predicated region
        $region29: #{imagenet_large_frames_forward.9} parent=27 // pred_check
          %p156 = pneg %p33
        $region30: #{imagenet_large_frames_forward.9} parent=27 // pred_check_branch
          %158 = sbr.rel (%p156) target = $region32
        $region31: #{imagenet_large_frames_forward.9} parent=27 // pred_region
          %p159 = scmp.lt.s32.totalorder %s13, 3
          %s160 = scalar_select %p159, %s13, 3
          %s161 = smul.addr %s160, 9
          %s162 = smul.addr %s161, 4
          %s163 = scalar_lea.vmem %s0, %s162
        $region32: #{imagenet_large_frames_forward.9} parent=27 // pred_fallthru
          _
      $region28: #{imagenet_large_frames_forward.9} parent=5 // pred_fallthru
        _
      %p164 = scmp.le.s32.totalorder 1, %s13
      %p165 = scmp.lt.s32.totalorder %s13, 5
      %p166 = pnand %p164, %p165
      %p167 = pneg %p166
      // Predicated region
      $region33: #{imagenet_large_frames_forward.9} parent=5 // pred_check
        _
      $region34: #{imagenet_large_frames_forward.9} parent=5 // pred_check_branch
        %169 = sbr.rel (%p166) target = $region36
      $region35: #{imagenet_large_frames_forward.9} parent=5 // pred_region
        %s170 = ssub.s32 %s13, 1
        %p171 = scmp.lt.s32.totalorder %s18, 3
        %s172 = scalar_select %p171, %s18, 3
        %s173 = smul.addr %s172, 9
        %s174 = smul.addr %s173, 4
        %s175 = scalar_lea.vmem %s0, %s174
        %p176 = pneg %p39
        %p177 = pneg %p36
        %p178 = pneg %p60
        %p179 = pneg %p57
        %p180 = pneg %p81
        %p181 = pneg %p78
        %p182 = pneg %p102
        %p183 = pneg %p99
        %p184 = pneg %p128
        %p185 = pneg %p125
        %s186 = sand.u32 %s115, 1
        %s187 = scalar_lea.sflag [#allocation4], %s186
        %s188 = sand.u32 %s115, 1
        %s189 = smul.addr %s188, 8
        %s190 = scalar_lea.vmem [#allocation3], %s189
        %p191 = scmp.lt.s32.totalorder %s18, 3
        %s192 = scalar_select %p191, %s18, 3
        %s193 = smul.addr %s192, 9
        %s194 = smul.addr %s193, 4
        %s195 = scalar_lea.vmem %s0, %s194
        %v197 = vld [vmem:[%s195] sm:$0xff]
        %v198 = vld [vmem:[%s195 + $0x8] sm:$0xf]
        %v199 = vld [vmem:[%s195 + $0xc] sm:$0xff]
        %v200 = vld [vmem:[%s195 + $0x14] sm:$0xf]
        %v201 = vld [vmem:[%s195 + $0x18] sm:$0xff]
        %v202 = vld [vmem:[%s195 + $0x20] sm:$0xf]
        %v206 = vcombine.high %v197, %v197
        %v207 = vcombine.high %v199, %v199
        %v208 = vcombine.high %v201, %v201
        %v212 = vpack.c.bf16 %v197, %v197
        %v213 = vpack.c.bf16 %v206, %v206
        %v214 = vpack.c.bf16 %v198, %v198
        %v215 = vpack.c.bf16 %v199, %v199
        %v216 = vpack.c.bf16 %v207, %v207
        %v217 = vpack.c.bf16 %v200, %v200
        %v218 = vpack.c.bf16 %v201, %v201
        %v219 = vpack.c.bf16 %v208, %v208
        %v220 = vpack.c.bf16 %v202, %v202
        %v221 = vld [vmem:[%s1] sm:$0xff]
        %v222 = vld [vmem:[%s1 + $0x8] sm:$0xff]
        %v223 = vld [vmem:[%s1 + $0x10] sm:$0xff]
        %v224 = vld [vmem:[%s1 + $0x18] sm:$0xff]
        %v225 = vld [vmem:[%s1 + $0x20] sm:$0xff]
        %v226 = vld [vmem:[%s1 + $0x28] sm:$0xff]
        %v227 = vld [vmem:[%s1 + $0x30] sm:$0xff]
        %v228 = vld [vmem:[%s1 + $0x38] sm:$0xff]
        %v229 = vld [vmem:[%s1 + $0x40] sm:$0xff]
        %v230 = vld [vmem:[%s1 + $0x48] sm:$0xff]
        %v231 = vld [vmem:[%s1 + $0x50] sm:$0xff]
        %v232 = vld [vmem:[%s1 + $0x58] sm:$0xff]
        %v233 = vld [vmem:[%s1 + $0x60] sm:$0xff]
        %v234 = vld [vmem:[%s1 + $0x68] sm:$0xff]
        %v235 = vld [vmem:[%s1 + $0x70] sm:$0xff]
        %v236 = vld [vmem:[%s1 + $0x78] sm:$0xff]
        %v237 = vld [vmem:[%s1 + $0x80] sm:$0xff]
        %v238 = vld [vmem:[%s1 + $0x88] sm:$0xff]
        %v239 = vld [vmem:[%s1 + $0x90] sm:$0xff]
        %v240 = vld [vmem:[%s1 + $0x98] sm:$0xff]
        %v241 = vld [vmem:[%s1 + $0xa0] sm:$0xff]
        %v242 = vld [vmem:[%s1 + $0xa8] sm:$0xff]
        %v243 = vld [vmem:[%s1 + $0xb0] sm:$0xff]
        %v244 = vld [vmem:[%s1 + $0xb8] sm:$0xff]
        %v245 = vld [vmem:[%s1 + $0xc0] sm:$0xff]
        %v246 = vld [vmem:[%s1 + $0xc8] sm:$0xff]
        %v247 = vld [vmem:[%s1 + $0xd0] sm:$0xff]
        %v248 = vld [vmem:[%s1 + $0xd8] sm:$0xff]
        %v249 = vld [vmem:[%s1 + $0xe0] sm:$0xff]
        %v250 = vld [vmem:[%s1 + $0xe8] sm:$0xff]
        %v251 = vld [vmem:[%s1 + $0xf0] sm:$0xff]
        %v252 = vld [vmem:[%s1 + $0xf8] sm:$0xff]
        %v253 = vld [vmem:[%s1 + $0x100] sm:$0xff]
        %v254 = vld [vmem:[%s1 + $0x108] sm:$0xff]
        %v255 = vld [vmem:[%s1 + $0x110] sm:$0xff]
        %v256 = vld [vmem:[%s1 + $0x118] sm:$0xff]
        %v257 = vld [vmem:[%s1 + $0x120] sm:$0xff]
        %v258 = vld [vmem:[%s1 + $0x128] sm:$0xff]
        %v259 = vld [vmem:[%s1 + $0x130] sm:$0xff]
        %v260 = vld [vmem:[%s1 + $0x138] sm:$0xff]
        %v261 = vld [vmem:[%s1 + $0x140] sm:$0xff]
        %v262 = vld [vmem:[%s1 + $0x148] sm:$0xff]
        %v263 = vld [vmem:[%s1 + $0x150] sm:$0xff]
        %v264 = vld [vmem:[%s1 + $0x158] sm:$0xff]
        %v265 = vld [vmem:[%s1 + $0x160] sm:$0xff]
        %v266 = vld [vmem:[%s1 + $0x168] sm:$0xff]
        %v267 = vld [vmem:[%s1 + $0x170] sm:$0xff]
        %v268 = vld [vmem:[%s1 + $0x178] sm:$0xff]
        %s269 = scalar_lea.vmem %s1, 384
        %v270 = vld [vmem:[%s269] sm:$0xff]
        %v271 = vld [vmem:[%s269 + $0x8] sm:$0xff]
        %v272 = vld [vmem:[%s269 + $0x10] sm:$0xff]
        %v273 = vld [vmem:[%s269 + $0x18] sm:$0xff]
        %v274 = vld [vmem:[%s269 + $0x20] sm:$0xff]
        %v275 = vld [vmem:[%s269 + $0x28] sm:$0xff]
        %v276 = vld [vmem:[%s269 + $0x30] sm:$0xff]
        %v277 = vld [vmem:[%s269 + $0x38] sm:$0xff]
        %v278 = vld [vmem:[%s269 + $0x40] sm:$0xff]
        %v279 = vld [vmem:[%s269 + $0x48] sm:$0xff]
        %v280 = vld [vmem:[%s269 + $0x50] sm:$0xff]
        %v281 = vld [vmem:[%s269 + $0x58] sm:$0xff]
        %v282 = vld [vmem:[%s269 + $0x60] sm:$0xff]
        %v283 = vld [vmem:[%s269 + $0x68] sm:$0xff]
        %v284 = vld [vmem:[%s269 + $0x70] sm:$0xff]
        %v285 = vld [vmem:[%s269 + $0x78] sm:$0xff]
        %v286 = vld [vmem:[%s269 + $0x80] sm:$0xff]
        %v287 = vld [vmem:[%s269 + $0x88] sm:$0xff]
        %v288 = vld [vmem:[%s269 + $0x90] sm:$0xff]
        %v289 = vld [vmem:[%s269 + $0x98] sm:$0xff]
        %v290 = vld [vmem:[%s269 + $0xa0] sm:$0xff]
        %v291 = vld [vmem:[%s269 + $0xa8] sm:$0xff]
        %v292 = vld [vmem:[%s269 + $0xb0] sm:$0xff]
        %v293 = vld [vmem:[%s269 + $0xb8] sm:$0xff]
        %v294 = vld [vmem:[%s269 + $0xc0] sm:$0xff]
        %v295 = vld [vmem:[%s269 + $0xc8] sm:$0xff]
        %v296 = vld [vmem:[%s269 + $0xd0] sm:$0xff]
        %v297 = vld [vmem:[%s269 + $0xd8] sm:$0xff]
        %v298 = vld [vmem:[%s269 + $0xe0] sm:$0xff]
        %v299 = vld [vmem:[%s269 + $0xe8] sm:$0xff]
        %v300 = vld [vmem:[%s269 + $0xf0] sm:$0xff]
        %v301 = vld [vmem:[%s269 + $0xf8] sm:$0xff]
        %v302 = vld [vmem:[%s269 + $0x100] sm:$0xff]
        %v303 = vld [vmem:[%s269 + $0x108] sm:$0xff]
        %v304 = vld [vmem:[%s269 + $0x110] sm:$0xff]
        %v305 = vld [vmem:[%s269 + $0x118] sm:$0xff]
        %v306 = vld [vmem:[%s269 + $0x120] sm:$0xff]
        %v307 = vld [vmem:[%s269 + $0x128] sm:$0xff]
        %v308 = vld [vmem:[%s269 + $0x130] sm:$0xff]
        %v309 = vld [vmem:[%s269 + $0x138] sm:$0xff]
        %v310 = vld [vmem:[%s269 + $0x140] sm:$0xff]
        %v311 = vld [vmem:[%s269 + $0x148] sm:$0xff]
        %v312 = vld [vmem:[%s269 + $0x150] sm:$0xff]
        %v313 = vld [vmem:[%s269 + $0x158] sm:$0xff]
        %v314 = vld [vmem:[%s269 + $0x160] sm:$0xff]
        %v315 = vld [vmem:[%s269 + $0x168] sm:$0xff]
        %v316 = vld [vmem:[%s269 + $0x170] sm:$0xff]
        %v317 = vld [vmem:[%s269 + $0x178] sm:$0xff]
        %v366 = vunpack.c.l.b16 %v270
        %v367 = vunpack.c.h.b16 %v270
        %v368 = vunpack.c.l.b16 %v271
        %v369 = vunpack.c.h.b16 %v271
        %v370 = vunpack.c.l.b16 %v272
        %v371 = vunpack.c.h.b16 %v272
        %v372 = vunpack.c.l.b16 %v273
        %v373 = vunpack.c.h.b16 %v273
        %v374 = vunpack.c.l.b16 %v274
        %v375 = vunpack.c.h.b16 %v274
        %v376 = vunpack.c.l.b16 %v275
        %v377 = vunpack.c.h.b16 %v275
        %v378 = vunpack.c.l.b16 %v276
        %v379 = vunpack.c.h.b16 %v276
        %v380 = vunpack.c.l.b16 %v277
        %v381 = vunpack.c.h.b16 %v277
        %v382 = vunpack.c.l.b16 %v278
        %v383 = vunpack.c.h.b16 %v278
        %v384 = vunpack.c.l.b16 %v279
        %v385 = vunpack.c.h.b16 %v279
        %v386 = vunpack.c.l.b16 %v280
        %v387 = vunpack.c.h.b16 %v280
        %v388 = vunpack.c.l.b16 %v281
        %v389 = vunpack.c.h.b16 %v281
        %v390 = vunpack.c.l.b16 %v282
        %v391 = vunpack.c.h.b16 %v282
        %v392 = vunpack.c.l.b16 %v283
        %v393 = vunpack.c.h.b16 %v283
        %v394 = vunpack.c.l.b16 %v284
        %v395 = vunpack.c.h.b16 %v284
        %v396 = vunpack.c.l.b16 %v285
        %v397 = vunpack.c.h.b16 %v285
        %v398 = vunpack.c.l.b16 %v286
        %v399 = vunpack.c.h.b16 %v286
        %v400 = vunpack.c.l.b16 %v287
        %v401 = vunpack.c.h.b16 %v287
        %v402 = vunpack.c.l.b16 %v288
        %v403 = vunpack.c.h.b16 %v288
        %v404 = vunpack.c.l.b16 %v289
        %v405 = vunpack.c.h.b16 %v289
        %v406 = vunpack.c.l.b16 %v290
        %v407 = vunpack.c.h.b16 %v290
        %v408 = vunpack.c.l.b16 %v291
        %v409 = vunpack.c.h.b16 %v291
        %v410 = vunpack.c.l.b16 %v292
        %v411 = vunpack.c.h.b16 %v292
        %v412 = vunpack.c.l.b16 %v293
        %v413 = vunpack.c.h.b16 %v293
        %v414 = vunpack.c.l.b16 %v294
        %v415 = vunpack.c.h.b16 %v294
        %v416 = vunpack.c.l.b16 %v295
        %v417 = vunpack.c.h.b16 %v295
        %v418 = vunpack.c.l.b16 %v296
        %v419 = vunpack.c.h.b16 %v296
        %v420 = vunpack.c.l.b16 %v297
        %v421 = vunpack.c.h.b16 %v297
        %v422 = vunpack.c.l.b16 %v298
        %v423 = vunpack.c.h.b16 %v298
        %v424 = vunpack.c.l.b16 %v299
        %v425 = vunpack.c.h.b16 %v299
        %v426 = vunpack.c.l.b16 %v300
        %v427 = vunpack.c.h.b16 %v300
        %v428 = vunpack.c.l.b16 %v301
        %v429 = vunpack.c.h.b16 %v301
        %v430 = vunpack.c.l.b16 %v302
        %v431 = vunpack.c.h.b16 %v302
        %v432 = vunpack.c.l.b16 %v303
        %v433 = vunpack.c.h.b16 %v303
        %v434 = vunpack.c.l.b16 %v304
        %v435 = vunpack.c.h.b16 %v304
        %v436 = vunpack.c.l.b16 %v305
        %v437 = vunpack.c.h.b16 %v305
        %v438 = vunpack.c.l.b16 %v306
        %v439 = vunpack.c.h.b16 %v306
        %v440 = vunpack.c.l.b16 %v307
        %v441 = vunpack.c.h.b16 %v307
        %v442 = vunpack.c.l.b16 %v308
        %v443 = vunpack.c.h.b16 %v308
        %v444 = vunpack.c.l.b16 %v309
        %v445 = vunpack.c.h.b16 %v309
        %v446 = vunpack.c.l.b16 %v310
        %v447 = vunpack.c.h.b16 %v310
        %v448 = vunpack.c.l.b16 %v311
        %v449 = vunpack.c.h.b16 %v311
        %v450 = vunpack.c.l.b16 %v312
        %v451 = vunpack.c.h.b16 %v312
        %v452 = vunpack.c.l.b16 %v313
        %v453 = vunpack.c.h.b16 %v313
        %v454 = vunpack.c.l.b16 %v314
        %v455 = vunpack.c.h.b16 %v314
        %v456 = vunpack.c.l.b16 %v315
        %v457 = vunpack.c.h.b16 %v315
        %v458 = vunpack.c.l.b16 %v316
        %v459 = vunpack.c.h.b16 %v316
        %v460 = vunpack.c.l.b16 %v317
        %v461 = vunpack.c.h.b16 %v317
        %v462 = vpack.c.b16 %v368, %v366
        %v463 = vpack.c.b16 %v369, %v367
        %v464 = vpack.c.b16 %v372, %v370
        %v465 = vpack.c.b16 %v373, %v371
        %v466 = vpack.c.b16 %v376, %v374
        %v467 = vpack.c.b16 %v377, %v375
        %v468 = vpack.c.b16 %v380, %v378
        %v469 = vpack.c.b16 %v381, %v379
        %v470 = vpack.c.b16 %v384, %v382
        %v471 = vpack.c.b16 %v385, %v383
        %v472 = vpack.c.b16 %v388, %v386
        %v473 = vpack.c.b16 %v389, %v387
        %v474 = vpack.c.b16 %v392, %v390
        %v475 = vpack.c.b16 %v393, %v391
        %v476 = vpack.c.b16 %v396, %v394
        %v477 = vpack.c.b16 %v397, %v395
        %v478 = vpack.c.b16 %v400, %v398
        %v479 = vpack.c.b16 %v401, %v399
        %v480 = vpack.c.b16 %v404, %v402
        %v481 = vpack.c.b16 %v405, %v403
        %v482 = vpack.c.b16 %v408, %v406
        %v483 = vpack.c.b16 %v409, %v407
        %v484 = vpack.c.b16 %v412, %v410
        %v485 = vpack.c.b16 %v413, %v411
        %v486 = vpack.c.b16 %v416, %v414
        %v487 = vpack.c.b16 %v417, %v415
        %v488 = vpack.c.b16 %v420, %v418
        %v489 = vpack.c.b16 %v421, %v419
        %v490 = vpack.c.b16 %v424, %v422
        %v491 = vpack.c.b16 %v425, %v423
        %v492 = vpack.c.b16 %v428, %v426
        %v493 = vpack.c.b16 %v429, %v427
        %v494 = vpack.c.b16 %v432, %v430
        %v495 = vpack.c.b16 %v433, %v431
        %v496 = vpack.c.b16 %v436, %v434
        %v497 = vpack.c.b16 %v437, %v435
        %v498 = vpack.c.b16 %v440, %v438
        %v499 = vpack.c.b16 %v441, %v439
        %v500 = vpack.c.b16 %v444, %v442
        %v501 = vpack.c.b16 %v445, %v443
        %v502 = vpack.c.b16 %v448, %v446
        %v503 = vpack.c.b16 %v449, %v447
        %v504 = vpack.c.b16 %v452, %v450
        %v505 = vpack.c.b16 %v453, %v451
        %v506 = vpack.c.b16 %v456, %v454
        %v507 = vpack.c.b16 %v457, %v455
        %v508 = vpack.c.b16 %v460, %v458
        %v509 = vpack.c.b16 %v461, %v459
        %558 = vmatprep.subr.bf16.mxu0 %v477
        %559 = vmatpush1.bf16.msra.mxu0 %v476
        %560 = vmatprep.subr.bf16.mxu0 %v475
        %561 = vmatpush1.bf16.msra.mxu0 %v474
        %562 = vmatprep.subr.bf16.mxu0 %v473
        %563 = vmatpush1.bf16.msra.mxu0 %v472
        %564 = vmatprep.subr.bf16.mxu0 %v471
        %565 = vmatpush1.bf16.msra.mxu0 %v470
        %566 = vmatprep.subr.bf16.mxu0 %v469
        %567 = vmatpush1.bf16.msra.mxu0 %v468
        %568 = vmatprep.subr.bf16.mxu0 %v467
        %569 = vmatpush1.bf16.msra.mxu0 %v466
        %570 = vmatprep.subr.bf16.mxu0 %v465
        %571 = vmatpush1.bf16.msra.mxu0 %v464
        %572 = vmatprep.subr.bf16.mxu0 %v463
        %573 = vmatpush1.bf16.msra.mxu0 %v462
        %574 = vmatprep.subr.bf16.mxu0 %v493
        %575 = vmatpush2.bf16.msra.mxu0 %v492
        %576 = vmatprep.subr.bf16.mxu0 %v491
        %577 = vmatpush2.bf16.msra.mxu0 %v490
        %578 = vmatprep.subr.bf16.mxu0 %v489
        %579 = vmatpush2.bf16.msra.mxu0 %v488
        %580 = vmatprep.subr.bf16.mxu0 %v487
        %581 = vmatpush2.bf16.msra.mxu0 %v486
        %582 = vmatprep.subr.bf16.mxu0 %v485
        %583 = vmatpush2.bf16.msra.mxu0 %v484
        %584 = vmatprep.subr.bf16.mxu0 %v483
        %585 = vmatpush2.bf16.msra.mxu0 %v482
        %586 = vmatprep.subr.bf16.mxu0 %v481
        %587 = vmatpush2.bf16.msra.mxu0 %v480
        %588 = vmatprep.subr.bf16.mxu0 %v479
        %589 = vmatpush2.bf16.msra.mxu0 %v478
        %590 = vmatprep.mubr.bf16.mxu0 %v216
        %591 = vmatmul.mubr.bf16.gmra.mxu0 %v215
        %v592 = vpop.f32.mrf.mxu0
        %v593 = vadd.f32 0.0, %v592
        %v594 = vpop.f32.mrf.mxu0
        %v595 = vadd.f32 0.0, %v594
        %v596 = vpop.f32.mrf.mxu0
        %v597 = vpop.f32.mrf.mxu0
        %598 = vdwg.mxu0
        %599 = vmatprep.subr.bf16.mxu0 %v509
        %600 = vmatpush1.bf16.msra.mxu0 %v508
        %601 = vmatprep.subr.bf16.mxu0 %v507
        %602 = vmatpush1.bf16.msra.mxu0 %v506
        %603 = vmatprep.subr.bf16.mxu0 %v505
        %604 = vmatpush1.bf16.msra.mxu0 %v504
        %605 = vmatprep.subr.bf16.mxu0 %v503
        %606 = vmatpush1.bf16.msra.mxu0 %v502
        %607 = vmatprep.subr.bf16.mxu0 %v501
        %608 = vmatpush1.bf16.msra.mxu0 %v500
        %609 = vmatprep.subr.bf16.mxu0 %v499
        %610 = vmatpush1.bf16.msra.mxu0 %v498
        %611 = vmatprep.subr.bf16.mxu0 %v497
        %612 = vmatpush1.bf16.msra.mxu0 %v496
        %613 = vmatprep.subr.bf16.mxu0 %v495
        %614 = vmatpush1.bf16.msra.mxu0 %v494
        %615 = vmatprep.subr.bf16.mxu0 0
        %616 = vmatpush2.bf16.msra.mxu0 0
        %617 = vmatprep.subr.bf16.mxu0 0
        %618 = vmatpush2.bf16.msra.mxu0 0
        %619 = vmatprep.subr.bf16.mxu0 0
        %620 = vmatpush2.bf16.msra.mxu0 0
        %621 = vmatprep.subr.bf16.mxu0 0
        %622 = vmatpush2.bf16.msra.mxu0 0
        %623 = vmatprep.subr.bf16.mxu0 0
        %624 = vmatpush2.bf16.msra.mxu0 0
        %625 = vmatprep.subr.bf16.mxu0 0
        %626 = vmatpush2.bf16.msra.mxu0 0
        %627 = vmatprep.subr.bf16.mxu0 0
        %628 = vmatpush2.bf16.msra.mxu0 0
        %629 = vmatprep.subr.bf16.mxu0 0
        %630 = vmatpush2.bf16.msra.mxu0 0
        %631 = vmatprep.mubr.bf16.mxu0 0
        %632 = vmatmul.mubr.bf16.gmra.mxu0 %v217
        %v633 = vpop.f32.mrf.mxu0
        %v634 = vadd.f32 %v593, %v633
        %v635 = vpop.f32.mrf.mxu0
        %v636 = vadd.f32 %v595, %v635
        %v637 = vpop.f32.mrf.mxu0
        %v638 = vpop.f32.mrf.mxu0
        %639 = vdwg.mxu0
        %v688 = vunpack.c.l.b16 %v221
        %v689 = vunpack.c.h.b16 %v221
        %v690 = vunpack.c.l.b16 %v222
        %v691 = vunpack.c.h.b16 %v222
        %v692 = vunpack.c.l.b16 %v223
        %v693 = vunpack.c.h.b16 %v223
        %v694 = vunpack.c.l.b16 %v224
        %v695 = vunpack.c.h.b16 %v224
        %v696 = vunpack.c.l.b16 %v225
        %v697 = vunpack.c.h.b16 %v225
        %v698 = vunpack.c.l.b16 %v226
        %v699 = vunpack.c.h.b16 %v226
        %v700 = vunpack.c.l.b16 %v227
        %v701 = vunpack.c.h.b16 %v227
        %v702 = vunpack.c.l.b16 %v228
        %v703 = vunpack.c.h.b16 %v228
        %v704 = vunpack.c.l.b16 %v229
        %v705 = vunpack.c.h.b16 %v229
        %v706 = vunpack.c.l.b16 %v230
        %v707 = vunpack.c.h.b16 %v230
        %v708 = vunpack.c.l.b16 %v231
        %v709 = vunpack.c.h.b16 %v231
        %v710 = vunpack.c.l.b16 %v232
        %v711 = vunpack.c.h.b16 %v232
        %v712 = vunpack.c.l.b16 %v233
        %v713 = vunpack.c.h.b16 %v233
        %v714 = vunpack.c.l.b16 %v234
        %v715 = vunpack.c.h.b16 %v234
        %v716 = vunpack.c.l.b16 %v235
        %v717 = vunpack.c.h.b16 %v235
        %v718 = vunpack.c.l.b16 %v236
        %v719 = vunpack.c.h.b16 %v236
        %v720 = vunpack.c.l.b16 %v237
        %v721 = vunpack.c.h.b16 %v237
        %v722 = vunpack.c.l.b16 %v238
        %v723 = vunpack.c.h.b16 %v238
        %v724 = vunpack.c.l.b16 %v239
        %v725 = vunpack.c.h.b16 %v239
        %v726 = vunpack.c.l.b16 %v240
        %v727 = vunpack.c.h.b16 %v240
        %v728 = vunpack.c.l.b16 %v241
        %v729 = vunpack.c.h.b16 %v241
        %v730 = vunpack.c.l.b16 %v242
        %v731 = vunpack.c.h.b16 %v242
        %v732 = vunpack.c.l.b16 %v243
        %v733 = vunpack.c.h.b16 %v243
        %v734 = vunpack.c.l.b16 %v244
        %v735 = vunpack.c.h.b16 %v244
        %v736 = vunpack.c.l.b16 %v245
        %v737 = vunpack.c.h.b16 %v245
        %v738 = vunpack.c.l.b16 %v246
        %v739 = vunpack.c.h.b16 %v246
        %v740 = vunpack.c.l.b16 %v247
        %v741 = vunpack.c.h.b16 %v247
        %v742 = vunpack.c.l.b16 %v248
        %v743 = vunpack.c.h.b16 %v248
        %v744 = vunpack.c.l.b16 %v249
        %v745 = vunpack.c.h.b16 %v249
        %v746 = vunpack.c.l.b16 %v250
        %v747 = vunpack.c.h.b16 %v250
        %v748 = vunpack.c.l.b16 %v251
        %v749 = vunpack.c.h.b16 %v251
        %v750 = vunpack.c.l.b16 %v252
        %v751 = vunpack.c.h.b16 %v252
        %v752 = vunpack.c.l.b16 %v253
        %v753 = vunpack.c.h.b16 %v253
        %v754 = vunpack.c.l.b16 %v254
        %v755 = vunpack.c.h.b16 %v254
        %v756 = vunpack.c.l.b16 %v255
        %v757 = vunpack.c.h.b16 %v255
        %v758 = vunpack.c.l.b16 %v256
        %v759 = vunpack.c.h.b16 %v256
        %v760 = vunpack.c.l.b16 %v257
        %v761 = vunpack.c.h.b16 %v257
        %v762 = vunpack.c.l.b16 %v258
        %v763 = vunpack.c.h.b16 %v258
        %v764 = vunpack.c.l.b16 %v259
        %v765 = vunpack.c.h.b16 %v259
        %v766 = vunpack.c.l.b16 %v260
        %v767 = vunpack.c.h.b16 %v260
        %v768 = vunpack.c.l.b16 %v261
        %v769 = vunpack.c.h.b16 %v261
        %v770 = vunpack.c.l.b16 %v262
        %v771 = vunpack.c.h.b16 %v262
        %v772 = vunpack.c.l.b16 %v263
        %v773 = vunpack.c.h.b16 %v263
        %v774 = vunpack.c.l.b16 %v264
        %v775 = vunpack.c.h.b16 %v264
        %v776 = vunpack.c.l.b16 %v265
        %v777 = vunpack.c.h.b16 %v265
        %v778 = vunpack.c.l.b16 %v266
        %v779 = vunpack.c.h.b16 %v266
        %v780 = vunpack.c.l.b16 %v267
        %v781 = vunpack.c.h.b16 %v267
        %v782 = vunpack.c.l.b16 %v268
        %v783 = vunpack.c.h.b16 %v268
        %v784 = vpack.c.b16 %v690, %v688
        %v785 = vpack.c.b16 %v691, %v689
        %v786 = vpack.c.b16 %v694, %v692
        %v787 = vpack.c.b16 %v695, %v693
        %v788 = vpack.c.b16 %v698, %v696
        %v789 = vpack.c.b16 %v699, %v697
        %v790 = vpack.c.b16 %v702, %v700
        %v791 = vpack.c.b16 %v703, %v701
        %v792 = vpack.c.b16 %v706, %v704
        %v793 = vpack.c.b16 %v707, %v705
        %v794 = vpack.c.b16 %v710, %v708
        %v795 = vpack.c.b16 %v711, %v709
        %v796 = vpack.c.b16 %v714, %v712
        %v797 = vpack.c.b16 %v715, %v713
        %v798 = vpack.c.b16 %v718, %v716
        %v799 = vpack.c.b16 %v719, %v717
        %v800 = vpack.c.b16 %v722, %v720
        %v801 = vpack.c.b16 %v723, %v721
        %v802 = vpack.c.b16 %v726, %v724
        %v803 = vpack.c.b16 %v727, %v725
        %v804 = vpack.c.b16 %v730, %v728
        %v805 = vpack.c.b16 %v731, %v729
        %v806 = vpack.c.b16 %v734, %v732
        %v807 = vpack.c.b16 %v735, %v733
        %v808 = vpack.c.b16 %v738, %v736
        %v809 = vpack.c.b16 %v739, %v737
        %v810 = vpack.c.b16 %v742, %v740
        %v811 = vpack.c.b16 %v743, %v741
        %v812 = vpack.c.b16 %v746, %v744
        %v813 = vpack.c.b16 %v747, %v745
        %v814 = vpack.c.b16 %v750, %v748
        %v815 = vpack.c.b16 %v751, %v749
        %v816 = vpack.c.b16 %v754, %v752
        %v817 = vpack.c.b16 %v755, %v753
        %v818 = vpack.c.b16 %v758, %v756
        %v819 = vpack.c.b16 %v759, %v757
        %v820 = vpack.c.b16 %v762, %v760
        %v821 = vpack.c.b16 %v763, %v761
        %v822 = vpack.c.b16 %v766, %v764
        %v823 = vpack.c.b16 %v767, %v765
        %v824 = vpack.c.b16 %v770, %v768
        %v825 = vpack.c.b16 %v771, %v769
        %v826 = vpack.c.b16 %v774, %v772
        %v827 = vpack.c.b16 %v775, %v773
        %v828 = vpack.c.b16 %v778, %v776
        %v829 = vpack.c.b16 %v779, %v777
        %v830 = vpack.c.b16 %v782, %v780
        %v831 = vpack.c.b16 %v783, %v781
        %880 = vmatprep.subr.bf16.mxu0 %v799
        %881 = vmatpush1.bf16.msra.mxu0 %v798
        %882 = vmatprep.subr.bf16.mxu0 %v797
        %883 = vmatpush1.bf16.msra.mxu0 %v796
        %884 = vmatprep.subr.bf16.mxu0 %v795
        %885 = vmatpush1.bf16.msra.mxu0 %v794
        %886 = vmatprep.subr.bf16.mxu0 %v793
        %887 = vmatpush1.bf16.msra.mxu0 %v792
        %888 = vmatprep.subr.bf16.mxu0 %v791
        %889 = vmatpush1.bf16.msra.mxu0 %v790
        %890 = vmatprep.subr.bf16.mxu0 %v789
        %891 = vmatpush1.bf16.msra.mxu0 %v788
        %892 = vmatprep.subr.bf16.mxu0 %v787
        %893 = vmatpush1.bf16.msra.mxu0 %v786
        %894 = vmatprep.subr.bf16.mxu0 %v785
        %895 = vmatpush1.bf16.msra.mxu0 %v784
        %896 = vmatprep.subr.bf16.mxu0 %v815
        %897 = vmatpush2.bf16.msra.mxu0 %v814
        %898 = vmatprep.subr.bf16.mxu0 %v813
        %899 = vmatpush2.bf16.msra.mxu0 %v812
        %900 = vmatprep.subr.bf16.mxu0 %v811
        %901 = vmatpush2.bf16.msra.mxu0 %v810
        %902 = vmatprep.subr.bf16.mxu0 %v809
        %903 = vmatpush2.bf16.msra.mxu0 %v808
        %904 = vmatprep.subr.bf16.mxu0 %v807
        %905 = vmatpush2.bf16.msra.mxu0 %v806
        %906 = vmatprep.subr.bf16.mxu0 %v805
        %907 = vmatpush2.bf16.msra.mxu0 %v804
        %908 = vmatprep.subr.bf16.mxu0 %v803
        %909 = vmatpush2.bf16.msra.mxu0 %v802
        %910 = vmatprep.subr.bf16.mxu0 %v801
        %911 = vmatpush2.bf16.msra.mxu0 %v800
        %912 = vmatprep.mubr.bf16.mxu0 %v213
        %913 = vmatmul.mubr.bf16.gmra.mxu0 %v212
        %v914 = vpop.f32.mrf.mxu0
        %v915 = vadd.f32 %v634, %v914
        %v916 = vpop.f32.mrf.mxu0
        %v917 = vadd.f32 %v636, %v916
        %v918 = vpop.f32.mrf.mxu0
        %v919 = vpop.f32.mrf.mxu0
        %920 = vdwg.mxu0
        %921 = vmatprep.subr.bf16.mxu0 %v831
        %922 = vmatpush1.bf16.msra.mxu0 %v830
        %923 = vmatprep.subr.bf16.mxu0 %v829
        %924 = vmatpush1.bf16.msra.mxu0 %v828
        %925 = vmatprep.subr.bf16.mxu0 %v827
        %926 = vmatpush1.bf16.msra.mxu0 %v826
        %927 = vmatprep.subr.bf16.mxu0 %v825
        %928 = vmatpush1.bf16.msra.mxu0 %v824
        %929 = vmatprep.subr.bf16.mxu0 %v823
        %930 = vmatpush1.bf16.msra.mxu0 %v822
        %931 = vmatprep.subr.bf16.mxu0 %v821
        %932 = vmatpush1.bf16.msra.mxu0 %v820
        %933 = vmatprep.subr.bf16.mxu0 %v819
        %934 = vmatpush1.bf16.msra.mxu0 %v818
        %935 = vmatprep.subr.bf16.mxu0 %v817
        %936 = vmatpush1.bf16.msra.mxu0 %v816
        %937 = vmatprep.subr.bf16.mxu0 0
        %938 = vmatpush2.bf16.msra.mxu0 0
        %939 = vmatprep.subr.bf16.mxu0 0
        %940 = vmatpush2.bf16.msra.mxu0 0
        %941 = vmatprep.subr.bf16.mxu0 0
        %942 = vmatpush2.bf16.msra.mxu0 0
        %943 = vmatprep.subr.bf16.mxu0 0
        %944 = vmatpush2.bf16.msra.mxu0 0
        %945 = vmatprep.subr.bf16.mxu0 0
        %946 = vmatpush2.bf16.msra.mxu0 0
        %947 = vmatprep.subr.bf16.mxu0 0
        %948 = vmatpush2.bf16.msra.mxu0 0
        %949 = vmatprep.subr.bf16.mxu0 0
        %950 = vmatpush2.bf16.msra.mxu0 0
        %951 = vmatprep.subr.bf16.mxu0 0
        %952 = vmatpush2.bf16.msra.mxu0 0
        %953 = vmatprep.mubr.bf16.mxu0 0
        %954 = vmatmul.mubr.bf16.gmra.mxu0 %v214
        %v955 = vpop.f32.mrf.mxu0
        %v956 = vadd.f32 %v915, %v955
        %v957 = vpop.f32.mrf.mxu0
        %v958 = vadd.f32 %v917, %v957
        %v959 = vpop.f32.mrf.mxu0
        %v960 = vpop.f32.mrf.mxu0
        %961 = vdwg.mxu0
        %s962 = scalar_lea.vmem %s1, 768
        %v963 = vld [vmem:[%s962] sm:$0xff]
        %v964 = vld [vmem:[%s962 + $0x8] sm:$0xff]
        %v965 = vld [vmem:[%s962 + $0x10] sm:$0xff]
        %v966 = vld [vmem:[%s962 + $0x18] sm:$0xff]
        %v967 = vld [vmem:[%s962 + $0x20] sm:$0xff]
        %v968 = vld [vmem:[%s962 + $0x28] sm:$0xff]
        %v969 = vld [vmem:[%s962 + $0x30] sm:$0xff]
        %v970 = vld [vmem:[%s962 + $0x38] sm:$0xff]
        %v971 = vld [vmem:[%s962 + $0x40] sm:$0xff]
        %v972 = vld [vmem:[%s962 + $0x48] sm:$0xff]
        %v973 = vld [vmem:[%s962 + $0x50] sm:$0xff]
        %v974 = vld [vmem:[%s962 + $0x58] sm:$0xff]
        %v975 = vld [vmem:[%s962 + $0x60] sm:$0xff]
        %v976 = vld [vmem:[%s962 + $0x68] sm:$0xff]
        %v977 = vld [vmem:[%s962 + $0x70] sm:$0xff]
        %v978 = vld [vmem:[%s962 + $0x78] sm:$0xff]
        %v979 = vld [vmem:[%s962 + $0x80] sm:$0xff]
        %v980 = vld [vmem:[%s962 + $0x88] sm:$0xff]
        %v981 = vld [vmem:[%s962 + $0x90] sm:$0xff]
        %v982 = vld [vmem:[%s962 + $0x98] sm:$0xff]
        %v983 = vld [vmem:[%s962 + $0xa0] sm:$0xff]
        %v984 = vld [vmem:[%s962 + $0xa8] sm:$0xff]
        %v985 = vld [vmem:[%s962 + $0xb0] sm:$0xff]
        %v986 = vld [vmem:[%s962 + $0xb8] sm:$0xff]
        %v987 = vld [vmem:[%s962 + $0xc0] sm:$0xff]
        %v988 = vld [vmem:[%s962 + $0xc8] sm:$0xff]
        %v989 = vld [vmem:[%s962 + $0xd0] sm:$0xff]
        %v990 = vld [vmem:[%s962 + $0xd8] sm:$0xff]
        %v991 = vld [vmem:[%s962 + $0xe0] sm:$0xff]
        %v992 = vld [vmem:[%s962 + $0xe8] sm:$0xff]
        %v993 = vld [vmem:[%s962 + $0xf0] sm:$0xff]
        %v994 = vld [vmem:[%s962 + $0xf8] sm:$0xff]
        %v995 = vld [vmem:[%s962 + $0x100] sm:$0xff]
        %v996 = vld [vmem:[%s962 + $0x108] sm:$0xff]
        %v997 = vld [vmem:[%s962 + $0x110] sm:$0xff]
        %v998 = vld [vmem:[%s962 + $0x118] sm:$0xff]
        %v999 = vld [vmem:[%s962 + $0x120] sm:$0xff]
        %v1000 = vld [vmem:[%s962 + $0x128] sm:$0xff]
        %v1001 = vld [vmem:[%s962 + $0x130] sm:$0xff]
        %v1002 = vld [vmem:[%s962 + $0x138] sm:$0xff]
        %v1003 = vld [vmem:[%s962 + $0x140] sm:$0xff]
        %v1004 = vld [vmem:[%s962 + $0x148] sm:$0xff]
        %v1005 = vld [vmem:[%s962 + $0x150] sm:$0xff]
        %v1006 = vld [vmem:[%s962 + $0x158] sm:$0xff]
        %v1007 = vld [vmem:[%s962 + $0x160] sm:$0xff]
        %v1008 = vld [vmem:[%s962 + $0x168] sm:$0xff]
        %v1009 = vld [vmem:[%s962 + $0x170] sm:$0xff]
        %v1010 = vld [vmem:[%s962 + $0x178] sm:$0xff]
        %v1059 = vunpack.c.l.b16 %v963
        %v1060 = vunpack.c.h.b16 %v963
        %v1061 = vunpack.c.l.b16 %v964
        %v1062 = vunpack.c.h.b16 %v964
        %v1063 = vunpack.c.l.b16 %v965
        %v1064 = vunpack.c.h.b16 %v965
        %v1065 = vunpack.c.l.b16 %v966
        %v1066 = vunpack.c.h.b16 %v966
        %v1067 = vunpack.c.l.b16 %v967
        %v1068 = vunpack.c.h.b16 %v967
        %v1069 = vunpack.c.l.b16 %v968
        %v1070 = vunpack.c.h.b16 %v968
        %v1071 = vunpack.c.l.b16 %v969
        %v1072 = vunpack.c.h.b16 %v969
        %v1073 = vunpack.c.l.b16 %v970
        %v1074 = vunpack.c.h.b16 %v970
        %v1075 = vunpack.c.l.b16 %v971
        %v1076 = vunpack.c.h.b16 %v971
        %v1077 = vunpack.c.l.b16 %v972
        %v1078 = vunpack.c.h.b16 %v972
        %v1079 = vunpack.c.l.b16 %v973
        %v1080 = vunpack.c.h.b16 %v973
        %v1081 = vunpack.c.l.b16 %v974
        %v1082 = vunpack.c.h.b16 %v974
        %v1083 = vunpack.c.l.b16 %v975
        %v1084 = vunpack.c.h.b16 %v975
        %v1085 = vunpack.c.l.b16 %v976
        %v1086 = vunpack.c.h.b16 %v976
        %v1087 = vunpack.c.l.b16 %v977
        %v1088 = vunpack.c.h.b16 %v977
        %v1089 = vunpack.c.l.b16 %v978
        %v1090 = vunpack.c.h.b16 %v978
        %v1091 = vunpack.c.l.b16 %v979
        %v1092 = vunpack.c.h.b16 %v979
        %v1093 = vunpack.c.l.b16 %v980
        %v1094 = vunpack.c.h.b16 %v980
        %v1095 = vunpack.c.l.b16 %v981
        %v1096 = vunpack.c.h.b16 %v981
        %v1097 = vunpack.c.l.b16 %v982
        %v1098 = vunpack.c.h.b16 %v982
        %v1099 = vunpack.c.l.b16 %v983
        %v1100 = vunpack.c.h.b16 %v983
        %v1101 = vunpack.c.l.b16 %v984
        %v1102 = vunpack.c.h.b16 %v984
        %v1103 = vunpack.c.l.b16 %v985
        %v1104 = vunpack.c.h.b16 %v985
        %v1105 = vunpack.c.l.b16 %v986
        %v1106 = vunpack.c.h.b16 %v986
        %v1107 = vunpack.c.l.b16 %v987
        %v1108 = vunpack.c.h.b16 %v987
        %v1109 = vunpack.c.l.b16 %v988
        %v1110 = vunpack.c.h.b16 %v988
        %v1111 = vunpack.c.l.b16 %v989
        %v1112 = vunpack.c.h.b16 %v989
        %v1113 = vunpack.c.l.b16 %v990
        %v1114 = vunpack.c.h.b16 %v990
        %v1115 = vunpack.c.l.b16 %v991
        %v1116 = vunpack.c.h.b16 %v991
        %v1117 = vunpack.c.l.b16 %v992
        %v1118 = vunpack.c.h.b16 %v992
        %v1119 = vunpack.c.l.b16 %v993
        %v1120 = vunpack.c.h.b16 %v993
        %v1121 = vunpack.c.l.b16 %v994
        %v1122 = vunpack.c.h.b16 %v994
        %v1123 = vunpack.c.l.b16 %v995
        %v1124 = vunpack.c.h.b16 %v995
        %v1125 = vunpack.c.l.b16 %v996
        %v1126 = vunpack.c.h.b16 %v996
        %v1127 = vunpack.c.l.b16 %v997
        %v1128 = vunpack.c.h.b16 %v997
        %v1129 = vunpack.c.l.b16 %v998
        %v1130 = vunpack.c.h.b16 %v998
        %v1131 = vunpack.c.l.b16 %v999
        %v1132 = vunpack.c.h.b16 %v999
        %v1133 = vunpack.c.l.b16 %v1000
        %v1134 = vunpack.c.h.b16 %v1000
        %v1135 = vunpack.c.l.b16 %v1001
        %v1136 = vunpack.c.h.b16 %v1001
        %v1137 = vunpack.c.l.b16 %v1002
        %v1138 = vunpack.c.h.b16 %v1002
        %v1139 = vunpack.c.l.b16 %v1003
        %v1140 = vunpack.c.h.b16 %v1003
        %v1141 = vunpack.c.l.b16 %v1004
        %v1142 = vunpack.c.h.b16 %v1004
        %v1143 = vunpack.c.l.b16 %v1005
        %v1144 = vunpack.c.h.b16 %v1005
        %v1145 = vunpack.c.l.b16 %v1006
        %v1146 = vunpack.c.h.b16 %v1006
        %v1147 = vunpack.c.l.b16 %v1007
        %v1148 = vunpack.c.h.b16 %v1007
        %v1149 = vunpack.c.l.b16 %v1008
        %v1150 = vunpack.c.h.b16 %v1008
        %v1151 = vunpack.c.l.b16 %v1009
        %v1152 = vunpack.c.h.b16 %v1009
        %v1153 = vunpack.c.l.b16 %v1010
        %v1154 = vunpack.c.h.b16 %v1010
        %v1155 = vpack.c.b16 %v1061, %v1059
        %v1156 = vpack.c.b16 %v1062, %v1060
        %v1157 = vpack.c.b16 %v1065, %v1063
        %v1158 = vpack.c.b16 %v1066, %v1064
        %v1159 = vpack.c.b16 %v1069, %v1067
        %v1160 = vpack.c.b16 %v1070, %v1068
        %v1161 = vpack.c.b16 %v1073, %v1071
        %v1162 = vpack.c.b16 %v1074, %v1072
        %v1163 = vpack.c.b16 %v1077, %v1075
        %v1164 = vpack.c.b16 %v1078, %v1076
        %v1165 = vpack.c.b16 %v1081, %v1079
        %v1166 = vpack.c.b16 %v1082, %v1080
        %v1167 = vpack.c.b16 %v1085, %v1083
        %v1168 = vpack.c.b16 %v1086, %v1084
        %v1169 = vpack.c.b16 %v1089, %v1087
        %v1170 = vpack.c.b16 %v1090, %v1088
        %v1171 = vpack.c.b16 %v1093, %v1091
        %v1172 = vpack.c.b16 %v1094, %v1092
        %v1173 = vpack.c.b16 %v1097, %v1095
        %v1174 = vpack.c.b16 %v1098, %v1096
        %v1175 = vpack.c.b16 %v1101, %v1099
        %v1176 = vpack.c.b16 %v1102, %v1100
        %v1177 = vpack.c.b16 %v1105, %v1103
        %v1178 = vpack.c.b16 %v1106, %v1104
        %v1179 = vpack.c.b16 %v1109, %v1107
        %v1180 = vpack.c.b16 %v1110, %v1108
        %v1181 = vpack.c.b16 %v1113, %v1111
        %v1182 = vpack.c.b16 %v1114, %v1112
        %v1183 = vpack.c.b16 %v1117, %v1115
        %v1184 = vpack.c.b16 %v1118, %v1116
        %v1185 = vpack.c.b16 %v1121, %v1119
        %v1186 = vpack.c.b16 %v1122, %v1120
        %v1187 = vpack.c.b16 %v1125, %v1123
        %v1188 = vpack.c.b16 %v1126, %v1124
        %v1189 = vpack.c.b16 %v1129, %v1127
        %v1190 = vpack.c.b16 %v1130, %v1128
        %v1191 = vpack.c.b16 %v1133, %v1131
        %v1192 = vpack.c.b16 %v1134, %v1132
        %v1193 = vpack.c.b16 %v1137, %v1135
        %v1194 = vpack.c.b16 %v1138, %v1136
        %v1195 = vpack.c.b16 %v1141, %v1139
        %v1196 = vpack.c.b16 %v1142, %v1140
        %v1197 = vpack.c.b16 %v1145, %v1143
        %v1198 = vpack.c.b16 %v1146, %v1144
        %v1199 = vpack.c.b16 %v1149, %v1147
        %v1200 = vpack.c.b16 %v1150, %v1148
        %v1201 = vpack.c.b16 %v1153, %v1151
        %v1202 = vpack.c.b16 %v1154, %v1152
        %1251 = vmatprep.subr.bf16.mxu0 %v1170
        %1252 = vmatpush1.bf16.msra.mxu0 %v1169
        %1253 = vmatprep.subr.bf16.mxu0 %v1168
        %1254 = vmatpush1.bf16.msra.mxu0 %v1167
        %1255 = vmatprep.subr.bf16.mxu0 %v1166
        %1256 = vmatpush1.bf16.msra.mxu0 %v1165
        %1257 = vmatprep.subr.bf16.mxu0 %v1164
        %1258 = vmatpush1.bf16.msra.mxu0 %v1163
        %1259 = vmatprep.subr.bf16.mxu0 %v1162
        %1260 = vmatpush1.bf16.msra.mxu0 %v1161
        %1261 = vmatprep.subr.bf16.mxu0 %v1160
        %1262 = vmatpush1.bf16.msra.mxu0 %v1159
        %1263 = vmatprep.subr.bf16.mxu0 %v1158
        %1264 = vmatpush1.bf16.msra.mxu0 %v1157
        %1265 = vmatprep.subr.bf16.mxu0 %v1156
        %1266 = vmatpush1.bf16.msra.mxu0 %v1155
        %1267 = vmatprep.subr.bf16.mxu0 %v1186
        %1268 = vmatpush2.bf16.msra.mxu0 %v1185
        %1269 = vmatprep.subr.bf16.mxu0 %v1184
        %1270 = vmatpush2.bf16.msra.mxu0 %v1183
        %1271 = vmatprep.subr.bf16.mxu0 %v1182
        %1272 = vmatpush2.bf16.msra.mxu0 %v1181
        %1273 = vmatprep.subr.bf16.mxu0 %v1180
        %1274 = vmatpush2.bf16.msra.mxu0 %v1179
        %1275 = vmatprep.subr.bf16.mxu0 %v1178
        %1276 = vmatpush2.bf16.msra.mxu0 %v1177
        %1277 = vmatprep.subr.bf16.mxu0 %v1176
        %1278 = vmatpush2.bf16.msra.mxu0 %v1175
        %1279 = vmatprep.subr.bf16.mxu0 %v1174
        %1280 = vmatpush2.bf16.msra.mxu0 %v1173
        %1281 = vmatprep.subr.bf16.mxu0 %v1172
        %1282 = vmatpush2.bf16.msra.mxu0 %v1171
        %1283 = vmatprep.mubr.bf16.mxu0 %v219
        %1284 = vmatmul.mubr.bf16.gmra.mxu0 %v218
        %v1285 = vpop.f32.mrf.mxu0
        %v1286 = vadd.f32 0.0, %v1285
        %v1287 = vpop.f32.mrf.mxu0
        %v1288 = vadd.f32 0.0, %v1287
        %v1289 = vpop.f32.mrf.mxu0
        %v1290 = vpop.f32.mrf.mxu0
        %1291 = vdwg.mxu0
        %1292 = vmatprep.subr.bf16.mxu0 %v1202
        %1293 = vmatpush1.bf16.msra.mxu0 %v1201
        %1294 = vmatprep.subr.bf16.mxu0 %v1200
        %1295 = vmatpush1.bf16.msra.mxu0 %v1199
        %1296 = vmatprep.subr.bf16.mxu0 %v1198
        %1297 = vmatpush1.bf16.msra.mxu0 %v1197
        %1298 = vmatprep.subr.bf16.mxu0 %v1196
        %1299 = vmatpush1.bf16.msra.mxu0 %v1195
        %1300 = vmatprep.subr.bf16.mxu0 %v1194
        %1301 = vmatpush1.bf16.msra.mxu0 %v1193
        %1302 = vmatprep.subr.bf16.mxu0 %v1192
        %1303 = vmatpush1.bf16.msra.mxu0 %v1191
        %1304 = vmatprep.subr.bf16.mxu0 %v1190
        %1305 = vmatpush1.bf16.msra.mxu0 %v1189
        %1306 = vmatprep.subr.bf16.mxu0 %v1188
        %1307 = vmatpush1.bf16.msra.mxu0 %v1187
        %1308 = vmatprep.subr.bf16.mxu0 0
        %1309 = vmatpush2.bf16.msra.mxu0 0
        %1310 = vmatprep.subr.bf16.mxu0 0
        %1311 = vmatpush2.bf16.msra.mxu0 0
        %1312 = vmatprep.subr.bf16.mxu0 0
        %1313 = vmatpush2.bf16.msra.mxu0 0
        %1314 = vmatprep.subr.bf16.mxu0 0
        %1315 = vmatpush2.bf16.msra.mxu0 0
        %1316 = vmatprep.subr.bf16.mxu0 0
        %1317 = vmatpush2.bf16.msra.mxu0 0
        %1318 = vmatprep.subr.bf16.mxu0 0
        %1319 = vmatpush2.bf16.msra.mxu0 0
        %1320 = vmatprep.subr.bf16.mxu0 0
        %1321 = vmatpush2.bf16.msra.mxu0 0
        %1322 = vmatprep.subr.bf16.mxu0 0
        %1323 = vmatpush2.bf16.msra.mxu0 0
        %1324 = vmatprep.mubr.bf16.mxu0 0
        %1325 = vmatmul.mubr.bf16.gmra.mxu0 %v220
        %v1326 = vpop.f32.mrf.mxu0
        %v1327 = vadd.f32 %v1286, %v1326
        %v1328 = vpop.f32.mrf.mxu0
        %v1329 = vadd.f32 %v1288, %v1328
        %v1330 = vpop.f32.mrf.mxu0
        %v1331 = vpop.f32.mrf.mxu0
        %1332 = vdwg.mxu0
        %v1333 = vadd.f32 %v956, %v1327
        %v1334 = vadd.f32 %v958, %v1329
        %v1335 = vld [vmem:[%s2] sm:$0x3]
        %v1337 = vlaneseq
        %v1338 = vshrl.u32 %v1337, 7
        %v1339 = vsub.s32 0, %v1338
        %v1340 = vrot.slane %v1335, %v1339
        %v1341 = vlaneseq
        %v1342 = vshrl.u32 %v1341, 7
        %v1343 = vsub.s32 1, %v1342
        %v1344 = vrot.slane %v1335, %v1343
        %v1347 = vmul.f32 %v1333, %v1340
        %v1348 = vmul.f32 %v1334, %v1344
        %v1349 = vld [vmem:[%s3] sm:$0x3]
        %v1351 = vlaneseq
        %v1352 = vshrl.u32 %v1351, 7
        %v1353 = vsub.s32 0, %v1352
        %v1354 = vrot.slane %v1349, %v1353
        %v1355 = vlaneseq
        %v1356 = vshrl.u32 %v1355, 7
        %v1357 = vsub.s32 1, %v1356
        %v1358 = vrot.slane %v1349, %v1357
        %v1361 = vadd.f32 %v1347, %v1354
        %v1362 = vadd.f32 %v1348, %v1358
        %v1363 = vmax.f32 %v1361, 0.0
        %v1364 = vmax.f32 %v1362, 0.0
        %v1367 = vcombine.low %v1363, %v1364
        %1369 = vst [vmem:[%s190] sm:$0xff] %v1367
        %s1370 = sand.u32 %s115, 1
        %s1371 = scalar_lea.sflag [#allocation4], %s1370
        %s1372 = sand.u32 %s115, 1
        %s1373 = smul.addr %s1372, 8
        %s1374 = scalar_lea.vmem [#allocation3], %s1373
        // Predicated region
        $region37: #{imagenet_large_frames_forward.9} parent=35 // pred_check
          %p1375 = pneg %p125
        $region38: #{imagenet_large_frames_forward.9} parent=35 // pred_check_branch
          %1377 = sbr.rel (%p1375) target = $region40
        $region39: #{imagenet_large_frames_forward.9} parent=35 // pred_region
          %s1379 = ssub.s32 128, 128
          %1380 = vsyncadd %s1371, %s1379
          %s1381 = smul.addr %s18, 2
          %s1382 = smul.addr %s1381, 64
          %s1383 = scalar_lea.hbm %s4, %s1382
          %s1385 = sshll.u32 %s1374, 4
          %s1386 = int_to_ptr.vmem [resolvable:$true] %s1385
          %1388 = dma.vmem_to_hbm [thread:$0]  %s1386, 128, %s1383, %s1371
        $region40: #{imagenet_large_frames_forward.9} parent=35 // pred_fallthru
          _
      $region36: #{imagenet_large_frames_forward.9} parent=5 // pred_fallthru
        _
      %p1389 = scmp.le.s32.totalorder 2, %s13
      // Predicated region
      $region41: #{imagenet_large_frames_forward.9} parent=5 // pred_check
        %p1390 = pneg %p1389
      $region42: #{imagenet_large_frames_forward.9} parent=5 // pred_check_branch
        %1392 = sbr.rel (%p1390) target = $region44
      $region43: #{imagenet_large_frames_forward.9} parent=5 // pred_region
        %s1393 = ssub.s32 %s13, 2
        // Predicated region
        $region45: #{imagenet_large_frames_forward.9} parent=43 // pred_check
          %p1394 = pneg %p131
        $region46: #{imagenet_large_frames_forward.9} parent=43 // pred_check_branch
          %1396 = sbr.rel (%p1394) target = $region48
        $region47: #{imagenet_large_frames_forward.9} parent=43 // pred_region
          %s1397 = sand.u32 %s116, 1
          %s1398 = scalar_lea.sflag [#allocation4], %s1397
          %s1399 = sand.u32 %s116, 1
          %s1400 = smul.addr %s1399, 8
          %s1401 = scalar_lea.vmem [#allocation3], %s1400
          %1402 = dma.done %s1398, 128
        $region48: #{imagenet_large_frames_forward.9} parent=43 // pred_fallthru
          _
      $region44: #{imagenet_large_frames_forward.9} parent=5 // pred_fallthru
        _
    $region6: #{imagenet_large_frames_forward.9} parent=1 // loop_footer
      %s17 = sadd.s32 1, %s13
    $region7: #{imagenet_large_frames_forward.9} parent=1 // loop_footer_branch
      %12 = sbr.rel target = $region3
    $region8: #{imagenet_large_frames_forward.9} parent=1 // loop_exit
      _
    %1403 = vsyncpa [#allocation4], 1
    %s1404 = scalar_lea.sflag [#allocation4], 1
    %1405 = vsyncpa %s1404, 1

</llo_original>
